<compile_context>
chip_gen: v7x
topology: tpu7x:2x2x1
jax: 0.10.0
libtpu: 0.0.40
codegen_flags: <defaults>
</compile_context>

<pallas_src>
import jax
import jax.numpy as jnp
from jax.experimental import pallas as pl
from jax.experimental.pallas import tpu as pltpu


L_IN = 1696            # input sequence length (fixed by Linear(64*212, 128))
L3 = 212               # length after the 3rd conv+pool stage
FEAT = 64 * L3         # 13568 flattened features
HID = 128              # fc1 width
H_HALF = HID // 2      # per-grid-step slice of the fc1 output (v7x: one half per TensorCore)

# widths of the (extended) polyphase buffers inside the fused conv kernel
_W1 = 216              # stage-1 pooled-phase width (212 valid cols + 2 zero-margin each side)
_W2 = 214              # stage-2 pooled-phase width (212 valid cols + 1 zero-margin each side)
_NPH = 8               # input polyphase factor (2*2*2 pooling stages)
_XW = 217              # per-phase input width: 8*217 = 1736 = 19 (left pad) + 1696 + 21 (right pad)


# ----------------------------------------------------------------------------
# Fused conv stack: Conv1d(1->16,7) / Conv1d(16->32,5) / Conv1d(32->64,3),
# each followed by ReLU + MaxPool1d(2).  `block_b` batch elements per grid step.
# ----------------------------------------------------------------------------
def _fused_conv_kernel(x8_ref, m1_ref, m2_ref, w1_ref, b1_ref, w2_ref, b2_ref,
                       w3_ref, b3_ref, out_ref):
    # x8_ref : (Bb, 8, 217) f32   mod-8 polyphase split of the zero-padded input row
    #                             (phase s, index m) <-> x_pad[8*m + s - 16]
    # m1/m2  : (1, 216)/(1, 214)  precomputed 0/1 margin masks (load-bearing: kill relu(bias))
    # w*_ref : banded packed conv weights in bf16; b*_ref tiled f32 biases (128, 1)
    # out_ref: (Bb, 64, 212) bf16 pooled output of stage 3 in PyTorch (C, L) order
    m1 = m1_ref[...]
    m2 = m2_ref[...]
    w1 = w1_ref[...]
    b1 = b1_ref[...]
    w2 = w2_ref[...]
    b2 = b2_ref[...]
    w3 = w3_ref[...]
    b3 = b3_ref[...]

    for e in range(x8_ref.shape[0]):        # static, small unroll over the batch block
        x8 = x8_ref[e]                                                        # (8, 217) f32

        # ---- stage 1: Conv1d(1->16, K=7, pad 3) + ReLU + MaxPool(2) ---------------------
        # slab1 row t holds x_pad[8*m + t - 16]; one dot yields all 8 conv phases.
        slab1 = jnp.concatenate([x8[:, 0:_W1], x8[:, 1:_W1 + 1]], axis=0)     # (16, 216)
        z1 = jnp.dot(w1, slab1.astype(jnp.bfloat16),
                     preferred_element_type=jnp.float32)                      # (128, 216) f32
        z1 = jnp.maximum(z1 + b1, 0.0) * m1      # exact zeros on the pad margins
        # pool adjacent conv phases -> mod-4 phases of a1:  r_s[m] = a1[4*(m-2) + s]
        r0 = jnp.maximum(z1[0:16],   z1[16:32]).astype(jnp.bfloat16)
        r1 = jnp.maximum(z1[32:48],  z1[48:64]).astype(jnp.bfloat16)
        r2 = jnp.maximum(z1[64:80],  z1[80:96]).astype(jnp.bfloat16)
        r3 = jnp.maximum(z1[96:112], z1[112:128]).astype(jnp.bfloat16)

        # ---- stage 2: Conv1d(16->32, K=5, pad 2) + ReLU + MaxPool(2) --------------------
        # slab2 block t (16 rows each) holds a1[4*(j-1) + t - 2]  (static lane slices only)
        slab2 = jnp.concatenate(
            [r2[:, 0:_W2],     r3[:, 0:_W2],
             r0[:, 1:_W2 + 1], r1[:, 1:_W2 + 1], r2[:, 1:_W2 + 1], r3[:, 1:_W2 + 1],
             r0[:, 2:_W2 + 2], r1[:, 2:_W2 + 2]], axis=0)                     # (128, 214) bf16
        z2 = jnp.dot(w2, slab2, preferred_element_type=jnp.float32)           # (128, 214) f32
        z2 = jnp.maximum(z2 + b2, 0.0) * m2
        # q_u[j] = a2[2*(j-1) + u]
        q0 = jnp.maximum(z2[0:32],  z2[32:64]).astype(jnp.bfloat16)
        q1 = jnp.maximum(z2[64:96], z2[96:128]).astype(jnp.bfloat16)

        # ---- stage 3: Conv1d(32->64, K=3, pad 1) + ReLU + MaxPool(2) --------------------
        # slab3 block t (32 rows each) holds a2[2*n + t - 1]
        slab3 = jnp.concatenate(
            [q1[:, 0:L3], q0[:, 1:L3 + 1], q1[:, 1:L3 + 1], q0[:, 2:L3 + 2]],
            axis=0)                                                           # (128, 212) bf16
        z3 = jnp.dot(w3, slab3, preferred_element_type=jnp.float32)           # (128, 212) f32
        z3 = jnp.maximum(z3 + b3, 0.0)
        out_ref[e] = jnp.maximum(z3[0:64], z3[64:128]).astype(out_ref.dtype)


def _pick_block_b(B):
    # amortize per-grid-step overhead at larger B, keep >=2 grid steps for megacore sharding
    for cand in (8, 4, 2):
        if B % cand == 0 and B // cand >= 2:
            return cand
    return 1


def _conv_stack(x8, prep, block_b):
    B = x8.shape[0]
    return pl.pallas_call(
        _fused_conv_kernel,
        out_shape=jax.ShapeDtypeStruct((B, 64, L3), jnp.bfloat16),
        grid=(B // block_b,),
        in_specs=[
            pl.BlockSpec((block_b, _NPH, _XW), lambda i: (i, 0, 0)),  # per-block input phases
            pl.BlockSpec((1, _W1), lambda i: (0, 0)),                 # margin mask, stage 1
            pl.BlockSpec((1, _W2), lambda i: (0, 0)),                 # margin mask, stage 2
            pl.BlockSpec((128, 16), lambda i: (0, 0)),                # packed conv1 weights
            pl.BlockSpec((128, 1), lambda i: (0, 0)),
            pl.BlockSpec((128, 128), lambda i: (0, 0)),               # packed conv2 weights
            pl.BlockSpec((128, 1), lambda i: (0, 0)),
            pl.BlockSpec((128, 128), lambda i: (0, 0)),               # packed conv3 weights
            pl.BlockSpec((128, 1), lambda i: (0, 0)),
        ],
        out_specs=pl.BlockSpec((block_b, 64, L3), lambda i: (i, 0, 0)),
        compiler_params=pltpu.CompilerParams(dimension_semantics=("parallel",)),
    )(x8, prep["mask1"], prep["mask2"], prep["w1"], prep["b1"],
      prep["w2"], prep["b2"], prep["w3"], prep["b3"])


# ----------------------------------------------------------------------------
# fc: Linear(64*212 -> 128) + ReLU + Linear(128 -> 2).
# Grid of 2 over the hidden dim halves ("parallel": both v7x TensorCores each stream half of
# the bf16 fc1 weight).  Each step emits partial logits; the two partials are summed outside.
# ----------------------------------------------------------------------------
def _mlp_kernel(x_ref, w1_ref, b1_ref, w2_ref, b2_ref, out_ref):
    h = jnp.dot(x_ref[...], w1_ref[...], preferred_element_type=jnp.float32)  # (B, 64) f32
    h = jnp.maximum(h + b1_ref[...], 0.0)
    part = jnp.dot(h, w2_ref[...], preferred_element_type=jnp.float32)        # (B, 2) f32
    bias2 = jnp.where(pl.program_id(0) == 0, b2_ref[...], jnp.zeros_like(b2_ref[...]))
    out_ref[...] = part + bias2


def _mlp(flat, prep):
    B, F = flat.shape
    # batch-aware VMEM budget: flat (bf16, double-buffered) + one fc1 half (bf16, double-buffered)
    need = 2 * (B * F * 2) + 2 * (F * H_HALF * 2) + (1 << 20)
    parts = pl.pallas_call(
        _mlp_kernel,
        out_shape=jax.ShapeDtypeStruct((2, B, 2), jnp.float32),
        grid=(2,),
        in_specs=[
            pl.BlockSpec((B, F), lambda i: (0, 0)),                 # bf16 features (both steps)
            pl.BlockSpec((None, F, H_HALF), lambda i: (i, 0, 0)),   # bf16 fc1 weight half
            pl.BlockSpec((None, 1, H_HALF), lambda i: (i, 0, 0)),   # fc1 bias half
            pl.BlockSpec((None, H_HALF, 2), lambda i: (i, 0, 0)),   # fc2 weight half (f32)
            pl.BlockSpec((1, 2), lambda i: (0, 0)),                 # fc2 bias
        ],
        out_specs=pl.BlockSpec((None, B, 2), lambda i: (i, 0, 0)),
        compiler_params=pltpu.CompilerParams(
            dimension_semantics=("parallel",),
            vmem_limit_bytes=int(2 * need + (6 << 20))),
    )(flat, prep["w_fc1_parts"], prep["b_fc1_parts"], prep["w_fc2_parts"], prep["b_fc2"])
    # trivial join of the two hidden-half partial logits (tiny XLA add)
    return parts[0] + parts[1]


# ----------------------------------------------------------------------------
# Full forward pass (matches DeepCNN1D.forward)
# ----------------------------------------------------------------------------
def deep_cnn1d_forward(x, prep):
    """x: (B, 1, 1696) f32 -> (B, 2) f32 logits.  `prep` = prepare_params(params)."""
    B = x.shape[0]
    assert x.shape[1] == 1 and x.shape[2] == L_IN
    block_b = _pick_block_b(B)
    # mod-8 polyphase split of the zero-padded input (tiny: ~14 KB per row).
    # xg[i] = x[i - 19]; 19 = conv1 left pad (3) + two phase-groups of margin (16).
    xg = jnp.pad(x.reshape(B, L_IN), ((0, 0), (19, _NPH * _XW - L_IN - 19)))   # (B, 1736)
    x8 = xg.reshape(B, _XW, _NPH).transpose(0, 2, 1)                           # (B, 8, 217)
    feats = _conv_stack(x8, prep, block_b)                                     # (B, 64, 212) bf16
    flat = feats.reshape(B, FEAT)       # same C-major order as PyTorch x.view(B, -1)
    return _mlp(flat, prep)


# ----------------------------------------------------------------------------
# One-time parameter preparation (kept OUT of the jitted per-call forward).
# ----------------------------------------------------------------------------
def prepare_params(p):
    def pack_conv(w, n_phase, n_taps):
        # w: (C_out, C_in, K) -> (n_phase*C_out, n_taps*C_in) banded matrix with
        # block[r, t] = w[:, :, t - r]  (zero outside 0 <= t - r < K), stored in bf16.
        C_out, C_in, K = w.shape
        rows = []
        for r in range(n_phase):
            blocks = []
            for t in range(n_taps):
                k = t - r
                if 0 <= k < K:
                    blocks.append(w[:, :, k])
                else:
                    blocks.append(jnp.zeros((C_out, C_in), w.dtype))
            rows.append(jnp.concatenate(blocks, axis=1))
        return jnp.concatenate(rows, axis=0).astype(jnp.bfloat16)

    col1 = jnp.arange(_W1)[None, :]
    col2 = jnp.arange(_W2)[None, :]

    # fc1 weight split into two (FEAT, 64) bf16 halves along the hidden dim, transposed once.
    w_fc1_parts = p["w_fc1"].astype(jnp.bfloat16).reshape(2, H_HALF, FEAT).transpose(0, 2, 1)
    w_fc2_parts = p["w_fc2"].T.reshape(2, H_HALF, 2)

    return {
        # conv stages: all output phases of a layer come from a single MXU dot
        "w1": pack_conv(p["w_c1"], 8, 16),                  # (128, 16)  bf16
        "b1": jnp.tile(p["b_c1"], 8).reshape(128, 1),
        "w2": pack_conv(p["w_c2"], 4, 8),                   # (128, 128) bf16
        "b2": jnp.tile(p["b_c2"], 4).reshape(128, 1),
        "w3": pack_conv(p["w_c3"], 2, 4),                   # (128, 128) bf16
        "b3": jnp.tile(p["b_c3"], 2).reshape(128, 1),
        # precomputed 0/1 margin masks (exact zeros outside the valid conv positions)
        "mask1": ((col1 >= 2) & (col1 <= 213)).astype(jnp.float32),   # (1, 216)
        "mask2": ((col2 >= 1) & (col2 <= 212)).astype(jnp.float32),   # (1, 214)
        # FC weights prepared once (transposed, bf16 for the big fc1 weight)
        "w_fc1_parts": w_fc1_parts,                         # (2, 13568, 64) bf16
        "b_fc1_parts": p["b_fc1"].reshape(2, 1, H_HALF),    # (2, 1, 64) f32
        "w_fc2_parts": w_fc2_parts,                         # (2, 64, 2) f32
        "b_fc2": p["b_fc2"].reshape(1, 2),
    }


# ----------------------------------------------------------------------------
# Deterministic parameter init (PyTorch default: U(-1/sqrt(fan_in), 1/sqrt(fan_in)))
# ----------------------------------------------------------------------------
def init_params(key):
    def u(k, shape, fan_in):
        bound = 1.0 / (fan_in ** 0.5)
        return jax.random.uniform(k, shape, jnp.float32, -bound, bound)

    ks = jax.random.split(key, 10)
    return {
        "w_c1": u(ks[0], (16, 1, 7), 1 * 7),
        "b_c1": u(ks[1], (16,), 1 * 7),
        "w_c2": u(ks[2], (32, 16, 5), 16 * 5),
        "b_c2": u(ks[3], (32,), 16 * 5),
        "w_c3": u(ks[4], (64, 32, 3), 32 * 3),
        "b_c3": u(ks[5], (64,), 32 * 3),
        "w_fc1": u(ks[6], (128, 64 * 212), 64 * 212),
        "b_fc1": u(ks[7], (128,), 64 * 212),
        "w_fc2": u(ks[8], (2, 128), 128),
        "b_fc2": u(ks[9], (2,), 128),
    }


# pure-JAX f32 reference for a correctness sanity check
def ref_forward(x, p):
    def crp(x, w, b):
        K = w.shape[-1]
        P = (K - 1) // 2
        y = jax.lax.conv_general_dilated(
            x, w, window_strides=(1,), padding=[(P, P)],
            dimension_numbers=("NCH", "OIH", "NCH"))
        y = jnp.maximum(y + b[None, :, None], 0.0)
        B, C, L = y.shape
        return y.reshape(B, C, L // 2, 2).max(axis=-1)

    h = crp(x, p["w_c1"], p["b_c1"])
    h = crp(h, p["w_c2"], p["b_c2"])
    h = crp(h, p["w_c3"], p["b_c3"])
    h = h.reshape(h.shape[0], -1)
    h = jnp.maximum(h @ p["w_fc1"].T + p["b_fc1"], 0.0)
    return h @ p["w_fc2"].T + p["b_fc2"]


if __name__ == "__main__":
    key = jax.random.PRNGKey(0)
    pkey, xkey = jax.random.split(key)
    params = init_params(pkey)
    prep = prepare_params(params)          # one-time weight repacking / transposes / bf16 casts

    B = 2                                   # L fixed by Linear(64*212, ...): 1696 -> 848 -> 424 -> 212
    x = jax.random.normal(xkey, (B, 1, L_IN), jnp.float32)

    fwd = jax.jit(deep_cnn1d_forward)
    out = jax.block_until_ready(fwd(x, prep))
    assert out.shape == (B, 2) and out.dtype == jnp.float32

    ref = jax.block_until_ready(ref_forward(x, params))
    # bf16 weights/activations with f32 accumulation: tolerance relaxed vs. the pure-f32 path.
    if not jnp.allclose(out, ref, rtol=2e-2, atol=2e-2):
        err = float(jnp.max(jnp.abs(out - ref)))
        raise AssertionError(f"Pallas output does not match JAX reference (max abs err {err})")

    print("KERNEL_OK")
</pallas_src>

<mosaic_0001>
module attributes {stable_mosaic.version = 11 : i64} {
  func.func @_fused_conv_kernel(%arg0: i32, %arg1: memref<1x8x217xf32, #tpu.memory_space<vmem>>, %arg2: memref<1x216xf32, #tpu.memory_space<vmem>>, %arg3: memref<1x214xf32, #tpu.memory_space<vmem>>, %arg4: memref<128x16xbf16, #tpu.memory_space<vmem>>, %arg5: memref<128x1xf32, #tpu.memory_space<vmem>>, %arg6: memref<128x128xbf16, #tpu.memory_space<vmem>>, %arg7: memref<128x1xf32, #tpu.memory_space<vmem>>, %arg8: memref<128x128xbf16, #tpu.memory_space<vmem>>, %arg9: memref<128x1xf32, #tpu.memory_space<vmem>>, %arg10: memref<1x64x212xbf16, #tpu.memory_space<vmem>>) attributes {dimension_semantics = [#tpu.dimension_semantics<parallel>], iteration_bounds = array<i64: 2>, scalar_prefetch = 0 : i64, scratch_operands = 0 : i64, tpu.core_type = #tpu.core_type<tc>, window_params = [{transform_indices = @transform_0, window_bounds = array<i64: 1, 8, 217>}, {pipeline_mode = #tpu.pipeline_mode<synchronous>, transform_indices = @transform_1, window_bounds = array<i64: 1, 216>}, {pipeline_mode = #tpu.pipeline_mode<synchronous>, transform_indices = @transform_2, window_bounds = array<i64: 1, 214>}, {pipeline_mode = #tpu.pipeline_mode<synchronous>, transform_indices = @transform_3, window_bounds = array<i64: 128, 16>}, {pipeline_mode = #tpu.pipeline_mode<synchronous>, transform_indices = @transform_4, window_bounds = array<i64: 128, 1>}, {pipeline_mode = #tpu.pipeline_mode<synchronous>, transform_indices = @transform_5, window_bounds = array<i64: 128, 128>}, {pipeline_mode = #tpu.pipeline_mode<synchronous>, transform_indices = @transform_6, window_bounds = array<i64: 128, 1>}, {pipeline_mode = #tpu.pipeline_mode<synchronous>, transform_indices = @transform_7, window_bounds = array<i64: 128, 128>}, {pipeline_mode = #tpu.pipeline_mode<synchronous>, transform_indices = @transform_8, window_bounds = array<i64: 128, 1>}, {transform_indices = @transform_9, window_bounds = array<i64: 1, 64, 212>}]} {
    %c0 = arith.constant 0 : index
    %c0_0 = arith.constant 0 : index
    %0 = vector.load %arg2[%c0, %c0_0] : memref<1x216xf32, #tpu.memory_space<vmem>>, vector<1x216xf32>
    %c0_1 = arith.constant 0 : index
    %c0_2 = arith.constant 0 : index
    %1 = vector.load %arg3[%c0_1, %c0_2] : memref<1x214xf32, #tpu.memory_space<vmem>>, vector<1x214xf32>
    %c0_3 = arith.constant 0 : index
    %c0_4 = arith.constant 0 : index
    %2 = vector.load %arg4[%c0_3, %c0_4] : memref<128x16xbf16, #tpu.memory_space<vmem>>, vector<128x16xbf16>
    %c0_5 = arith.constant 0 : index
    %c0_6 = arith.constant 0 : index
    %3 = vector.load %arg5[%c0_5, %c0_6] : memref<128x1xf32, #tpu.memory_space<vmem>>, vector<128x1xf32>
    %c0_7 = arith.constant 0 : index
    %c0_8 = arith.constant 0 : index
    %4 = vector.load %arg6[%c0_7, %c0_8] : memref<128x128xbf16, #tpu.memory_space<vmem>>, vector<128x128xbf16>
    %c0_9 = arith.constant 0 : index
    %c0_10 = arith.constant 0 : index
    %5 = vector.load %arg7[%c0_9, %c0_10] : memref<128x1xf32, #tpu.memory_space<vmem>>, vector<128x1xf32>
    %c0_11 = arith.constant 0 : index
    %c0_12 = arith.constant 0 : index
    %6 = vector.load %arg8[%c0_11, %c0_12] : memref<128x128xbf16, #tpu.memory_space<vmem>>, vector<128x128xbf16>
    %c0_13 = arith.constant 0 : index
    %c0_14 = arith.constant 0 : index
    %7 = vector.load %arg9[%c0_13, %c0_14] : memref<128x1xf32, #tpu.memory_space<vmem>>, vector<128x1xf32>
    %c0_15 = arith.constant 0 : index
    %c0_16 = arith.constant 0 : index
    %c0_17 = arith.constant 0 : index
    %8 = vector.load %arg1[%c0_15, %c0_16, %c0_17] : memref<1x8x217xf32, #tpu.memory_space<vmem>>, vector<1x8x217xf32>
    %9 = vector.shape_cast %8 : vector<1x8x217xf32> to vector<8x217xf32>
    %10 = vector.extract_strided_slice %9 {offsets = [0, 0], sizes = [8, 216], strides = [1, 1]} : vector<8x217xf32> to vector<8x216xf32>
    %11 = vector.extract_strided_slice %9 {offsets = [0, 1], sizes = [8, 216], strides = [1, 1]} : vector<8x217xf32> to vector<8x216xf32>
    %12 = tpu.concatenate %10, %11 in 0 : vector<8x216xf32>, vector<8x216xf32> -> vector<16x216xf32>
    %13 = arith.truncf %12 : vector<16x216xf32> to vector<16x216xbf16>
    %cst = arith.constant dense<0.000000e+00> : vector<128x216xf32>
    %14 = tpu.matmul %2, %13, %cst {dimension_numbers = #tpu.dot_dimension_numbers<[1], [0], [0], [1], [0, 0, 1, 1], [], []>} : vector<128x16xbf16>, vector<16x216xbf16>, vector<128x216xf32> -> vector<128x216xf32>
    %15 = vector.broadcast %3 : vector<128x1xf32> to vector<128x216xf32>
    %16 = arith.addf %14, %15 : vector<128x216xf32>
    %cst_18 = arith.constant 0.000000e+00 : f32
    %17 = vector.broadcast %cst_18 : f32 to vector<128x216xf32>
    %18 = arith.maximumf %16, %17 : vector<128x216xf32>
    %19 = vector.broadcast %0 : vector<1x216xf32> to vector<128x216xf32>
    %20 = arith.mulf %18, %19 : vector<128x216xf32>
    %21 = vector.extract_strided_slice %20 {offsets = [0, 0], sizes = [16, 216], strides = [1, 1]} : vector<128x216xf32> to vector<16x216xf32>
    %22 = vector.extract_strided_slice %20 {offsets = [16, 0], sizes = [16, 216], strides = [1, 1]} : vector<128x216xf32> to vector<16x216xf32>
    %23 = arith.maximumf %21, %22 : vector<16x216xf32>
    %24 = arith.truncf %23 : vector<16x216xf32> to vector<16x216xbf16>
    %25 = vector.extract_strided_slice %20 {offsets = [32, 0], sizes = [16, 216], strides = [1, 1]} : vector<128x216xf32> to vector<16x216xf32>
    %26 = vector.extract_strided_slice %20 {offsets = [48, 0], sizes = [16, 216], strides = [1, 1]} : vector<128x216xf32> to vector<16x216xf32>
    %27 = arith.maximumf %25, %26 : vector<16x216xf32>
    %28 = arith.truncf %27 : vector<16x216xf32> to vector<16x216xbf16>
    %29 = vector.extract_strided_slice %20 {offsets = [64, 0], sizes = [16, 216], strides = [1, 1]} : vector<128x216xf32> to vector<16x216xf32>
    %30 = vector.extract_strided_slice %20 {offsets = [80, 0], sizes = [16, 216], strides = [1, 1]} : vector<128x216xf32> to vector<16x216xf32>
    %31 = arith.maximumf %29, %30 : vector<16x216xf32>
    %32 = arith.truncf %31 : vector<16x216xf32> to vector<16x216xbf16>
    %33 = vector.extract_strided_slice %20 {offsets = [96, 0], sizes = [16, 216], strides = [1, 1]} : vector<128x216xf32> to vector<16x216xf32>
    %34 = vector.extract_strided_slice %20 {offsets = [112, 0], sizes = [16, 216], strides = [1, 1]} : vector<128x216xf32> to vector<16x216xf32>
    %35 = arith.maximumf %33, %34 : vector<16x216xf32>
    %36 = arith.truncf %35 : vector<16x216xf32> to vector<16x216xbf16>
    %37 = vector.extract_strided_slice %32 {offsets = [0, 0], sizes = [16, 214], strides = [1, 1]} : vector<16x216xbf16> to vector<16x214xbf16>
    %38 = vector.extract_strided_slice %36 {offsets = [0, 0], sizes = [16, 214], strides = [1, 1]} : vector<16x216xbf16> to vector<16x214xbf16>
    %39 = vector.extract_strided_slice %24 {offsets = [0, 1], sizes = [16, 214], strides = [1, 1]} : vector<16x216xbf16> to vector<16x214xbf16>
    %40 = vector.extract_strided_slice %28 {offsets = [0, 1], sizes = [16, 214], strides = [1, 1]} : vector<16x216xbf16> to vector<16x214xbf16>
    %41 = vector.extract_strided_slice %32 {offsets = [0, 1], sizes = [16, 214], strides = [1, 1]} : vector<16x216xbf16> to vector<16x214xbf16>
    %42 = vector.extract_strided_slice %36 {offsets = [0, 1], sizes = [16, 214], strides = [1, 1]} : vector<16x216xbf16> to vector<16x214xbf16>
    %43 = vector.extract_strided_slice %24 {offsets = [0, 2], sizes = [16, 214], strides = [1, 1]} : vector<16x216xbf16> to vector<16x214xbf16>
    %44 = vector.extract_strided_slice %28 {offsets = [0, 2], sizes = [16, 214], strides = [1, 1]} : vector<16x216xbf16> to vector<16x214xbf16>
    %45 = tpu.concatenate %37, %38, %39, %40, %41, %42, %43, %44 in 0 : vector<16x214xbf16>, vector<16x214xbf16>, vector<16x214xbf16>, vector<16x214xbf16>, vector<16x214xbf16>, vector<16x214xbf16>, vector<16x214xbf16>, vector<16x214xbf16> -> vector<128x214xbf16>
    %cst_19 = arith.constant dense<0.000000e+00> : vector<128x214xf32>
    %46 = tpu.matmul %4, %45, %cst_19 {dimension_numbers = #tpu.dot_dimension_numbers<[1], [0], [0], [1], [0, 0, 1, 1], [], []>} : vector<128x128xbf16>, vector<128x214xbf16>, vector<128x214xf32> -> vector<128x214xf32>
    %47 = vector.broadcast %5 : vector<128x1xf32> to vector<128x214xf32>
    %48 = arith.addf %46, %47 : vector<128x214xf32>
    %cst_20 = arith.constant 0.000000e+00 : f32
    %49 = vector.broadcast %cst_20 : f32 to vector<128x214xf32>
    %50 = arith.maximumf %48, %49 : vector<128x214xf32>
    %51 = vector.broadcast %1 : vector<1x214xf32> to vector<128x214xf32>
    %52 = arith.mulf %50, %51 : vector<128x214xf32>
    %53 = vector.extract_strided_slice %52 {offsets = [0, 0], sizes = [32, 214], strides = [1, 1]} : vector<128x214xf32> to vector<32x214xf32>
    %54 = vector.extract_strided_slice %52 {offsets = [32, 0], sizes = [32, 214], strides = [1, 1]} : vector<128x214xf32> to vector<32x214xf32>
    %55 = arith.maximumf %53, %54 : vector<32x214xf32>
    %56 = arith.truncf %55 : vector<32x214xf32> to vector<32x214xbf16>
    %57 = vector.extract_strided_slice %52 {offsets = [64, 0], sizes = [32, 214], strides = [1, 1]} : vector<128x214xf32> to vector<32x214xf32>
    %58 = vector.extract_strided_slice %52 {offsets = [96, 0], sizes = [32, 214], strides = [1, 1]} : vector<128x214xf32> to vector<32x214xf32>
    %59 = arith.maximumf %57, %58 : vector<32x214xf32>
    %60 = arith.truncf %59 : vector<32x214xf32> to vector<32x214xbf16>
    %61 = vector.extract_strided_slice %60 {offsets = [0, 0], sizes = [32, 212], strides = [1, 1]} : vector<32x214xbf16> to vector<32x212xbf16>
    %62 = vector.extract_strided_slice %56 {offsets = [0, 1], sizes = [32, 212], strides = [1, 1]} : vector<32x214xbf16> to vector<32x212xbf16>
    %63 = vector.extract_strided_slice %60 {offsets = [0, 1], sizes = [32, 212], strides = [1, 1]} : vector<32x214xbf16> to vector<32x212xbf16>
    %64 = vector.extract_strided_slice %56 {offsets = [0, 2], sizes = [32, 212], strides = [1, 1]} : vector<32x214xbf16> to vector<32x212xbf16>
    %65 = tpu.concatenate %61, %62, %63, %64 in 0 : vector<32x212xbf16>, vector<32x212xbf16>, vector<32x212xbf16>, vector<32x212xbf16> -> vector<128x212xbf16>
    %cst_21 = arith.constant dense<0.000000e+00> : vector<128x212xf32>
    %66 = tpu.matmul %6, %65, %cst_21 {dimension_numbers = #tpu.dot_dimension_numbers<[1], [0], [0], [1], [0, 0, 1, 1], [], []>} : vector<128x128xbf16>, vector<128x212xbf16>, vector<128x212xf32> -> vector<128x212xf32>
    %67 = vector.broadcast %7 : vector<128x1xf32> to vector<128x212xf32>
    %68 = arith.addf %66, %67 : vector<128x212xf32>
    %cst_22 = arith.constant 0.000000e+00 : f32
    %69 = vector.broadcast %cst_22 : f32 to vector<128x212xf32>
    %70 = arith.maximumf %68, %69 : vector<128x212xf32>
    %71 = vector.extract_strided_slice %70 {offsets = [0, 0], sizes = [64, 212], strides = [1, 1]} : vector<128x212xf32> to vector<64x212xf32>
    %72 = vector.extract_strided_slice %70 {offsets = [64, 0], sizes = [64, 212], strides = [1, 1]} : vector<128x212xf32> to vector<64x212xf32>
    %73 = arith.maximumf %71, %72 : vector<64x212xf32>
    %74 = arith.truncf %73 : vector<64x212xf32> to vector<64x212xbf16>
    %c0_23 = arith.constant 0 : index
    %c0_24 = arith.constant 0 : index
    %c0_25 = arith.constant 0 : index
    %75 = vector.load %arg10[%c0_23, %c0_24, %c0_25] : memref<1x64x212xbf16, #tpu.memory_space<vmem>>, vector<1x64x212xbf16>
    %76 = vector.shape_cast %75 : vector<1x64x212xbf16> to vector<64x212xbf16>
    %77 = vector.shape_cast %74 : vector<64x212xbf16> to vector<1x64x212xbf16>
    tpu.vector_store %arg10[%c0_23, %c0_24, %c0_25], %77 {strides = array<i32>} : memref<1x64x212xbf16, #tpu.memory_space<vmem>>, vector<1x64x212xbf16>,
    return
  }
  func.func @transform_0(%arg0: i32) -> (i32, i32, i32) {
    %c0_i32 = arith.constant 0 : i32
    %c0_i32_0 = arith.constant 0 : i32
    %c0_i32_1 = arith.constant 0 : i32
    return %arg0, %c0_i32, %c0_i32_0 : i32, i32, i32
  }
  func.func @transform_1(%arg0: i32) -> (i32, i32) {
    %c0_i32 = arith.constant 0 : i32
    %c0_i32_0 = arith.constant 0 : i32
    %c0_i32_1 = arith.constant 0 : i32
    return %c0_i32, %c0_i32_0 : i32, i32
  }
  func.func @transform_2(%arg0: i32) -> (i32, i32) {
    %c0_i32 = arith.constant 0 : i32
    %c0_i32_0 = arith.constant 0 : i32
    %c0_i32_1 = arith.constant 0 : i32
    return %c0_i32, %c0_i32_0 : i32, i32
  }
  func.func @transform_3(%arg0: i32) -> (i32, i32) {
    %c0_i32 = arith.constant 0 : i32
    %c0_i32_0 = arith.constant 0 : i32
    %c0_i32_1 = arith.constant 0 : i32
    return %c0_i32, %c0_i32_0 : i32, i32
  }
  func.func @transform_4(%arg0: i32) -> (i32, i32) {
    %c0_i32 = arith.constant 0 : i32
    %c0_i32_0 = arith.constant 0 : i32
    %c0_i32_1 = arith.constant 0 : i32
    return %c0_i32, %c0_i32_0 : i32, i32
  }
  func.func @transform_5(%arg0: i32) -> (i32, i32) {
    %c0_i32 = arith.constant 0 : i32
    %c0_i32_0 = arith.constant 0 : i32
    %c0_i32_1 = arith.constant 0 : i32
    return %c0_i32, %c0_i32_0 : i32, i32
  }
  func.func @transform_6(%arg0: i32) -> (i32, i32) {
    %c0_i32 = arith.constant 0 : i32
    %c0_i32_0 = arith.constant 0 : i32
    %c0_i32_1 = arith.constant 0 : i32
    return %c0_i32, %c0_i32_0 : i32, i32
  }
  func.func @transform_7(%arg0: i32) -> (i32, i32) {
    %c0_i32 = arith.constant 0 : i32
    %c0_i32_0 = arith.constant 0 : i32
    %c0_i32_1 = arith.constant 0 : i32
    return %c0_i32, %c0_i32_0 : i32, i32
  }
  func.func @transform_8(%arg0: i32) -> (i32, i32) {
    %c0_i32 = arith.constant 0 : i32
    %c0_i32_0 = arith.constant 0 : i32
    %c0_i32_1 = arith.constant 0 : i32
    return %c0_i32, %c0_i32_0 : i32, i32
  }
  func.func @transform_9(%arg0: i32) -> (i32, i32, i32) {
    %c0_i32 = arith.constant 0 : i32
    %c0_i32_0 = arith.constant 0 : i32
    %c0_i32_1 = arith.constant 0 : i32
    return %arg0, %c0_i32, %c0_i32_0 : i32, i32, i32
  }
}

module attributes {stable_mosaic.version = 11 : i64} {
  func.func @_mlp_kernel(%arg0: i32, %arg1: memref<2x13568xbf16, #tpu.memory_space<vmem>>, %arg2: memref<1x13568x64xbf16, #tpu.memory_space<vmem>>, %arg3: memref<1x1x64xf32, #tpu.memory_space<vmem>>, %arg4: memref<1x64x2xf32, #tpu.memory_space<vmem>>, %arg5: memref<1x2xf32, #tpu.memory_space<vmem>>, %arg6: memref<1x2x2xf32, #tpu.memory_space<vmem>>) attributes {dimension_semantics = [#tpu.dimension_semantics<parallel>], iteration_bounds = array<i64: 2>, scalar_prefetch = 0 : i64, scratch_operands = 0 : i64, tpu.core_type = #tpu.core_type<tc>, window_params = [{pipeline_mode = #tpu.pipeline_mode<synchronous>, transform_indices = @transform_0, window_bounds = array<i64: 2, 13568>}, {transform_indices = @transform_1, window_bounds = array<i64: 1, 13568, 64>}, {transform_indices = @transform_2, window_bounds = array<i64: 1, 1, 64>}, {transform_indices = @transform_3, window_bounds = array<i64: 1, 64, 2>}, {pipeline_mode = #tpu.pipeline_mode<synchronous>, transform_indices = @transform_4, window_bounds = array<i64: 1, 2>}, {transform_indices = @transform_5, window_bounds = array<i64: 1, 2, 2>}]} {
    %c0 = arith.constant 0 : index
    %c0_0 = arith.constant 0 : index
    %0 = vector.load %arg1[%c0, %c0_0] : memref<2x13568xbf16, #tpu.memory_space<vmem>>, vector<2x13568xbf16>
    %c0_1 = arith.constant 0 : index
    %c0_2 = arith.constant 0 : index
    %c0_3 = arith.constant 0 : index
    %1 = vector.load %arg2[%c0_1, %c0_2, %c0_3] : memref<1x13568x64xbf16, #tpu.memory_space<vmem>>, vector<1x13568x64xbf16>
    %2 = vector.shape_cast %1 : vector<1x13568x64xbf16> to vector<13568x64xbf16>
    %cst = arith.constant dense<0.000000e+00> : vector<2x64xf32>
    %3 = tpu.matmul %0, %2, %cst {dimension_numbers = #tpu.dot_dimension_numbers<[1], [0], [0], [1], [0, 0, 1, 1], [], []>} : vector<2x13568xbf16>, vector<13568x64xbf16>, vector<2x64xf32> -> vector<2x64xf32>
    %c0_4 = arith.constant 0 : index
    %c0_5 = arith.constant 0 : index
    %c0_6 = arith.constant 0 : index
    %4 = vector.load %arg3[%c0_4, %c0_5, %c0_6] : memref<1x1x64xf32, #tpu.memory_space<vmem>>, vector<1x1x64xf32>
    %5 = vector.shape_cast %4 : vector<1x1x64xf32> to vector<1x64xf32>
    %6 = vector.broadcast %5 : vector<1x64xf32> to vector<2x64xf32>
    %7 = arith.addf %3, %6 : vector<2x64xf32>
    %cst_7 = arith.constant 0.000000e+00 : f32
    %8 = vector.broadcast %cst_7 : f32 to vector<2x64xf32>
    %9 = arith.maximumf %7, %8 : vector<2x64xf32>
    %c0_8 = arith.constant 0 : index
    %c0_9 = arith.constant 0 : index
    %c0_10 = arith.constant 0 : index
    %10 = vector.load %arg4[%c0_8, %c0_9, %c0_10] : memref<1x64x2xf32, #tpu.memory_space<vmem>>, vector<1x64x2xf32>
    %11 = vector.shape_cast %10 : vector<1x64x2xf32> to vector<64x2xf32>
    %cst_11 = arith.constant dense<0.000000e+00> : vector<2x2xf32>
    %12 = tpu.matmul %9, %11, %cst_11 {dimension_numbers = #tpu.dot_dimension_numbers<[1], [0], [0], [1], [0, 0, 1, 1], [], []>} : vector<2x64xf32>, vector<64x2xf32>, vector<2x2xf32> -> vector<2x2xf32>
    %c0_i32 = arith.constant 0 : i32
    %13 = arith.cmpi eq, %arg0, %c0_i32 : i32
    %c0_12 = arith.constant 0 : index
    %c0_13 = arith.constant 0 : index
    %14 = vector.load %arg5[%c0_12, %c0_13] : memref<1x2xf32, #tpu.memory_space<vmem>>, vector<1x2xf32>
    %cst_14 = arith.constant 0.000000e+00 : f32
    %15 = vector.broadcast %cst_14 : f32 to vector<1x2xf32>
    %16 = arith.select %13, %14, %15 : vector<1x2xf32>
    %17 = vector.broadcast %16 : vector<1x2xf32> to vector<2x2xf32>
    %18 = arith.addf %12, %17 : vector<2x2xf32>
    %c0_15 = arith.constant 0 : index
    %c0_16 = arith.constant 0 : index
    %c0_17 = arith.constant 0 : index
    %19 = vector.load %arg6[%c0_15, %c0_16, %c0_17] : memref<1x2x2xf32, #tpu.memory_space<vmem>>, vector<1x2x2xf32>
    %20 = vector.shape_cast %19 : vector<1x2x2xf32> to vector<2x2xf32>
    %21 = vector.shape_cast %18 : vector<2x2xf32> to vector<1x2x2xf32>
    tpu.vector_store %arg6[%c0_15, %c0_16, %c0_17], %21 {strides = array<i32>} : memref<1x2x2xf32, #tpu.memory_space<vmem>>, vector<1x2x2xf32>,
    return
  }
  func.func @transform_0(%arg0: i32) -> (i32, i32) {
    %c0_i32 = arith.constant 0 : i32
    %c0_i32_0 = arith.constant 0 : i32
    %c0_i32_1 = arith.constant 0 : i32
    return %c0_i32, %c0_i32_0 : i32, i32
  }
  func.func @transform_1(%arg0: i32) -> (i32, i32, i32) {
    %c0_i32 = arith.constant 0 : i32
    %c0_i32_0 = arith.constant 0 : i32
    %c0_i32_1 = arith.constant 0 : i32
    return %arg0, %c0_i32, %c0_i32_0 : i32, i32, i32
  }
  func.func @transform_2(%arg0: i32) -> (i32, i32, i32) {
    %c0_i32 = arith.constant 0 : i32
    %c0_i32_0 = arith.constant 0 : i32
    %c0_i32_1 = arith.constant 0 : i32
    return %arg0, %c0_i32, %c0_i32_0 : i32, i32, i32
  }
  func.func @transform_3(%arg0: i32) -> (i32, i32, i32) {
    %c0_i32 = arith.constant 0 : i32
    %c0_i32_0 = arith.constant 0 : i32
    %c0_i32_1 = arith.constant 0 : i32
    return %arg0, %c0_i32, %c0_i32_0 : i32, i32, i32
  }
  func.func @transform_4(%arg0: i32) -> (i32, i32) {
    %c0_i32 = arith.constant 0 : i32
    %c0_i32_0 = arith.constant 0 : i32
    %c0_i32_1 = arith.constant 0 : i32
    return %c0_i32, %c0_i32_0 : i32, i32
  }
  func.func @transform_5(%arg0: i32) -> (i32, i32, i32) {
    %c0_i32 = arith.constant 0 : i32
    %c0_i32_0 = arith.constant 0 : i32
    %c0_i32_1 = arith.constant 0 : i32
    return %arg0, %c0_i32, %c0_i32_0 : i32, i32, i32
  }
}

</mosaic_0001>

<llo_original>
// kernel: deep_cnn1d_forward.2
$region0: #{deep_cnn1d_forward.2}
  #allocation0 [shape = 'u32[]', space=smem, size = 0x4, offset = 0x4, fixed_abs, tag = 'smem constant byte address 0x4 - core index']
  #allocation1 [shape = 'u32[144,128]{1,0:T(1,128)}', space=vmem, size = 0x12000, scoped, tag = 'internal scratch']
  %s0 = inlined_call_operand.vmem [shape: f32[2,8,217], index: 0, kind: input, shape index: {}]
  %s1 = inlined_call_operand.hbm [shape: f32[1,216], index: 1, kind: input, shape index: {}]
  %s2 = inlined_call_operand.hbm [shape: f32[1,214], index: 2, kind: input, shape index: {}]
  %s3 = inlined_call_operand.vmem [shape: bf16[128,16], index: 3, kind: input, shape index: {}]
  %s4 = inlined_call_operand.vmem [shape: f32[128,1], index: 4, kind: input, shape index: {}]
  %s5 = inlined_call_operand.hbm [shape: bf16[128,128], index: 5, kind: input, shape index: {}]
  %s6 = inlined_call_operand.vmem [shape: f32[128,1], index: 6, kind: input, shape index: {}]
  %s7 = inlined_call_operand.hbm [shape: bf16[128,128], index: 7, kind: input, shape index: {}]
  %s8 = inlined_call_operand.vmem [shape: f32[128,1], index: 8, kind: input, shape index: {}]
  %s9 = inlined_call_operand.vmem [shape: bf16[2,64,212], index: 9, kind: output, shape index: {}]
  %s10 = sld [smem:[#allocation0]]
  $region85: #{deep_cnn1d_forward.2} parent=0
    _
  %s12 = ssub.s32 1, %s10
  %s13 = scalar_select 0, %s12, %s10
  $region1: #{deep_cnn1d_forward.2} parent=0
    #allocation2 [shape = 'u8[1024]{0}', space=vmem, size = 0x400, scoped, tag = 'input window, operand 1, single buffered']
    #allocation3 [shape = 's32[2]{0}', space=sflag, size = 0x8, scoped, tag = 'scoped memory for deep_cnn1d_forward.2']
    #allocation4 [shape = 'u8[1024]{0}', space=vmem, size = 0x400, scoped, tag = 'input window, operand 2, single buffered']
    #allocation5 [shape = 's32[1]{0}', space=sflag, size = 0x4, scoped, tag = 'scoped memory for deep_cnn1d_forward.2']
    #allocation6 [shape = 'u8[32768]{0}', space=vmem, size = 0x8000, scoped, tag = 'input window, operand 5, single buffered']
    #allocation7 [shape = 'u8[32768]{0}', space=vmem, size = 0x8000, scoped, tag = 'input window, operand 7, single buffered']
    #allocation8 [shape = 's32[1]{0}', space=sflag, size = 0x4, scoped, tag = 'scoped memory for deep_cnn1d_forward.2']
    %14 = vsyncpa [#allocation3], 0
    %15 = vsyncpa [#allocation5], 0
    %16 = vsyncpa [#allocation8], 0
    loop: start=0, step=1, limit=4
    $region2: #{deep_cnn1d_forward.2} parent=1 // loop_pre_header
      _
    $region3: #{deep_cnn1d_forward.2} parent=1 // loop_header
      %s18 = sphi 0, %s22
      %p19 = scmp.ge.s32.totalorder %s18, 4
      %s28 = sphi 0, %s30
      %s31 = sphi 0, %s28
      %s32 = sphi 0, %s31
      %s48 = sphi 0, %s32
      %s52 = sphi 0, %s52
      %s54 = sphi 0, %s52
      %s55 = sphi 0, %s54
      %s69 = sphi 0, %s55
      %s73 = sphi 0, %s73
      %s75 = sphi 0, %s73
      %s76 = sphi 0, %s75
      %s90 = sphi 0, %s76
      %s94 = sphi 0, %s94
      %s96 = sphi 0, %s94
      %s97 = sphi 0, %s96
      %s111 = sphi 0, %s97
      %s115 = sphi 0, %s115
      %s117 = sphi 0, %s115
      %s118 = sphi 0, %s117
      %s132 = sphi 0, %s118
      %s136 = sphi 0, %s136
      %s138 = sphi 0, %s136
      %s139 = sphi 0, %s138
      %s153 = sphi 0, %s139
      %s157 = sphi 0, %s157
      %s159 = sphi 0, %s157
      %s160 = sphi 0, %s159
      %s174 = sphi 0, %s160
      %s178 = sphi 0, %s178
      %s180 = sphi 0, %s178
      %s181 = sphi 0, %s180
      %s195 = sphi 0, %s181
      %s199 = sphi 0, %s199
      %s201 = sphi 0, %s199
      %s202 = sphi 0, %s201
      %s216 = sphi 0, %s202
      %s222 = sphi 0, %s224
      %s225 = sphi 0, %s222
      %s226 = sphi 0, %s225
      %s242 = sphi 0, %s226
    $region4: #{deep_cnn1d_forward.2} parent=1 // loop_header_branch
      %21 = sbr.rel (%p19) target = $region8
    $region5: #{deep_cnn1d_forward.2} parent=1 // loop_body
      %s23 = ssub.s32 %s18, 1
      %s24 = ssub.s32 %s18, 2
      %s25 = sadd.s32 %s18, 1
      %s26 = ssub.s32 %s18, %s25
      %p27 = scmp.eq.s32.totalorder %s26, 0
      %s29 = sadd.s32 %s28, 1
      %s30 = scalar_select %p27, %s28, %s29
      %p33 = pneg %p27
      %p34 = scmp.eq.s32.totalorder %s18, 1
      %p35 = por %p33, %p34
      %p36 = scmp.ne.s32.totalorder %s28, %s31
      %p37 = scmp.eq.s32.totalorder %s18, 0
      %p38 = por %p36, %p37
      %p39 = scmp.ne.s32.totalorder %s28, %s31
      %p40 = scmp.eq.s32.totalorder %s23, 1
      %p41 = por %p39, %p40
      %p42 = scmp.ne.s32.totalorder %s31, %s32
      %p43 = scmp.eq.s32.totalorder %s23, 0
      %p44 = por %p42, %p43
      %p45 = scmp.ne.s32.totalorder %s31, %s32
      %p46 = scmp.eq.s32.totalorder %s24, 1
      %p47 = por %p45, %p46
      %p49 = scmp.ne.s32.totalorder %s32, %s48
      %p50 = scmp.eq.s32.totalorder %s24, 0
      %p51 = por %p49, %p50
      %s53 = sadd.s32 %s52, 1
      %p56 = scmp.eq.s32.totalorder %s18, 1
      %p57 = scmp.ne.s32.totalorder %s52, %s54
      %p58 = scmp.eq.s32.totalorder %s18, 0
      %p59 = por %p57, %p58
      %p60 = scmp.ne.s32.totalorder %s52, %s54
      %p61 = scmp.eq.s32.totalorder %s23, 1
      %p62 = por %p60, %p61
      %p63 = scmp.ne.s32.totalorder %s54, %s55
      %p64 = scmp.eq.s32.totalorder %s23, 0
      %p65 = por %p63, %p64
      %p66 = scmp.ne.s32.totalorder %s54, %s55
      %p67 = scmp.eq.s32.totalorder %s24, 1
      %p68 = por %p66, %p67
      %p70 = scmp.ne.s32.totalorder %s55, %s69
      %p71 = scmp.eq.s32.totalorder %s24, 0
      %p72 = por %p70, %p71
      %s74 = sadd.s32 %s73, 1
      %p77 = scmp.eq.s32.totalorder %s18, 1
      %p78 = scmp.ne.s32.totalorder %s73, %s75
      %p79 = scmp.eq.s32.totalorder %s18, 0
      %p80 = por %p78, %p79
      %p81 = scmp.ne.s32.totalorder %s73, %s75
      %p82 = scmp.eq.s32.totalorder %s23, 1
      %p83 = por %p81, %p82
      %p84 = scmp.ne.s32.totalorder %s75, %s76
      %p85 = scmp.eq.s32.totalorder %s23, 0
      %p86 = por %p84, %p85
      %p87 = scmp.ne.s32.totalorder %s75, %s76
      %p88 = scmp.eq.s32.totalorder %s24, 1
      %p89 = por %p87, %p88
      %p91 = scmp.ne.s32.totalorder %s76, %s90
      %p92 = scmp.eq.s32.totalorder %s24, 0
      %p93 = por %p91, %p92
      %s95 = sadd.s32 %s94, 1
      %p98 = scmp.eq.s32.totalorder %s18, 1
      %p99 = scmp.ne.s32.totalorder %s94, %s96
      %p100 = scmp.eq.s32.totalorder %s18, 0
      %p101 = por %p99, %p100
      %p102 = scmp.ne.s32.totalorder %s94, %s96
      %p103 = scmp.eq.s32.totalorder %s23, 1
      %p104 = por %p102, %p103
      %p105 = scmp.ne.s32.totalorder %s96, %s97
      %p106 = scmp.eq.s32.totalorder %s23, 0
      %p107 = por %p105, %p106
      %p108 = scmp.ne.s32.totalorder %s96, %s97
      %p109 = scmp.eq.s32.totalorder %s24, 1
      %p110 = por %p108, %p109
      %p112 = scmp.ne.s32.totalorder %s97, %s111
      %p113 = scmp.eq.s32.totalorder %s24, 0
      %p114 = por %p112, %p113
      %s116 = sadd.s32 %s115, 1
      %p119 = scmp.eq.s32.totalorder %s18, 1
      %p120 = scmp.ne.s32.totalorder %s115, %s117
      %p121 = scmp.eq.s32.totalorder %s18, 0
      %p122 = por %p120, %p121
      %p123 = scmp.ne.s32.totalorder %s115, %s117
      %p124 = scmp.eq.s32.totalorder %s23, 1
      %p125 = por %p123, %p124
      %p126 = scmp.ne.s32.totalorder %s117, %s118
      %p127 = scmp.eq.s32.totalorder %s23, 0
      %p128 = por %p126, %p127
      %p129 = scmp.ne.s32.totalorder %s117, %s118
      %p130 = scmp.eq.s32.totalorder %s24, 1
      %p131 = por %p129, %p130
      %p133 = scmp.ne.s32.totalorder %s118, %s132
      %p134 = scmp.eq.s32.totalorder %s24, 0
      %p135 = por %p133, %p134
      %s137 = sadd.s32 %s136, 1
      %p140 = scmp.eq.s32.totalorder %s18, 1
      %p141 = scmp.ne.s32.totalorder %s136, %s138
      %p142 = scmp.eq.s32.totalorder %s18, 0
      %p143 = por %p141, %p142
      %p144 = scmp.ne.s32.totalorder %s136, %s138
      %p145 = scmp.eq.s32.totalorder %s23, 1
      %p146 = por %p144, %p145
      %p147 = scmp.ne.s32.totalorder %s138, %s139
      %p148 = scmp.eq.s32.totalorder %s23, 0
      %p149 = por %p147, %p148
      %p150 = scmp.ne.s32.totalorder %s138, %s139
      %p151 = scmp.eq.s32.totalorder %s24, 1
      %p152 = por %p150, %p151
      %p154 = scmp.ne.s32.totalorder %s139, %s153
      %p155 = scmp.eq.s32.totalorder %s24, 0
      %p156 = por %p154, %p155
      %s158 = sadd.s32 %s157, 1
      %p161 = scmp.eq.s32.totalorder %s18, 1
      %p162 = scmp.ne.s32.totalorder %s157, %s159
      %p163 = scmp.eq.s32.totalorder %s18, 0
      %p164 = por %p162, %p163
      %p165 = scmp.ne.s32.totalorder %s157, %s159
      %p166 = scmp.eq.s32.totalorder %s23, 1
      %p167 = por %p165, %p166
      %p168 = scmp.ne.s32.totalorder %s159, %s160
      %p169 = scmp.eq.s32.totalorder %s23, 0
      %p170 = por %p168, %p169
      %p171 = scmp.ne.s32.totalorder %s159, %s160
      %p172 = scmp.eq.s32.totalorder %s24, 1
      %p173 = por %p171, %p172
      %p175 = scmp.ne.s32.totalorder %s160, %s174
      %p176 = scmp.eq.s32.totalorder %s24, 0
      %p177 = por %p175, %p176
      %s179 = sadd.s32 %s178, 1
      %p182 = scmp.eq.s32.totalorder %s18, 1
      %p183 = scmp.ne.s32.totalorder %s178, %s180
      %p184 = scmp.eq.s32.totalorder %s18, 0
      %p185 = por %p183, %p184
      %p186 = scmp.ne.s32.totalorder %s178, %s180
      %p187 = scmp.eq.s32.totalorder %s23, 1
      %p188 = por %p186, %p187
      %p189 = scmp.ne.s32.totalorder %s180, %s181
      %p190 = scmp.eq.s32.totalorder %s23, 0
      %p191 = por %p189, %p190
      %p192 = scmp.ne.s32.totalorder %s180, %s181
      %p193 = scmp.eq.s32.totalorder %s24, 1
      %p194 = por %p192, %p193
      %p196 = scmp.ne.s32.totalorder %s181, %s195
      %p197 = scmp.eq.s32.totalorder %s24, 0
      %p198 = por %p196, %p197
      %s200 = sadd.s32 %s199, 1
      %p203 = scmp.eq.s32.totalorder %s18, 1
      %p204 = scmp.ne.s32.totalorder %s199, %s201
      %p205 = scmp.eq.s32.totalorder %s18, 0
      %p206 = por %p204, %p205
      %p207 = scmp.ne.s32.totalorder %s199, %s201
      %p208 = scmp.eq.s32.totalorder %s23, 1
      %p209 = por %p207, %p208
      %p210 = scmp.ne.s32.totalorder %s201, %s202
      %p211 = scmp.eq.s32.totalorder %s23, 0
      %p212 = por %p210, %p211
      %p213 = scmp.ne.s32.totalorder %s201, %s202
      %p214 = scmp.eq.s32.totalorder %s24, 1
      %p215 = por %p213, %p214
      %p217 = scmp.ne.s32.totalorder %s202, %s216
      %p218 = scmp.eq.s32.totalorder %s24, 0
      %p219 = por %p217, %p218
      %s220 = ssub.s32 %s18, %s25
      %p221 = scmp.eq.s32.totalorder %s220, 0
      %s223 = sadd.s32 %s222, 1
      %s224 = scalar_select %p221, %s222, %s223
      %p227 = pneg %p221
      %p228 = scmp.eq.s32.totalorder %s18, 1
      %p229 = por %p227, %p228
      %p230 = scmp.ne.s32.totalorder %s222, %s225
      %p231 = scmp.eq.s32.totalorder %s18, 0
      %p232 = por %p230, %p231
      %p233 = scmp.ne.s32.totalorder %s222, %s225
      %p234 = scmp.eq.s32.totalorder %s23, 1
      %p235 = por %p233, %p234
      %p236 = scmp.ne.s32.totalorder %s225, %s226
      %p237 = scmp.eq.s32.totalorder %s23, 0
      %p238 = por %p236, %p237
      %p239 = scmp.ne.s32.totalorder %s225, %s226
      %p240 = scmp.eq.s32.totalorder %s24, 1
      %p241 = por %p239, %p240
      %p243 = scmp.ne.s32.totalorder %s226, %s242
      %p244 = scmp.eq.s32.totalorder %s24, 0
      %p245 = por %p243, %p244
      %p246 = scmp.le.s32.totalorder 1, %s18
      %p247 = scmp.lt.s32.totalorder %s18, 3
      %p248 = pnand %p246, %p247
      %p249 = pneg %p248
      // Predicated region
      $region9: #{deep_cnn1d_forward.2} parent=5 // pred_check
        _
      $region10: #{deep_cnn1d_forward.2} parent=5 // pred_check_branch
        %251 = sbr.rel (%p248) target = $region12
      $region11: #{deep_cnn1d_forward.2} parent=5 // pred_region
        %s252 = ssub.s32 %s18, 1
        // Predicated region
        $region13: #{deep_cnn1d_forward.2} parent=11 // pred_check
          %p253 = pneg %p65
        $region14: #{deep_cnn1d_forward.2} parent=11 // pred_check_branch
          %255 = sbr.rel (%p253) target = $region16
        $region15: #{deep_cnn1d_forward.2} parent=11 // pred_region
          %s257 = ssub.s32 32, 32
          %258 = vsyncadd [#allocation3], %s257
          %s260 = sshll.u32 [#allocation2], 4
          %s261 = int_to_ptr.vmem [resolvable:$true] %s260
          %263 = dma.hbm_to_vmem [thread:$0]  %s1, 32, %s261, [#allocation3]
        $region16: #{deep_cnn1d_forward.2} parent=11 // pred_fallthru
          _
        // Predicated region
        $region17: #{deep_cnn1d_forward.2} parent=11 // pred_check
          %p264 = pneg %p86
        $region18: #{deep_cnn1d_forward.2} parent=11 // pred_check_branch
          %266 = sbr.rel (%p264) target = $region20
        $region19: #{deep_cnn1d_forward.2} parent=11 // pred_region
          %s268 = ssub.s32 32, 32
          %269 = vsyncadd [#allocation5], %s268
          %s271 = sshll.u32 [#allocation4], 4
          %s272 = int_to_ptr.vmem [resolvable:$true] %s271
          %274 = dma.hbm_to_vmem [thread:$0]  %s2, 32, %s272, [#allocation5]
        $region20: #{deep_cnn1d_forward.2} parent=11 // pred_fallthru
          _
        // Predicated region
        $region21: #{deep_cnn1d_forward.2} parent=11 // pred_check
          %p275 = pneg %p107
        $region22: #{deep_cnn1d_forward.2} parent=11 // pred_check_branch
          %277 = sbr.rel (%p275) target = $region24
        $region23: #{deep_cnn1d_forward.2} parent=11 // pred_region
          _
        $region24: #{deep_cnn1d_forward.2} parent=11 // pred_fallthru
          _
        // Predicated region
        $region25: #{deep_cnn1d_forward.2} parent=11 // pred_check
          %p278 = pneg %p128
        $region26: #{deep_cnn1d_forward.2} parent=11 // pred_check_branch
          %280 = sbr.rel (%p278) target = $region28
        $region27: #{deep_cnn1d_forward.2} parent=11 // pred_region
          _
        $region28: #{deep_cnn1d_forward.2} parent=11 // pred_fallthru
          _
        // Predicated region
        $region29: #{deep_cnn1d_forward.2} parent=11 // pred_check
          %p281 = pneg %p149
        $region30: #{deep_cnn1d_forward.2} parent=11 // pred_check_branch
          %283 = sbr.rel (%p281) target = $region32
        $region31: #{deep_cnn1d_forward.2} parent=11 // pred_region
          %s285 = ssub.s32 1024, 1024
          %286 = vsyncadd [#allocation5], %s285
          %s287 = sshll.u32 [#allocation6], 4
          %s288 = int_to_ptr.vmem [resolvable:$true] %s287
          %293 = dma.hbm_to_vmem [thread:$0]  %s5, 1024, %s288, [#allocation5], 64, 64, 4
        $region32: #{deep_cnn1d_forward.2} parent=11 // pred_fallthru
          _
        // Predicated region
        $region33: #{deep_cnn1d_forward.2} parent=11 // pred_check
          %p294 = pneg %p170
        $region34: #{deep_cnn1d_forward.2} parent=11 // pred_check_branch
          %296 = sbr.rel (%p294) target = $region36
        $region35: #{deep_cnn1d_forward.2} parent=11 // pred_region
          _
        $region36: #{deep_cnn1d_forward.2} parent=11 // pred_fallthru
          _
        // Predicated region
        $region37: #{deep_cnn1d_forward.2} parent=11 // pred_check
          %p297 = pneg %p191
        $region38: #{deep_cnn1d_forward.2} parent=11 // pred_check_branch
          %299 = sbr.rel (%p297) target = $region40
        $region39: #{deep_cnn1d_forward.2} parent=11 // pred_region
          %s301 = ssub.s32 1024, 1024
          %302 = vsyncadd [#allocation8], %s301
          %s303 = sshll.u32 [#allocation7], 4
          %s304 = int_to_ptr.vmem [resolvable:$true] %s303
          %309 = dma.hbm_to_vmem [thread:$0]  %s7, 1024, %s304, [#allocation8], 64, 64, 4
        $region40: #{deep_cnn1d_forward.2} parent=11 // pred_fallthru
          _
        // Predicated region
        $region41: #{deep_cnn1d_forward.2} parent=11 // pred_check
          %p310 = pneg %p212
        $region42: #{deep_cnn1d_forward.2} parent=11 // pred_check_branch
          %312 = sbr.rel (%p310) target = $region44
        $region43: #{deep_cnn1d_forward.2} parent=11 // pred_region
          _
        $region44: #{deep_cnn1d_forward.2} parent=11 // pred_fallthru
          _
      $region12: #{deep_cnn1d_forward.2} parent=5 // pred_fallthru
        _
      %p313 = scmp.lt.s32.totalorder %s18, 2
      // Predicated region
      $region45: #{deep_cnn1d_forward.2} parent=5 // pred_check
        %p314 = pneg %p313
      $region46: #{deep_cnn1d_forward.2} parent=5 // pred_check_branch
        %316 = sbr.rel (%p314) target = $region48
      $region47: #{deep_cnn1d_forward.2} parent=5 // pred_region
        // Predicated region
        $region49: #{deep_cnn1d_forward.2} parent=47 // pred_check
          %p317 = pneg %p38
        $region50: #{deep_cnn1d_forward.2} parent=47 // pred_check_branch
          %319 = sbr.rel (%p317) target = $region52
        $region51: #{deep_cnn1d_forward.2} parent=47 // pred_region
          %p320 = scmp.lt.s32.totalorder %s18, 1
          %s321 = scalar_select %p320, %s18, 1
          %s322 = smul.addr %s321, 2
          %s323 = smul.addr %s322, 8
          %s324 = scalar_lea.vmem %s0, %s323
        $region52: #{deep_cnn1d_forward.2} parent=47 // pred_fallthru
          _
      $region48: #{deep_cnn1d_forward.2} parent=5 // pred_fallthru
        _
      %p325 = scmp.le.s32.totalorder 1, %s18
      %p326 = scmp.lt.s32.totalorder %s18, 3
      %p327 = pnand %p325, %p326
      %p328 = pneg %p327
      // Predicated region
      $region53: #{deep_cnn1d_forward.2} parent=5 // pred_check
        _
      $region54: #{deep_cnn1d_forward.2} parent=5 // pred_check_branch
        %330 = sbr.rel (%p327) target = $region56
      $region55: #{deep_cnn1d_forward.2} parent=5 // pred_region
        %s331 = ssub.s32 %s18, 1
        // Predicated region
        $region57: #{deep_cnn1d_forward.2} parent=55 // pred_check
          %p332 = pneg %p65
        $region58: #{deep_cnn1d_forward.2} parent=55 // pred_check_branch
          %334 = sbr.rel (%p332) target = $region60
        $region59: #{deep_cnn1d_forward.2} parent=55 // pred_region
          %335 = dma.done [#allocation3], 32
        $region60: #{deep_cnn1d_forward.2} parent=55 // pred_fallthru
          _
        // Predicated region
        $region61: #{deep_cnn1d_forward.2} parent=55 // pred_check
          %p336 = pneg %p86
        $region62: #{deep_cnn1d_forward.2} parent=55 // pred_check_branch
          %338 = sbr.rel (%p336) target = $region64
        $region63: #{deep_cnn1d_forward.2} parent=55 // pred_region
          %339 = dma.done [#allocation5], 32
        $region64: #{deep_cnn1d_forward.2} parent=55 // pred_fallthru
          _
        // Predicated region
        $region65: #{deep_cnn1d_forward.2} parent=55 // pred_check
          %p340 = pneg %p149
        $region66: #{deep_cnn1d_forward.2} parent=55 // pred_check_branch
          %342 = sbr.rel (%p340) target = $region68
        $region67: #{deep_cnn1d_forward.2} parent=55 // pred_region
          %343 = dma.done [#allocation5], 1024
        $region68: #{deep_cnn1d_forward.2} parent=55 // pred_fallthru
          _
        // Predicated region
        $region69: #{deep_cnn1d_forward.2} parent=55 // pred_check
          %p344 = pneg %p191
        $region70: #{deep_cnn1d_forward.2} parent=55 // pred_check_branch
          %346 = sbr.rel (%p344) target = $region72
        $region71: #{deep_cnn1d_forward.2} parent=55 // pred_region
          %347 = dma.done [#allocation8], 1024
        $region72: #{deep_cnn1d_forward.2} parent=55 // pred_fallthru
          _
        %p348 = scmp.lt.s32.totalorder %s23, 1
        %s349 = scalar_select %p348, %s23, 1
        %s350 = smul.addr %s349, 2
        %s351 = smul.addr %s350, 8
        %s352 = scalar_lea.vmem %s0, %s351
        %p353 = pneg %p44
        %p354 = pneg %p41
        %p355 = pneg %p65
        %p356 = pneg %p62
        %p357 = pneg %p86
        %p358 = pneg %p83
        %p359 = pneg %p107
        %p360 = pneg %p104
        %p361 = pneg %p128
        %p362 = pneg %p125
        %p363 = pneg %p149
        %p364 = pneg %p146
        %p365 = pneg %p170
        %p366 = pneg %p167
        %p367 = pneg %p191
        %p368 = pneg %p188
        %p369 = pneg %p212
        %p370 = pneg %p209
        %p371 = pneg %p238
        %p372 = pneg %p235
        %p373 = scmp.lt.s32.totalorder %s23, 1
        %s374 = scalar_select %p373, %s23, 1
        %s375 = smul.addr %s374, 16
        %s376 = smul.addr %s375, 4
        %s377 = scalar_lea.vmem %s9, %s376
        %p378 = scmp.lt.s32.totalorder %s23, 1
        %s379 = scalar_select %p378, %s23, 1
        %s380 = smul.addr %s379, 2
        %s381 = smul.addr %s380, 8
        %s382 = scalar_lea.vmem %s0, %s381
        %p383 = scmp.lt.s32.totalorder %s23, 1
        %s384 = scalar_select %p383, %s23, 1
        %s385 = smul.addr %s384, 16
        %s386 = smul.addr %s385, 4
        %s387 = scalar_lea.vmem %s9, %s386
        %v389 = vld [vmem:[#allocation2] sm:$0x3]
        %v390 = vld [vmem:[#allocation4] sm:$0x3]
        %v391 = vld [vmem:[%s3] sm:$0xf]
        %v392 = vld [vmem:[%s3 + $0x4] sm:$0xf]
        %v393 = vld [vmem:[%s3 + $0x8] sm:$0xf]
        %v394 = vld [vmem:[%s3 + $0xc] sm:$0xf]
        %v395 = vld [vmem:[%s3 + $0x10] sm:$0xf]
        %v396 = vld [vmem:[%s3 + $0x14] sm:$0xf]
        %v397 = vld [vmem:[%s3 + $0x18] sm:$0xf]
        %v398 = vld [vmem:[%s3 + $0x1c] sm:$0xf]
        %v399 = vld [vmem:[%s3 + $0x20] sm:$0xf]
        %v400 = vld [vmem:[%s3 + $0x24] sm:$0xf]
        %v401 = vld [vmem:[%s3 + $0x28] sm:$0xf]
        %v402 = vld [vmem:[%s3 + $0x2c] sm:$0xf]
        %v403 = vld [vmem:[%s3 + $0x30] sm:$0xf]
        %v404 = vld [vmem:[%s3 + $0x34] sm:$0xf]
        %v405 = vld [vmem:[%s3 + $0x38] sm:$0xf]
        %v406 = vld [vmem:[%s3 + $0x3c] sm:$0xf]
        %v407 = vld [vmem:[%s4] sm:$0xff]
        %v408 = vld [vmem:[%s4 + $0x8] sm:$0xff]
        %v409 = vld [vmem:[%s4 + $0x10] sm:$0xff]
        %v410 = vld [vmem:[%s4 + $0x18] sm:$0xff]
        %v411 = vld [vmem:[%s4 + $0x20] sm:$0xff]
        %v412 = vld [vmem:[%s4 + $0x28] sm:$0xff]
        %v413 = vld [vmem:[%s4 + $0x30] sm:$0xff]
        %v414 = vld [vmem:[%s4 + $0x38] sm:$0xff]
        %v415 = vld [vmem:[%s4 + $0x40] sm:$0xff]
        %v416 = vld [vmem:[%s4 + $0x48] sm:$0xff]
        %v417 = vld [vmem:[%s4 + $0x50] sm:$0xff]
        %v418 = vld [vmem:[%s4 + $0x58] sm:$0xff]
        %v419 = vld [vmem:[%s4 + $0x60] sm:$0xff]
        %v420 = vld [vmem:[%s4 + $0x68] sm:$0xff]
        %v421 = vld [vmem:[%s4 + $0x70] sm:$0xff]
        %v422 = vld [vmem:[%s4 + $0x78] sm:$0xff]
        %v423 = vld [vmem:[#allocation6] sm:$0xf]
        %v424 = vld [vmem:[#allocation6 + $0x4] sm:$0xf]
        %v425 = vld [vmem:[#allocation6 + $0x8] sm:$0xf]
        %v426 = vld [vmem:[#allocation6 + $0xc] sm:$0xf]
        %v427 = vld [vmem:[#allocation6 + $0x10] sm:$0xf]
        %v428 = vld [vmem:[#allocation6 + $0x14] sm:$0xf]
        %v429 = vld [vmem:[#allocation6 + $0x18] sm:$0xf]
        %v430 = vld [vmem:[#allocation6 + $0x1c] sm:$0xf]
        %v431 = vld [vmem:[#allocation6 + $0x20] sm:$0xf]
        %v432 = vld [vmem:[#allocation6 + $0x24] sm:$0xf]
        %v433 = vld [vmem:[#allocation6 + $0x28] sm:$0xf]
        %v434 = vld [vmem:[#allocation6 + $0x2c] sm:$0xf]
        %v435 = vld [vmem:[#allocation6 + $0x30] sm:$0xf]
        %v436 = vld [vmem:[#allocation6 + $0x34] sm:$0xf]
        %v437 = vld [vmem:[#allocation6 + $0x38] sm:$0xf]
        %v438 = vld [vmem:[#allocation6 + $0x3c] sm:$0xf]
        %v439 = vld [vmem:[%s6] sm:$0xff]
        %v440 = vld [vmem:[%s6 + $0x8] sm:$0xff]
        %v441 = vld [vmem:[%s6 + $0x10] sm:$0xff]
        %v442 = vld [vmem:[%s6 + $0x18] sm:$0xff]
        %v443 = vld [vmem:[%s6 + $0x20] sm:$0xff]
        %v444 = vld [vmem:[%s6 + $0x28] sm:$0xff]
        %v445 = vld [vmem:[%s6 + $0x30] sm:$0xff]
        %v446 = vld [vmem:[%s6 + $0x38] sm:$0xff]
        %v447 = vld [vmem:[%s6 + $0x40] sm:$0xff]
        %v448 = vld [vmem:[%s6 + $0x48] sm:$0xff]
        %v449 = vld [vmem:[%s6 + $0x50] sm:$0xff]
        %v450 = vld [vmem:[%s6 + $0x58] sm:$0xff]
        %v451 = vld [vmem:[%s6 + $0x60] sm:$0xff]
        %v452 = vld [vmem:[%s6 + $0x68] sm:$0xff]
        %v453 = vld [vmem:[%s6 + $0x70] sm:$0xff]
        %v454 = vld [vmem:[%s6 + $0x78] sm:$0xff]
        %v455 = vld [vmem:[#allocation7] sm:$0xf]
        %v456 = vld [vmem:[#allocation7 + $0x4] sm:$0xf]
        %v457 = vld [vmem:[#allocation7 + $0x8] sm:$0xf]
        %v458 = vld [vmem:[#allocation7 + $0xc] sm:$0xf]
        %v459 = vld [vmem:[#allocation7 + $0x10] sm:$0xf]
        %v460 = vld [vmem:[#allocation7 + $0x14] sm:$0xf]
        %v461 = vld [vmem:[#allocation7 + $0x18] sm:$0xf]
        %v462 = vld [vmem:[#allocation7 + $0x1c] sm:$0xf]
        %v463 = vld [vmem:[#allocation7 + $0x20] sm:$0xf]
        %v464 = vld [vmem:[#allocation7 + $0x24] sm:$0xf]
        %v465 = vld [vmem:[#allocation7 + $0x28] sm:$0xf]
        %v466 = vld [vmem:[#allocation7 + $0x2c] sm:$0xf]
        %v467 = vld [vmem:[#allocation7 + $0x30] sm:$0xf]
        %v468 = vld [vmem:[#allocation7 + $0x34] sm:$0xf]
        %v469 = vld [vmem:[#allocation7 + $0x38] sm:$0xf]
        %v470 = vld [vmem:[#allocation7 + $0x3c] sm:$0xf]
        %v471 = vld [vmem:[%s8] sm:$0xff]
        %v472 = vld [vmem:[%s8 + $0x8] sm:$0xff]
        %v473 = vld [vmem:[%s8 + $0x10] sm:$0xff]
        %v474 = vld [vmem:[%s8 + $0x18] sm:$0xff]
        %v475 = vld [vmem:[%s8 + $0x20] sm:$0xff]
        %v476 = vld [vmem:[%s8 + $0x28] sm:$0xff]
        %v477 = vld [vmem:[%s8 + $0x30] sm:$0xff]
        %v478 = vld [vmem:[%s8 + $0x38] sm:$0xff]
        %v479 = vld [vmem:[%s8 + $0x40] sm:$0xff]
        %v480 = vld [vmem:[%s8 + $0x48] sm:$0xff]
        %v481 = vld [vmem:[%s8 + $0x50] sm:$0xff]
        %v482 = vld [vmem:[%s8 + $0x58] sm:$0xff]
        %v483 = vld [vmem:[%s8 + $0x60] sm:$0xff]
        %v484 = vld [vmem:[%s8 + $0x68] sm:$0xff]
        %v485 = vld [vmem:[%s8 + $0x70] sm:$0xff]
        %v486 = vld [vmem:[%s8 + $0x78] sm:$0xff]
        %v487 = vld [vmem:[%s382] sm:$0xff]
        %v488 = vld [vmem:[%s382 + $0x8] sm:$0xff]
        %491 = vrot.lane.b32.xlu0 %v487, 127
        %v492 = vpop.permute.xlu0 %491
        %493 = vrot.lane.b32.xlu0 %v488, 127
        %v494 = vpop.permute.xlu0 %493
        %vm495 = vcmask 1039360
        %v496 = vsel %vm495, %v492, %v494
        %v499 = vpack.c.bf16 %v496, %v487
        %v500 = vpack.c.bf16 %v494, %v488
        %502 = vset.pattern.permute.xlu0 0
        %503 = vperm.xlu0 %502, %v407
        %v504 = vpop.permute.xlu0 %503
        %507 = vset.pattern.permute.xlu0 0
        %508 = vperm.xlu0 %507, %v408
        %v509 = vpop.permute.xlu0 %508
        %512 = vset.pattern.permute.xlu0 0
        %513 = vperm.xlu0 %512, %v409
        %v514 = vpop.permute.xlu0 %513
        %517 = vset.pattern.permute.xlu0 0
        %518 = vperm.xlu0 %517, %v410
        %v519 = vpop.permute.xlu0 %518
        %522 = vset.pattern.permute.xlu0 0
        %523 = vperm.xlu0 %522, %v411
        %v524 = vpop.permute.xlu0 %523
        %527 = vset.pattern.permute.xlu0 0
        %528 = vperm.xlu0 %527, %v412
        %v529 = vpop.permute.xlu0 %528
        %532 = vset.pattern.permute.xlu0 0
        %533 = vperm.xlu0 %532, %v413
        %v534 = vpop.permute.xlu0 %533
        %537 = vset.pattern.permute.xlu0 0
        %538 = vperm.xlu0 %537, %v414
        %v539 = vpop.permute.xlu0 %538
        %542 = vset.pattern.permute.xlu0 0
        %543 = vperm.xlu0 %542, %v415
        %v544 = vpop.permute.xlu0 %543
        %547 = vset.pattern.permute.xlu0 0
        %548 = vperm.xlu0 %547, %v416
        %v549 = vpop.permute.xlu0 %548
        %552 = vset.pattern.permute.xlu0 0
        %553 = vperm.xlu0 %552, %v417
        %v554 = vpop.permute.xlu0 %553
        %557 = vset.pattern.permute.xlu0 0
        %558 = vperm.xlu0 %557, %v418
        %v559 = vpop.permute.xlu0 %558
        %562 = vset.pattern.permute.xlu0 0
        %563 = vperm.xlu0 %562, %v419
        %v564 = vpop.permute.xlu0 %563
        %567 = vset.pattern.permute.xlu0 0
        %568 = vperm.xlu0 %567, %v420
        %v569 = vpop.permute.xlu0 %568
        %572 = vset.pattern.permute.xlu0 0
        %573 = vperm.xlu0 %572, %v421
        %v574 = vpop.permute.xlu0 %573
        %577 = vset.pattern.permute.xlu0 0
        %578 = vperm.xlu0 %577, %v422
        %v579 = vpop.permute.xlu0 %578
        %v597 = vunpack.c.l.b16 %v391
        %v598 = vunpack.c.l.b16 %v392
        %v599 = vunpack.c.l.b16 %v393
        %v600 = vunpack.c.l.b16 %v394
        %v601 = vunpack.c.l.b16 %v395
        %v602 = vunpack.c.l.b16 %v396
        %v603 = vunpack.c.l.b16 %v397
        %v604 = vunpack.c.l.b16 %v398
        %v605 = vunpack.c.l.b16 %v399
        %v606 = vunpack.c.l.b16 %v400
        %v607 = vunpack.c.l.b16 %v401
        %v608 = vunpack.c.l.b16 %v402
        %v609 = vunpack.c.l.b16 %v403
        %v610 = vunpack.c.l.b16 %v404
        %v611 = vunpack.c.l.b16 %v405
        %v612 = vunpack.c.l.b16 %v406
        %v613 = vpack.c.b16 %v598, %v597
        %v614 = vpack.c.b16 %v600, %v599
        %v615 = vpack.c.b16 %v602, %v601
        %v616 = vpack.c.b16 %v604, %v603
        %v617 = vpack.c.b16 %v606, %v605
        %v618 = vpack.c.b16 %v608, %v607
        %v619 = vpack.c.b16 %v610, %v609
        %v620 = vpack.c.b16 %v612, %v611
        %vm621 = vcmask 130048
        %v623 = vsel %vm621, %v613, 0
        %v626 = vsel %vm621, %v614, 0
        %v629 = vsel %vm621, %v615, 0
        %v632 = vsel %vm621, %v616, 0
        %v635 = vsel %vm621, %v617, 0
        %v638 = vsel %vm621, %v618, 0
        %v641 = vsel %vm621, %v619, 0
        %v644 = vsel %vm621, %v620, 0
        %646 = vmatprep.subr.bf16.mxu0 %v500
        %647 = vmatpush1.bf16.msra.mxu0 %v499
        %648 = vmatprep.subr.bf16.mxu0 0
        %649 = vmatpush1.bf16.msra.mxu0 0
        %650 = vmatprep.subr.bf16.mxu0 0
        %651 = vmatpush1.bf16.msra.mxu0 0
        %652 = vmatprep.subr.bf16.mxu0 0
        %653 = vmatpush1.bf16.msra.mxu0 0
        %654 = vmatprep.subr.bf16.mxu0 0
        %655 = vmatpush1.bf16.msra.mxu0 0
        %656 = vmatprep.subr.bf16.mxu0 0
        %657 = vmatpush1.bf16.msra.mxu0 0
        %658 = vmatprep.subr.bf16.mxu0 0
        %659 = vmatpush1.bf16.msra.mxu0 0
        %660 = vmatprep.subr.bf16.mxu0 0
        %661 = vmatpush1.bf16.msra.mxu0 0
        %662 = vmatprep.subr.bf16.mxu0 0
        %663 = vmatpush1.bf16.msra.mxu0 0
        %664 = vmatprep.subr.bf16.mxu0 0
        %665 = vmatpush1.bf16.msra.mxu0 0
        %666 = vmatprep.subr.bf16.mxu0 0
        %667 = vmatpush1.bf16.msra.mxu0 0
        %668 = vmatprep.subr.bf16.mxu0 0
        %669 = vmatpush1.bf16.msra.mxu0 0
        %670 = vmatprep.subr.bf16.mxu0 0
        %671 = vmatpush1.bf16.msra.mxu0 0
        %672 = vmatprep.subr.bf16.mxu0 0
        %673 = vmatpush1.bf16.msra.mxu0 0
        %674 = vmatprep.subr.bf16.mxu0 0
        %675 = vmatpush1.bf16.msra.mxu0 0
        %676 = vmatprep.subr.bf16.mxu0 0
        %677 = vmatpush1.bf16.msra.mxu0 0
        %678 = vmatprep.mubr.bf16.mxu0 0
        %679 = vmatmul.mubr.bf16.gmra.mrb[0].mxu0 %v623
        %v680 = vpop.f32.mrb[0].mxu0
        %v681 = vadd.f32 %v504, %v680
        %v682 = vpop.f32.mrb[0].mxu0
        %v683 = vadd.f32 %v504, %v682
        %v684 = vpop.f32.mrb[0].mxu0
        %v685 = vadd.f32 %v509, %v684
        %v686 = vpop.f32.mrb[0].mxu0
        %v687 = vadd.f32 %v509, %v686
        %688 = vmatprep.mubr.bf16.mxu0 0
        %689 = vmatmul.mubr.bf16.gmra.mrb[0].mxu0 %v626
        %v690 = vpop.f32.mrb[0].mxu0
        %v691 = vadd.f32 %v514, %v690
        %v692 = vpop.f32.mrb[0].mxu0
        %v693 = vadd.f32 %v514, %v692
        %v694 = vpop.f32.mrb[0].mxu0
        %v695 = vadd.f32 %v519, %v694
        %v696 = vpop.f32.mrb[0].mxu0
        %v697 = vadd.f32 %v519, %v696
        %698 = vmatprep.mubr.bf16.mxu0 0
        %699 = vmatmul.mubr.bf16.gmra.mrb[0].mxu0 %v629
        %v700 = vpop.f32.mrb[0].mxu0
        %v701 = vadd.f32 %v524, %v700
        %v702 = vpop.f32.mrb[0].mxu0
        %v703 = vadd.f32 %v524, %v702
        %v704 = vpop.f32.mrb[0].mxu0
        %v705 = vadd.f32 %v529, %v704
        %v706 = vpop.f32.mrb[0].mxu0
        %v707 = vadd.f32 %v529, %v706
        %708 = vmatprep.mubr.bf16.mxu0 0
        %709 = vmatmul.mubr.bf16.gmra.mrb[0].mxu0 %v632
        %v710 = vpop.f32.mrb[0].mxu0
        %v711 = vadd.f32 %v534, %v710
        %v712 = vpop.f32.mrb[0].mxu0
        %v713 = vadd.f32 %v534, %v712
        %v714 = vpop.f32.mrb[0].mxu0
        %v715 = vadd.f32 %v539, %v714
        %v716 = vpop.f32.mrb[0].mxu0
        %v717 = vadd.f32 %v539, %v716
        %718 = vmatprep.mubr.bf16.mxu0 0
        %719 = vmatmul.mubr.bf16.gmra.mrb[0].mxu0 %v635
        %v720 = vpop.f32.mrb[0].mxu0
        %v721 = vadd.f32 %v544, %v720
        %v722 = vpop.f32.mrb[0].mxu0
        %v723 = vadd.f32 %v544, %v722
        %v724 = vpop.f32.mrb[0].mxu0
        %v725 = vadd.f32 %v549, %v724
        %v726 = vpop.f32.mrb[0].mxu0
        %v727 = vadd.f32 %v549, %v726
        %728 = vmatprep.mubr.bf16.mxu0 0
        %729 = vmatmul.mubr.bf16.gmra.mrb[0].mxu0 %v638
        %v730 = vpop.f32.mrb[0].mxu0
        %v731 = vadd.f32 %v554, %v730
        %v732 = vpop.f32.mrb[0].mxu0
        %v733 = vadd.f32 %v554, %v732
        %v734 = vpop.f32.mrb[0].mxu0
        %v735 = vadd.f32 %v559, %v734
        %v736 = vpop.f32.mrb[0].mxu0
        %v737 = vadd.f32 %v559, %v736
        %738 = vmatprep.mubr.bf16.mxu0 0
        %739 = vmatmul.mubr.bf16.gmra.mrb[0].mxu0 %v641
        %v740 = vpop.f32.mrb[0].mxu0
        %v741 = vadd.f32 %v564, %v740
        %v742 = vpop.f32.mrb[0].mxu0
        %v743 = vadd.f32 %v564, %v742
        %v744 = vpop.f32.mrb[0].mxu0
        %v745 = vadd.f32 %v569, %v744
        %v746 = vpop.f32.mrb[0].mxu0
        %v747 = vadd.f32 %v569, %v746
        %748 = vmatprep.mubr.bf16.mxu0 0
        %749 = vmatmul.mubr.bf16.gmra.mrb[0].mxu0 %v644
        %v750 = vpop.f32.mrb[0].mxu0
        %v751 = vadd.f32 %v574, %v750
        %v752 = vpop.f32.mrb[0].mxu0
        %v753 = vadd.f32 %v574, %v752
        %v754 = vpop.f32.mrb[0].mxu0
        %v755 = vadd.f32 %v579, %v754
        %v756 = vpop.f32.mrb[0].mxu0
        %v757 = vadd.f32 %v579, %v756
        %758 = vdwg.mxu0
        %v759 = vmax.f32 %v681, 0.0
        %v760 = vmax.f32 %v683, 0.0
        %v761 = vmax.f32 %v685, 0.0
        %v762 = vmax.f32 %v687, 0.0
        %v763 = vmax.f32 %v691, 0.0
        %v764 = vmax.f32 %v693, 0.0
        %v765 = vmax.f32 %v695, 0.0
        %v766 = vmax.f32 %v697, 0.0
        %v767 = vmax.f32 %v701, 0.0
        %v768 = vmax.f32 %v703, 0.0
        %v769 = vmax.f32 %v705, 0.0
        %v770 = vmax.f32 %v707, 0.0
        %v771 = vmax.f32 %v711, 0.0
        %v772 = vmax.f32 %v713, 0.0
        %v773 = vmax.f32 %v715, 0.0
        %v774 = vmax.f32 %v717, 0.0
        %v775 = vmax.f32 %v721, 0.0
        %v776 = vmax.f32 %v723, 0.0
        %v777 = vmax.f32 %v725, 0.0
        %v778 = vmax.f32 %v727, 0.0
        %v779 = vmax.f32 %v731, 0.0
        %v780 = vmax.f32 %v733, 0.0
        %v781 = vmax.f32 %v735, 0.0
        %v782 = vmax.f32 %v737, 0.0
        %v783 = vmax.f32 %v741, 0.0
        %v784 = vmax.f32 %v743, 0.0
        %v785 = vmax.f32 %v745, 0.0
        %v786 = vmax.f32 %v747, 0.0
        %v787 = vmax.f32 %v751, 0.0
        %v788 = vmax.f32 %v753, 0.0
        %v789 = vmax.f32 %v755, 0.0
        %v790 = vmax.f32 %v757, 0.0
        %v792 = vlaneseq
        %v793 = vshrl.u32 %v792, 7
        %v794 = vsub.s32 0, %v793
        %v795 = vrot.slane %v389, %v794
        %v796 = vlaneseq
        %v797 = vshrl.u32 %v796, 7
        %v798 = vsub.s32 1, %v797
        %v799 = vrot.slane %v389, %v798
        %v802 = vmul.f32 %v759, %v795
        %v803 = vmul.f32 %v760, %v799
        %v804 = vmul.f32 %v761, %v795
        %v805 = vmul.f32 %v762, %v799
        %v806 = vmul.f32 %v763, %v795
        %v807 = vmul.f32 %v764, %v799
        %v808 = vmul.f32 %v765, %v795
        %v809 = vmul.f32 %v766, %v799
        %v810 = vmul.f32 %v767, %v795
        %v811 = vmul.f32 %v768, %v799
        %v812 = vmul.f32 %v769, %v795
        %v813 = vmul.f32 %v770, %v799
        %v814 = vmul.f32 %v771, %v795
        %v815 = vmul.f32 %v772, %v799
        %v816 = vmul.f32 %v773, %v795
        %v817 = vmul.f32 %v774, %v799
        %v818 = vmul.f32 %v775, %v795
        %v819 = vmul.f32 %v776, %v799
        %v820 = vmul.f32 %v777, %v795
        %v821 = vmul.f32 %v778, %v799
        %v822 = vmul.f32 %v779, %v795
        %v823 = vmul.f32 %v780, %v799
        %v824 = vmul.f32 %v781, %v795
        %v825 = vmul.f32 %v782, %v799
        %v826 = vmul.f32 %v783, %v795
        %v827 = vmul.f32 %v784, %v799
        %v828 = vmul.f32 %v785, %v795
        %v829 = vmul.f32 %v786, %v799
        %v830 = vmul.f32 %v787, %v795
        %v831 = vmul.f32 %v788, %v799
        %v832 = vmul.f32 %v789, %v795
        %v833 = vmul.f32 %v790, %v799
        %v834 = vmax.f32 %v802, %v806
        %v835 = vmax.f32 %v803, %v807
        %v836 = vmax.f32 %v804, %v808
        %v837 = vmax.f32 %v805, %v809
        %v838 = vpack.c.bf16 %v836, %v834
        %v839 = vpack.c.bf16 %v837, %v835
        %v840 = vmax.f32 %v810, %v814
        %v841 = vmax.f32 %v811, %v815
        %v842 = vmax.f32 %v812, %v816
        %v843 = vmax.f32 %v813, %v817
        %v844 = vpack.c.bf16 %v842, %v840
        %v845 = vpack.c.bf16 %v843, %v841
        %v846 = vmax.f32 %v818, %v822
        %v847 = vmax.f32 %v819, %v823
        %v848 = vmax.f32 %v820, %v824
        %v849 = vmax.f32 %v821, %v825
        %v850 = vpack.c.bf16 %v848, %v846
        %v851 = vpack.c.bf16 %v849, %v847
        %v852 = vmax.f32 %v826, %v830
        %v853 = vmax.f32 %v827, %v831
        %v854 = vmax.f32 %v828, %v832
        %v855 = vmax.f32 %v829, %v833
        %v856 = vpack.c.bf16 %v854, %v852
        %v857 = vpack.c.bf16 %v855, %v853
        %860 = vrot.lane.b32.xlu0 %v838, 127
        %v861 = vpop.permute.xlu0 %860
        %862 = vrot.lane.b32.xlu0 %v839, 127
        %v863 = vpop.permute.xlu0 %862
        %vm864 = vcmask 1039360
        %v865 = vsel %vm864, %v861, %v863
        %870 = vrot.lane.b32.xlu0 %v844, 127
        %v871 = vpop.permute.xlu0 %870
        %872 = vrot.lane.b32.xlu0 %v845, 127
        %v873 = vpop.permute.xlu0 %872
        %v874 = vsel %vm864, %v871, %v873
        %879 = vrot.lane.b32.xlu0 %v850, 127
        %v880 = vpop.permute.xlu0 %879
        %881 = vrot.lane.b32.xlu0 %v851, 127
        %v882 = vpop.permute.xlu0 %881
        %v883 = vsel %vm864, %v880, %v882
        %888 = vrot.lane.b32.xlu0 %v856, 127
        %v889 = vpop.permute.xlu0 %888
        %890 = vrot.lane.b32.xlu0 %v857, 127
        %v891 = vpop.permute.xlu0 %890
        %v892 = vsel %vm864, %v889, %v891
        %895 = vrot.lane.b32.xlu0 %v838, 126
        %v896 = vpop.permute.xlu0 %895
        %897 = vrot.lane.b32.xlu0 %v839, 126
        %v898 = vpop.permute.xlu0 %897
        %vm899 = vcmask 1031168
        %v900 = vsel %vm899, %v896, %v898
        %903 = vrot.lane.b32.xlu0 %v844, 126
        %v904 = vpop.permute.xlu0 %903
        %905 = vrot.lane.b32.xlu0 %v845, 126
        %v906 = vpop.permute.xlu0 %905
        %v907 = vsel %vm899, %v904, %v906
        %911 = vset.pattern.permute.xlu0 0
        %912 = vperm.xlu0 %911, %v439
        %v913 = vpop.permute.xlu0 %912
        %916 = vset.pattern.permute.xlu0 0
        %917 = vperm.xlu0 %916, %v440
        %v918 = vpop.permute.xlu0 %917
        %921 = vset.pattern.permute.xlu0 0
        %922 = vperm.xlu0 %921, %v441
        %v923 = vpop.permute.xlu0 %922
        %926 = vset.pattern.permute.xlu0 0
        %927 = vperm.xlu0 %926, %v442
        %v928 = vpop.permute.xlu0 %927
        %931 = vset.pattern.permute.xlu0 0
        %932 = vperm.xlu0 %931, %v443
        %v933 = vpop.permute.xlu0 %932
        %936 = vset.pattern.permute.xlu0 0
        %937 = vperm.xlu0 %936, %v444
        %v938 = vpop.permute.xlu0 %937
        %941 = vset.pattern.permute.xlu0 0
        %942 = vperm.xlu0 %941, %v445
        %v943 = vpop.permute.xlu0 %942
        %946 = vset.pattern.permute.xlu0 0
        %947 = vperm.xlu0 %946, %v446
        %v948 = vpop.permute.xlu0 %947
        %951 = vset.pattern.permute.xlu0 0
        %952 = vperm.xlu0 %951, %v447
        %v953 = vpop.permute.xlu0 %952
        %956 = vset.pattern.permute.xlu0 0
        %957 = vperm.xlu0 %956, %v448
        %v958 = vpop.permute.xlu0 %957
        %961 = vset.pattern.permute.xlu0 0
        %962 = vperm.xlu0 %961, %v449
        %v963 = vpop.permute.xlu0 %962
        %966 = vset.pattern.permute.xlu0 0
        %967 = vperm.xlu0 %966, %v450
        %v968 = vpop.permute.xlu0 %967
        %971 = vset.pattern.permute.xlu0 0
        %972 = vperm.xlu0 %971, %v451
        %v973 = vpop.permute.xlu0 %972
        %976 = vset.pattern.permute.xlu0 0
        %977 = vperm.xlu0 %976, %v452
        %v978 = vpop.permute.xlu0 %977
        %981 = vset.pattern.permute.xlu0 0
        %982 = vperm.xlu0 %981, %v453
        %v983 = vpop.permute.xlu0 %982
        %986 = vset.pattern.permute.xlu0 0
        %987 = vperm.xlu0 %986, %v454
        %v988 = vpop.permute.xlu0 %987
        %v1006 = vunpack.c.l.b16 %v423
        %v1007 = vunpack.c.l.b16 %v424
        %v1008 = vunpack.c.l.b16 %v425
        %v1009 = vunpack.c.l.b16 %v426
        %v1010 = vunpack.c.l.b16 %v427
        %v1011 = vunpack.c.l.b16 %v428
        %v1012 = vunpack.c.l.b16 %v429
        %v1013 = vunpack.c.l.b16 %v430
        %v1014 = vunpack.c.l.b16 %v431
        %v1015 = vunpack.c.l.b16 %v432
        %v1016 = vunpack.c.l.b16 %v433
        %v1017 = vunpack.c.l.b16 %v434
        %v1018 = vunpack.c.l.b16 %v435
        %v1019 = vunpack.c.l.b16 %v436
        %v1020 = vunpack.c.l.b16 %v437
        %v1021 = vunpack.c.l.b16 %v438
        %v1022 = vpack.c.b16 %v1007, %v1006
        %v1023 = vpack.c.b16 %v1009, %v1008
        %v1024 = vpack.c.b16 %v1011, %v1010
        %v1025 = vpack.c.b16 %v1013, %v1012
        %v1026 = vpack.c.b16 %v1015, %v1014
        %v1027 = vpack.c.b16 %v1017, %v1016
        %v1028 = vpack.c.b16 %v1019, %v1018
        %v1029 = vpack.c.b16 %v1021, %v1020
        %1038 = vmatprep.subr.bf16.mxu0 %v851
        %1039 = vmatpush1.bf16.msra.mxu0 %v850
        %1040 = vmatprep.subr.bf16.mxu0 %v857
        %1041 = vmatpush1.bf16.msra.mxu0 %v856
        %1042 = vmatprep.subr.bf16.mxu0 %v863
        %1043 = vmatpush1.bf16.msra.mxu0 %v865
        %1044 = vmatprep.subr.bf16.mxu0 %v873
        %1045 = vmatpush1.bf16.msra.mxu0 %v874
        %1046 = vmatprep.subr.bf16.mxu0 %v882
        %1047 = vmatpush1.bf16.msra.mxu0 %v883
        %1048 = vmatprep.subr.bf16.mxu0 %v891
        %1049 = vmatpush1.bf16.msra.mxu0 %v892
        %1050 = vmatprep.subr.bf16.mxu0 %v898
        %1051 = vmatpush1.bf16.msra.mxu0 %v900
        %1052 = vmatprep.subr.bf16.mxu0 %v906
        %1053 = vmatpush1.bf16.msra.mxu0 %v907
        %1054 = vmatprep.subr.bf16.mxu0 0
        %1055 = vmatpush1.bf16.msra.mxu0 0
        %1056 = vmatprep.subr.bf16.mxu0 0
        %1057 = vmatpush1.bf16.msra.mxu0 0
        %1058 = vmatprep.subr.bf16.mxu0 0
        %1059 = vmatpush1.bf16.msra.mxu0 0
        %1060 = vmatprep.subr.bf16.mxu0 0
        %1061 = vmatpush1.bf16.msra.mxu0 0
        %1062 = vmatprep.subr.bf16.mxu0 0
        %1063 = vmatpush1.bf16.msra.mxu0 0
        %1064 = vmatprep.subr.bf16.mxu0 0
        %1065 = vmatpush1.bf16.msra.mxu0 0
        %1066 = vmatprep.subr.bf16.mxu0 0
        %1067 = vmatpush1.bf16.msra.mxu0 0
        %1068 = vmatprep.subr.bf16.mxu0 0
        %1069 = vmatpush1.bf16.msra.mxu0 0
        %1070 = vmatprep.mubr.bf16.mxu0 0
        %1071 = vmatmul.mubr.bf16.gmra.mrb[0].mxu0 %v1022
        %v1072 = vpop.f32.mrb[0].mxu0
        %v1073 = vadd.f32 %v913, %v1072
        %v1074 = vpop.f32.mrb[0].mxu0
        %v1075 = vadd.f32 %v913, %v1074
        %v1076 = vpop.f32.mrb[0].mxu0
        %v1077 = vadd.f32 %v918, %v1076
        %v1078 = vpop.f32.mrb[0].mxu0
        %v1079 = vadd.f32 %v918, %v1078
        %1080 = vmatprep.mubr.bf16.mxu0 0
        %1081 = vmatmul.mubr.bf16.gmra.mrb[0].mxu0 %v1023
        %v1082 = vpop.f32.mrb[0].mxu0
        %v1083 = vadd.f32 %v923, %v1082
        %v1084 = vpop.f32.mrb[0].mxu0
        %v1085 = vadd.f32 %v923, %v1084
        %v1086 = vpop.f32.mrb[0].mxu0
        %v1087 = vadd.f32 %v928, %v1086
        %v1088 = vpop.f32.mrb[0].mxu0
        %v1089 = vadd.f32 %v928, %v1088
        %1090 = vmatprep.mubr.bf16.mxu0 0
        %1091 = vmatmul.mubr.bf16.gmra.mrb[0].mxu0 %v1024
        %v1092 = vpop.f32.mrb[0].mxu0
        %v1093 = vadd.f32 %v933, %v1092
        %v1094 = vpop.f32.mrb[0].mxu0
        %v1095 = vadd.f32 %v933, %v1094
        %v1096 = vpop.f32.mrb[0].mxu0
        %v1097 = vadd.f32 %v938, %v1096
        %v1098 = vpop.f32.mrb[0].mxu0
        %v1099 = vadd.f32 %v938, %v1098
        %1100 = vmatprep.mubr.bf16.mxu0 0
        %1101 = vmatmul.mubr.bf16.gmra.mrb[0].mxu0 %v1025
        %v1102 = vpop.f32.mrb[0].mxu0
        %v1103 = vadd.f32 %v943, %v1102
        %v1104 = vpop.f32.mrb[0].mxu0
        %v1105 = vadd.f32 %v943, %v1104
        %v1106 = vpop.f32.mrb[0].mxu0
        %v1107 = vadd.f32 %v948, %v1106
        %v1108 = vpop.f32.mrb[0].mxu0
        %v1109 = vadd.f32 %v948, %v1108
        %1110 = vmatprep.mubr.bf16.mxu0 0
        %1111 = vmatmul.mubr.bf16.gmra.mrb[0].mxu0 %v1026
        %v1112 = vpop.f32.mrb[0].mxu0
        %v1113 = vadd.f32 %v953, %v1112
        %v1114 = vpop.f32.mrb[0].mxu0
        %v1115 = vadd.f32 %v953, %v1114
        %v1116 = vpop.f32.mrb[0].mxu0
        %v1117 = vadd.f32 %v958, %v1116
        %v1118 = vpop.f32.mrb[0].mxu0
        %v1119 = vadd.f32 %v958, %v1118
        %1120 = vmatprep.mubr.bf16.mxu0 0
        %1121 = vmatmul.mubr.bf16.gmra.mrb[0].mxu0 %v1027
        %v1122 = vpop.f32.mrb[0].mxu0
        %v1123 = vadd.f32 %v963, %v1122
        %v1124 = vpop.f32.mrb[0].mxu0
        %v1125 = vadd.f32 %v963, %v1124
        %v1126 = vpop.f32.mrb[0].mxu0
        %v1127 = vadd.f32 %v968, %v1126
        %v1128 = vpop.f32.mrb[0].mxu0
        %v1129 = vadd.f32 %v968, %v1128
        %1130 = vmatprep.mubr.bf16.mxu0 0
        %1131 = vmatmul.mubr.bf16.gmra.mrb[0].mxu0 %v1028
        %v1132 = vpop.f32.mrb[0].mxu0
        %v1133 = vadd.f32 %v973, %v1132
        %v1134 = vpop.f32.mrb[0].mxu0
        %v1135 = vadd.f32 %v973, %v1134
        %v1136 = vpop.f32.mrb[0].mxu0
        %v1137 = vadd.f32 %v978, %v1136
        %v1138 = vpop.f32.mrb[0].mxu0
        %v1139 = vadd.f32 %v978, %v1138
        %1140 = vmatprep.mubr.bf16.mxu0 0
        %1141 = vmatmul.mubr.bf16.gmra.mrb[0].mxu0 %v1029
        %v1142 = vpop.f32.mrb[0].mxu0
        %v1143 = vadd.f32 %v983, %v1142
        %v1144 = vpop.f32.mrb[0].mxu0
        %v1145 = vadd.f32 %v983, %v1144
        %v1146 = vpop.f32.mrb[0].mxu0
        %v1147 = vadd.f32 %v988, %v1146
        %v1148 = vpop.f32.mrb[0].mxu0
        %v1149 = vadd.f32 %v988, %v1148
        %1150 = vdwg.mxu0
        %v1151 = vmax.f32 %v1073, 0.0
        %v1152 = vmax.f32 %v1075, 0.0
        %v1153 = vmax.f32 %v1077, 0.0
        %v1154 = vmax.f32 %v1079, 0.0
        %v1155 = vmax.f32 %v1083, 0.0
        %v1156 = vmax.f32 %v1085, 0.0
        %v1157 = vmax.f32 %v1087, 0.0
        %v1158 = vmax.f32 %v1089, 0.0
        %v1159 = vmax.f32 %v1093, 0.0
        %v1160 = vmax.f32 %v1095, 0.0
        %v1161 = vmax.f32 %v1097, 0.0
        %v1162 = vmax.f32 %v1099, 0.0
        %v1163 = vmax.f32 %v1103, 0.0
        %v1164 = vmax.f32 %v1105, 0.0
        %v1165 = vmax.f32 %v1107, 0.0
        %v1166 = vmax.f32 %v1109, 0.0
        %v1167 = vmax.f32 %v1113, 0.0
        %v1168 = vmax.f32 %v1115, 0.0
        %v1169 = vmax.f32 %v1117, 0.0
        %v1170 = vmax.f32 %v1119, 0.0
        %v1171 = vmax.f32 %v1123, 0.0
        %v1172 = vmax.f32 %v1125, 0.0
        %v1173 = vmax.f32 %v1127, 0.0
        %v1174 = vmax.f32 %v1129, 0.0
        %v1175 = vmax.f32 %v1133, 0.0
        %v1176 = vmax.f32 %v1135, 0.0
        %v1177 = vmax.f32 %v1137, 0.0
        %v1178 = vmax.f32 %v1139, 0.0
        %v1179 = vmax.f32 %v1143, 0.0
        %v1180 = vmax.f32 %v1145, 0.0
        %v1181 = vmax.f32 %v1147, 0.0
        %v1182 = vmax.f32 %v1149, 0.0
        %v1184 = vlaneseq
        %v1185 = vshrl.u32 %v1184, 7
        %v1186 = vsub.s32 0, %v1185
        %v1187 = vrot.slane %v390, %v1186
        %v1188 = vlaneseq
        %v1189 = vshrl.u32 %v1188, 7
        %v1190 = vsub.s32 1, %v1189
        %v1191 = vrot.slane %v390, %v1190
        %v1194 = vmul.f32 %v1151, %v1187
        %v1195 = vmul.f32 %v1152, %v1191
        %v1196 = vmul.f32 %v1153, %v1187
        %v1197 = vmul.f32 %v1154, %v1191
        %v1198 = vmul.f32 %v1155, %v1187
        %v1199 = vmul.f32 %v1156, %v1191
        %v1200 = vmul.f32 %v1157, %v1187
        %v1201 = vmul.f32 %v1158, %v1191
        %v1202 = vmul.f32 %v1159, %v1187
        %v1203 = vmul.f32 %v1160, %v1191
        %v1204 = vmul.f32 %v1161, %v1187
        %v1205 = vmul.f32 %v1162, %v1191
        %v1206 = vmul.f32 %v1163, %v1187
        %v1207 = vmul.f32 %v1164, %v1191
        %v1208 = vmul.f32 %v1165, %v1187
        %v1209 = vmul.f32 %v1166, %v1191
        %v1210 = vmul.f32 %v1167, %v1187
        %v1211 = vmul.f32 %v1168, %v1191
        %v1212 = vmul.f32 %v1169, %v1187
        %v1213 = vmul.f32 %v1170, %v1191
        %v1214 = vmul.f32 %v1171, %v1187
        %v1215 = vmul.f32 %v1172, %v1191
        %v1216 = vmul.f32 %v1173, %v1187
        %v1217 = vmul.f32 %v1174, %v1191
        %v1218 = vmul.f32 %v1175, %v1187
        %v1219 = vmul.f32 %v1176, %v1191
        %v1220 = vmul.f32 %v1177, %v1187
        %v1221 = vmul.f32 %v1178, %v1191
        %v1222 = vmul.f32 %v1179, %v1187
        %v1223 = vmul.f32 %v1180, %v1191
        %v1224 = vmul.f32 %v1181, %v1187
        %v1225 = vmul.f32 %v1182, %v1191
        %v1226 = vmax.f32 %v1194, %v1202
        %v1227 = vmax.f32 %v1195, %v1203
        %v1228 = vmax.f32 %v1196, %v1204
        %v1229 = vmax.f32 %v1197, %v1205
        %v1230 = vmax.f32 %v1198, %v1206
        %v1231 = vmax.f32 %v1199, %v1207
        %v1232 = vmax.f32 %v1200, %v1208
        %v1233 = vmax.f32 %v1201, %v1209
        %v1234 = vpack.c.bf16 %v1228, %v1226
        %v1235 = vpack.c.bf16 %v1229, %v1227
        %v1236 = vpack.c.bf16 %v1232, %v1230
        %v1237 = vpack.c.bf16 %v1233, %v1231
        %v1238 = vmax.f32 %v1210, %v1218
        %v1239 = vmax.f32 %v1211, %v1219
        %v1240 = vmax.f32 %v1212, %v1220
        %v1241 = vmax.f32 %v1213, %v1221
        %v1242 = vmax.f32 %v1214, %v1222
        %v1243 = vmax.f32 %v1215, %v1223
        %v1244 = vmax.f32 %v1216, %v1224
        %v1245 = vmax.f32 %v1217, %v1225
        %v1246 = vpack.c.bf16 %v1240, %v1238
        %v1247 = vpack.c.bf16 %v1241, %v1239
        %v1248 = vpack.c.bf16 %v1244, %v1242
        %v1249 = vpack.c.bf16 %v1245, %v1243
        %1254 = vrot.lane.b32.xlu0 %v1234, 127
        %v1255 = vpop.permute.xlu0 %1254
        %1256 = vrot.lane.b32.xlu0 %v1235, 127
        %v1257 = vpop.permute.xlu0 %1256
        %1258 = vrot.lane.b32.xlu0 %v1236, 127
        %v1259 = vpop.permute.xlu0 %1258
        %1260 = vrot.lane.b32.xlu0 %v1237, 127
        %v1261 = vpop.permute.xlu0 %1260
        %v1262 = vsel %vm864, %v1255, %v1257
        %v1263 = vsel %vm864, %v1259, %v1261
        %1272 = vrot.lane.b32.xlu0 %v1246, 127
        %v1273 = vpop.permute.xlu0 %1272
        %1274 = vrot.lane.b32.xlu0 %v1247, 127
        %v1275 = vpop.permute.xlu0 %1274
        %1276 = vrot.lane.b32.xlu0 %v1248, 127
        %v1277 = vpop.permute.xlu0 %1276
        %1278 = vrot.lane.b32.xlu0 %v1249, 127
        %v1279 = vpop.permute.xlu0 %1278
        %v1280 = vsel %vm864, %v1273, %v1275
        %v1281 = vsel %vm864, %v1277, %v1279
        %1286 = vrot.lane.b32.xlu0 %v1234, 126
        %v1287 = vpop.permute.xlu0 %1286
        %1288 = vrot.lane.b32.xlu0 %v1235, 126
        %v1289 = vpop.permute.xlu0 %1288
        %1290 = vrot.lane.b32.xlu0 %v1236, 126
        %v1291 = vpop.permute.xlu0 %1290
        %1292 = vrot.lane.b32.xlu0 %v1237, 126
        %v1293 = vpop.permute.xlu0 %1292
        %v1294 = vsel %vm899, %v1287, %v1289
        %v1295 = vsel %vm899, %v1291, %v1293
        %1301 = vset.pattern.permute.xlu0 0
        %1302 = vperm.xlu0 %1301, %v471
        %v1303 = vpop.permute.xlu0 %1302
        %1306 = vset.pattern.permute.xlu0 0
        %1307 = vperm.xlu0 %1306, %v472
        %v1308 = vpop.permute.xlu0 %1307
        %1311 = vset.pattern.permute.xlu0 0
        %1312 = vperm.xlu0 %1311, %v473
        %v1313 = vpop.permute.xlu0 %1312
        %1316 = vset.pattern.permute.xlu0 0
        %1317 = vperm.xlu0 %1316, %v474
        %v1318 = vpop.permute.xlu0 %1317
        %1321 = vset.pattern.permute.xlu0 0
        %1322 = vperm.xlu0 %1321, %v475
        %v1323 = vpop.permute.xlu0 %1322
        %1326 = vset.pattern.permute.xlu0 0
        %1327 = vperm.xlu0 %1326, %v476
        %v1328 = vpop.permute.xlu0 %1327
        %1331 = vset.pattern.permute.xlu0 0
        %1332 = vperm.xlu0 %1331, %v477
        %v1333 = vpop.permute.xlu0 %1332
        %1336 = vset.pattern.permute.xlu0 0
        %1337 = vperm.xlu0 %1336, %v478
        %v1338 = vpop.permute.xlu0 %1337
        %1341 = vset.pattern.permute.xlu0 0
        %1342 = vperm.xlu0 %1341, %v479
        %v1343 = vpop.permute.xlu0 %1342
        %1346 = vset.pattern.permute.xlu0 0
        %1347 = vperm.xlu0 %1346, %v480
        %v1348 = vpop.permute.xlu0 %1347
        %1351 = vset.pattern.permute.xlu0 0
        %1352 = vperm.xlu0 %1351, %v481
        %v1353 = vpop.permute.xlu0 %1352
        %1356 = vset.pattern.permute.xlu0 0
        %1357 = vperm.xlu0 %1356, %v482
        %v1358 = vpop.permute.xlu0 %1357
        %1361 = vset.pattern.permute.xlu0 0
        %1362 = vperm.xlu0 %1361, %v483
        %v1363 = vpop.permute.xlu0 %1362
        %1366 = vset.pattern.permute.xlu0 0
        %1367 = vperm.xlu0 %1366, %v484
        %v1368 = vpop.permute.xlu0 %1367
        %1371 = vset.pattern.permute.xlu0 0
        %1372 = vperm.xlu0 %1371, %v485
        %v1373 = vpop.permute.xlu0 %1372
        %1376 = vset.pattern.permute.xlu0 0
        %1377 = vperm.xlu0 %1376, %v486
        %v1378 = vpop.permute.xlu0 %1377
        %v1396 = vunpack.c.l.b16 %v455
        %v1397 = vunpack.c.l.b16 %v456
        %v1398 = vunpack.c.l.b16 %v457
        %v1399 = vunpack.c.l.b16 %v458
        %v1400 = vunpack.c.l.b16 %v459
        %v1401 = vunpack.c.l.b16 %v460
        %v1402 = vunpack.c.l.b16 %v461
        %v1403 = vunpack.c.l.b16 %v462
        %v1404 = vunpack.c.l.b16 %v463
        %v1405 = vunpack.c.l.b16 %v464
        %v1406 = vunpack.c.l.b16 %v465
        %v1407 = vunpack.c.l.b16 %v466
        %v1408 = vunpack.c.l.b16 %v467
        %v1409 = vunpack.c.l.b16 %v468
        %v1410 = vunpack.c.l.b16 %v469
        %v1411 = vunpack.c.l.b16 %v470
        %v1412 = vpack.c.b16 %v1397, %v1396
        %v1413 = vpack.c.b16 %v1399, %v1398
        %v1414 = vpack.c.b16 %v1401, %v1400
        %v1415 = vpack.c.b16 %v1403, %v1402
        %v1416 = vpack.c.b16 %v1405, %v1404
        %v1417 = vpack.c.b16 %v1407, %v1406
        %v1418 = vpack.c.b16 %v1409, %v1408
        %v1419 = vpack.c.b16 %v1411, %v1410
        %1428 = vmatprep.subr.bf16.mxu0 %v1247
        %1429 = vmatpush1.bf16.msra.mxu0 %v1246
        %1430 = vmatprep.subr.bf16.mxu0 %v1249
        %1431 = vmatpush1.bf16.msra.mxu0 %v1248
        %1432 = vmatprep.subr.bf16.mxu0 %v1257
        %1433 = vmatpush1.bf16.msra.mxu0 %v1262
        %1434 = vmatprep.subr.bf16.mxu0 %v1261
        %1435 = vmatpush1.bf16.msra.mxu0 %v1263
        %1436 = vmatprep.subr.bf16.mxu0 %v1275
        %1437 = vmatpush1.bf16.msra.mxu0 %v1280
        %1438 = vmatprep.subr.bf16.mxu0 %v1279
        %1439 = vmatpush1.bf16.msra.mxu0 %v1281
        %1440 = vmatprep.subr.bf16.mxu0 %v1289
        %1441 = vmatpush1.bf16.msra.mxu0 %v1294
        %1442 = vmatprep.subr.bf16.mxu0 %v1293
        %1443 = vmatpush1.bf16.msra.mxu0 %v1295
        %1444 = vmatprep.subr.bf16.mxu0 0
        %1445 = vmatpush1.bf16.msra.mxu0 0
        %1446 = vmatprep.subr.bf16.mxu0 0
        %1447 = vmatpush1.bf16.msra.mxu0 0
        %1448 = vmatprep.subr.bf16.mxu0 0
        %1449 = vmatpush1.bf16.msra.mxu0 0
        %1450 = vmatprep.subr.bf16.mxu0 0
        %1451 = vmatpush1.bf16.msra.mxu0 0
        %1452 = vmatprep.subr.bf16.mxu0 0
        %1453 = vmatpush1.bf16.msra.mxu0 0
        %1454 = vmatprep.subr.bf16.mxu0 0
        %1455 = vmatpush1.bf16.msra.mxu0 0
        %1456 = vmatprep.subr.bf16.mxu0 0
        %1457 = vmatpush1.bf16.msra.mxu0 0
        %1458 = vmatprep.subr.bf16.mxu0 0
        %1459 = vmatpush1.bf16.msra.mxu0 0
        %1460 = vmatprep.mubr.bf16.mxu0 0
        %1461 = vmatmul.mubr.bf16.gmra.mrb[0].mxu0 %v1412
        %v1462 = vpop.f32.mrb[0].mxu0
        %v1463 = vadd.f32 %v1303, %v1462
        %v1464 = vpop.f32.mrb[0].mxu0
        %v1465 = vadd.f32 %v1303, %v1464
        %v1466 = vpop.f32.mrb[0].mxu0
        %v1467 = vadd.f32 %v1308, %v1466
        %v1468 = vpop.f32.mrb[0].mxu0
        %v1469 = vadd.f32 %v1308, %v1468
        %1470 = vmatprep.mubr.bf16.mxu0 0
        %1471 = vmatmul.mubr.bf16.gmra.mrb[0].mxu0 %v1413
        %v1472 = vpop.f32.mrb[0].mxu0
        %v1473 = vadd.f32 %v1313, %v1472
        %v1474 = vpop.f32.mrb[0].mxu0
        %v1475 = vadd.f32 %v1313, %v1474
        %v1476 = vpop.f32.mrb[0].mxu0
        %v1477 = vadd.f32 %v1318, %v1476
        %v1478 = vpop.f32.mrb[0].mxu0
        %v1479 = vadd.f32 %v1318, %v1478
        %1480 = vmatprep.mubr.bf16.mxu0 0
        %1481 = vmatmul.mubr.bf16.gmra.mrb[0].mxu0 %v1414
        %v1482 = vpop.f32.mrb[0].mxu0
        %v1483 = vadd.f32 %v1323, %v1482
        %v1484 = vpop.f32.mrb[0].mxu0
        %v1485 = vadd.f32 %v1323, %v1484
        %v1486 = vpop.f32.mrb[0].mxu0
        %v1487 = vadd.f32 %v1328, %v1486
        %v1488 = vpop.f32.mrb[0].mxu0
        %v1489 = vadd.f32 %v1328, %v1488
        %1490 = vmatprep.mubr.bf16.mxu0 0
        %1491 = vmatmul.mubr.bf16.gmra.mrb[0].mxu0 %v1415
        %v1492 = vpop.f32.mrb[0].mxu0
        %v1493 = vadd.f32 %v1333, %v1492
        %v1494 = vpop.f32.mrb[0].mxu0
        %v1495 = vadd.f32 %v1333, %v1494
        %v1496 = vpop.f32.mrb[0].mxu0
        %v1497 = vadd.f32 %v1338, %v1496
        %v1498 = vpop.f32.mrb[0].mxu0
        %v1499 = vadd.f32 %v1338, %v1498
        %1500 = vmatprep.mubr.bf16.mxu0 0
        %1501 = vmatmul.mubr.bf16.gmra.mrb[0].mxu0 %v1416
        %v1502 = vpop.f32.mrb[0].mxu0
        %v1503 = vadd.f32 %v1343, %v1502
        %v1504 = vpop.f32.mrb[0].mxu0
        %v1505 = vadd.f32 %v1343, %v1504
        %v1506 = vpop.f32.mrb[0].mxu0
        %v1507 = vadd.f32 %v1348, %v1506
        %v1508 = vpop.f32.mrb[0].mxu0
        %v1509 = vadd.f32 %v1348, %v1508
        %1510 = vmatprep.mubr.bf16.mxu0 0
        %1511 = vmatmul.mubr.bf16.gmra.mrb[0].mxu0 %v1417
        %v1512 = vpop.f32.mrb[0].mxu0
        %v1513 = vadd.f32 %v1353, %v1512
        %v1514 = vpop.f32.mrb[0].mxu0
        %v1515 = vadd.f32 %v1353, %v1514
        %v1516 = vpop.f32.mrb[0].mxu0
        %v1517 = vadd.f32 %v1358, %v1516
        %v1518 = vpop.f32.mrb[0].mxu0
        %v1519 = vadd.f32 %v1358, %v1518
        %1520 = vmatprep.mubr.bf16.mxu0 0
        %1521 = vmatmul.mubr.bf16.gmra.mrb[0].mxu0 %v1418
        %v1522 = vpop.f32.mrb[0].mxu0
        %v1523 = vadd.f32 %v1363, %v1522
        %v1524 = vpop.f32.mrb[0].mxu0
        %v1525 = vadd.f32 %v1363, %v1524
        %v1526 = vpop.f32.mrb[0].mxu0
        %v1527 = vadd.f32 %v1368, %v1526
        %v1528 = vpop.f32.mrb[0].mxu0
        %v1529 = vadd.f32 %v1368, %v1528
        %1530 = vmatprep.mubr.bf16.mxu0 0
        %1531 = vmatmul.mubr.bf16.gmra.mrb[0].mxu0 %v1419
        %v1532 = vpop.f32.mrb[0].mxu0
        %v1533 = vadd.f32 %v1373, %v1532
        %v1534 = vpop.f32.mrb[0].mxu0
        %v1535 = vadd.f32 %v1373, %v1534
        %v1536 = vpop.f32.mrb[0].mxu0
        %v1537 = vadd.f32 %v1378, %v1536
        %v1538 = vpop.f32.mrb[0].mxu0
        %v1539 = vadd.f32 %v1378, %v1538
        %1540 = vdwg.mxu0
        %v1541 = vmax.f32 %v1463, 0.0
        %v1542 = vmax.f32 %v1465, 0.0
        %v1543 = vmax.f32 %v1467, 0.0
        %v1544 = vmax.f32 %v1469, 0.0
        %v1545 = vmax.f32 %v1473, 0.0
        %v1546 = vmax.f32 %v1475, 0.0
        %v1547 = vmax.f32 %v1477, 0.0
        %v1548 = vmax.f32 %v1479, 0.0
        %v1549 = vmax.f32 %v1483, 0.0
        %v1550 = vmax.f32 %v1485, 0.0
        %v1551 = vmax.f32 %v1487, 0.0
        %v1552 = vmax.f32 %v1489, 0.0
        %v1553 = vmax.f32 %v1493, 0.0
        %v1554 = vmax.f32 %v1495, 0.0
        %v1555 = vmax.f32 %v1497, 0.0
        %v1556 = vmax.f32 %v1499, 0.0
        %v1557 = vmax.f32 %v1503, 0.0
        %v1558 = vmax.f32 %v1505, 0.0
        %v1559 = vmax.f32 %v1507, 0.0
        %v1560 = vmax.f32 %v1509, 0.0
        %v1561 = vmax.f32 %v1513, 0.0
        %v1562 = vmax.f32 %v1515, 0.0
        %v1563 = vmax.f32 %v1517, 0.0
        %v1564 = vmax.f32 %v1519, 0.0
        %v1565 = vmax.f32 %v1523, 0.0
        %v1566 = vmax.f32 %v1525, 0.0
        %v1567 = vmax.f32 %v1527, 0.0
        %v1568 = vmax.f32 %v1529, 0.0
        %v1569 = vmax.f32 %v1533, 0.0
        %v1570 = vmax.f32 %v1535, 0.0
        %v1571 = vmax.f32 %v1537, 0.0
        %v1572 = vmax.f32 %v1539, 0.0
        %v1573 = vmax.f32 %v1541, %v1557
        %v1574 = vmax.f32 %v1542, %v1558
        %v1575 = vmax.f32 %v1543, %v1559
        %v1576 = vmax.f32 %v1544, %v1560
        %v1577 = vmax.f32 %v1545, %v1561
        %v1578 = vmax.f32 %v1546, %v1562
        %v1579 = vmax.f32 %v1547, %v1563
        %v1580 = vmax.f32 %v1548, %v1564
        %v1581 = vmax.f32 %v1549, %v1565
        %v1582 = vmax.f32 %v1550, %v1566
        %v1583 = vmax.f32 %v1551, %v1567
        %v1584 = vmax.f32 %v1552, %v1568
        %v1585 = vmax.f32 %v1553, %v1569
        %v1586 = vmax.f32 %v1554, %v1570
        %v1587 = vmax.f32 %v1555, %v1571
        %v1588 = vmax.f32 %v1556, %v1572
        %v1589 = vpack.c.bf16 %v1575, %v1573
        %v1590 = vpack.c.bf16 %v1576, %v1574
        %v1591 = vpack.c.bf16 %v1579, %v1577
        %v1592 = vpack.c.bf16 %v1580, %v1578
        %v1593 = vpack.c.bf16 %v1583, %v1581
        %v1594 = vpack.c.bf16 %v1584, %v1582
        %v1595 = vpack.c.bf16 %v1587, %v1585
        %v1596 = vpack.c.bf16 %v1588, %v1586
        %v1605 = vunpack.c.l.b16 %v1589
        %v1606 = vunpack.c.l.b16 %v1590
        %v1607 = vunpack.c.h.b16 %v1589
        %v1608 = vunpack.c.h.b16 %v1590
        %v1609 = vunpack.c.l.b16 %v1591
        %v1610 = vunpack.c.l.b16 %v1592
        %v1611 = vunpack.c.h.b16 %v1591
        %v1612 = vunpack.c.h.b16 %v1592
        %v1613 = vunpack.c.l.b16 %v1593
        %v1614 = vunpack.c.l.b16 %v1594
        %v1615 = vunpack.c.h.b16 %v1593
        %v1616 = vunpack.c.h.b16 %v1594
        %v1617 = vunpack.c.l.b16 %v1595
        %v1618 = vunpack.c.l.b16 %v1596
        %v1619 = vunpack.c.h.b16 %v1595
        %v1620 = vunpack.c.h.b16 %v1596
        %v1621 = vpack.c.b16 %v1606, %v1605
        %v1622 = vpack.c.b16 %v1608, %v1607
        %v1623 = vpack.c.b16 %v1610, %v1609
        %v1624 = vpack.c.b16 %v1612, %v1611
        %v1625 = vpack.c.b16 %v1614, %v1613
        %v1626 = vpack.c.b16 %v1616, %v1615
        %v1627 = vpack.c.b16 %v1618, %v1617
        %v1628 = vpack.c.b16 %v1620, %v1619
        %vm1637 = vcmask 1043456
        %vm1638 = vcmask 687108
        %vm1639 = vmor %vm1638, %vm1637
        %1640 = vst.msk [vmem:[%s387] sm:$0xff] %vm1639, %v1621
        %1641 = vst.msk [vmem:[%s387 + $0x8] sm:$0xff] %vm1639, %v1622
        %1642 = vst.msk [vmem:[%s387 + $0x10] sm:$0xff] %vm1639, %v1623
        %1643 = vst.msk [vmem:[%s387 + $0x18] sm:$0xff] %vm1639, %v1624
        %1644 = vst.msk [vmem:[%s387 + $0x20] sm:$0xff] %vm1639, %v1625
        %1645 = vst.msk [vmem:[%s387 + $0x28] sm:$0xff] %vm1639, %v1626
        %1646 = vst.msk [vmem:[%s387 + $0x30] sm:$0xff] %vm1639, %v1627
        %1647 = vst.msk [vmem:[%s387 + $0x38] sm:$0xff] %vm1639, %v1628
        %p1648 = scmp.lt.s32.totalorder %s23, 1
        %s1649 = scalar_select %p1648, %s23, 1
        %s1650 = smul.addr %s1649, 16
        %s1651 = smul.addr %s1650, 4
        %s1652 = scalar_lea.vmem %s9, %s1651
        // Predicated region
        $region73: #{deep_cnn1d_forward.2} parent=55 // pred_check
          %p1653 = pneg %p235
        $region74: #{deep_cnn1d_forward.2} parent=55 // pred_check_branch
          %1655 = sbr.rel (%p1653) target = $region76
        $region75: #{deep_cnn1d_forward.2} parent=55 // pred_region
          _
        $region76: #{deep_cnn1d_forward.2} parent=55 // pred_fallthru
          _
      $region56: #{deep_cnn1d_forward.2} parent=5 // pred_fallthru
        _
      %p1656 = scmp.le.s32.totalorder 2, %s18
      // Predicated region
      $region77: #{deep_cnn1d_forward.2} parent=5 // pred_check
        %p1657 = pneg %p1656
      $region78: #{deep_cnn1d_forward.2} parent=5 // pred_check_branch
        %1659 = sbr.rel (%p1657) target = $region80
      $region79: #{deep_cnn1d_forward.2} parent=5 // pred_region
        %s1660 = ssub.s32 %s18, 2
        // Predicated region
        $region81: #{deep_cnn1d_forward.2} parent=79 // pred_check
          %p1661 = pneg %p241
        $region82: #{deep_cnn1d_forward.2} parent=79 // pred_check_branch
          %1663 = sbr.rel (%p1661) target = $region84
        $region83: #{deep_cnn1d_forward.2} parent=79 // pred_region
          %p1664 = scmp.lt.s32.totalorder %s24, 1
          %s1665 = scalar_select %p1664, %s24, 1
          %s1666 = smul.addr %s1665, 16
          %s1667 = smul.addr %s1666, 4
          %s1668 = scalar_lea.vmem %s9, %s1667
        $region84: #{deep_cnn1d_forward.2} parent=79 // pred_fallthru
          _
      $region80: #{deep_cnn1d_forward.2} parent=5 // pred_fallthru
        _
    $region6: #{deep_cnn1d_forward.2} parent=1 // loop_footer
      %s22 = sadd.s32 1, %s18
    $region7: #{deep_cnn1d_forward.2} parent=1 // loop_footer_branch
      %17 = sbr.rel target = $region3
    $region8: #{deep_cnn1d_forward.2} parent=1 // loop_exit
      _
    %1669 = vsyncpa [#allocation3], 1
    %s1670 = scalar_lea.sflag [#allocation3], 1
    %1671 = vsyncpa %s1670, 1
    %1672 = vsyncpa [#allocation5], 1
    %1673 = vsyncpa [#allocation8], 1

// kernel: deep_cnn1d_forward.3
$region0: #{deep_cnn1d_forward.3}
  #allocation0 [shape = 'u32[]', space=smem, size = 0x4, offset = 0x4, fixed_abs, tag = 'smem constant byte address 0x4 - core index']
  #allocation1 [shape = 'u32[144,128]{1,0:T(1,128)}', space=vmem, size = 0x12000, scoped, tag = 'internal scratch']
  %s0 = inlined_call_operand.vmem [shape: bf16[2,13568], index: 0, kind: input, shape index: {}]
  %s1 = inlined_call_operand.vmem [shape: bf16[2,13568,64], index: 1, kind: input, shape index: {}]
  %s2 = inlined_call_operand.vmem [shape: f32[2,1,64], index: 2, kind: input, shape index: {}]
  %s3 = inlined_call_operand.vmem [shape: f32[2,64,2], index: 3, kind: input, shape index: {}]
  %s4 = inlined_call_operand.vmem [shape: f32[1,2], index: 4, kind: input, shape index: {}]
  %s5 = inlined_call_operand.vmem [shape: f32[2,2,2], index: 5, kind: output, shape index: {}]
  %s6 = sld [smem:[#allocation0]]
  $region53: #{deep_cnn1d_forward.3} parent=0
    _
  %s8 = ssub.s32 1, %s6
  %s9 = scalar_select 0, %s8, %s6
  loop: start=0, step=1, limit=4
  $region2: #{deep_cnn1d_forward.3} parent=0 // loop_pre_header
    _
  $region3: #{deep_cnn1d_forward.3} parent=0 // loop_header
    %s11 = sphi 0, %s15
    %p12 = scmp.ge.s32.totalorder %s11, 4
    %s19 = sphi 0, %s19
    %s21 = sphi 0, %s19
    %s22 = sphi 0, %s21
    %s36 = sphi 0, %s22
    %s42 = sphi 0, %s44
    %s45 = sphi 0, %s42
    %s46 = sphi 0, %s45
    %s62 = sphi 0, %s46
    %s68 = sphi 0, %s70
    %s71 = sphi 0, %s68
    %s72 = sphi 0, %s71
    %s88 = sphi 0, %s72
    %s94 = sphi 0, %s96
    %s97 = sphi 0, %s94
    %s98 = sphi 0, %s97
    %s114 = sphi 0, %s98
    %s118 = sphi 0, %s118
    %s120 = sphi 0, %s118
    %s121 = sphi 0, %s120
    %s135 = sphi 0, %s121
    %s141 = sphi 0, %s143
    %s144 = sphi 0, %s141
    %s145 = sphi 0, %s144
    %s161 = sphi 0, %s145
  $region4: #{deep_cnn1d_forward.3} parent=0 // loop_header_branch
    %14 = sbr.rel (%p12) target = $region8
  $region5: #{deep_cnn1d_forward.3} parent=0 // loop_body
    %s16 = ssub.s32 %s11, 1
    %s17 = ssub.s32 %s11, 2
    %s18 = sadd.s32 %s11, 1
    %s20 = sadd.s32 %s19, 1
    %p23 = scmp.eq.s32.totalorder %s11, 1
    %p24 = scmp.ne.s32.totalorder %s19, %s21
    %p25 = scmp.eq.s32.totalorder %s11, 0
    %p26 = por %p24, %p25
    %p27 = scmp.ne.s32.totalorder %s19, %s21
    %p28 = scmp.eq.s32.totalorder %s16, 1
    %p29 = por %p27, %p28
    %p30 = scmp.ne.s32.totalorder %s21, %s22
    %p31 = scmp.eq.s32.totalorder %s16, 0
    %p32 = por %p30, %p31
    %p33 = scmp.ne.s32.totalorder %s21, %s22
    %p34 = scmp.eq.s32.totalorder %s17, 1
    %p35 = por %p33, %p34
    %p37 = scmp.ne.s32.totalorder %s22, %s36
    %p38 = scmp.eq.s32.totalorder %s17, 0
    %p39 = por %p37, %p38
    %s40 = ssub.s32 %s11, %s18
    %p41 = scmp.eq.s32.totalorder %s40, 0
    %s43 = sadd.s32 %s42, 1
    %s44 = scalar_select %p41, %s42, %s43
    %p47 = pneg %p41
    %p48 = scmp.eq.s32.totalorder %s11, 1
    %p49 = por %p47, %p48
    %p50 = scmp.ne.s32.totalorder %s42, %s45
    %p51 = scmp.eq.s32.totalorder %s11, 0
    %p52 = por %p50, %p51
    %p53 = scmp.ne.s32.totalorder %s42, %s45
    %p54 = scmp.eq.s32.totalorder %s16, 1
    %p55 = por %p53, %p54
    %p56 = scmp.ne.s32.totalorder %s45, %s46
    %p57 = scmp.eq.s32.totalorder %s16, 0
    %p58 = por %p56, %p57
    %p59 = scmp.ne.s32.totalorder %s45, %s46
    %p60 = scmp.eq.s32.totalorder %s17, 1
    %p61 = por %p59, %p60
    %p63 = scmp.ne.s32.totalorder %s46, %s62
    %p64 = scmp.eq.s32.totalorder %s17, 0
    %p65 = por %p63, %p64
    %s66 = ssub.s32 %s11, %s18
    %p67 = scmp.eq.s32.totalorder %s66, 0
    %s69 = sadd.s32 %s68, 1
    %s70 = scalar_select %p67, %s68, %s69
    %p73 = pneg %p67
    %p74 = scmp.eq.s32.totalorder %s11, 1
    %p75 = por %p73, %p74
    %p76 = scmp.ne.s32.totalorder %s68, %s71
    %p77 = scmp.eq.s32.totalorder %s11, 0
    %p78 = por %p76, %p77
    %p79 = scmp.ne.s32.totalorder %s68, %s71
    %p80 = scmp.eq.s32.totalorder %s16, 1
    %p81 = por %p79, %p80
    %p82 = scmp.ne.s32.totalorder %s71, %s72
    %p83 = scmp.eq.s32.totalorder %s16, 0
    %p84 = por %p82, %p83
    %p85 = scmp.ne.s32.totalorder %s71, %s72
    %p86 = scmp.eq.s32.totalorder %s17, 1
    %p87 = por %p85, %p86
    %p89 = scmp.ne.s32.totalorder %s72, %s88
    %p90 = scmp.eq.s32.totalorder %s17, 0
    %p91 = por %p89, %p90
    %s92 = ssub.s32 %s11, %s18
    %p93 = scmp.eq.s32.totalorder %s92, 0
    %s95 = sadd.s32 %s94, 1
    %s96 = scalar_select %p93, %s94, %s95
    %p99 = pneg %p93
    %p100 = scmp.eq.s32.totalorder %s11, 1
    %p101 = por %p99, %p100
    %p102 = scmp.ne.s32.totalorder %s94, %s97
    %p103 = scmp.eq.s32.totalorder %s11, 0
    %p104 = por %p102, %p103
    %p105 = scmp.ne.s32.totalorder %s94, %s97
    %p106 = scmp.eq.s32.totalorder %s16, 1
    %p107 = por %p105, %p106
    %p108 = scmp.ne.s32.totalorder %s97, %s98
    %p109 = scmp.eq.s32.totalorder %s16, 0
    %p110 = por %p108, %p109
    %p111 = scmp.ne.s32.totalorder %s97, %s98
    %p112 = scmp.eq.s32.totalorder %s17, 1
    %p113 = por %p111, %p112
    %p115 = scmp.ne.s32.totalorder %s98, %s114
    %p116 = scmp.eq.s32.totalorder %s17, 0
    %p117 = por %p115, %p116
    %s119 = sadd.s32 %s118, 1
    %p122 = scmp.eq.s32.totalorder %s11, 1
    %p123 = scmp.ne.s32.totalorder %s118, %s120
    %p124 = scmp.eq.s32.totalorder %s11, 0
    %p125 = por %p123, %p124
    %p126 = scmp.ne.s32.totalorder %s118, %s120
    %p127 = scmp.eq.s32.totalorder %s16, 1
    %p128 = por %p126, %p127
    %p129 = scmp.ne.s32.totalorder %s120, %s121
    %p130 = scmp.eq.s32.totalorder %s16, 0
    %p131 = por %p129, %p130
    %p132 = scmp.ne.s32.totalorder %s120, %s121
    %p133 = scmp.eq.s32.totalorder %s17, 1
    %p134 = por %p132, %p133
    %p136 = scmp.ne.s32.totalorder %s121, %s135
    %p137 = scmp.eq.s32.totalorder %s17, 0
    %p138 = por %p136, %p137
    %s139 = ssub.s32 %s11, %s18
    %p140 = scmp.eq.s32.totalorder %s139, 0
    %s142 = sadd.s32 %s141, 1
    %s143 = scalar_select %p140, %s141, %s142
    %p146 = pneg %p140
    %p147 = scmp.eq.s32.totalorder %s11, 1
    %p148 = por %p146, %p147
    %p149 = scmp.ne.s32.totalorder %s141, %s144
    %p150 = scmp.eq.s32.totalorder %s11, 0
    %p151 = por %p149, %p150
    %p152 = scmp.ne.s32.totalorder %s141, %s144
    %p153 = scmp.eq.s32.totalorder %s16, 1
    %p154 = por %p152, %p153
    %p155 = scmp.ne.s32.totalorder %s144, %s145
    %p156 = scmp.eq.s32.totalorder %s16, 0
    %p157 = por %p155, %p156
    %p158 = scmp.ne.s32.totalorder %s144, %s145
    %p159 = scmp.eq.s32.totalorder %s17, 1
    %p160 = por %p158, %p159
    %p162 = scmp.ne.s32.totalorder %s145, %s161
    %p163 = scmp.eq.s32.totalorder %s17, 0
    %p164 = por %p162, %p163
    %p165 = scmp.le.s32.totalorder 1, %s11
    %p166 = scmp.lt.s32.totalorder %s11, 3
    %p167 = pnand %p165, %p166
    %p168 = pneg %p167
    // Predicated region
    $region9: #{deep_cnn1d_forward.3} parent=5 // pred_check
      _
    $region10: #{deep_cnn1d_forward.3} parent=5 // pred_check_branch
      %170 = sbr.rel (%p167) target = $region12
    $region11: #{deep_cnn1d_forward.3} parent=5 // pred_region
      %s171 = ssub.s32 %s11, 1
      // Predicated region
      $region13: #{deep_cnn1d_forward.3} parent=11 // pred_check
        %p172 = pneg %p32
      $region14: #{deep_cnn1d_forward.3} parent=11 // pred_check_branch
        %174 = sbr.rel (%p172) target = $region16
      $region15: #{deep_cnn1d_forward.3} parent=11 // pred_region
        _
      $region16: #{deep_cnn1d_forward.3} parent=11 // pred_fallthru
        _
      // Predicated region
      $region17: #{deep_cnn1d_forward.3} parent=11 // pred_check
        %p175 = pneg %p131
      $region18: #{deep_cnn1d_forward.3} parent=11 // pred_check_branch
        %177 = sbr.rel (%p175) target = $region20
      $region19: #{deep_cnn1d_forward.3} parent=11 // pred_region
        _
      $region20: #{deep_cnn1d_forward.3} parent=11 // pred_fallthru
        _
    $region12: #{deep_cnn1d_forward.3} parent=5 // pred_fallthru
      _
    %p178 = scmp.lt.s32.totalorder %s11, 2
    // Predicated region
    $region21: #{deep_cnn1d_forward.3} parent=5 // pred_check
      %p179 = pneg %p178
    $region22: #{deep_cnn1d_forward.3} parent=5 // pred_check_branch
      %181 = sbr.rel (%p179) target = $region24
    $region23: #{deep_cnn1d_forward.3} parent=5 // pred_region
      // Predicated region
      $region25: #{deep_cnn1d_forward.3} parent=23 // pred_check
        %p182 = pneg %p52
      $region26: #{deep_cnn1d_forward.3} parent=23 // pred_check_branch
        %184 = sbr.rel (%p182) target = $region28
      $region27: #{deep_cnn1d_forward.3} parent=23 // pred_region
        %p185 = scmp.lt.s32.totalorder %s11, 1
        %s186 = scalar_select %p185, %s11, 1
        %s187 = smul.addr %s186, 1696
        %s188 = smul.addr %s187, 4
        %s189 = scalar_lea.vmem %s1, %s188
      $region28: #{deep_cnn1d_forward.3} parent=23 // pred_fallthru
        _
      // Predicated region
      $region29: #{deep_cnn1d_forward.3} parent=23 // pred_check
        %p190 = pneg %p78
      $region30: #{deep_cnn1d_forward.3} parent=23 // pred_check_branch
        %192 = sbr.rel (%p190) target = $region32
      $region31: #{deep_cnn1d_forward.3} parent=23 // pred_region
        %p193 = scmp.lt.s32.totalorder %s11, 1
        %s194 = scalar_select %p193, %s11, 1
        %s195 = scalar_lea.vmem %s2, %s194
      $region32: #{deep_cnn1d_forward.3} parent=23 // pred_fallthru
        _
      // Predicated region
      $region33: #{deep_cnn1d_forward.3} parent=23 // pred_check
        %p196 = pneg %p104
      $region34: #{deep_cnn1d_forward.3} parent=23 // pred_check_branch
        %198 = sbr.rel (%p196) target = $region36
      $region35: #{deep_cnn1d_forward.3} parent=23 // pred_region
        %p199 = scmp.lt.s32.totalorder %s11, 1
        %s200 = scalar_select %p199, %s11, 1
        %s201 = smul.addr %s200, 8
        %s202 = smul.addr %s201, 8
        %s203 = scalar_lea.vmem %s3, %s202
      $region36: #{deep_cnn1d_forward.3} parent=23 // pred_fallthru
        _
    $region24: #{deep_cnn1d_forward.3} parent=5 // pred_fallthru
      _
    %p204 = scmp.le.s32.totalorder 1, %s11
    %p205 = scmp.lt.s32.totalorder %s11, 3
    %p206 = pnand %p204, %p205
    %p207 = pneg %p206
    // Predicated region
    $region37: #{deep_cnn1d_forward.3} parent=5 // pred_check
      _
    $region38: #{deep_cnn1d_forward.3} parent=5 // pred_check_branch
      %209 = sbr.rel (%p206) target = $region40
    $region39: #{deep_cnn1d_forward.3} parent=5 // pred_region
      %s210 = ssub.s32 %s11, 1
      %p211 = pneg %p32
      %p212 = pneg %p29
      %p213 = scmp.lt.s32.totalorder %s16, 1
      %s214 = scalar_select %p213, %s16, 1
      %s215 = smul.addr %s214, 1696
      %s216 = smul.addr %s215, 4
      %s217 = scalar_lea.vmem %s1, %s216
      %p218 = pneg %p58
      %p219 = pneg %p55
      %p220 = scmp.lt.s32.totalorder %s16, 1
      %s221 = scalar_select %p220, %s16, 1
      %s222 = scalar_lea.vmem %s2, %s221
      %p223 = pneg %p84
      %p224 = pneg %p81
      %p225 = scmp.lt.s32.totalorder %s16, 1
      %s226 = scalar_select %p225, %s16, 1
      %s227 = smul.addr %s226, 8
      %s228 = smul.addr %s227, 8
      %s229 = scalar_lea.vmem %s3, %s228
      %p230 = pneg %p110
      %p231 = pneg %p107
      %p232 = pneg %p131
      %p233 = pneg %p128
      %p234 = pneg %p157
      %p235 = pneg %p154
      %p236 = scmp.lt.s32.totalorder %s16, 1
      %s237 = scalar_select %p236, %s16, 1
      %s238 = smul.addr %s237, 2
      %s239 = scalar_lea.vmem %s5, %s238
      %p240 = scmp.lt.s32.totalorder %s16, 1
      %s241 = scalar_select %p240, %s16, 1
      %s242 = smul.addr %s241, 1696
      %s243 = smul.addr %s242, 4
      %s244 = scalar_lea.vmem %s1, %s243
      %p245 = scmp.lt.s32.totalorder %s16, 1
      %s246 = scalar_select %p245, %s16, 1
      %s247 = scalar_lea.vmem %s2, %s246
      %p248 = scmp.lt.s32.totalorder %s16, 1
      %s249 = scalar_select %p248, %s16, 1
      %s250 = smul.addr %s249, 8
      %s251 = smul.addr %s250, 8
      %s252 = scalar_lea.vmem %s3, %s251
      %p253 = scmp.lt.s32.totalorder %s16, 1
      %s254 = scalar_select %p253, %s16, 1
      %s255 = smul.addr %s254, 2
      %s256 = scalar_lea.vmem %s5, %s255
      %v258 = vld [vmem:[%s0] sm:$0xff]
      %v259 = vld [vmem:[%s0 + $0x8] sm:$0xff]
      %v260 = vld [vmem:[%s0 + $0x10] sm:$0xff]
      %v261 = vld [vmem:[%s0 + $0x18] sm:$0xff]
      %v262 = vld [vmem:[%s0 + $0x20] sm:$0xff]
      %v263 = vld [vmem:[%s0 + $0x28] sm:$0xff]
      %v264 = vld [vmem:[%s0 + $0x30] sm:$0xff]
      %v265 = vld [vmem:[%s0 + $0x38] sm:$0xff]
      %v266 = vld [vmem:[%s0 + $0x40] sm:$0xff]
      %v267 = vld [vmem:[%s0 + $0x48] sm:$0xff]
      %v268 = vld [vmem:[%s0 + $0x50] sm:$0xff]
      %v269 = vld [vmem:[%s0 + $0x58] sm:$0xff]
      %v270 = vld [vmem:[%s0 + $0x60] sm:$0xff]
      %v271 = vld [vmem:[%s0 + $0x68] sm:$0x3]
      %v272 = vld [vmem:[%s244] sm:$0xf]
      %v273 = vld [vmem:[%s244 + $0x4] sm:$0xf]
      %v274 = vld [vmem:[%s244 + $0x8] sm:$0xf]
      %v275 = vld [vmem:[%s244 + $0xc] sm:$0xf]
      %v276 = vld [vmem:[%s244 + $0x10] sm:$0xf]
      %v277 = vld [vmem:[%s244 + $0x14] sm:$0xf]
      %v278 = vld [vmem:[%s244 + $0x18] sm:$0xf]
      %v279 = vld [vmem:[%s244 + $0x1c] sm:$0xf]
      %v280 = vld [vmem:[%s244 + $0x20] sm:$0xf]
      %v281 = vld [vmem:[%s244 + $0x24] sm:$0xf]
      %v282 = vld [vmem:[%s244 + $0x28] sm:$0xf]
      %v283 = vld [vmem:[%s244 + $0x2c] sm:$0xf]
      %v284 = vld [vmem:[%s244 + $0x30] sm:$0xf]
      %v285 = vld [vmem:[%s244 + $0x34] sm:$0xf]
      %v286 = vld [vmem:[%s244 + $0x38] sm:$0xf]
      %v287 = vld [vmem:[%s244 + $0x3c] sm:$0xf]
      %v288 = vld [vmem:[%s244 + $0x40] sm:$0xf]
      %v289 = vld [vmem:[%s244 + $0x44] sm:$0xf]
      %v290 = vld [vmem:[%s244 + $0x48] sm:$0xf]
      %v291 = vld [vmem:[%s244 + $0x4c] sm:$0xf]
      %v292 = vld [vmem:[%s244 + $0x50] sm:$0xf]
      %v293 = vld [vmem:[%s244 + $0x54] sm:$0xf]
      %v294 = vld [vmem:[%s244 + $0x58] sm:$0xf]
      %v295 = vld [vmem:[%s244 + $0x5c] sm:$0xf]
      %v296 = vld [vmem:[%s244 + $0x60] sm:$0xf]
      %v297 = vld [vmem:[%s244 + $0x64] sm:$0xf]
      %v298 = vld [vmem:[%s244 + $0x68] sm:$0xf]
      %v299 = vld [vmem:[%s244 + $0x6c] sm:$0xf]
      %v300 = vld [vmem:[%s244 + $0x70] sm:$0xf]
      %v301 = vld [vmem:[%s244 + $0x74] sm:$0xf]
      %v302 = vld [vmem:[%s244 + $0x78] sm:$0xf]
      %v303 = vld [vmem:[%s244 + $0x7c] sm:$0xf]
      %v304 = vld [vmem:[%s244 + $0x80] sm:$0xf]
      %v305 = vld [vmem:[%s244 + $0x84] sm:$0xf]
      %v306 = vld [vmem:[%s244 + $0x88] sm:$0xf]
      %v307 = vld [vmem:[%s244 + $0x8c] sm:$0xf]
      %v308 = vld [vmem:[%s244 + $0x90] sm:$0xf]
      %v309 = vld [vmem:[%s244 + $0x94] sm:$0xf]
      %v310 = vld [vmem:[%s244 + $0x98] sm:$0xf]
      %v311 = vld [vmem:[%s244 + $0x9c] sm:$0xf]
      %v312 = vld [vmem:[%s244 + $0xa0] sm:$0xf]
      %v313 = vld [vmem:[%s244 + $0xa4] sm:$0xf]
      %v314 = vld [vmem:[%s244 + $0xa8] sm:$0xf]
      %v315 = vld [vmem:[%s244 + $0xac] sm:$0xf]
      %v316 = vld [vmem:[%s244 + $0xb0] sm:$0xf]
      %v317 = vld [vmem:[%s244 + $0xb4] sm:$0xf]
      %v318 = vld [vmem:[%s244 + $0xb8] sm:$0xf]
      %v319 = vld [vmem:[%s244 + $0xbc] sm:$0xf]
      %v320 = vld [vmem:[%s244 + $0xc0] sm:$0xf]
      %v321 = vld [vmem:[%s244 + $0xc4] sm:$0xf]
      %v322 = vld [vmem:[%s244 + $0xc8] sm:$0xf]
      %v323 = vld [vmem:[%s244 + $0xcc] sm:$0xf]
      %v324 = vld [vmem:[%s244 + $0xd0] sm:$0xf]
      %v325 = vld [vmem:[%s244 + $0xd4] sm:$0xf]
      %v326 = vld [vmem:[%s244 + $0xd8] sm:$0xf]
      %v327 = vld [vmem:[%s244 + $0xdc] sm:$0xf]
      %v328 = vld [vmem:[%s244 + $0xe0] sm:$0xf]
      %v329 = vld [vmem:[%s244 + $0xe4] sm:$0xf]
      %v330 = vld [vmem:[%s244 + $0xe8] sm:$0xf]
      %v331 = vld [vmem:[%s244 + $0xec] sm:$0xf]
      %v332 = vld [vmem:[%s244 + $0xf0] sm:$0xf]
      %v333 = vld [vmem:[%s244 + $0xf4] sm:$0xf]
      %v334 = vld [vmem:[%s244 + $0xf8] sm:$0xf]
      %v335 = vld [vmem:[%s244 + $0xfc] sm:$0xf]
      %v336 = vld [vmem:[%s244 + $0x100] sm:$0xf]
      %v337 = vld [vmem:[%s244 + $0x104] sm:$0xf]
      %v338 = vld [vmem:[%s244 + $0x108] sm:$0xf]
      %v339 = vld [vmem:[%s244 + $0x10c] sm:$0xf]
      %v340 = vld [vmem:[%s244 + $0x110] sm:$0xf]
      %v341 = vld [vmem:[%s244 + $0x114] sm:$0xf]
      %v342 = vld [vmem:[%s244 + $0x118] sm:$0xf]
      %v343 = vld [vmem:[%s244 + $0x11c] sm:$0xf]
      %v344 = vld [vmem:[%s244 + $0x120] sm:$0xf]
      %v345 = vld [vmem:[%s244 + $0x124] sm:$0xf]
      %v346 = vld [vmem:[%s244 + $0x128] sm:$0xf]
      %v347 = vld [vmem:[%s244 + $0x12c] sm:$0xf]
      %v348 = vld [vmem:[%s244 + $0x130] sm:$0xf]
      %v349 = vld [vmem:[%s244 + $0x134] sm:$0xf]
      %v350 = vld [vmem:[%s244 + $0x138] sm:$0xf]
      %v351 = vld [vmem:[%s244 + $0x13c] sm:$0xf]
      %v352 = vld [vmem:[%s244 + $0x140] sm:$0xf]
      %v353 = vld [vmem:[%s244 + $0x144] sm:$0xf]
      %v354 = vld [vmem:[%s244 + $0x148] sm:$0xf]
      %v355 = vld [vmem:[%s244 + $0x14c] sm:$0xf]
      %v356 = vld [vmem:[%s244 + $0x150] sm:$0xf]
      %v357 = vld [vmem:[%s244 + $0x154] sm:$0xf]
      %v358 = vld [vmem:[%s244 + $0x158] sm:$0xf]
      %v359 = vld [vmem:[%s244 + $0x15c] sm:$0xf]
      %v360 = vld [vmem:[%s244 + $0x160] sm:$0xf]
      %v361 = vld [vmem:[%s244 + $0x164] sm:$0xf]
      %v362 = vld [vmem:[%s244 + $0x168] sm:$0xf]
      %v363 = vld [vmem:[%s244 + $0x16c] sm:$0xf]
      %v364 = vld [vmem:[%s244 + $0x170] sm:$0xf]
      %v365 = vld [vmem:[%s244 + $0x174] sm:$0xf]
      %v366 = vld [vmem:[%s244 + $0x178] sm:$0xf]
      %v367 = vld [vmem:[%s244 + $0x17c] sm:$0xf]
      %v368 = vld [vmem:[%s244 + $0x180] sm:$0xf]
      %v369 = vld [vmem:[%s244 + $0x184] sm:$0xf]
      %v370 = vld [vmem:[%s244 + $0x188] sm:$0xf]
      %v371 = vld [vmem:[%s244 + $0x18c] sm:$0xf]
      %v372 = vld [vmem:[%s244 + $0x190] sm:$0xf]
      %v373 = vld [vmem:[%s244 + $0x194] sm:$0xf]
      %v374 = vld [vmem:[%s244 + $0x198] sm:$0xf]
      %v375 = vld [vmem:[%s244 + $0x19c] sm:$0xf]
      %v376 = vld [vmem:[%s244 + $0x1a0] sm:$0xf]
      %v377 = vld [vmem:[%s244 + $0x1a4] sm:$0xf]
      %v378 = vld [vmem:[%s244 + $0x1a8] sm:$0xf]
      %v379 = vld [vmem:[%s244 + $0x1ac] sm:$0xf]
      %v380 = vld [vmem:[%s244 + $0x1b0] sm:$0xf]
      %v381 = vld [vmem:[%s244 + $0x1b4] sm:$0xf]
      %v382 = vld [vmem:[%s244 + $0x1b8] sm:$0xf]
      %v383 = vld [vmem:[%s244 + $0x1bc] sm:$0xf]
      %v384 = vld [vmem:[%s244 + $0x1c0] sm:$0xf]
      %v385 = vld [vmem:[%s244 + $0x1c4] sm:$0xf]
      %v386 = vld [vmem:[%s244 + $0x1c8] sm:$0xf]
      %v387 = vld [vmem:[%s244 + $0x1cc] sm:$0xf]
      %v388 = vld [vmem:[%s244 + $0x1d0] sm:$0xf]
      %v389 = vld [vmem:[%s244 + $0x1d4] sm:$0xf]
      %v390 = vld [vmem:[%s244 + $0x1d8] sm:$0xf]
      %v391 = vld [vmem:[%s244 + $0x1dc] sm:$0xf]
      %v392 = vld [vmem:[%s244 + $0x1e0] sm:$0xf]
      %v393 = vld [vmem:[%s244 + $0x1e4] sm:$0xf]
      %v394 = vld [vmem:[%s244 + $0x1e8] sm:$0xf]
      %v395 = vld [vmem:[%s244 + $0x1ec] sm:$0xf]
      %v396 = vld [vmem:[%s244 + $0x1f0] sm:$0xf]
      %v397 = vld [vmem:[%s244 + $0x1f4] sm:$0xf]
      %v398 = vld [vmem:[%s244 + $0x1f8] sm:$0xf]
      %v399 = vld [vmem:[%s244 + $0x1fc] sm:$0xf]
      %v400 = vld [vmem:[%s244 + $0x200] sm:$0xf]
      %v401 = vld [vmem:[%s244 + $0x204] sm:$0xf]
      %v402 = vld [vmem:[%s244 + $0x208] sm:$0xf]
      %v403 = vld [vmem:[%s244 + $0x20c] sm:$0xf]
      %v404 = vld [vmem:[%s244 + $0x210] sm:$0xf]
      %v405 = vld [vmem:[%s244 + $0x214] sm:$0xf]
      %v406 = vld [vmem:[%s244 + $0x218] sm:$0xf]
      %v407 = vld [vmem:[%s244 + $0x21c] sm:$0xf]
      %v408 = vld [vmem:[%s244 + $0x220] sm:$0xf]
      %v409 = vld [vmem:[%s244 + $0x224] sm:$0xf]
      %v410 = vld [vmem:[%s244 + $0x228] sm:$0xf]
      %v411 = vld [vmem:[%s244 + $0x22c] sm:$0xf]
      %v412 = vld [vmem:[%s244 + $0x230] sm:$0xf]
      %v413 = vld [vmem:[%s244 + $0x234] sm:$0xf]
      %v414 = vld [vmem:[%s244 + $0x238] sm:$0xf]
      %v415 = vld [vmem:[%s244 + $0x23c] sm:$0xf]
      %v416 = vld [vmem:[%s244 + $0x240] sm:$0xf]
      %v417 = vld [vmem:[%s244 + $0x244] sm:$0xf]
      %v418 = vld [vmem:[%s244 + $0x248] sm:$0xf]
      %v419 = vld [vmem:[%s244 + $0x24c] sm:$0xf]
      %v420 = vld [vmem:[%s244 + $0x250] sm:$0xf]
      %v421 = vld [vmem:[%s244 + $0x254] sm:$0xf]
      %v422 = vld [vmem:[%s244 + $0x258] sm:$0xf]
      %v423 = vld [vmem:[%s244 + $0x25c] sm:$0xf]
      %v424 = vld [vmem:[%s244 + $0x260] sm:$0xf]
      %v425 = vld [vmem:[%s244 + $0x264] sm:$0xf]
      %v426 = vld [vmem:[%s244 + $0x268] sm:$0xf]
      %v427 = vld [vmem:[%s244 + $0x26c] sm:$0xf]
      %v428 = vld [vmem:[%s244 + $0x270] sm:$0xf]
      %v429 = vld [vmem:[%s244 + $0x274] sm:$0xf]
      %v430 = vld [vmem:[%s244 + $0x278] sm:$0xf]
      %v431 = vld [vmem:[%s244 + $0x27c] sm:$0xf]
      %v432 = vld [vmem:[%s244 + $0x280] sm:$0xf]
      %v433 = vld [vmem:[%s244 + $0x284] sm:$0xf]
      %v434 = vld [vmem:[%s244 + $0x288] sm:$0xf]
      %v435 = vld [vmem:[%s244 + $0x28c] sm:$0xf]
      %v436 = vld [vmem:[%s244 + $0x290] sm:$0xf]
      %v437 = vld [vmem:[%s244 + $0x294] sm:$0xf]
      %v438 = vld [vmem:[%s244 + $0x298] sm:$0xf]
      %v439 = vld [vmem:[%s244 + $0x29c] sm:$0xf]
      %v440 = vld [vmem:[%s244 + $0x2a0] sm:$0xf]
      %v441 = vld [vmem:[%s244 + $0x2a4] sm:$0xf]
      %v442 = vld [vmem:[%s244 + $0x2a8] sm:$0xf]
      %v443 = vld [vmem:[%s244 + $0x2ac] sm:$0xf]
      %v444 = vld [vmem:[%s244 + $0x2b0] sm:$0xf]
      %v445 = vld [vmem:[%s244 + $0x2b4] sm:$0xf]
      %v446 = vld [vmem:[%s244 + $0x2b8] sm:$0xf]
      %v447 = vld [vmem:[%s244 + $0x2bc] sm:$0xf]
      %v448 = vld [vmem:[%s244 + $0x2c0] sm:$0xf]
      %v449 = vld [vmem:[%s244 + $0x2c4] sm:$0xf]
      %v450 = vld [vmem:[%s244 + $0x2c8] sm:$0xf]
      %v451 = vld [vmem:[%s244 + $0x2cc] sm:$0xf]
      %v452 = vld [vmem:[%s244 + $0x2d0] sm:$0xf]
      %v453 = vld [vmem:[%s244 + $0x2d4] sm:$0xf]
      %v454 = vld [vmem:[%s244 + $0x2d8] sm:$0xf]
      %v455 = vld [vmem:[%s244 + $0x2dc] sm:$0xf]
      %v456 = vld [vmem:[%s244 + $0x2e0] sm:$0xf]
      %v457 = vld [vmem:[%s244 + $0x2e4] sm:$0xf]
      %v458 = vld [vmem:[%s244 + $0x2e8] sm:$0xf]
      %v459 = vld [vmem:[%s244 + $0x2ec] sm:$0xf]
      %v460 = vld [vmem:[%s244 + $0x2f0] sm:$0xf]
      %v461 = vld [vmem:[%s244 + $0x2f4] sm:$0xf]
      %v462 = vld [vmem:[%s244 + $0x2f8] sm:$0xf]
      %v463 = vld [vmem:[%s244 + $0x2fc] sm:$0xf]
      %v464 = vld [vmem:[%s244 + $0x300] sm:$0xf]
      %v465 = vld [vmem:[%s244 + $0x304] sm:$0xf]
      %v466 = vld [vmem:[%s244 + $0x308] sm:$0xf]
      %v467 = vld [vmem:[%s244 + $0x30c] sm:$0xf]
      %v468 = vld [vmem:[%s244 + $0x310] sm:$0xf]
      %v469 = vld [vmem:[%s244 + $0x314] sm:$0xf]
      %v470 = vld [vmem:[%s244 + $0x318] sm:$0xf]
      %v471 = vld [vmem:[%s244 + $0x31c] sm:$0xf]
      %v472 = vld [vmem:[%s244 + $0x320] sm:$0xf]
      %v473 = vld [vmem:[%s244 + $0x324] sm:$0xf]
      %v474 = vld [vmem:[%s244 + $0x328] sm:$0xf]
      %v475 = vld [vmem:[%s244 + $0x32c] sm:$0xf]
      %v476 = vld [vmem:[%s244 + $0x330] sm:$0xf]
      %v477 = vld [vmem:[%s244 + $0x334] sm:$0xf]
      %v478 = vld [vmem:[%s244 + $0x338] sm:$0xf]
      %v479 = vld [vmem:[%s244 + $0x33c] sm:$0xf]
      %v480 = vld [vmem:[%s244 + $0x340] sm:$0xf]
      %v481 = vld [vmem:[%s244 + $0x344] sm:$0xf]
      %v482 = vld [vmem:[%s244 + $0x348] sm:$0xf]
      %v483 = vld [vmem:[%s244 + $0x34c] sm:$0xf]
      %v484 = vld [vmem:[%s244 + $0x350] sm:$0xf]
      %v485 = vld [vmem:[%s244 + $0x354] sm:$0xf]
      %v486 = vld [vmem:[%s244 + $0x358] sm:$0xf]
      %v487 = vld [vmem:[%s244 + $0x35c] sm:$0xf]
      %v488 = vld [vmem:[%s244 + $0x360] sm:$0xf]
      %v489 = vld [vmem:[%s244 + $0x364] sm:$0xf]
      %v490 = vld [vmem:[%s244 + $0x368] sm:$0xf]
      %v491 = vld [vmem:[%s244 + $0x36c] sm:$0xf]
      %v492 = vld [vmem:[%s244 + $0x370] sm:$0xf]
      %v493 = vld [vmem:[%s244 + $0x374] sm:$0xf]
      %v494 = vld [vmem:[%s244 + $0x378] sm:$0xf]
      %v495 = vld [vmem:[%s244 + $0x37c] sm:$0xf]
      %v496 = vld [vmem:[%s244 + $0x380] sm:$0xf]
      %v497 = vld [vmem:[%s244 + $0x384] sm:$0xf]
      %v498 = vld [vmem:[%s244 + $0x388] sm:$0xf]
      %v499 = vld [vmem:[%s244 + $0x38c] sm:$0xf]
      %v500 = vld [vmem:[%s244 + $0x390] sm:$0xf]
      %v501 = vld [vmem:[%s244 + $0x394] sm:$0xf]
      %v502 = vld [vmem:[%s244 + $0x398] sm:$0xf]
      %v503 = vld [vmem:[%s244 + $0x39c] sm:$0xf]
      %v504 = vld [vmem:[%s244 + $0x3a0] sm:$0xf]
      %v505 = vld [vmem:[%s244 + $0x3a4] sm:$0xf]
      %v506 = vld [vmem:[%s244 + $0x3a8] sm:$0xf]
      %v507 = vld [vmem:[%s244 + $0x3ac] sm:$0xf]
      %v508 = vld [vmem:[%s244 + $0x3b0] sm:$0xf]
      %v509 = vld [vmem:[%s244 + $0x3b4] sm:$0xf]
      %v510 = vld [vmem:[%s244 + $0x3b8] sm:$0xf]
      %v511 = vld [vmem:[%s244 + $0x3bc] sm:$0xf]
      %v512 = vld [vmem:[%s244 + $0x3c0] sm:$0xf]
      %v513 = vld [vmem:[%s244 + $0x3c4] sm:$0xf]
      %v514 = vld [vmem:[%s244 + $0x3c8] sm:$0xf]
      %v515 = vld [vmem:[%s244 + $0x3cc] sm:$0xf]
      %v516 = vld [vmem:[%s244 + $0x3d0] sm:$0xf]
      %v517 = vld [vmem:[%s244 + $0x3d4] sm:$0xf]
      %v518 = vld [vmem:[%s244 + $0x3d8] sm:$0xf]
      %v519 = vld [vmem:[%s244 + $0x3dc] sm:$0xf]
      %v520 = vld [vmem:[%s244 + $0x3e0] sm:$0xf]
      %v521 = vld [vmem:[%s244 + $0x3e4] sm:$0xf]
      %v522 = vld [vmem:[%s244 + $0x3e8] sm:$0xf]
      %v523 = vld [vmem:[%s244 + $0x3ec] sm:$0xf]
      %v524 = vld [vmem:[%s244 + $0x3f0] sm:$0xf]
      %v525 = vld [vmem:[%s244 + $0x3f4] sm:$0xf]
      %v526 = vld [vmem:[%s244 + $0x3f8] sm:$0xf]
      %v527 = vld [vmem:[%s244 + $0x3fc] sm:$0xf]
      %v528 = vld [vmem:[%s244 + $0x400] sm:$0xf]
      %v529 = vld [vmem:[%s244 + $0x404] sm:$0xf]
      %v530 = vld [vmem:[%s244 + $0x408] sm:$0xf]
      %v531 = vld [vmem:[%s244 + $0x40c] sm:$0xf]
      %v532 = vld [vmem:[%s244 + $0x410] sm:$0xf]
      %v533 = vld [vmem:[%s244 + $0x414] sm:$0xf]
      %v534 = vld [vmem:[%s244 + $0x418] sm:$0xf]
      %v535 = vld [vmem:[%s244 + $0x41c] sm:$0xf]
      %v536 = vld [vmem:[%s244 + $0x420] sm:$0xf]
      %v537 = vld [vmem:[%s244 + $0x424] sm:$0xf]
      %v538 = vld [vmem:[%s244 + $0x428] sm:$0xf]
      %v539 = vld [vmem:[%s244 + $0x42c] sm:$0xf]
      %v540 = vld [vmem:[%s244 + $0x430] sm:$0xf]
      %v541 = vld [vmem:[%s244 + $0x434] sm:$0xf]
      %v542 = vld [vmem:[%s244 + $0x438] sm:$0xf]
      %v543 = vld [vmem:[%s244 + $0x43c] sm:$0xf]
      %v544 = vld [vmem:[%s244 + $0x440] sm:$0xf]
      %v545 = vld [vmem:[%s244 + $0x444] sm:$0xf]
      %v546 = vld [vmem:[%s244 + $0x448] sm:$0xf]
      %v547 = vld [vmem:[%s244 + $0x44c] sm:$0xf]
      %v548 = vld [vmem:[%s244 + $0x450] sm:$0xf]
      %v549 = vld [vmem:[%s244 + $0x454] sm:$0xf]
      %v550 = vld [vmem:[%s244 + $0x458] sm:$0xf]
      %v551 = vld [vmem:[%s244 + $0x45c] sm:$0xf]
      %v552 = vld [vmem:[%s244 + $0x460] sm:$0xf]
      %v553 = vld [vmem:[%s244 + $0x464] sm:$0xf]
      %v554 = vld [vmem:[%s244 + $0x468] sm:$0xf]
      %v555 = vld [vmem:[%s244 + $0x46c] sm:$0xf]
      %v556 = vld [vmem:[%s244 + $0x470] sm:$0xf]
      %v557 = vld [vmem:[%s244 + $0x474] sm:$0xf]
      %v558 = vld [vmem:[%s244 + $0x478] sm:$0xf]
      %v559 = vld [vmem:[%s244 + $0x47c] sm:$0xf]
      %v560 = vld [vmem:[%s244 + $0x480] sm:$0xf]
      %v561 = vld [vmem:[%s244 + $0x484] sm:$0xf]
      %v562 = vld [vmem:[%s244 + $0x488] sm:$0xf]
      %v563 = vld [vmem:[%s244 + $0x48c] sm:$0xf]
      %v564 = vld [vmem:[%s244 + $0x490] sm:$0xf]
      %v565 = vld [vmem:[%s244 + $0x494] sm:$0xf]
      %v566 = vld [vmem:[%s244 + $0x498] sm:$0xf]
      %v567 = vld [vmem:[%s244 + $0x49c] sm:$0xf]
      %v568 = vld [vmem:[%s244 + $0x4a0] sm:$0xf]
      %v569 = vld [vmem:[%s244 + $0x4a4] sm:$0xf]
      %v570 = vld [vmem:[%s244 + $0x4a8] sm:$0xf]
      %v571 = vld [vmem:[%s244 + $0x4ac] sm:$0xf]
      %v572 = vld [vmem:[%s244 + $0x4b0] sm:$0xf]
      %v573 = vld [vmem:[%s244 + $0x4b4] sm:$0xf]
      %v574 = vld [vmem:[%s244 + $0x4b8] sm:$0xf]
      %v575 = vld [vmem:[%s244 + $0x4bc] sm:$0xf]
      %v576 = vld [vmem:[%s244 + $0x4c0] sm:$0xf]
      %v577 = vld [vmem:[%s244 + $0x4c4] sm:$0xf]
      %v578 = vld [vmem:[%s244 + $0x4c8] sm:$0xf]
      %v579 = vld [vmem:[%s244 + $0x4cc] sm:$0xf]
      %v580 = vld [vmem:[%s244 + $0x4d0] sm:$0xf]
      %v581 = vld [vmem:[%s244 + $0x4d4] sm:$0xf]
      %v582 = vld [vmem:[%s244 + $0x4d8] sm:$0xf]
      %v583 = vld [vmem:[%s244 + $0x4dc] sm:$0xf]
      %v584 = vld [vmem:[%s244 + $0x4e0] sm:$0xf]
      %v585 = vld [vmem:[%s244 + $0x4e4] sm:$0xf]
      %v586 = vld [vmem:[%s244 + $0x4e8] sm:$0xf]
      %v587 = vld [vmem:[%s244 + $0x4ec] sm:$0xf]
      %v588 = vld [vmem:[%s244 + $0x4f0] sm:$0xf]
      %v589 = vld [vmem:[%s244 + $0x4f4] sm:$0xf]
      %v590 = vld [vmem:[%s244 + $0x4f8] sm:$0xf]
      %v591 = vld [vmem:[%s244 + $0x4fc] sm:$0xf]
      %v592 = vld [vmem:[%s244 + $0x500] sm:$0xf]
      %v593 = vld [vmem:[%s244 + $0x504] sm:$0xf]
      %v594 = vld [vmem:[%s244 + $0x508] sm:$0xf]
      %v595 = vld [vmem:[%s244 + $0x50c] sm:$0xf]
      %v596 = vld [vmem:[%s244 + $0x510] sm:$0xf]
      %v597 = vld [vmem:[%s244 + $0x514] sm:$0xf]
      %v598 = vld [vmem:[%s244 + $0x518] sm:$0xf]
      %v599 = vld [vmem:[%s244 + $0x51c] sm:$0xf]
      %v600 = vld [vmem:[%s244 + $0x520] sm:$0xf]
      %v601 = vld [vmem:[%s244 + $0x524] sm:$0xf]
      %v602 = vld [vmem:[%s244 + $0x528] sm:$0xf]
      %v603 = vld [vmem:[%s244 + $0x52c] sm:$0xf]
      %v604 = vld [vmem:[%s244 + $0x530] sm:$0xf]
      %v605 = vld [vmem:[%s244 + $0x534] sm:$0xf]
      %v606 = vld [vmem:[%s244 + $0x538] sm:$0xf]
      %v607 = vld [vmem:[%s244 + $0x53c] sm:$0xf]
      %v608 = vld [vmem:[%s244 + $0x540] sm:$0xf]
      %v609 = vld [vmem:[%s244 + $0x544] sm:$0xf]
      %v610 = vld [vmem:[%s244 + $0x548] sm:$0xf]
      %v611 = vld [vmem:[%s244 + $0x54c] sm:$0xf]
      %v612 = vld [vmem:[%s244 + $0x550] sm:$0xf]
      %v613 = vld [vmem:[%s244 + $0x554] sm:$0xf]
      %v614 = vld [vmem:[%s244 + $0x558] sm:$0xf]
      %v615 = vld [vmem:[%s244 + $0x55c] sm:$0xf]
      %v616 = vld [vmem:[%s244 + $0x560] sm:$0xf]
      %v617 = vld [vmem:[%s244 + $0x564] sm:$0xf]
      %v618 = vld [vmem:[%s244 + $0x568] sm:$0xf]
      %v619 = vld [vmem:[%s244 + $0x56c] sm:$0xf]
      %v620 = vld [vmem:[%s244 + $0x570] sm:$0xf]
      %v621 = vld [vmem:[%s244 + $0x574] sm:$0xf]
      %v622 = vld [vmem:[%s244 + $0x578] sm:$0xf]
      %v623 = vld [vmem:[%s244 + $0x57c] sm:$0xf]
      %v624 = vld [vmem:[%s244 + $0x580] sm:$0xf]
      %v625 = vld [vmem:[%s244 + $0x584] sm:$0xf]
      %v626 = vld [vmem:[%s244 + $0x588] sm:$0xf]
      %v627 = vld [vmem:[%s244 + $0x58c] sm:$0xf]
      %v628 = vld [vmem:[%s244 + $0x590] sm:$0xf]
      %v629 = vld [vmem:[%s244 + $0x594] sm:$0xf]
      %v630 = vld [vmem:[%s244 + $0x598] sm:$0xf]
      %v631 = vld [vmem:[%s244 + $0x59c] sm:$0xf]
      %v632 = vld [vmem:[%s244 + $0x5a0] sm:$0xf]
      %v633 = vld [vmem:[%s244 + $0x5a4] sm:$0xf]
      %v634 = vld [vmem:[%s244 + $0x5a8] sm:$0xf]
      %v635 = vld [vmem:[%s244 + $0x5ac] sm:$0xf]
      %v636 = vld [vmem:[%s244 + $0x5b0] sm:$0xf]
      %v637 = vld [vmem:[%s244 + $0x5b4] sm:$0xf]
      %v638 = vld [vmem:[%s244 + $0x5b8] sm:$0xf]
      %v639 = vld [vmem:[%s244 + $0x5bc] sm:$0xf]
      %v640 = vld [vmem:[%s244 + $0x5c0] sm:$0xf]
      %v641 = vld [vmem:[%s244 + $0x5c4] sm:$0xf]
      %v642 = vld [vmem:[%s244 + $0x5c8] sm:$0xf]
      %v643 = vld [vmem:[%s244 + $0x5cc] sm:$0xf]
      %v644 = vld [vmem:[%s244 + $0x5d0] sm:$0xf]
      %v645 = vld [vmem:[%s244 + $0x5d4] sm:$0xf]
      %v646 = vld [vmem:[%s244 + $0x5d8] sm:$0xf]
      %v647 = vld [vmem:[%s244 + $0x5dc] sm:$0xf]
      %v648 = vld [vmem:[%s244 + $0x5e0] sm:$0xf]
      %v649 = vld [vmem:[%s244 + $0x5e4] sm:$0xf]
      %v650 = vld [vmem:[%s244 + $0x5e8] sm:$0xf]
      %v651 = vld [vmem:[%s244 + $0x5ec] sm:$0xf]
      %v652 = vld [vmem:[%s244 + $0x5f0] sm:$0xf]
      %v653 = vld [vmem:[%s244 + $0x5f4] sm:$0xf]
      %v654 = vld [vmem:[%s244 + $0x5f8] sm:$0xf]
      %v655 = vld [vmem:[%s244 + $0x5fc] sm:$0xf]
      %v656 = vld [vmem:[%s244 + $0x600] sm:$0xf]
      %v657 = vld [vmem:[%s244 + $0x604] sm:$0xf]
      %v658 = vld [vmem:[%s244 + $0x608] sm:$0xf]
      %v659 = vld [vmem:[%s244 + $0x60c] sm:$0xf]
      %v660 = vld [vmem:[%s244 + $0x610] sm:$0xf]
      %v661 = vld [vmem:[%s244 + $0x614] sm:$0xf]
      %v662 = vld [vmem:[%s244 + $0x618] sm:$0xf]
      %v663 = vld [vmem:[%s244 + $0x61c] sm:$0xf]
      %v664 = vld [vmem:[%s244 + $0x620] sm:$0xf]
      %v665 = vld [vmem:[%s244 + $0x624] sm:$0xf]
      %v666 = vld [vmem:[%s244 + $0x628] sm:$0xf]
      %v667 = vld [vmem:[%s244 + $0x62c] sm:$0xf]
      %v668 = vld [vmem:[%s244 + $0x630] sm:$0xf]
      %v669 = vld [vmem:[%s244 + $0x634] sm:$0xf]
      %v670 = vld [vmem:[%s244 + $0x638] sm:$0xf]
      %v671 = vld [vmem:[%s244 + $0x63c] sm:$0xf]
      %v672 = vld [vmem:[%s244 + $0x640] sm:$0xf]
      %v673 = vld [vmem:[%s244 + $0x644] sm:$0xf]
      %v674 = vld [vmem:[%s244 + $0x648] sm:$0xf]
      %v675 = vld [vmem:[%s244 + $0x64c] sm:$0xf]
      %v676 = vld [vmem:[%s244 + $0x650] sm:$0xf]
      %v677 = vld [vmem:[%s244 + $0x654] sm:$0xf]
      %v678 = vld [vmem:[%s244 + $0x658] sm:$0xf]
      %v679 = vld [vmem:[%s244 + $0x65c] sm:$0xf]
      %v680 = vld [vmem:[%s244 + $0x660] sm:$0xf]
      %v681 = vld [vmem:[%s244 + $0x664] sm:$0xf]
      %v682 = vld [vmem:[%s244 + $0x668] sm:$0xf]
      %v683 = vld [vmem:[%s244 + $0x66c] sm:$0xf]
      %v684 = vld [vmem:[%s244 + $0x670] sm:$0xf]
      %v685 = vld [vmem:[%s244 + $0x674] sm:$0xf]
      %v686 = vld [vmem:[%s244 + $0x678] sm:$0xf]
      %v687 = vld [vmem:[%s244 + $0x67c] sm:$0xf]
      %v688 = vld [vmem:[%s244 + $0x680] sm:$0xf]
      %v689 = vld [vmem:[%s244 + $0x684] sm:$0xf]
      %v690 = vld [vmem:[%s244 + $0x688] sm:$0xf]
      %v691 = vld [vmem:[%s244 + $0x68c] sm:$0xf]
      %v692 = vld [vmem:[%s244 + $0x690] sm:$0xf]
      %v693 = vld [vmem:[%s244 + $0x694] sm:$0xf]
      %v694 = vld [vmem:[%s244 + $0x698] sm:$0xf]
      %v695 = vld [vmem:[%s244 + $0x69c] sm:$0xf]
      %v696 = vld [vmem:[%s244 + $0x6a0] sm:$0xf]
      %v697 = vld [vmem:[%s244 + $0x6a4] sm:$0xf]
      %v698 = vld [vmem:[%s244 + $0x6a8] sm:$0xf]
      %v699 = vld [vmem:[%s244 + $0x6ac] sm:$0xf]
      %v700 = vld [vmem:[%s244 + $0x6b0] sm:$0xf]
      %v701 = vld [vmem:[%s244 + $0x6b4] sm:$0xf]
      %v702 = vld [vmem:[%s244 + $0x6b8] sm:$0xf]
      %v703 = vld [vmem:[%s244 + $0x6bc] sm:$0xf]
      %v704 = vld [vmem:[%s244 + $0x6c0] sm:$0xf]
      %v705 = vld [vmem:[%s244 + $0x6c4] sm:$0xf]
      %v706 = vld [vmem:[%s244 + $0x6c8] sm:$0xf]
      %v707 = vld [vmem:[%s244 + $0x6cc] sm:$0xf]
      %v708 = vld [vmem:[%s244 + $0x6d0] sm:$0xf]
      %v709 = vld [vmem:[%s244 + $0x6d4] sm:$0xf]
      %v710 = vld [vmem:[%s244 + $0x6d8] sm:$0xf]
      %v711 = vld [vmem:[%s244 + $0x6dc] sm:$0xf]
      %v712 = vld [vmem:[%s244 + $0x6e0] sm:$0xf]
      %v713 = vld [vmem:[%s244 + $0x6e4] sm:$0xf]
      %v714 = vld [vmem:[%s244 + $0x6e8] sm:$0xf]
      %v715 = vld [vmem:[%s244 + $0x6ec] sm:$0xf]
      %v716 = vld [vmem:[%s244 + $0x6f0] sm:$0xf]
      %v717 = vld [vmem:[%s244 + $0x6f4] sm:$0xf]
      %v718 = vld [vmem:[%s244 + $0x6f8] sm:$0xf]
      %v719 = vld [vmem:[%s244 + $0x6fc] sm:$0xf]
      %v720 = vld [vmem:[%s244 + $0x700] sm:$0xf]
      %v721 = vld [vmem:[%s244 + $0x704] sm:$0xf]
      %v722 = vld [vmem:[%s244 + $0x708] sm:$0xf]
      %v723 = vld [vmem:[%s244 + $0x70c] sm:$0xf]
      %v724 = vld [vmem:[%s244 + $0x710] sm:$0xf]
      %v725 = vld [vmem:[%s244 + $0x714] sm:$0xf]
      %v726 = vld [vmem:[%s244 + $0x718] sm:$0xf]
      %v727 = vld [vmem:[%s244 + $0x71c] sm:$0xf]
      %v728 = vld [vmem:[%s244 + $0x720] sm:$0xf]
      %v729 = vld [vmem:[%s244 + $0x724] sm:$0xf]
      %v730 = vld [vmem:[%s244 + $0x728] sm:$0xf]
      %v731 = vld [vmem:[%s244 + $0x72c] sm:$0xf]
      %v732 = vld [vmem:[%s244 + $0x730] sm:$0xf]
      %v733 = vld [vmem:[%s244 + $0x734] sm:$0xf]
      %v734 = vld [vmem:[%s244 + $0x738] sm:$0xf]
      %v735 = vld [vmem:[%s244 + $0x73c] sm:$0xf]
      %v736 = vld [vmem:[%s244 + $0x740] sm:$0xf]
      %v737 = vld [vmem:[%s244 + $0x744] sm:$0xf]
      %v738 = vld [vmem:[%s244 + $0x748] sm:$0xf]
      %v739 = vld [vmem:[%s244 + $0x74c] sm:$0xf]
      %v740 = vld [vmem:[%s244 + $0x750] sm:$0xf]
      %v741 = vld [vmem:[%s244 + $0x754] sm:$0xf]
      %v742 = vld [vmem:[%s244 + $0x758] sm:$0xf]
      %v743 = vld [vmem:[%s244 + $0x75c] sm:$0xf]
      %v744 = vld [vmem:[%s244 + $0x760] sm:$0xf]
      %v745 = vld [vmem:[%s244 + $0x764] sm:$0xf]
      %v746 = vld [vmem:[%s244 + $0x768] sm:$0xf]
      %v747 = vld [vmem:[%s244 + $0x76c] sm:$0xf]
      %v748 = vld [vmem:[%s244 + $0x770] sm:$0xf]
      %v749 = vld [vmem:[%s244 + $0x774] sm:$0xf]
      %v750 = vld [vmem:[%s244 + $0x778] sm:$0xf]
      %v751 = vld [vmem:[%s244 + $0x77c] sm:$0xf]
      %v752 = vld [vmem:[%s244 + $0x780] sm:$0xf]
      %v753 = vld [vmem:[%s244 + $0x784] sm:$0xf]
      %v754 = vld [vmem:[%s244 + $0x788] sm:$0xf]
      %v755 = vld [vmem:[%s244 + $0x78c] sm:$0xf]
      %v756 = vld [vmem:[%s244 + $0x790] sm:$0xf]
      %v757 = vld [vmem:[%s244 + $0x794] sm:$0xf]
      %v758 = vld [vmem:[%s244 + $0x798] sm:$0xf]
      %v759 = vld [vmem:[%s244 + $0x79c] sm:$0xf]
      %v760 = vld [vmem:[%s244 + $0x7a0] sm:$0xf]
      %v761 = vld [vmem:[%s244 + $0x7a4] sm:$0xf]
      %v762 = vld [vmem:[%s244 + $0x7a8] sm:$0xf]
      %v763 = vld [vmem:[%s244 + $0x7ac] sm:$0xf]
      %v764 = vld [vmem:[%s244 + $0x7b0] sm:$0xf]
      %v765 = vld [vmem:[%s244 + $0x7b4] sm:$0xf]
      %v766 = vld [vmem:[%s244 + $0x7b8] sm:$0xf]
      %v767 = vld [vmem:[%s244 + $0x7bc] sm:$0xf]
      %v768 = vld [vmem:[%s244 + $0x7c0] sm:$0xf]
      %v769 = vld [vmem:[%s244 + $0x7c4] sm:$0xf]
      %v770 = vld [vmem:[%s244 + $0x7c8] sm:$0xf]
      %v771 = vld [vmem:[%s244 + $0x7cc] sm:$0xf]
      %v772 = vld [vmem:[%s244 + $0x7d0] sm:$0xf]
      %v773 = vld [vmem:[%s244 + $0x7d4] sm:$0xf]
      %v774 = vld [vmem:[%s244 + $0x7d8] sm:$0xf]
      %v775 = vld [vmem:[%s244 + $0x7dc] sm:$0xf]
      %v776 = vld [vmem:[%s244 + $0x7e0] sm:$0xf]
      %v777 = vld [vmem:[%s244 + $0x7e4] sm:$0xf]
      %v778 = vld [vmem:[%s244 + $0x7e8] sm:$0xf]
      %v779 = vld [vmem:[%s244 + $0x7ec] sm:$0xf]
      %v780 = vld [vmem:[%s244 + $0x7f0] sm:$0xf]
      %v781 = vld [vmem:[%s244 + $0x7f4] sm:$0xf]
      %v782 = vld [vmem:[%s244 + $0x7f8] sm:$0xf]
      %v783 = vld [vmem:[%s244 + $0x7fc] sm:$0xf]
      %v784 = vld [vmem:[%s244 + $0x800] sm:$0xf]
      %v785 = vld [vmem:[%s244 + $0x804] sm:$0xf]
      %v786 = vld [vmem:[%s244 + $0x808] sm:$0xf]
      %v787 = vld [vmem:[%s244 + $0x80c] sm:$0xf]
      %v788 = vld [vmem:[%s244 + $0x810] sm:$0xf]
      %v789 = vld [vmem:[%s244 + $0x814] sm:$0xf]
      %v790 = vld [vmem:[%s244 + $0x818] sm:$0xf]
      %v791 = vld [vmem:[%s244 + $0x81c] sm:$0xf]
      %v792 = vld [vmem:[%s244 + $0x820] sm:$0xf]
      %v793 = vld [vmem:[%s244 + $0x824] sm:$0xf]
      %v794 = vld [vmem:[%s244 + $0x828] sm:$0xf]
      %v795 = vld [vmem:[%s244 + $0x82c] sm:$0xf]
      %v796 = vld [vmem:[%s244 + $0x830] sm:$0xf]
      %v797 = vld [vmem:[%s244 + $0x834] sm:$0xf]
      %v798 = vld [vmem:[%s244 + $0x838] sm:$0xf]
      %v799 = vld [vmem:[%s244 + $0x83c] sm:$0xf]
      %v800 = vld [vmem:[%s244 + $0x840] sm:$0xf]
      %v801 = vld [vmem:[%s244 + $0x844] sm:$0xf]
      %v802 = vld [vmem:[%s244 + $0x848] sm:$0xf]
      %v803 = vld [vmem:[%s244 + $0x84c] sm:$0xf]
      %v804 = vld [vmem:[%s244 + $0x850] sm:$0xf]
      %v805 = vld [vmem:[%s244 + $0x854] sm:$0xf]
      %v806 = vld [vmem:[%s244 + $0x858] sm:$0xf]
      %v807 = vld [vmem:[%s244 + $0x85c] sm:$0xf]
      %v808 = vld [vmem:[%s244 + $0x860] sm:$0xf]
      %v809 = vld [vmem:[%s244 + $0x864] sm:$0xf]
      %v810 = vld [vmem:[%s244 + $0x868] sm:$0xf]
      %v811 = vld [vmem:[%s244 + $0x86c] sm:$0xf]
      %v812 = vld [vmem:[%s244 + $0x870] sm:$0xf]
      %v813 = vld [vmem:[%s244 + $0x874] sm:$0xf]
      %v814 = vld [vmem:[%s244 + $0x878] sm:$0xf]
      %v815 = vld [vmem:[%s244 + $0x87c] sm:$0xf]
      %v816 = vld [vmem:[%s244 + $0x880] sm:$0xf]
      %v817 = vld [vmem:[%s244 + $0x884] sm:$0xf]
      %v818 = vld [vmem:[%s244 + $0x888] sm:$0xf]
      %v819 = vld [vmem:[%s244 + $0x88c] sm:$0xf]
      %v820 = vld [vmem:[%s244 + $0x890] sm:$0xf]
      %v821 = vld [vmem:[%s244 + $0x894] sm:$0xf]
      %v822 = vld [vmem:[%s244 + $0x898] sm:$0xf]
      %v823 = vld [vmem:[%s244 + $0x89c] sm:$0xf]
      %v824 = vld [vmem:[%s244 + $0x8a0] sm:$0xf]
      %v825 = vld [vmem:[%s244 + $0x8a4] sm:$0xf]
      %v826 = vld [vmem:[%s244 + $0x8a8] sm:$0xf]
      %v827 = vld [vmem:[%s244 + $0x8ac] sm:$0xf]
      %v828 = vld [vmem:[%s244 + $0x8b0] sm:$0xf]
      %v829 = vld [vmem:[%s244 + $0x8b4] sm:$0xf]
      %v830 = vld [vmem:[%s244 + $0x8b8] sm:$0xf]
      %v831 = vld [vmem:[%s244 + $0x8bc] sm:$0xf]
      %v832 = vld [vmem:[%s244 + $0x8c0] sm:$0xf]
      %v833 = vld [vmem:[%s244 + $0x8c4] sm:$0xf]
      %v834 = vld [vmem:[%s244 + $0x8c8] sm:$0xf]
      %v835 = vld [vmem:[%s244 + $0x8cc] sm:$0xf]
      %v836 = vld [vmem:[%s244 + $0x8d0] sm:$0xf]
      %v837 = vld [vmem:[%s244 + $0x8d4] sm:$0xf]
      %v838 = vld [vmem:[%s244 + $0x8d8] sm:$0xf]
      %v839 = vld [vmem:[%s244 + $0x8dc] sm:$0xf]
      %v840 = vld [vmem:[%s244 + $0x8e0] sm:$0xf]
      %v841 = vld [vmem:[%s244 + $0x8e4] sm:$0xf]
      %v842 = vld [vmem:[%s244 + $0x8e8] sm:$0xf]
      %v843 = vld [vmem:[%s244 + $0x8ec] sm:$0xf]
      %v844 = vld [vmem:[%s244 + $0x8f0] sm:$0xf]
      %v845 = vld [vmem:[%s244 + $0x8f4] sm:$0xf]
      %v846 = vld [vmem:[%s244 + $0x8f8] sm:$0xf]
      %v847 = vld [vmem:[%s244 + $0x8fc] sm:$0xf]
      %v848 = vld [vmem:[%s244 + $0x900] sm:$0xf]
      %v849 = vld [vmem:[%s244 + $0x904] sm:$0xf]
      %v850 = vld [vmem:[%s244 + $0x908] sm:$0xf]
      %v851 = vld [vmem:[%s244 + $0x90c] sm:$0xf]
      %v852 = vld [vmem:[%s244 + $0x910] sm:$0xf]
      %v853 = vld [vmem:[%s244 + $0x914] sm:$0xf]
      %v854 = vld [vmem:[%s244 + $0x918] sm:$0xf]
      %v855 = vld [vmem:[%s244 + $0x91c] sm:$0xf]
      %v856 = vld [vmem:[%s244 + $0x920] sm:$0xf]
      %v857 = vld [vmem:[%s244 + $0x924] sm:$0xf]
      %v858 = vld [vmem:[%s244 + $0x928] sm:$0xf]
      %v859 = vld [vmem:[%s244 + $0x92c] sm:$0xf]
      %v860 = vld [vmem:[%s244 + $0x930] sm:$0xf]
      %v861 = vld [vmem:[%s244 + $0x934] sm:$0xf]
      %v862 = vld [vmem:[%s244 + $0x938] sm:$0xf]
      %v863 = vld [vmem:[%s244 + $0x93c] sm:$0xf]
      %v864 = vld [vmem:[%s244 + $0x940] sm:$0xf]
      %v865 = vld [vmem:[%s244 + $0x944] sm:$0xf]
      %v866 = vld [vmem:[%s244 + $0x948] sm:$0xf]
      %v867 = vld [vmem:[%s244 + $0x94c] sm:$0xf]
      %v868 = vld [vmem:[%s244 + $0x950] sm:$0xf]
      %v869 = vld [vmem:[%s244 + $0x954] sm:$0xf]
      %v870 = vld [vmem:[%s244 + $0x958] sm:$0xf]
      %v871 = vld [vmem:[%s244 + $0x95c] sm:$0xf]
      %v872 = vld [vmem:[%s244 + $0x960] sm:$0xf]
      %v873 = vld [vmem:[%s244 + $0x964] sm:$0xf]
      %v874 = vld [vmem:[%s244 + $0x968] sm:$0xf]
      %v875 = vld [vmem:[%s244 + $0x96c] sm:$0xf]
      %v876 = vld [vmem:[%s244 + $0x970] sm:$0xf]
      %v877 = vld [vmem:[%s244 + $0x974] sm:$0xf]
      %v878 = vld [vmem:[%s244 + $0x978] sm:$0xf]
      %v879 = vld [vmem:[%s244 + $0x97c] sm:$0xf]
      %v880 = vld [vmem:[%s244 + $0x980] sm:$0xf]
      %v881 = vld [vmem:[%s244 + $0x984] sm:$0xf]
      %v882 = vld [vmem:[%s244 + $0x988] sm:$0xf]
      %v883 = vld [vmem:[%s244 + $0x98c] sm:$0xf]
      %v884 = vld [vmem:[%s244 + $0x990] sm:$0xf]
      %v885 = vld [vmem:[%s244 + $0x994] sm:$0xf]
      %v886 = vld [vmem:[%s244 + $0x998] sm:$0xf]
      %v887 = vld [vmem:[%s244 + $0x99c] sm:$0xf]
      %v888 = vld [vmem:[%s244 + $0x9a0] sm:$0xf]
      %v889 = vld [vmem:[%s244 + $0x9a4] sm:$0xf]
      %v890 = vld [vmem:[%s244 + $0x9a8] sm:$0xf]
      %v891 = vld [vmem:[%s244 + $0x9ac] sm:$0xf]
      %v892 = vld [vmem:[%s244 + $0x9b0] sm:$0xf]
      %v893 = vld [vmem:[%s244 + $0x9b4] sm:$0xf]
      %v894 = vld [vmem:[%s244 + $0x9b8] sm:$0xf]
      %v895 = vld [vmem:[%s244 + $0x9bc] sm:$0xf]
      %v896 = vld [vmem:[%s244 + $0x9c0] sm:$0xf]
      %v897 = vld [vmem:[%s244 + $0x9c4] sm:$0xf]
      %v898 = vld [vmem:[%s244 + $0x9c8] sm:$0xf]
      %v899 = vld [vmem:[%s244 + $0x9cc] sm:$0xf]
      %v900 = vld [vmem:[%s244 + $0x9d0] sm:$0xf]
      %v901 = vld [vmem:[%s244 + $0x9d4] sm:$0xf]
      %v902 = vld [vmem:[%s244 + $0x9d8] sm:$0xf]
      %v903 = vld [vmem:[%s244 + $0x9dc] sm:$0xf]
      %v904 = vld [vmem:[%s244 + $0x9e0] sm:$0xf]
      %v905 = vld [vmem:[%s244 + $0x9e4] sm:$0xf]
      %v906 = vld [vmem:[%s244 + $0x9e8] sm:$0xf]
      %v907 = vld [vmem:[%s244 + $0x9ec] sm:$0xf]
      %v908 = vld [vmem:[%s244 + $0x9f0] sm:$0xf]
      %v909 = vld [vmem:[%s244 + $0x9f4] sm:$0xf]
      %v910 = vld [vmem:[%s244 + $0x9f8] sm:$0xf]
      %v911 = vld [vmem:[%s244 + $0x9fc] sm:$0xf]
      %v912 = vld [vmem:[%s244 + $0xa00] sm:$0xf]
      %v913 = vld [vmem:[%s244 + $0xa04] sm:$0xf]
      %v914 = vld [vmem:[%s244 + $0xa08] sm:$0xf]
      %v915 = vld [vmem:[%s244 + $0xa0c] sm:$0xf]
      %v916 = vld [vmem:[%s244 + $0xa10] sm:$0xf]
      %v917 = vld [vmem:[%s244 + $0xa14] sm:$0xf]
      %v918 = vld [vmem:[%s244 + $0xa18] sm:$0xf]
      %v919 = vld [vmem:[%s244 + $0xa1c] sm:$0xf]
      %v920 = vld [vmem:[%s244 + $0xa20] sm:$0xf]
      %v921 = vld [vmem:[%s244 + $0xa24] sm:$0xf]
      %v922 = vld [vmem:[%s244 + $0xa28] sm:$0xf]
      %v923 = vld [vmem:[%s244 + $0xa2c] sm:$0xf]
      %v924 = vld [vmem:[%s244 + $0xa30] sm:$0xf]
      %v925 = vld [vmem:[%s244 + $0xa34] sm:$0xf]
      %v926 = vld [vmem:[%s244 + $0xa38] sm:$0xf]
      %v927 = vld [vmem:[%s244 + $0xa3c] sm:$0xf]
      %v928 = vld [vmem:[%s244 + $0xa40] sm:$0xf]
      %v929 = vld [vmem:[%s244 + $0xa44] sm:$0xf]
      %v930 = vld [vmem:[%s244 + $0xa48] sm:$0xf]
      %v931 = vld [vmem:[%s244 + $0xa4c] sm:$0xf]
      %v932 = vld [vmem:[%s244 + $0xa50] sm:$0xf]
      %v933 = vld [vmem:[%s244 + $0xa54] sm:$0xf]
      %v934 = vld [vmem:[%s244 + $0xa58] sm:$0xf]
      %v935 = vld [vmem:[%s244 + $0xa5c] sm:$0xf]
      %v936 = vld [vmem:[%s244 + $0xa60] sm:$0xf]
      %v937 = vld [vmem:[%s244 + $0xa64] sm:$0xf]
      %v938 = vld [vmem:[%s244 + $0xa68] sm:$0xf]
      %v939 = vld [vmem:[%s244 + $0xa6c] sm:$0xf]
      %v940 = vld [vmem:[%s244 + $0xa70] sm:$0xf]
      %v941 = vld [vmem:[%s244 + $0xa74] sm:$0xf]
      %v942 = vld [vmem:[%s244 + $0xa78] sm:$0xf]
      %v943 = vld [vmem:[%s244 + $0xa7c] sm:$0xf]
      %v944 = vld [vmem:[%s244 + $0xa80] sm:$0xf]
      %v945 = vld [vmem:[%s244 + $0xa84] sm:$0xf]
      %v946 = vld [vmem:[%s244 + $0xa88] sm:$0xf]
      %v947 = vld [vmem:[%s244 + $0xa8c] sm:$0xf]
      %v948 = vld [vmem:[%s244 + $0xa90] sm:$0xf]
      %v949 = vld [vmem:[%s244 + $0xa94] sm:$0xf]
      %v950 = vld [vmem:[%s244 + $0xa98] sm:$0xf]
      %v951 = vld [vmem:[%s244 + $0xa9c] sm:$0xf]
      %v952 = vld [vmem:[%s244 + $0xaa0] sm:$0xf]
      %v953 = vld [vmem:[%s244 + $0xaa4] sm:$0xf]
      %v954 = vld [vmem:[%s244 + $0xaa8] sm:$0xf]
      %v955 = vld [vmem:[%s244 + $0xaac] sm:$0xf]
      %v956 = vld [vmem:[%s244 + $0xab0] sm:$0xf]
      %v957 = vld [vmem:[%s244 + $0xab4] sm:$0xf]
      %v958 = vld [vmem:[%s244 + $0xab8] sm:$0xf]
      %v959 = vld [vmem:[%s244 + $0xabc] sm:$0xf]
      %v960 = vld [vmem:[%s244 + $0xac0] sm:$0xf]
      %v961 = vld [vmem:[%s244 + $0xac4] sm:$0xf]
      %v962 = vld [vmem:[%s244 + $0xac8] sm:$0xf]
      %v963 = vld [vmem:[%s244 + $0xacc] sm:$0xf]
      %v964 = vld [vmem:[%s244 + $0xad0] sm:$0xf]
      %v965 = vld [vmem:[%s244 + $0xad4] sm:$0xf]
      %v966 = vld [vmem:[%s244 + $0xad8] sm:$0xf]
      %v967 = vld [vmem:[%s244 + $0xadc] sm:$0xf]
      %v968 = vld [vmem:[%s244 + $0xae0] sm:$0xf]
      %v969 = vld [vmem:[%s244 + $0xae4] sm:$0xf]
      %v970 = vld [vmem:[%s244 + $0xae8] sm:$0xf]
      %v971 = vld [vmem:[%s244 + $0xaec] sm:$0xf]
      %v972 = vld [vmem:[%s244 + $0xaf0] sm:$0xf]
      %v973 = vld [vmem:[%s244 + $0xaf4] sm:$0xf]
      %v974 = vld [vmem:[%s244 + $0xaf8] sm:$0xf]
      %v975 = vld [vmem:[%s244 + $0xafc] sm:$0xf]
      %v976 = vld [vmem:[%s244 + $0xb00] sm:$0xf]
      %v977 = vld [vmem:[%s244 + $0xb04] sm:$0xf]
      %v978 = vld [vmem:[%s244 + $0xb08] sm:$0xf]
      %v979 = vld [vmem:[%s244 + $0xb0c] sm:$0xf]
      %v980 = vld [vmem:[%s244 + $0xb10] sm:$0xf]
      %v981 = vld [vmem:[%s244 + $0xb14] sm:$0xf]
      %v982 = vld [vmem:[%s244 + $0xb18] sm:$0xf]
      %v983 = vld [vmem:[%s244 + $0xb1c] sm:$0xf]
      %v984 = vld [vmem:[%s244 + $0xb20] sm:$0xf]
      %v985 = vld [vmem:[%s244 + $0xb24] sm:$0xf]
      %v986 = vld [vmem:[%s244 + $0xb28] sm:$0xf]
      %v987 = vld [vmem:[%s244 + $0xb2c] sm:$0xf]
      %v988 = vld [vmem:[%s244 + $0xb30] sm:$0xf]
      %v989 = vld [vmem:[%s244 + $0xb34] sm:$0xf]
      %v990 = vld [vmem:[%s244 + $0xb38] sm:$0xf]
      %v991 = vld [vmem:[%s244 + $0xb3c] sm:$0xf]
      %v992 = vld [vmem:[%s244 + $0xb40] sm:$0xf]
      %v993 = vld [vmem:[%s244 + $0xb44] sm:$0xf]
      %v994 = vld [vmem:[%s244 + $0xb48] sm:$0xf]
      %v995 = vld [vmem:[%s244 + $0xb4c] sm:$0xf]
      %v996 = vld [vmem:[%s244 + $0xb50] sm:$0xf]
      %v997 = vld [vmem:[%s244 + $0xb54] sm:$0xf]
      %v998 = vld [vmem:[%s244 + $0xb58] sm:$0xf]
      %v999 = vld [vmem:[%s244 + $0xb5c] sm:$0xf]
      %v1000 = vld [vmem:[%s244 + $0xb60] sm:$0xf]
      %v1001 = vld [vmem:[%s244 + $0xb64] sm:$0xf]
      %v1002 = vld [vmem:[%s244 + $0xb68] sm:$0xf]
      %v1003 = vld [vmem:[%s244 + $0xb6c] sm:$0xf]
      %v1004 = vld [vmem:[%s244 + $0xb70] sm:$0xf]
      %v1005 = vld [vmem:[%s244 + $0xb74] sm:$0xf]
      %v1006 = vld [vmem:[%s244 + $0xb78] sm:$0xf]
      %v1007 = vld [vmem:[%s244 + $0xb7c] sm:$0xf]
      %v1008 = vld [vmem:[%s244 + $0xb80] sm:$0xf]
      %v1009 = vld [vmem:[%s244 + $0xb84] sm:$0xf]
      %v1010 = vld [vmem:[%s244 + $0xb88] sm:$0xf]
      %v1011 = vld [vmem:[%s244 + $0xb8c] sm:$0xf]
      %v1012 = vld [vmem:[%s244 + $0xb90] sm:$0xf]
      %v1013 = vld [vmem:[%s244 + $0xb94] sm:$0xf]
      %v1014 = vld [vmem:[%s244 + $0xb98] sm:$0xf]
      %v1015 = vld [vmem:[%s244 + $0xb9c] sm:$0xf]
      %v1016 = vld [vmem:[%s244 + $0xba0] sm:$0xf]
      %v1017 = vld [vmem:[%s244 + $0xba4] sm:$0xf]
      %v1018 = vld [vmem:[%s244 + $0xba8] sm:$0xf]
      %v1019 = vld [vmem:[%s244 + $0xbac] sm:$0xf]
      %v1020 = vld [vmem:[%s244 + $0xbb0] sm:$0xf]
      %v1021 = vld [vmem:[%s244 + $0xbb4] sm:$0xf]
      %v1022 = vld [vmem:[%s244 + $0xbb8] sm:$0xf]
      %v1023 = vld [vmem:[%s244 + $0xbbc] sm:$0xf]
      %v1024 = vld [vmem:[%s244 + $0xbc0] sm:$0xf]
      %v1025 = vld [vmem:[%s244 + $0xbc4] sm:$0xf]
      %v1026 = vld [vmem:[%s244 + $0xbc8] sm:$0xf]
      %v1027 = vld [vmem:[%s244 + $0xbcc] sm:$0xf]
      %v1028 = vld [vmem:[%s244 + $0xbd0] sm:$0xf]
      %v1029 = vld [vmem:[%s244 + $0xbd4] sm:$0xf]
      %v1030 = vld [vmem:[%s244 + $0xbd8] sm:$0xf]
      %v1031 = vld [vmem:[%s244 + $0xbdc] sm:$0xf]
      %v1032 = vld [vmem:[%s244 + $0xbe0] sm:$0xf]
      %v1033 = vld [vmem:[%s244 + $0xbe4] sm:$0xf]
      %v1034 = vld [vmem:[%s244 + $0xbe8] sm:$0xf]
      %v1035 = vld [vmem:[%s244 + $0xbec] sm:$0xf]
      %v1036 = vld [vmem:[%s244 + $0xbf0] sm:$0xf]
      %v1037 = vld [vmem:[%s244 + $0xbf4] sm:$0xf]
      %v1038 = vld [vmem:[%s244 + $0xbf8] sm:$0xf]
      %v1039 = vld [vmem:[%s244 + $0xbfc] sm:$0xf]
      %v1040 = vld [vmem:[%s244 + $0xc00] sm:$0xf]
      %v1041 = vld [vmem:[%s244 + $0xc04] sm:$0xf]
      %v1042 = vld [vmem:[%s244 + $0xc08] sm:$0xf]
      %v1043 = vld [vmem:[%s244 + $0xc0c] sm:$0xf]
      %v1044 = vld [vmem:[%s244 + $0xc10] sm:$0xf]
      %v1045 = vld [vmem:[%s244 + $0xc14] sm:$0xf]
      %v1046 = vld [vmem:[%s244 + $0xc18] sm:$0xf]
      %v1047 = vld [vmem:[%s244 + $0xc1c] sm:$0xf]
      %v1048 = vld [vmem:[%s244 + $0xc20] sm:$0xf]
      %v1049 = vld [vmem:[%s244 + $0xc24] sm:$0xf]
      %v1050 = vld [vmem:[%s244 + $0xc28] sm:$0xf]
      %v1051 = vld [vmem:[%s244 + $0xc2c] sm:$0xf]
      %v1052 = vld [vmem:[%s244 + $0xc30] sm:$0xf]
      %v1053 = vld [vmem:[%s244 + $0xc34] sm:$0xf]
      %v1054 = vld [vmem:[%s244 + $0xc38] sm:$0xf]
      %v1055 = vld [vmem:[%s244 + $0xc3c] sm:$0xf]
      %v1056 = vld [vmem:[%s244 + $0xc40] sm:$0xf]
      %v1057 = vld [vmem:[%s244 + $0xc44] sm:$0xf]
      %v1058 = vld [vmem:[%s244 + $0xc48] sm:$0xf]
      %v1059 = vld [vmem:[%s244 + $0xc4c] sm:$0xf]
      %v1060 = vld [vmem:[%s244 + $0xc50] sm:$0xf]
      %v1061 = vld [vmem:[%s244 + $0xc54] sm:$0xf]
      %v1062 = vld [vmem:[%s244 + $0xc58] sm:$0xf]
      %v1063 = vld [vmem:[%s244 + $0xc5c] sm:$0xf]
      %v1064 = vld [vmem:[%s244 + $0xc60] sm:$0xf]
      %v1065 = vld [vmem:[%s244 + $0xc64] sm:$0xf]
      %v1066 = vld [vmem:[%s244 + $0xc68] sm:$0xf]
      %v1067 = vld [vmem:[%s244 + $0xc6c] sm:$0xf]
      %v1068 = vld [vmem:[%s244 + $0xc70] sm:$0xf]
      %v1069 = vld [vmem:[%s244 + $0xc74] sm:$0xf]
      %v1070 = vld [vmem:[%s244 + $0xc78] sm:$0xf]
      %v1071 = vld [vmem:[%s244 + $0xc7c] sm:$0xf]
      %v1072 = vld [vmem:[%s244 + $0xc80] sm:$0xf]
      %v1073 = vld [vmem:[%s244 + $0xc84] sm:$0xf]
      %v1074 = vld [vmem:[%s244 + $0xc88] sm:$0xf]
      %v1075 = vld [vmem:[%s244 + $0xc8c] sm:$0xf]
      %v1076 = vld [vmem:[%s244 + $0xc90] sm:$0xf]
      %v1077 = vld [vmem:[%s244 + $0xc94] sm:$0xf]
      %v1078 = vld [vmem:[%s244 + $0xc98] sm:$0xf]
      %v1079 = vld [vmem:[%s244 + $0xc9c] sm:$0xf]
      %v1080 = vld [vmem:[%s244 + $0xca0] sm:$0xf]
      %v1081 = vld [vmem:[%s244 + $0xca4] sm:$0xf]
      %v1082 = vld [vmem:[%s244 + $0xca8] sm:$0xf]
      %v1083 = vld [vmem:[%s244 + $0xcac] sm:$0xf]
      %v1084 = vld [vmem:[%s244 + $0xcb0] sm:$0xf]
      %v1085 = vld [vmem:[%s244 + $0xcb4] sm:$0xf]
      %v1086 = vld [vmem:[%s244 + $0xcb8] sm:$0xf]
      %v1087 = vld [vmem:[%s244 + $0xcbc] sm:$0xf]
      %v1088 = vld [vmem:[%s244 + $0xcc0] sm:$0xf]
      %v1089 = vld [vmem:[%s244 + $0xcc4] sm:$0xf]
      %v1090 = vld [vmem:[%s244 + $0xcc8] sm:$0xf]
      %v1091 = vld [vmem:[%s244 + $0xccc] sm:$0xf]
      %v1092 = vld [vmem:[%s244 + $0xcd0] sm:$0xf]
      %v1093 = vld [vmem:[%s244 + $0xcd4] sm:$0xf]
      %v1094 = vld [vmem:[%s244 + $0xcd8] sm:$0xf]
      %v1095 = vld [vmem:[%s244 + $0xcdc] sm:$0xf]
      %v1096 = vld [vmem:[%s244 + $0xce0] sm:$0xf]
      %v1097 = vld [vmem:[%s244 + $0xce4] sm:$0xf]
      %v1098 = vld [vmem:[%s244 + $0xce8] sm:$0xf]
      %v1099 = vld [vmem:[%s244 + $0xcec] sm:$0xf]
      %v1100 = vld [vmem:[%s244 + $0xcf0] sm:$0xf]
      %v1101 = vld [vmem:[%s244 + $0xcf4] sm:$0xf]
      %v1102 = vld [vmem:[%s244 + $0xcf8] sm:$0xf]
      %v1103 = vld [vmem:[%s244 + $0xcfc] sm:$0xf]
      %v1104 = vld [vmem:[%s244 + $0xd00] sm:$0xf]
      %v1105 = vld [vmem:[%s244 + $0xd04] sm:$0xf]
      %v1106 = vld [vmem:[%s244 + $0xd08] sm:$0xf]
      %v1107 = vld [vmem:[%s244 + $0xd0c] sm:$0xf]
      %v1108 = vld [vmem:[%s244 + $0xd10] sm:$0xf]
      %v1109 = vld [vmem:[%s244 + $0xd14] sm:$0xf]
      %v1110 = vld [vmem:[%s244 + $0xd18] sm:$0xf]
      %v1111 = vld [vmem:[%s244 + $0xd1c] sm:$0xf]
      %v1112 = vld [vmem:[%s244 + $0xd20] sm:$0xf]
      %v1113 = vld [vmem:[%s244 + $0xd24] sm:$0xf]
      %v1114 = vld [vmem:[%s244 + $0xd28] sm:$0xf]
      %v1115 = vld [vmem:[%s244 + $0xd2c] sm:$0xf]
      %v1116 = vld [vmem:[%s244 + $0xd30] sm:$0xf]
      %v1117 = vld [vmem:[%s244 + $0xd34] sm:$0xf]
      %v1118 = vld [vmem:[%s244 + $0xd38] sm:$0xf]
      %v1119 = vld [vmem:[%s244 + $0xd3c] sm:$0xf]
      %v1120 = vld [vmem:[%s244 + $0xd40] sm:$0xf]
      %v1121 = vld [vmem:[%s244 + $0xd44] sm:$0xf]
      %v1122 = vld [vmem:[%s244 + $0xd48] sm:$0xf]
      %v1123 = vld [vmem:[%s244 + $0xd4c] sm:$0xf]
      %v1124 = vld [vmem:[%s244 + $0xd50] sm:$0xf]
      %v1125 = vld [vmem:[%s244 + $0xd54] sm:$0xf]
      %v1126 = vld [vmem:[%s244 + $0xd58] sm:$0xf]
      %v1127 = vld [vmem:[%s244 + $0xd5c] sm:$0xf]
      %v1128 = vld [vmem:[%s244 + $0xd60] sm:$0xf]
      %v1129 = vld [vmem:[%s244 + $0xd64] sm:$0xf]
      %v1130 = vld [vmem:[%s244 + $0xd68] sm:$0xf]
      %v1131 = vld [vmem:[%s244 + $0xd6c] sm:$0xf]
      %v1132 = vld [vmem:[%s244 + $0xd70] sm:$0xf]
      %v1133 = vld [vmem:[%s244 + $0xd74] sm:$0xf]
      %v1134 = vld [vmem:[%s244 + $0xd78] sm:$0xf]
      %v1135 = vld [vmem:[%s244 + $0xd7c] sm:$0xf]
      %v1136 = vld [vmem:[%s244 + $0xd80] sm:$0xf]
      %v1137 = vld [vmem:[%s244 + $0xd84] sm:$0xf]
      %v1138 = vld [vmem:[%s244 + $0xd88] sm:$0xf]
      %v1139 = vld [vmem:[%s244 + $0xd8c] sm:$0xf]
      %v1140 = vld [vmem:[%s244 + $0xd90] sm:$0xf]
      %v1141 = vld [vmem:[%s244 + $0xd94] sm:$0xf]
      %v1142 = vld [vmem:[%s244 + $0xd98] sm:$0xf]
      %v1143 = vld [vmem:[%s244 + $0xd9c] sm:$0xf]
      %v1144 = vld [vmem:[%s244 + $0xda0] sm:$0xf]
      %v1145 = vld [vmem:[%s244 + $0xda4] sm:$0xf]
      %v1146 = vld [vmem:[%s244 + $0xda8] sm:$0xf]
      %v1147 = vld [vmem:[%s244 + $0xdac] sm:$0xf]
      %v1148 = vld [vmem:[%s244 + $0xdb0] sm:$0xf]
      %v1149 = vld [vmem:[%s244 + $0xdb4] sm:$0xf]
      %v1150 = vld [vmem:[%s244 + $0xdb8] sm:$0xf]
      %v1151 = vld [vmem:[%s244 + $0xdbc] sm:$0xf]
      %v1152 = vld [vmem:[%s244 + $0xdc0] sm:$0xf]
      %v1153 = vld [vmem:[%s244 + $0xdc4] sm:$0xf]
      %v1154 = vld [vmem:[%s244 + $0xdc8] sm:$0xf]
      %v1155 = vld [vmem:[%s244 + $0xdcc] sm:$0xf]
      %v1156 = vld [vmem:[%s244 + $0xdd0] sm:$0xf]
      %v1157 = vld [vmem:[%s244 + $0xdd4] sm:$0xf]
      %v1158 = vld [vmem:[%s244 + $0xdd8] sm:$0xf]
      %v1159 = vld [vmem:[%s244 + $0xddc] sm:$0xf]
      %v1160 = vld [vmem:[%s244 + $0xde0] sm:$0xf]
      %v1161 = vld [vmem:[%s244 + $0xde4] sm:$0xf]
      %v1162 = vld [vmem:[%s244 + $0xde8] sm:$0xf]
      %v1163 = vld [vmem:[%s244 + $0xdec] sm:$0xf]
      %v1164 = vld [vmem:[%s244 + $0xdf0] sm:$0xf]
      %v1165 = vld [vmem:[%s244 + $0xdf4] sm:$0xf]
      %v1166 = vld [vmem:[%s244 + $0xdf8] sm:$0xf]
      %v1167 = vld [vmem:[%s244 + $0xdfc] sm:$0xf]
      %v1168 = vld [vmem:[%s244 + $0xe00] sm:$0xf]
      %v1169 = vld [vmem:[%s244 + $0xe04] sm:$0xf]
      %v1170 = vld [vmem:[%s244 + $0xe08] sm:$0xf]
      %v1171 = vld [vmem:[%s244 + $0xe0c] sm:$0xf]
      %v1172 = vld [vmem:[%s244 + $0xe10] sm:$0xf]
      %v1173 = vld [vmem:[%s244 + $0xe14] sm:$0xf]
      %v1174 = vld [vmem:[%s244 + $0xe18] sm:$0xf]
      %v1175 = vld [vmem:[%s244 + $0xe1c] sm:$0xf]
      %v1176 = vld [vmem:[%s244 + $0xe20] sm:$0xf]
      %v1177 = vld [vmem:[%s244 + $0xe24] sm:$0xf]
      %v1178 = vld [vmem:[%s244 + $0xe28] sm:$0xf]
      %v1179 = vld [vmem:[%s244 + $0xe2c] sm:$0xf]
      %v1180 = vld [vmem:[%s244 + $0xe30] sm:$0xf]
      %v1181 = vld [vmem:[%s244 + $0xe34] sm:$0xf]
      %v1182 = vld [vmem:[%s244 + $0xe38] sm:$0xf]
      %v1183 = vld [vmem:[%s244 + $0xe3c] sm:$0xf]
      %v1184 = vld [vmem:[%s244 + $0xe40] sm:$0xf]
      %v1185 = vld [vmem:[%s244 + $0xe44] sm:$0xf]
      %v1186 = vld [vmem:[%s244 + $0xe48] sm:$0xf]
      %v1187 = vld [vmem:[%s244 + $0xe4c] sm:$0xf]
      %v1188 = vld [vmem:[%s244 + $0xe50] sm:$0xf]
      %v1189 = vld [vmem:[%s244 + $0xe54] sm:$0xf]
      %v1190 = vld [vmem:[%s244 + $0xe58] sm:$0xf]
      %v1191 = vld [vmem:[%s244 + $0xe5c] sm:$0xf]
      %v1192 = vld [vmem:[%s244 + $0xe60] sm:$0xf]
      %v1193 = vld [vmem:[%s244 + $0xe64] sm:$0xf]
      %v1194 = vld [vmem:[%s244 + $0xe68] sm:$0xf]
      %v1195 = vld [vmem:[%s244 + $0xe6c] sm:$0xf]
      %v1196 = vld [vmem:[%s244 + $0xe70] sm:$0xf]
      %v1197 = vld [vmem:[%s244 + $0xe74] sm:$0xf]
      %v1198 = vld [vmem:[%s244 + $0xe78] sm:$0xf]
      %v1199 = vld [vmem:[%s244 + $0xe7c] sm:$0xf]
      %v1200 = vld [vmem:[%s244 + $0xe80] sm:$0xf]
      %v1201 = vld [vmem:[%s244 + $0xe84] sm:$0xf]
      %v1202 = vld [vmem:[%s244 + $0xe88] sm:$0xf]
      %v1203 = vld [vmem:[%s244 + $0xe8c] sm:$0xf]
      %v1204 = vld [vmem:[%s244 + $0xe90] sm:$0xf]
      %v1205 = vld [vmem:[%s244 + $0xe94] sm:$0xf]
      %v1206 = vld [vmem:[%s244 + $0xe98] sm:$0xf]
      %v1207 = vld [vmem:[%s244 + $0xe9c] sm:$0xf]
      %v1208 = vld [vmem:[%s244 + $0xea0] sm:$0xf]
      %v1209 = vld [vmem:[%s244 + $0xea4] sm:$0xf]
      %v1210 = vld [vmem:[%s244 + $0xea8] sm:$0xf]
      %v1211 = vld [vmem:[%s244 + $0xeac] sm:$0xf]
      %v1212 = vld [vmem:[%s244 + $0xeb0] sm:$0xf]
      %v1213 = vld [vmem:[%s244 + $0xeb4] sm:$0xf]
      %v1214 = vld [vmem:[%s244 + $0xeb8] sm:$0xf]
      %v1215 = vld [vmem:[%s244 + $0xebc] sm:$0xf]
      %v1216 = vld [vmem:[%s244 + $0xec0] sm:$0xf]
      %v1217 = vld [vmem:[%s244 + $0xec4] sm:$0xf]
      %v1218 = vld [vmem:[%s244 + $0xec8] sm:$0xf]
      %v1219 = vld [vmem:[%s244 + $0xecc] sm:$0xf]
      %v1220 = vld [vmem:[%s244 + $0xed0] sm:$0xf]
      %v1221 = vld [vmem:[%s244 + $0xed4] sm:$0xf]
      %v1222 = vld [vmem:[%s244 + $0xed8] sm:$0xf]
      %v1223 = vld [vmem:[%s244 + $0xedc] sm:$0xf]
      %v1224 = vld [vmem:[%s244 + $0xee0] sm:$0xf]
      %v1225 = vld [vmem:[%s244 + $0xee4] sm:$0xf]
      %v1226 = vld [vmem:[%s244 + $0xee8] sm:$0xf]
      %v1227 = vld [vmem:[%s244 + $0xeec] sm:$0xf]
      %v1228 = vld [vmem:[%s244 + $0xef0] sm:$0xf]
      %v1229 = vld [vmem:[%s244 + $0xef4] sm:$0xf]
      %v1230 = vld [vmem:[%s244 + $0xef8] sm:$0xf]
      %v1231 = vld [vmem:[%s244 + $0xefc] sm:$0xf]
      %v1232 = vld [vmem:[%s244 + $0xf00] sm:$0xf]
      %v1233 = vld [vmem:[%s244 + $0xf04] sm:$0xf]
      %v1234 = vld [vmem:[%s244 + $0xf08] sm:$0xf]
      %v1235 = vld [vmem:[%s244 + $0xf0c] sm:$0xf]
      %v1236 = vld [vmem:[%s244 + $0xf10] sm:$0xf]
      %v1237 = vld [vmem:[%s244 + $0xf14] sm:$0xf]
      %v1238 = vld [vmem:[%s244 + $0xf18] sm:$0xf]
      %v1239 = vld [vmem:[%s244 + $0xf1c] sm:$0xf]
      %v1240 = vld [vmem:[%s244 + $0xf20] sm:$0xf]
      %v1241 = vld [vmem:[%s244 + $0xf24] sm:$0xf]
      %v1242 = vld [vmem:[%s244 + $0xf28] sm:$0xf]
      %v1243 = vld [vmem:[%s244 + $0xf2c] sm:$0xf]
      %v1244 = vld [vmem:[%s244 + $0xf30] sm:$0xf]
      %v1245 = vld [vmem:[%s244 + $0xf34] sm:$0xf]
      %v1246 = vld [vmem:[%s244 + $0xf38] sm:$0xf]
      %v1247 = vld [vmem:[%s244 + $0xf3c] sm:$0xf]
      %v1248 = vld [vmem:[%s244 + $0xf40] sm:$0xf]
      %v1249 = vld [vmem:[%s244 + $0xf44] sm:$0xf]
      %v1250 = vld [vmem:[%s244 + $0xf48] sm:$0xf]
      %v1251 = vld [vmem:[%s244 + $0xf4c] sm:$0xf]
      %v1252 = vld [vmem:[%s244 + $0xf50] sm:$0xf]
      %v1253 = vld [vmem:[%s244 + $0xf54] sm:$0xf]
      %v1254 = vld [vmem:[%s244 + $0xf58] sm:$0xf]
      %v1255 = vld [vmem:[%s244 + $0xf5c] sm:$0xf]
      %v1256 = vld [vmem:[%s244 + $0xf60] sm:$0xf]
      %v1257 = vld [vmem:[%s244 + $0xf64] sm:$0xf]
      %v1258 = vld [vmem:[%s244 + $0xf68] sm:$0xf]
      %v1259 = vld [vmem:[%s244 + $0xf6c] sm:$0xf]
      %v1260 = vld [vmem:[%s244 + $0xf70] sm:$0xf]
      %v1261 = vld [vmem:[%s244 + $0xf74] sm:$0xf]
      %v1262 = vld [vmem:[%s244 + $0xf78] sm:$0xf]
      %v1263 = vld [vmem:[%s244 + $0xf7c] sm:$0xf]
      %v1264 = vld [vmem:[%s244 + $0xf80] sm:$0xf]
      %v1265 = vld [vmem:[%s244 + $0xf84] sm:$0xf]
      %v1266 = vld [vmem:[%s244 + $0xf88] sm:$0xf]
      %v1267 = vld [vmem:[%s244 + $0xf8c] sm:$0xf]
      %v1268 = vld [vmem:[%s244 + $0xf90] sm:$0xf]
      %v1269 = vld [vmem:[%s244 + $0xf94] sm:$0xf]
      %v1270 = vld [vmem:[%s244 + $0xf98] sm:$0xf]
      %v1271 = vld [vmem:[%s244 + $0xf9c] sm:$0xf]
      %v1272 = vld [vmem:[%s244 + $0xfa0] sm:$0xf]
      %v1273 = vld [vmem:[%s244 + $0xfa4] sm:$0xf]
      %v1274 = vld [vmem:[%s244 + $0xfa8] sm:$0xf]
      %v1275 = vld [vmem:[%s244 + $0xfac] sm:$0xf]
      %v1276 = vld [vmem:[%s244 + $0xfb0] sm:$0xf]
      %v1277 = vld [vmem:[%s244 + $0xfb4] sm:$0xf]
      %v1278 = vld [vmem:[%s244 + $0xfb8] sm:$0xf]
      %v1279 = vld [vmem:[%s244 + $0xfbc] sm:$0xf]
      %v1280 = vld [vmem:[%s244 + $0xfc0] sm:$0xf]
      %v1281 = vld [vmem:[%s244 + $0xfc4] sm:$0xf]
      %v1282 = vld [vmem:[%s244 + $0xfc8] sm:$0xf]
      %v1283 = vld [vmem:[%s244 + $0xfcc] sm:$0xf]
      %v1284 = vld [vmem:[%s244 + $0xfd0] sm:$0xf]
      %v1285 = vld [vmem:[%s244 + $0xfd4] sm:$0xf]
      %v1286 = vld [vmem:[%s244 + $0xfd8] sm:$0xf]
      %v1287 = vld [vmem:[%s244 + $0xfdc] sm:$0xf]
      %v1288 = vld [vmem:[%s244 + $0xfe0] sm:$0xf]
      %v1289 = vld [vmem:[%s244 + $0xfe4] sm:$0xf]
      %v1290 = vld [vmem:[%s244 + $0xfe8] sm:$0xf]
      %v1291 = vld [vmem:[%s244 + $0xfec] sm:$0xf]
      %v1292 = vld [vmem:[%s244 + $0xff0] sm:$0xf]
      %v1293 = vld [vmem:[%s244 + $0xff4] sm:$0xf]
      %v1294 = vld [vmem:[%s244 + $0xff8] sm:$0xf]
      %v1295 = vld [vmem:[%s244 + $0xffc] sm:$0xf]
      %v1296 = vld [vmem:[%s244 + $0x1000] sm:$0xf]
      %v1297 = vld [vmem:[%s244 + $0x1004] sm:$0xf]
      %v1298 = vld [vmem:[%s244 + $0x1008] sm:$0xf]
      %v1299 = vld [vmem:[%s244 + $0x100c] sm:$0xf]
      %v1300 = vld [vmem:[%s244 + $0x1010] sm:$0xf]
      %v1301 = vld [vmem:[%s244 + $0x1014] sm:$0xf]
      %v1302 = vld [vmem:[%s244 + $0x1018] sm:$0xf]
      %v1303 = vld [vmem:[%s244 + $0x101c] sm:$0xf]
      %v1304 = vld [vmem:[%s244 + $0x1020] sm:$0xf]
      %v1305 = vld [vmem:[%s244 + $0x1024] sm:$0xf]
      %v1306 = vld [vmem:[%s244 + $0x1028] sm:$0xf]
      %v1307 = vld [vmem:[%s244 + $0x102c] sm:$0xf]
      %v1308 = vld [vmem:[%s244 + $0x1030] sm:$0xf]
      %v1309 = vld [vmem:[%s244 + $0x1034] sm:$0xf]
      %v1310 = vld [vmem:[%s244 + $0x1038] sm:$0xf]
      %v1311 = vld [vmem:[%s244 + $0x103c] sm:$0xf]
      %v1312 = vld [vmem:[%s244 + $0x1040] sm:$0xf]
      %v1313 = vld [vmem:[%s244 + $0x1044] sm:$0xf]
      %v1314 = vld [vmem:[%s244 + $0x1048] sm:$0xf]
      %v1315 = vld [vmem:[%s244 + $0x104c] sm:$0xf]
      %v1316 = vld [vmem:[%s244 + $0x1050] sm:$0xf]
      %v1317 = vld [vmem:[%s244 + $0x1054] sm:$0xf]
      %v1318 = vld [vmem:[%s244 + $0x1058] sm:$0xf]
      %v1319 = vld [vmem:[%s244 + $0x105c] sm:$0xf]
      %v1320 = vld [vmem:[%s244 + $0x1060] sm:$0xf]
      %v1321 = vld [vmem:[%s244 + $0x1064] sm:$0xf]
      %v1322 = vld [vmem:[%s244 + $0x1068] sm:$0xf]
      %v1323 = vld [vmem:[%s244 + $0x106c] sm:$0xf]
      %v1324 = vld [vmem:[%s244 + $0x1070] sm:$0xf]
      %v1325 = vld [vmem:[%s244 + $0x1074] sm:$0xf]
      %v1326 = vld [vmem:[%s244 + $0x1078] sm:$0xf]
      %v1327 = vld [vmem:[%s244 + $0x107c] sm:$0xf]
      %v1328 = vld [vmem:[%s244 + $0x1080] sm:$0xf]
      %v1329 = vld [vmem:[%s244 + $0x1084] sm:$0xf]
      %v1330 = vld [vmem:[%s244 + $0x1088] sm:$0xf]
      %v1331 = vld [vmem:[%s244 + $0x108c] sm:$0xf]
      %v1332 = vld [vmem:[%s244 + $0x1090] sm:$0xf]
      %v1333 = vld [vmem:[%s244 + $0x1094] sm:$0xf]
      %v1334 = vld [vmem:[%s244 + $0x1098] sm:$0xf]
      %v1335 = vld [vmem:[%s244 + $0x109c] sm:$0xf]
      %v1336 = vld [vmem:[%s244 + $0x10a0] sm:$0xf]
      %v1337 = vld [vmem:[%s244 + $0x10a4] sm:$0xf]
      %v1338 = vld [vmem:[%s244 + $0x10a8] sm:$0xf]
      %v1339 = vld [vmem:[%s244 + $0x10ac] sm:$0xf]
      %v1340 = vld [vmem:[%s244 + $0x10b0] sm:$0xf]
      %v1341 = vld [vmem:[%s244 + $0x10b4] sm:$0xf]
      %v1342 = vld [vmem:[%s244 + $0x10b8] sm:$0xf]
      %v1343 = vld [vmem:[%s244 + $0x10bc] sm:$0xf]
      %v1344 = vld [vmem:[%s244 + $0x10c0] sm:$0xf]
      %v1345 = vld [vmem:[%s244 + $0x10c4] sm:$0xf]
      %v1346 = vld [vmem:[%s244 + $0x10c8] sm:$0xf]
      %v1347 = vld [vmem:[%s244 + $0x10cc] sm:$0xf]
      %v1348 = vld [vmem:[%s244 + $0x10d0] sm:$0xf]
      %v1349 = vld [vmem:[%s244 + $0x10d4] sm:$0xf]
      %v1350 = vld [vmem:[%s244 + $0x10d8] sm:$0xf]
      %v1351 = vld [vmem:[%s244 + $0x10dc] sm:$0xf]
      %v1352 = vld [vmem:[%s244 + $0x10e0] sm:$0xf]
      %v1353 = vld [vmem:[%s244 + $0x10e4] sm:$0xf]
      %v1354 = vld [vmem:[%s244 + $0x10e8] sm:$0xf]
      %v1355 = vld [vmem:[%s244 + $0x10ec] sm:$0xf]
      %v1356 = vld [vmem:[%s244 + $0x10f0] sm:$0xf]
      %v1357 = vld [vmem:[%s244 + $0x10f4] sm:$0xf]
      %v1358 = vld [vmem:[%s244 + $0x10f8] sm:$0xf]
      %v1359 = vld [vmem:[%s244 + $0x10fc] sm:$0xf]
      %v1360 = vld [vmem:[%s244 + $0x1100] sm:$0xf]
      %v1361 = vld [vmem:[%s244 + $0x1104] sm:$0xf]
      %v1362 = vld [vmem:[%s244 + $0x1108] sm:$0xf]
      %v1363 = vld [vmem:[%s244 + $0x110c] sm:$0xf]
      %v1364 = vld [vmem:[%s244 + $0x1110] sm:$0xf]
      %v1365 = vld [vmem:[%s244 + $0x1114] sm:$0xf]
      %v1366 = vld [vmem:[%s244 + $0x1118] sm:$0xf]
      %v1367 = vld [vmem:[%s244 + $0x111c] sm:$0xf]
      %v1368 = vld [vmem:[%s244 + $0x1120] sm:$0xf]
      %v1369 = vld [vmem:[%s244 + $0x1124] sm:$0xf]
      %v1370 = vld [vmem:[%s244 + $0x1128] sm:$0xf]
      %v1371 = vld [vmem:[%s244 + $0x112c] sm:$0xf]
      %v1372 = vld [vmem:[%s244 + $0x1130] sm:$0xf]
      %v1373 = vld [vmem:[%s244 + $0x1134] sm:$0xf]
      %v1374 = vld [vmem:[%s244 + $0x1138] sm:$0xf]
      %v1375 = vld [vmem:[%s244 + $0x113c] sm:$0xf]
      %v1376 = vld [vmem:[%s244 + $0x1140] sm:$0xf]
      %v1377 = vld [vmem:[%s244 + $0x1144] sm:$0xf]
      %v1378 = vld [vmem:[%s244 + $0x1148] sm:$0xf]
      %v1379 = vld [vmem:[%s244 + $0x114c] sm:$0xf]
      %v1380 = vld [vmem:[%s244 + $0x1150] sm:$0xf]
      %v1381 = vld [vmem:[%s244 + $0x1154] sm:$0xf]
      %v1382 = vld [vmem:[%s244 + $0x1158] sm:$0xf]
      %v1383 = vld [vmem:[%s244 + $0x115c] sm:$0xf]
      %v1384 = vld [vmem:[%s244 + $0x1160] sm:$0xf]
      %v1385 = vld [vmem:[%s244 + $0x1164] sm:$0xf]
      %v1386 = vld [vmem:[%s244 + $0x1168] sm:$0xf]
      %v1387 = vld [vmem:[%s244 + $0x116c] sm:$0xf]
      %v1388 = vld [vmem:[%s244 + $0x1170] sm:$0xf]
      %v1389 = vld [vmem:[%s244 + $0x1174] sm:$0xf]
      %v1390 = vld [vmem:[%s244 + $0x1178] sm:$0xf]
      %v1391 = vld [vmem:[%s244 + $0x117c] sm:$0xf]
      %v1392 = vld [vmem:[%s244 + $0x1180] sm:$0xf]
      %v1393 = vld [vmem:[%s244 + $0x1184] sm:$0xf]
      %v1394 = vld [vmem:[%s244 + $0x1188] sm:$0xf]
      %v1395 = vld [vmem:[%s244 + $0x118c] sm:$0xf]
      %v1396 = vld [vmem:[%s244 + $0x1190] sm:$0xf]
      %v1397 = vld [vmem:[%s244 + $0x1194] sm:$0xf]
      %v1398 = vld [vmem:[%s244 + $0x1198] sm:$0xf]
      %v1399 = vld [vmem:[%s244 + $0x119c] sm:$0xf]
      %v1400 = vld [vmem:[%s244 + $0x11a0] sm:$0xf]
      %v1401 = vld [vmem:[%s244 + $0x11a4] sm:$0xf]
      %v1402 = vld [vmem:[%s244 + $0x11a8] sm:$0xf]
      %v1403 = vld [vmem:[%s244 + $0x11ac] sm:$0xf]
      %v1404 = vld [vmem:[%s244 + $0x11b0] sm:$0xf]
      %v1405 = vld [vmem:[%s244 + $0x11b4] sm:$0xf]
      %v1406 = vld [vmem:[%s244 + $0x11b8] sm:$0xf]
      %v1407 = vld [vmem:[%s244 + $0x11bc] sm:$0xf]
      %v1408 = vld [vmem:[%s244 + $0x11c0] sm:$0xf]
      %v1409 = vld [vmem:[%s244 + $0x11c4] sm:$0xf]
      %v1410 = vld [vmem:[%s244 + $0x11c8] sm:$0xf]
      %v1411 = vld [vmem:[%s244 + $0x11cc] sm:$0xf]
      %v1412 = vld [vmem:[%s244 + $0x11d0] sm:$0xf]
      %v1413 = vld [vmem:[%s244 + $0x11d4] sm:$0xf]
      %v1414 = vld [vmem:[%s244 + $0x11d8] sm:$0xf]
      %v1415 = vld [vmem:[%s244 + $0x11dc] sm:$0xf]
      %v1416 = vld [vmem:[%s244 + $0x11e0] sm:$0xf]
      %v1417 = vld [vmem:[%s244 + $0x11e4] sm:$0xf]
      %v1418 = vld [vmem:[%s244 + $0x11e8] sm:$0xf]
      %v1419 = vld [vmem:[%s244 + $0x11ec] sm:$0xf]
      %v1420 = vld [vmem:[%s244 + $0x11f0] sm:$0xf]
      %v1421 = vld [vmem:[%s244 + $0x11f4] sm:$0xf]
      %v1422 = vld [vmem:[%s244 + $0x11f8] sm:$0xf]
      %v1423 = vld [vmem:[%s244 + $0x11fc] sm:$0xf]
      %v1424 = vld [vmem:[%s244 + $0x1200] sm:$0xf]
      %v1425 = vld [vmem:[%s244 + $0x1204] sm:$0xf]
      %v1426 = vld [vmem:[%s244 + $0x1208] sm:$0xf]
      %v1427 = vld [vmem:[%s244 + $0x120c] sm:$0xf]
      %v1428 = vld [vmem:[%s244 + $0x1210] sm:$0xf]
      %v1429 = vld [vmem:[%s244 + $0x1214] sm:$0xf]
      %v1430 = vld [vmem:[%s244 + $0x1218] sm:$0xf]
      %v1431 = vld [vmem:[%s244 + $0x121c] sm:$0xf]
      %v1432 = vld [vmem:[%s244 + $0x1220] sm:$0xf]
      %v1433 = vld [vmem:[%s244 + $0x1224] sm:$0xf]
      %v1434 = vld [vmem:[%s244 + $0x1228] sm:$0xf]
      %v1435 = vld [vmem:[%s244 + $0x122c] sm:$0xf]
      %v1436 = vld [vmem:[%s244 + $0x1230] sm:$0xf]
      %v1437 = vld [vmem:[%s244 + $0x1234] sm:$0xf]
      %v1438 = vld [vmem:[%s244 + $0x1238] sm:$0xf]
      %v1439 = vld [vmem:[%s244 + $0x123c] sm:$0xf]
      %v1440 = vld [vmem:[%s244 + $0x1240] sm:$0xf]
      %v1441 = vld [vmem:[%s244 + $0x1244] sm:$0xf]
      %v1442 = vld [vmem:[%s244 + $0x1248] sm:$0xf]
      %v1443 = vld [vmem:[%s244 + $0x124c] sm:$0xf]
      %v1444 = vld [vmem:[%s244 + $0x1250] sm:$0xf]
      %v1445 = vld [vmem:[%s244 + $0x1254] sm:$0xf]
      %v1446 = vld [vmem:[%s244 + $0x1258] sm:$0xf]
      %v1447 = vld [vmem:[%s244 + $0x125c] sm:$0xf]
      %v1448 = vld [vmem:[%s244 + $0x1260] sm:$0xf]
      %v1449 = vld [vmem:[%s244 + $0x1264] sm:$0xf]
      %v1450 = vld [vmem:[%s244 + $0x1268] sm:$0xf]
      %v1451 = vld [vmem:[%s244 + $0x126c] sm:$0xf]
      %v1452 = vld [vmem:[%s244 + $0x1270] sm:$0xf]
      %v1453 = vld [vmem:[%s244 + $0x1274] sm:$0xf]
      %v1454 = vld [vmem:[%s244 + $0x1278] sm:$0xf]
      %v1455 = vld [vmem:[%s244 + $0x127c] sm:$0xf]
      %v1456 = vld [vmem:[%s244 + $0x1280] sm:$0xf]
      %v1457 = vld [vmem:[%s244 + $0x1284] sm:$0xf]
      %v1458 = vld [vmem:[%s244 + $0x1288] sm:$0xf]
      %v1459 = vld [vmem:[%s244 + $0x128c] sm:$0xf]
      %v1460 = vld [vmem:[%s244 + $0x1290] sm:$0xf]
      %v1461 = vld [vmem:[%s244 + $0x1294] sm:$0xf]
      %v1462 = vld [vmem:[%s244 + $0x1298] sm:$0xf]
      %v1463 = vld [vmem:[%s244 + $0x129c] sm:$0xf]
      %v1464 = vld [vmem:[%s244 + $0x12a0] sm:$0xf]
      %v1465 = vld [vmem:[%s244 + $0x12a4] sm:$0xf]
      %v1466 = vld [vmem:[%s244 + $0x12a8] sm:$0xf]
      %v1467 = vld [vmem:[%s244 + $0x12ac] sm:$0xf]
      %v1468 = vld [vmem:[%s244 + $0x12b0] sm:$0xf]
      %v1469 = vld [vmem:[%s244 + $0x12b4] sm:$0xf]
      %v1470 = vld [vmem:[%s244 + $0x12b8] sm:$0xf]
      %v1471 = vld [vmem:[%s244 + $0x12bc] sm:$0xf]
      %v1472 = vld [vmem:[%s244 + $0x12c0] sm:$0xf]
      %v1473 = vld [vmem:[%s244 + $0x12c4] sm:$0xf]
      %v1474 = vld [vmem:[%s244 + $0x12c8] sm:$0xf]
      %v1475 = vld [vmem:[%s244 + $0x12cc] sm:$0xf]
      %v1476 = vld [vmem:[%s244 + $0x12d0] sm:$0xf]
      %v1477 = vld [vmem:[%s244 + $0x12d4] sm:$0xf]
      %v1478 = vld [vmem:[%s244 + $0x12d8] sm:$0xf]
      %v1479 = vld [vmem:[%s244 + $0x12dc] sm:$0xf]
      %v1480 = vld [vmem:[%s244 + $0x12e0] sm:$0xf]
      %v1481 = vld [vmem:[%s244 + $0x12e4] sm:$0xf]
      %v1482 = vld [vmem:[%s244 + $0x12e8] sm:$0xf]
      %v1483 = vld [vmem:[%s244 + $0x12ec] sm:$0xf]
      %v1484 = vld [vmem:[%s244 + $0x12f0] sm:$0xf]
      %v1485 = vld [vmem:[%s244 + $0x12f4] sm:$0xf]
      %v1486 = vld [vmem:[%s244 + $0x12f8] sm:$0xf]
      %v1487 = vld [vmem:[%s244 + $0x12fc] sm:$0xf]
      %v1488 = vld [vmem:[%s244 + $0x1300] sm:$0xf]
      %v1489 = vld [vmem:[%s244 + $0x1304] sm:$0xf]
      %v1490 = vld [vmem:[%s244 + $0x1308] sm:$0xf]
      %v1491 = vld [vmem:[%s244 + $0x130c] sm:$0xf]
      %v1492 = vld [vmem:[%s244 + $0x1310] sm:$0xf]
      %v1493 = vld [vmem:[%s244 + $0x1314] sm:$0xf]
      %v1494 = vld [vmem:[%s244 + $0x1318] sm:$0xf]
      %v1495 = vld [vmem:[%s244 + $0x131c] sm:$0xf]
      %v1496 = vld [vmem:[%s244 + $0x1320] sm:$0xf]
      %v1497 = vld [vmem:[%s244 + $0x1324] sm:$0xf]
      %v1498 = vld [vmem:[%s244 + $0x1328] sm:$0xf]
      %v1499 = vld [vmem:[%s244 + $0x132c] sm:$0xf]
      %v1500 = vld [vmem:[%s244 + $0x1330] sm:$0xf]
      %v1501 = vld [vmem:[%s244 + $0x1334] sm:$0xf]
      %v1502 = vld [vmem:[%s244 + $0x1338] sm:$0xf]
      %v1503 = vld [vmem:[%s244 + $0x133c] sm:$0xf]
      %v1504 = vld [vmem:[%s244 + $0x1340] sm:$0xf]
      %v1505 = vld [vmem:[%s244 + $0x1344] sm:$0xf]
      %v1506 = vld [vmem:[%s244 + $0x1348] sm:$0xf]
      %v1507 = vld [vmem:[%s244 + $0x134c] sm:$0xf]
      %v1508 = vld [vmem:[%s244 + $0x1350] sm:$0xf]
      %v1509 = vld [vmem:[%s244 + $0x1354] sm:$0xf]
      %v1510 = vld [vmem:[%s244 + $0x1358] sm:$0xf]
      %v1511 = vld [vmem:[%s244 + $0x135c] sm:$0xf]
      %v1512 = vld [vmem:[%s244 + $0x1360] sm:$0xf]
      %v1513 = vld [vmem:[%s244 + $0x1364] sm:$0xf]
      %v1514 = vld [vmem:[%s244 + $0x1368] sm:$0xf]
      %v1515 = vld [vmem:[%s244 + $0x136c] sm:$0xf]
      %v1516 = vld [vmem:[%s244 + $0x1370] sm:$0xf]
      %v1517 = vld [vmem:[%s244 + $0x1374] sm:$0xf]
      %v1518 = vld [vmem:[%s244 + $0x1378] sm:$0xf]
      %v1519 = vld [vmem:[%s244 + $0x137c] sm:$0xf]
      %v1520 = vld [vmem:[%s244 + $0x1380] sm:$0xf]
      %v1521 = vld [vmem:[%s244 + $0x1384] sm:$0xf]
      %v1522 = vld [vmem:[%s244 + $0x1388] sm:$0xf]
      %v1523 = vld [vmem:[%s244 + $0x138c] sm:$0xf]
      %v1524 = vld [vmem:[%s244 + $0x1390] sm:$0xf]
      %v1525 = vld [vmem:[%s244 + $0x1394] sm:$0xf]
      %v1526 = vld [vmem:[%s244 + $0x1398] sm:$0xf]
      %v1527 = vld [vmem:[%s244 + $0x139c] sm:$0xf]
      %v1528 = vld [vmem:[%s244 + $0x13a0] sm:$0xf]
      %v1529 = vld [vmem:[%s244 + $0x13a4] sm:$0xf]
      %v1530 = vld [vmem:[%s244 + $0x13a8] sm:$0xf]
      %v1531 = vld [vmem:[%s244 + $0x13ac] sm:$0xf]
      %v1532 = vld [vmem:[%s244 + $0x13b0] sm:$0xf]
      %v1533 = vld [vmem:[%s244 + $0x13b4] sm:$0xf]
      %v1534 = vld [vmem:[%s244 + $0x13b8] sm:$0xf]
      %v1535 = vld [vmem:[%s244 + $0x13bc] sm:$0xf]
      %v1536 = vld [vmem:[%s244 + $0x13c0] sm:$0xf]
      %v1537 = vld [vmem:[%s244 + $0x13c4] sm:$0xf]
      %v1538 = vld [vmem:[%s244 + $0x13c8] sm:$0xf]
      %v1539 = vld [vmem:[%s244 + $0x13cc] sm:$0xf]
      %v1540 = vld [vmem:[%s244 + $0x13d0] sm:$0xf]
      %v1541 = vld [vmem:[%s244 + $0x13d4] sm:$0xf]
      %v1542 = vld [vmem:[%s244 + $0x13d8] sm:$0xf]
      %v1543 = vld [vmem:[%s244 + $0x13dc] sm:$0xf]
      %v1544 = vld [vmem:[%s244 + $0x13e0] sm:$0xf]
      %v1545 = vld [vmem:[%s244 + $0x13e4] sm:$0xf]
      %v1546 = vld [vmem:[%s244 + $0x13e8] sm:$0xf]
      %v1547 = vld [vmem:[%s244 + $0x13ec] sm:$0xf]
      %v1548 = vld [vmem:[%s244 + $0x13f0] sm:$0xf]
      %v1549 = vld [vmem:[%s244 + $0x13f4] sm:$0xf]
      %v1550 = vld [vmem:[%s244 + $0x13f8] sm:$0xf]
      %v1551 = vld [vmem:[%s244 + $0x13fc] sm:$0xf]
      %v1552 = vld [vmem:[%s244 + $0x1400] sm:$0xf]
      %v1553 = vld [vmem:[%s244 + $0x1404] sm:$0xf]
      %v1554 = vld [vmem:[%s244 + $0x1408] sm:$0xf]
      %v1555 = vld [vmem:[%s244 + $0x140c] sm:$0xf]
      %v1556 = vld [vmem:[%s244 + $0x1410] sm:$0xf]
      %v1557 = vld [vmem:[%s244 + $0x1414] sm:$0xf]
      %v1558 = vld [vmem:[%s244 + $0x1418] sm:$0xf]
      %v1559 = vld [vmem:[%s244 + $0x141c] sm:$0xf]
      %v1560 = vld [vmem:[%s244 + $0x1420] sm:$0xf]
      %v1561 = vld [vmem:[%s244 + $0x1424] sm:$0xf]
      %v1562 = vld [vmem:[%s244 + $0x1428] sm:$0xf]
      %v1563 = vld [vmem:[%s244 + $0x142c] sm:$0xf]
      %v1564 = vld [vmem:[%s244 + $0x1430] sm:$0xf]
      %v1565 = vld [vmem:[%s244 + $0x1434] sm:$0xf]
      %v1566 = vld [vmem:[%s244 + $0x1438] sm:$0xf]
      %v1567 = vld [vmem:[%s244 + $0x143c] sm:$0xf]
      %v1568 = vld [vmem:[%s244 + $0x1440] sm:$0xf]
      %v1569 = vld [vmem:[%s244 + $0x1444] sm:$0xf]
      %v1570 = vld [vmem:[%s244 + $0x1448] sm:$0xf]
      %v1571 = vld [vmem:[%s244 + $0x144c] sm:$0xf]
      %v1572 = vld [vmem:[%s244 + $0x1450] sm:$0xf]
      %v1573 = vld [vmem:[%s244 + $0x1454] sm:$0xf]
      %v1574 = vld [vmem:[%s244 + $0x1458] sm:$0xf]
      %v1575 = vld [vmem:[%s244 + $0x145c] sm:$0xf]
      %v1576 = vld [vmem:[%s244 + $0x1460] sm:$0xf]
      %v1577 = vld [vmem:[%s244 + $0x1464] sm:$0xf]
      %v1578 = vld [vmem:[%s244 + $0x1468] sm:$0xf]
      %v1579 = vld [vmem:[%s244 + $0x146c] sm:$0xf]
      %v1580 = vld [vmem:[%s244 + $0x1470] sm:$0xf]
      %v1581 = vld [vmem:[%s244 + $0x1474] sm:$0xf]
      %v1582 = vld [vmem:[%s244 + $0x1478] sm:$0xf]
      %v1583 = vld [vmem:[%s244 + $0x147c] sm:$0xf]
      %v1584 = vld [vmem:[%s244 + $0x1480] sm:$0xf]
      %v1585 = vld [vmem:[%s244 + $0x1484] sm:$0xf]
      %v1586 = vld [vmem:[%s244 + $0x1488] sm:$0xf]
      %v1587 = vld [vmem:[%s244 + $0x148c] sm:$0xf]
      %v1588 = vld [vmem:[%s244 + $0x1490] sm:$0xf]
      %v1589 = vld [vmem:[%s244 + $0x1494] sm:$0xf]
      %v1590 = vld [vmem:[%s244 + $0x1498] sm:$0xf]
      %v1591 = vld [vmem:[%s244 + $0x149c] sm:$0xf]
      %v1592 = vld [vmem:[%s244 + $0x14a0] sm:$0xf]
      %v1593 = vld [vmem:[%s244 + $0x14a4] sm:$0xf]
      %v1594 = vld [vmem:[%s244 + $0x14a8] sm:$0xf]
      %v1595 = vld [vmem:[%s244 + $0x14ac] sm:$0xf]
      %v1596 = vld [vmem:[%s244 + $0x14b0] sm:$0xf]
      %v1597 = vld [vmem:[%s244 + $0x14b4] sm:$0xf]
      %v1598 = vld [vmem:[%s244 + $0x14b8] sm:$0xf]
      %v1599 = vld [vmem:[%s244 + $0x14bc] sm:$0xf]
      %v1600 = vld [vmem:[%s244 + $0x14c0] sm:$0xf]
      %v1601 = vld [vmem:[%s244 + $0x14c4] sm:$0xf]
      %v1602 = vld [vmem:[%s244 + $0x14c8] sm:$0xf]
      %v1603 = vld [vmem:[%s244 + $0x14cc] sm:$0xf]
      %v1604 = vld [vmem:[%s244 + $0x14d0] sm:$0xf]
      %v1605 = vld [vmem:[%s244 + $0x14d4] sm:$0xf]
      %v1606 = vld [vmem:[%s244 + $0x14d8] sm:$0xf]
      %v1607 = vld [vmem:[%s244 + $0x14dc] sm:$0xf]
      %v1608 = vld [vmem:[%s244 + $0x14e0] sm:$0xf]
      %v1609 = vld [vmem:[%s244 + $0x14e4] sm:$0xf]
      %v1610 = vld [vmem:[%s244 + $0x14e8] sm:$0xf]
      %v1611 = vld [vmem:[%s244 + $0x14ec] sm:$0xf]
      %v1612 = vld [vmem:[%s244 + $0x14f0] sm:$0xf]
      %v1613 = vld [vmem:[%s244 + $0x14f4] sm:$0xf]
      %v1614 = vld [vmem:[%s244 + $0x14f8] sm:$0xf]
      %v1615 = vld [vmem:[%s244 + $0x14fc] sm:$0xf]
      %v1616 = vld [vmem:[%s244 + $0x1500] sm:$0xf]
      %v1617 = vld [vmem:[%s244 + $0x1504] sm:$0xf]
      %v1618 = vld [vmem:[%s244 + $0x1508] sm:$0xf]
      %v1619 = vld [vmem:[%s244 + $0x150c] sm:$0xf]
      %v1620 = vld [vmem:[%s244 + $0x1510] sm:$0xf]
      %v1621 = vld [vmem:[%s244 + $0x1514] sm:$0xf]
      %v1622 = vld [vmem:[%s244 + $0x1518] sm:$0xf]
      %v1623 = vld [vmem:[%s244 + $0x151c] sm:$0xf]
      %v1624 = vld [vmem:[%s244 + $0x1520] sm:$0xf]
      %v1625 = vld [vmem:[%s244 + $0x1524] sm:$0xf]
      %v1626 = vld [vmem:[%s244 + $0x1528] sm:$0xf]
      %v1627 = vld [vmem:[%s244 + $0x152c] sm:$0xf]
      %v1628 = vld [vmem:[%s244 + $0x1530] sm:$0xf]
      %v1629 = vld [vmem:[%s244 + $0x1534] sm:$0xf]
      %v1630 = vld [vmem:[%s244 + $0x1538] sm:$0xf]
      %v1631 = vld [vmem:[%s244 + $0x153c] sm:$0xf]
      %v1632 = vld [vmem:[%s244 + $0x1540] sm:$0xf]
      %v1633 = vld [vmem:[%s244 + $0x1544] sm:$0xf]
      %v1634 = vld [vmem:[%s244 + $0x1548] sm:$0xf]
      %v1635 = vld [vmem:[%s244 + $0x154c] sm:$0xf]
      %v1636 = vld [vmem:[%s244 + $0x1550] sm:$0xf]
      %v1637 = vld [vmem:[%s244 + $0x1554] sm:$0xf]
      %v1638 = vld [vmem:[%s244 + $0x1558] sm:$0xf]
      %v1639 = vld [vmem:[%s244 + $0x155c] sm:$0xf]
      %v1640 = vld [vmem:[%s244 + $0x1560] sm:$0xf]
      %v1641 = vld [vmem:[%s244 + $0x1564] sm:$0xf]
      %v1642 = vld [vmem:[%s244 + $0x1568] sm:$0xf]
      %v1643 = vld [vmem:[%s244 + $0x156c] sm:$0xf]
      %v1644 = vld [vmem:[%s244 + $0x1570] sm:$0xf]
      %v1645 = vld [vmem:[%s244 + $0x1574] sm:$0xf]
      %v1646 = vld [vmem:[%s244 + $0x1578] sm:$0xf]
      %v1647 = vld [vmem:[%s244 + $0x157c] sm:$0xf]
      %v1648 = vld [vmem:[%s244 + $0x1580] sm:$0xf]
      %v1649 = vld [vmem:[%s244 + $0x1584] sm:$0xf]
      %v1650 = vld [vmem:[%s244 + $0x1588] sm:$0xf]
      %v1651 = vld [vmem:[%s244 + $0x158c] sm:$0xf]
      %v1652 = vld [vmem:[%s244 + $0x1590] sm:$0xf]
      %v1653 = vld [vmem:[%s244 + $0x1594] sm:$0xf]
      %v1654 = vld [vmem:[%s244 + $0x1598] sm:$0xf]
      %v1655 = vld [vmem:[%s244 + $0x159c] sm:$0xf]
      %v1656 = vld [vmem:[%s244 + $0x15a0] sm:$0xf]
      %v1657 = vld [vmem:[%s244 + $0x15a4] sm:$0xf]
      %v1658 = vld [vmem:[%s244 + $0x15a8] sm:$0xf]
      %v1659 = vld [vmem:[%s244 + $0x15ac] sm:$0xf]
      %v1660 = vld [vmem:[%s244 + $0x15b0] sm:$0xf]
      %v1661 = vld [vmem:[%s244 + $0x15b4] sm:$0xf]
      %v1662 = vld [vmem:[%s244 + $0x15b8] sm:$0xf]
      %v1663 = vld [vmem:[%s244 + $0x15bc] sm:$0xf]
      %v1664 = vld [vmem:[%s244 + $0x15c0] sm:$0xf]
      %v1665 = vld [vmem:[%s244 + $0x15c4] sm:$0xf]
      %v1666 = vld [vmem:[%s244 + $0x15c8] sm:$0xf]
      %v1667 = vld [vmem:[%s244 + $0x15cc] sm:$0xf]
      %v1668 = vld [vmem:[%s244 + $0x15d0] sm:$0xf]
      %v1669 = vld [vmem:[%s244 + $0x15d4] sm:$0xf]
      %v1670 = vld [vmem:[%s244 + $0x15d8] sm:$0xf]
      %v1671 = vld [vmem:[%s244 + $0x15dc] sm:$0xf]
      %v1672 = vld [vmem:[%s244 + $0x15e0] sm:$0xf]
      %v1673 = vld [vmem:[%s244 + $0x15e4] sm:$0xf]
      %v1674 = vld [vmem:[%s244 + $0x15e8] sm:$0xf]
      %v1675 = vld [vmem:[%s244 + $0x15ec] sm:$0xf]
      %v1676 = vld [vmem:[%s244 + $0x15f0] sm:$0xf]
      %v1677 = vld [vmem:[%s244 + $0x15f4] sm:$0xf]
      %v1678 = vld [vmem:[%s244 + $0x15f8] sm:$0xf]
      %v1679 = vld [vmem:[%s244 + $0x15fc] sm:$0xf]
      %v1680 = vld [vmem:[%s244 + $0x1600] sm:$0xf]
      %v1681 = vld [vmem:[%s244 + $0x1604] sm:$0xf]
      %v1682 = vld [vmem:[%s244 + $0x1608] sm:$0xf]
      %v1683 = vld [vmem:[%s244 + $0x160c] sm:$0xf]
      %v1684 = vld [vmem:[%s244 + $0x1610] sm:$0xf]
      %v1685 = vld [vmem:[%s244 + $0x1614] sm:$0xf]
      %v1686 = vld [vmem:[%s244 + $0x1618] sm:$0xf]
      %v1687 = vld [vmem:[%s244 + $0x161c] sm:$0xf]
      %v1688 = vld [vmem:[%s244 + $0x1620] sm:$0xf]
      %v1689 = vld [vmem:[%s244 + $0x1624] sm:$0xf]
      %v1690 = vld [vmem:[%s244 + $0x1628] sm:$0xf]
      %v1691 = vld [vmem:[%s244 + $0x162c] sm:$0xf]
      %v1692 = vld [vmem:[%s244 + $0x1630] sm:$0xf]
      %v1693 = vld [vmem:[%s244 + $0x1634] sm:$0xf]
      %v1694 = vld [vmem:[%s244 + $0x1638] sm:$0xf]
      %v1695 = vld [vmem:[%s244 + $0x163c] sm:$0xf]
      %v1696 = vld [vmem:[%s244 + $0x1640] sm:$0xf]
      %v1697 = vld [vmem:[%s244 + $0x1644] sm:$0xf]
      %v1698 = vld [vmem:[%s244 + $0x1648] sm:$0xf]
      %v1699 = vld [vmem:[%s244 + $0x164c] sm:$0xf]
      %v1700 = vld [vmem:[%s244 + $0x1650] sm:$0xf]
      %v1701 = vld [vmem:[%s244 + $0x1654] sm:$0xf]
      %v1702 = vld [vmem:[%s244 + $0x1658] sm:$0xf]
      %v1703 = vld [vmem:[%s244 + $0x165c] sm:$0xf]
      %v1704 = vld [vmem:[%s244 + $0x1660] sm:$0xf]
      %v1705 = vld [vmem:[%s244 + $0x1664] sm:$0xf]
      %v1706 = vld [vmem:[%s244 + $0x1668] sm:$0xf]
      %v1707 = vld [vmem:[%s244 + $0x166c] sm:$0xf]
      %v1708 = vld [vmem:[%s244 + $0x1670] sm:$0xf]
      %v1709 = vld [vmem:[%s244 + $0x1674] sm:$0xf]
      %v1710 = vld [vmem:[%s244 + $0x1678] sm:$0xf]
      %v1711 = vld [vmem:[%s244 + $0x167c] sm:$0xf]
      %v1712 = vld [vmem:[%s244 + $0x1680] sm:$0xf]
      %v1713 = vld [vmem:[%s244 + $0x1684] sm:$0xf]
      %v1714 = vld [vmem:[%s244 + $0x1688] sm:$0xf]
      %v1715 = vld [vmem:[%s244 + $0x168c] sm:$0xf]
      %v1716 = vld [vmem:[%s244 + $0x1690] sm:$0xf]
      %v1717 = vld [vmem:[%s244 + $0x1694] sm:$0xf]
      %v1718 = vld [vmem:[%s244 + $0x1698] sm:$0xf]
      %v1719 = vld [vmem:[%s244 + $0x169c] sm:$0xf]
      %v1720 = vld [vmem:[%s244 + $0x16a0] sm:$0xf]
      %v1721 = vld [vmem:[%s244 + $0x16a4] sm:$0xf]
      %v1722 = vld [vmem:[%s244 + $0x16a8] sm:$0xf]
      %v1723 = vld [vmem:[%s244 + $0x16ac] sm:$0xf]
      %v1724 = vld [vmem:[%s244 + $0x16b0] sm:$0xf]
      %v1725 = vld [vmem:[%s244 + $0x16b4] sm:$0xf]
      %v1726 = vld [vmem:[%s244 + $0x16b8] sm:$0xf]
      %v1727 = vld [vmem:[%s244 + $0x16bc] sm:$0xf]
      %v1728 = vld [vmem:[%s244 + $0x16c0] sm:$0xf]
      %v1729 = vld [vmem:[%s244 + $0x16c4] sm:$0xf]
      %v1730 = vld [vmem:[%s244 + $0x16c8] sm:$0xf]
      %v1731 = vld [vmem:[%s244 + $0x16cc] sm:$0xf]
      %v1732 = vld [vmem:[%s244 + $0x16d0] sm:$0xf]
      %v1733 = vld [vmem:[%s244 + $0x16d4] sm:$0xf]
      %v1734 = vld [vmem:[%s244 + $0x16d8] sm:$0xf]
      %v1735 = vld [vmem:[%s244 + $0x16dc] sm:$0xf]
      %v1736 = vld [vmem:[%s244 + $0x16e0] sm:$0xf]
      %v1737 = vld [vmem:[%s244 + $0x16e4] sm:$0xf]
      %v1738 = vld [vmem:[%s244 + $0x16e8] sm:$0xf]
      %v1739 = vld [vmem:[%s244 + $0x16ec] sm:$0xf]
      %v1740 = vld [vmem:[%s244 + $0x16f0] sm:$0xf]
      %v1741 = vld [vmem:[%s244 + $0x16f4] sm:$0xf]
      %v1742 = vld [vmem:[%s244 + $0x16f8] sm:$0xf]
      %v1743 = vld [vmem:[%s244 + $0x16fc] sm:$0xf]
      %v1744 = vld [vmem:[%s244 + $0x1700] sm:$0xf]
      %v1745 = vld [vmem:[%s244 + $0x1704] sm:$0xf]
      %v1746 = vld [vmem:[%s244 + $0x1708] sm:$0xf]
      %v1747 = vld [vmem:[%s244 + $0x170c] sm:$0xf]
      %v1748 = vld [vmem:[%s244 + $0x1710] sm:$0xf]
      %v1749 = vld [vmem:[%s244 + $0x1714] sm:$0xf]
      %v1750 = vld [vmem:[%s244 + $0x1718] sm:$0xf]
      %v1751 = vld [vmem:[%s244 + $0x171c] sm:$0xf]
      %v1752 = vld [vmem:[%s244 + $0x1720] sm:$0xf]
      %v1753 = vld [vmem:[%s244 + $0x1724] sm:$0xf]
      %v1754 = vld [vmem:[%s244 + $0x1728] sm:$0xf]
      %v1755 = vld [vmem:[%s244 + $0x172c] sm:$0xf]
      %v1756 = vld [vmem:[%s244 + $0x1730] sm:$0xf]
      %v1757 = vld [vmem:[%s244 + $0x1734] sm:$0xf]
      %v1758 = vld [vmem:[%s244 + $0x1738] sm:$0xf]
      %v1759 = vld [vmem:[%s244 + $0x173c] sm:$0xf]
      %v1760 = vld [vmem:[%s244 + $0x1740] sm:$0xf]
      %v1761 = vld [vmem:[%s244 + $0x1744] sm:$0xf]
      %v1762 = vld [vmem:[%s244 + $0x1748] sm:$0xf]
      %v1763 = vld [vmem:[%s244 + $0x174c] sm:$0xf]
      %v1764 = vld [vmem:[%s244 + $0x1750] sm:$0xf]
      %v1765 = vld [vmem:[%s244 + $0x1754] sm:$0xf]
      %v1766 = vld [vmem:[%s244 + $0x1758] sm:$0xf]
      %v1767 = vld [vmem:[%s244 + $0x175c] sm:$0xf]
      %v1768 = vld [vmem:[%s244 + $0x1760] sm:$0xf]
      %v1769 = vld [vmem:[%s244 + $0x1764] sm:$0xf]
      %v1770 = vld [vmem:[%s244 + $0x1768] sm:$0xf]
      %v1771 = vld [vmem:[%s244 + $0x176c] sm:$0xf]
      %v1772 = vld [vmem:[%s244 + $0x1770] sm:$0xf]
      %v1773 = vld [vmem:[%s244 + $0x1774] sm:$0xf]
      %v1774 = vld [vmem:[%s244 + $0x1778] sm:$0xf]
      %v1775 = vld [vmem:[%s244 + $0x177c] sm:$0xf]
      %v1776 = vld [vmem:[%s244 + $0x1780] sm:$0xf]
      %v1777 = vld [vmem:[%s244 + $0x1784] sm:$0xf]
      %v1778 = vld [vmem:[%s244 + $0x1788] sm:$0xf]
      %v1779 = vld [vmem:[%s244 + $0x178c] sm:$0xf]
      %v1780 = vld [vmem:[%s244 + $0x1790] sm:$0xf]
      %v1781 = vld [vmem:[%s244 + $0x1794] sm:$0xf]
      %v1782 = vld [vmem:[%s244 + $0x1798] sm:$0xf]
      %v1783 = vld [vmem:[%s244 + $0x179c] sm:$0xf]
      %v1784 = vld [vmem:[%s244 + $0x17a0] sm:$0xf]
      %v1785 = vld [vmem:[%s244 + $0x17a4] sm:$0xf]
      %v1786 = vld [vmem:[%s244 + $0x17a8] sm:$0xf]
      %v1787 = vld [vmem:[%s244 + $0x17ac] sm:$0xf]
      %v1788 = vld [vmem:[%s244 + $0x17b0] sm:$0xf]
      %v1789 = vld [vmem:[%s244 + $0x17b4] sm:$0xf]
      %v1790 = vld [vmem:[%s244 + $0x17b8] sm:$0xf]
      %v1791 = vld [vmem:[%s244 + $0x17bc] sm:$0xf]
      %v1792 = vld [vmem:[%s244 + $0x17c0] sm:$0xf]
      %v1793 = vld [vmem:[%s244 + $0x17c4] sm:$0xf]
      %v1794 = vld [vmem:[%s244 + $0x17c8] sm:$0xf]
      %v1795 = vld [vmem:[%s244 + $0x17cc] sm:$0xf]
      %v1796 = vld [vmem:[%s244 + $0x17d0] sm:$0xf]
      %v1797 = vld [vmem:[%s244 + $0x17d4] sm:$0xf]
      %v1798 = vld [vmem:[%s244 + $0x17d8] sm:$0xf]
      %v1799 = vld [vmem:[%s244 + $0x17dc] sm:$0xf]
      %v1800 = vld [vmem:[%s244 + $0x17e0] sm:$0xf]
      %v1801 = vld [vmem:[%s244 + $0x17e4] sm:$0xf]
      %v1802 = vld [vmem:[%s244 + $0x17e8] sm:$0xf]
      %v1803 = vld [vmem:[%s244 + $0x17ec] sm:$0xf]
      %v1804 = vld [vmem:[%s244 + $0x17f0] sm:$0xf]
      %v1805 = vld [vmem:[%s244 + $0x17f4] sm:$0xf]
      %v1806 = vld [vmem:[%s244 + $0x17f8] sm:$0xf]
      %v1807 = vld [vmem:[%s244 + $0x17fc] sm:$0xf]
      %v1808 = vld [vmem:[%s244 + $0x1800] sm:$0xf]
      %v1809 = vld [vmem:[%s244 + $0x1804] sm:$0xf]
      %v1810 = vld [vmem:[%s244 + $0x1808] sm:$0xf]
      %v1811 = vld [vmem:[%s244 + $0x180c] sm:$0xf]
      %v1812 = vld [vmem:[%s244 + $0x1810] sm:$0xf]
      %v1813 = vld [vmem:[%s244 + $0x1814] sm:$0xf]
      %v1814 = vld [vmem:[%s244 + $0x1818] sm:$0xf]
      %v1815 = vld [vmem:[%s244 + $0x181c] sm:$0xf]
      %v1816 = vld [vmem:[%s244 + $0x1820] sm:$0xf]
      %v1817 = vld [vmem:[%s244 + $0x1824] sm:$0xf]
      %v1818 = vld [vmem:[%s244 + $0x1828] sm:$0xf]
      %v1819 = vld [vmem:[%s244 + $0x182c] sm:$0xf]
      %v1820 = vld [vmem:[%s244 + $0x1830] sm:$0xf]
      %v1821 = vld [vmem:[%s244 + $0x1834] sm:$0xf]
      %v1822 = vld [vmem:[%s244 + $0x1838] sm:$0xf]
      %v1823 = vld [vmem:[%s244 + $0x183c] sm:$0xf]
      %v1824 = vld [vmem:[%s244 + $0x1840] sm:$0xf]
      %v1825 = vld [vmem:[%s244 + $0x1844] sm:$0xf]
      %v1826 = vld [vmem:[%s244 + $0x1848] sm:$0xf]
      %v1827 = vld [vmem:[%s244 + $0x184c] sm:$0xf]
      %v1828 = vld [vmem:[%s244 + $0x1850] sm:$0xf]
      %v1829 = vld [vmem:[%s244 + $0x1854] sm:$0xf]
      %v1830 = vld [vmem:[%s244 + $0x1858] sm:$0xf]
      %v1831 = vld [vmem:[%s244 + $0x185c] sm:$0xf]
      %v1832 = vld [vmem:[%s244 + $0x1860] sm:$0xf]
      %v1833 = vld [vmem:[%s244 + $0x1864] sm:$0xf]
      %v1834 = vld [vmem:[%s244 + $0x1868] sm:$0xf]
      %v1835 = vld [vmem:[%s244 + $0x186c] sm:$0xf]
      %v1836 = vld [vmem:[%s244 + $0x1870] sm:$0xf]
      %v1837 = vld [vmem:[%s244 + $0x1874] sm:$0xf]
      %v1838 = vld [vmem:[%s244 + $0x1878] sm:$0xf]
      %v1839 = vld [vmem:[%s244 + $0x187c] sm:$0xf]
      %v1840 = vld [vmem:[%s244 + $0x1880] sm:$0xf]
      %v1841 = vld [vmem:[%s244 + $0x1884] sm:$0xf]
      %v1842 = vld [vmem:[%s244 + $0x1888] sm:$0xf]
      %v1843 = vld [vmem:[%s244 + $0x188c] sm:$0xf]
      %v1844 = vld [vmem:[%s244 + $0x1890] sm:$0xf]
      %v1845 = vld [vmem:[%s244 + $0x1894] sm:$0xf]
      %v1846 = vld [vmem:[%s244 + $0x1898] sm:$0xf]
      %v1847 = vld [vmem:[%s244 + $0x189c] sm:$0xf]
      %v1848 = vld [vmem:[%s244 + $0x18a0] sm:$0xf]
      %v1849 = vld [vmem:[%s244 + $0x18a4] sm:$0xf]
      %v1850 = vld [vmem:[%s244 + $0x18a8] sm:$0xf]
      %v1851 = vld [vmem:[%s244 + $0x18ac] sm:$0xf]
      %v1852 = vld [vmem:[%s244 + $0x18b0] sm:$0xf]
      %v1853 = vld [vmem:[%s244 + $0x18b4] sm:$0xf]
      %v1854 = vld [vmem:[%s244 + $0x18b8] sm:$0xf]
      %v1855 = vld [vmem:[%s244 + $0x18bc] sm:$0xf]
      %v1856 = vld [vmem:[%s244 + $0x18c0] sm:$0xf]
      %v1857 = vld [vmem:[%s244 + $0x18c4] sm:$0xf]
      %v1858 = vld [vmem:[%s244 + $0x18c8] sm:$0xf]
      %v1859 = vld [vmem:[%s244 + $0x18cc] sm:$0xf]
      %v1860 = vld [vmem:[%s244 + $0x18d0] sm:$0xf]
      %v1861 = vld [vmem:[%s244 + $0x18d4] sm:$0xf]
      %v1862 = vld [vmem:[%s244 + $0x18d8] sm:$0xf]
      %v1863 = vld [vmem:[%s244 + $0x18dc] sm:$0xf]
      %v1864 = vld [vmem:[%s244 + $0x18e0] sm:$0xf]
      %v1865 = vld [vmem:[%s244 + $0x18e4] sm:$0xf]
      %v1866 = vld [vmem:[%s244 + $0x18e8] sm:$0xf]
      %v1867 = vld [vmem:[%s244 + $0x18ec] sm:$0xf]
      %v1868 = vld [vmem:[%s244 + $0x18f0] sm:$0xf]
      %v1869 = vld [vmem:[%s244 + $0x18f4] sm:$0xf]
      %v1870 = vld [vmem:[%s244 + $0x18f8] sm:$0xf]
      %v1871 = vld [vmem:[%s244 + $0x18fc] sm:$0xf]
      %v1872 = vld [vmem:[%s244 + $0x1900] sm:$0xf]
      %v1873 = vld [vmem:[%s244 + $0x1904] sm:$0xf]
      %v1874 = vld [vmem:[%s244 + $0x1908] sm:$0xf]
      %v1875 = vld [vmem:[%s244 + $0x190c] sm:$0xf]
      %v1876 = vld [vmem:[%s244 + $0x1910] sm:$0xf]
      %v1877 = vld [vmem:[%s244 + $0x1914] sm:$0xf]
      %v1878 = vld [vmem:[%s244 + $0x1918] sm:$0xf]
      %v1879 = vld [vmem:[%s244 + $0x191c] sm:$0xf]
      %v1880 = vld [vmem:[%s244 + $0x1920] sm:$0xf]
      %v1881 = vld [vmem:[%s244 + $0x1924] sm:$0xf]
      %v1882 = vld [vmem:[%s244 + $0x1928] sm:$0xf]
      %v1883 = vld [vmem:[%s244 + $0x192c] sm:$0xf]
      %v1884 = vld [vmem:[%s244 + $0x1930] sm:$0xf]
      %v1885 = vld [vmem:[%s244 + $0x1934] sm:$0xf]
      %v1886 = vld [vmem:[%s244 + $0x1938] sm:$0xf]
      %v1887 = vld [vmem:[%s244 + $0x193c] sm:$0xf]
      %v1888 = vld [vmem:[%s244 + $0x1940] sm:$0xf]
      %v1889 = vld [vmem:[%s244 + $0x1944] sm:$0xf]
      %v1890 = vld [vmem:[%s244 + $0x1948] sm:$0xf]
      %v1891 = vld [vmem:[%s244 + $0x194c] sm:$0xf]
      %v1892 = vld [vmem:[%s244 + $0x1950] sm:$0xf]
      %v1893 = vld [vmem:[%s244 + $0x1954] sm:$0xf]
      %v1894 = vld [vmem:[%s244 + $0x1958] sm:$0xf]
      %v1895 = vld [vmem:[%s244 + $0x195c] sm:$0xf]
      %v1896 = vld [vmem:[%s244 + $0x1960] sm:$0xf]
      %v1897 = vld [vmem:[%s244 + $0x1964] sm:$0xf]
      %v1898 = vld [vmem:[%s244 + $0x1968] sm:$0xf]
      %v1899 = vld [vmem:[%s244 + $0x196c] sm:$0xf]
      %v1900 = vld [vmem:[%s244 + $0x1970] sm:$0xf]
      %v1901 = vld [vmem:[%s244 + $0x1974] sm:$0xf]
      %v1902 = vld [vmem:[%s244 + $0x1978] sm:$0xf]
      %v1903 = vld [vmem:[%s244 + $0x197c] sm:$0xf]
      %v1904 = vld [vmem:[%s244 + $0x1980] sm:$0xf]
      %v1905 = vld [vmem:[%s244 + $0x1984] sm:$0xf]
      %v1906 = vld [vmem:[%s244 + $0x1988] sm:$0xf]
      %v1907 = vld [vmem:[%s244 + $0x198c] sm:$0xf]
      %v1908 = vld [vmem:[%s244 + $0x1990] sm:$0xf]
      %v1909 = vld [vmem:[%s244 + $0x1994] sm:$0xf]
      %v1910 = vld [vmem:[%s244 + $0x1998] sm:$0xf]
      %v1911 = vld [vmem:[%s244 + $0x199c] sm:$0xf]
      %v1912 = vld [vmem:[%s244 + $0x19a0] sm:$0xf]
      %v1913 = vld [vmem:[%s244 + $0x19a4] sm:$0xf]
      %v1914 = vld [vmem:[%s244 + $0x19a8] sm:$0xf]
      %v1915 = vld [vmem:[%s244 + $0x19ac] sm:$0xf]
      %v1916 = vld [vmem:[%s244 + $0x19b0] sm:$0xf]
      %v1917 = vld [vmem:[%s244 + $0x19b4] sm:$0xf]
      %v1918 = vld [vmem:[%s244 + $0x19b8] sm:$0xf]
      %v1919 = vld [vmem:[%s244 + $0x19bc] sm:$0xf]
      %v1920 = vld [vmem:[%s244 + $0x19c0] sm:$0xf]
      %v1921 = vld [vmem:[%s244 + $0x19c4] sm:$0xf]
      %v1922 = vld [vmem:[%s244 + $0x19c8] sm:$0xf]
      %v1923 = vld [vmem:[%s244 + $0x19cc] sm:$0xf]
      %v1924 = vld [vmem:[%s244 + $0x19d0] sm:$0xf]
      %v1925 = vld [vmem:[%s244 + $0x19d4] sm:$0xf]
      %v1926 = vld [vmem:[%s244 + $0x19d8] sm:$0xf]
      %v1927 = vld [vmem:[%s244 + $0x19dc] sm:$0xf]
      %v1928 = vld [vmem:[%s244 + $0x19e0] sm:$0xf]
      %v1929 = vld [vmem:[%s244 + $0x19e4] sm:$0xf]
      %v1930 = vld [vmem:[%s244 + $0x19e8] sm:$0xf]
      %v1931 = vld [vmem:[%s244 + $0x19ec] sm:$0xf]
      %v1932 = vld [vmem:[%s244 + $0x19f0] sm:$0xf]
      %v1933 = vld [vmem:[%s244 + $0x19f4] sm:$0xf]
      %v1934 = vld [vmem:[%s244 + $0x19f8] sm:$0xf]
      %v1935 = vld [vmem:[%s244 + $0x19fc] sm:$0xf]
      %v1936 = vld [vmem:[%s244 + $0x1a00] sm:$0xf]
      %v1937 = vld [vmem:[%s244 + $0x1a04] sm:$0xf]
      %v1938 = vld [vmem:[%s244 + $0x1a08] sm:$0xf]
      %v1939 = vld [vmem:[%s244 + $0x1a0c] sm:$0xf]
      %v1940 = vld [vmem:[%s244 + $0x1a10] sm:$0xf]
      %v1941 = vld [vmem:[%s244 + $0x1a14] sm:$0xf]
      %v1942 = vld [vmem:[%s244 + $0x1a18] sm:$0xf]
      %v1943 = vld [vmem:[%s244 + $0x1a1c] sm:$0xf]
      %v1944 = vld [vmem:[%s244 + $0x1a20] sm:$0xf]
      %v1945 = vld [vmem:[%s244 + $0x1a24] sm:$0xf]
      %v1946 = vld [vmem:[%s244 + $0x1a28] sm:$0xf]
      %v1947 = vld [vmem:[%s244 + $0x1a2c] sm:$0xf]
      %v1948 = vld [vmem:[%s244 + $0x1a30] sm:$0xf]
      %v1949 = vld [vmem:[%s244 + $0x1a34] sm:$0xf]
      %v1950 = vld [vmem:[%s244 + $0x1a38] sm:$0xf]
      %v1951 = vld [vmem:[%s244 + $0x1a3c] sm:$0xf]
      %v1952 = vld [vmem:[%s244 + $0x1a40] sm:$0xf]
      %v1953 = vld [vmem:[%s244 + $0x1a44] sm:$0xf]
      %v1954 = vld [vmem:[%s244 + $0x1a48] sm:$0xf]
      %v1955 = vld [vmem:[%s244 + $0x1a4c] sm:$0xf]
      %v1956 = vld [vmem:[%s244 + $0x1a50] sm:$0xf]
      %v1957 = vld [vmem:[%s244 + $0x1a54] sm:$0xf]
      %v1958 = vld [vmem:[%s244 + $0x1a58] sm:$0xf]
      %v1959 = vld [vmem:[%s244 + $0x1a5c] sm:$0xf]
      %v1960 = vld [vmem:[%s244 + $0x1a60] sm:$0xf]
      %v1961 = vld [vmem:[%s244 + $0x1a64] sm:$0xf]
      %v1962 = vld [vmem:[%s244 + $0x1a68] sm:$0xf]
      %v1963 = vld [vmem:[%s244 + $0x1a6c] sm:$0xf]
      %v1964 = vld [vmem:[%s244 + $0x1a70] sm:$0xf]
      %v1965 = vld [vmem:[%s244 + $0x1a74] sm:$0xf]
      %v1966 = vld [vmem:[%s244 + $0x1a78] sm:$0xf]
      %v1967 = vld [vmem:[%s244 + $0x1a7c] sm:$0xf]
      %v1968 = vld [vmem:[%s247] sm:$0x1]
      %v1970 = vlaneseq
      %v1971 = vshrl.u32 %v1970, 7
      %v1972 = vsub.s32 0, %v1971
      %v1973 = vrot.slane %v1968, %v1972
      %v1989 = vcombine.high %v258, %v258
      %v1991 = vunpack.c.l.s4 1966171168
      %v1992 = vunpack.c.0.s8 %v1991
      %v1993 = vlaneseq
      %v1994 = vshrl.u32 %v1993, 7
      %v1995 = vsub.s32 %v1992, %v1994
      %v1996 = vrot.slane %v258, %v1995
      %v1998 = vunpack.c.l.s4 1966171168
      %v1999 = vunpack.c.0.s8 %v1998
      %v2000 = vlaneseq
      %v2001 = vshrl.u32 %v2000, 7
      %v2002 = vsub.s32 %v1999, %v2001
      %v2003 = vrot.slane %v1989, %v2002
      %v2004 = vcombine.high %v1996, %v1996
      %v2005 = vcombine.high %v2003, %v2003
      %v2007 = vunpack.c.l.s4 1966171168
      %v2008 = vunpack.c.0.s8 %v2007
      %v2009 = vlaneseq
      %v2010 = vshrl.u32 %v2009, 7
      %v2011 = vsub.s32 %v2008, %v2010
      %v2012 = vrot.slane %v1996, %v2011
      %v2014 = vunpack.c.l.s4 1966171168
      %v2015 = vunpack.c.0.s8 %v2014
      %v2016 = vlaneseq
      %v2017 = vshrl.u32 %v2016, 7
      %v2018 = vsub.s32 %v2015, %v2017
      %v2019 = vrot.slane %v2003, %v2018
      %v2021 = vunpack.c.l.s4 1966171168
      %v2022 = vunpack.c.0.s8 %v2021
      %v2023 = vlaneseq
      %v2024 = vshrl.u32 %v2023, 7
      %v2025 = vsub.s32 %v2022, %v2024
      %v2026 = vrot.slane %v2004, %v2025
      %v2028 = vunpack.c.l.s4 1966171168
      %v2029 = vunpack.c.0.s8 %v2028
      %v2030 = vlaneseq
      %v2031 = vshrl.u32 %v2030, 7
      %v2032 = vsub.s32 %v2029, %v2031
      %v2033 = vrot.slane %v2005, %v2032
      %v2034 = vcombine.high %v2012, %v2012
      %v2035 = vcombine.high %v2019, %v2019
      %v2036 = vcombine.high %v2026, %v2026
      %v2037 = vcombine.high %v2033, %v2033
      %v2038 = vcombine.high %v259, %v259
      %v2040 = vunpack.c.l.s4 1966171168
      %v2041 = vunpack.c.0.s8 %v2040
      %v2042 = vlaneseq
      %v2043 = vshrl.u32 %v2042, 7
      %v2044 = vsub.s32 %v2041, %v2043
      %v2045 = vrot.slane %v259, %v2044
      %v2047 = vunpack.c.l.s4 1966171168
      %v2048 = vunpack.c.0.s8 %v2047
      %v2049 = vlaneseq
      %v2050 = vshrl.u32 %v2049, 7
      %v2051 = vsub.s32 %v2048, %v2050
      %v2052 = vrot.slane %v2038, %v2051
      %v2053 = vcombine.high %v2045, %v2045
      %v2054 = vcombine.high %v2052, %v2052
      %v2056 = vunpack.c.l.s4 1966171168
      %v2057 = vunpack.c.0.s8 %v2056
      %v2058 = vlaneseq
      %v2059 = vshrl.u32 %v2058, 7
      %v2060 = vsub.s32 %v2057, %v2059
      %v2061 = vrot.slane %v2045, %v2060
      %v2063 = vunpack.c.l.s4 1966171168
      %v2064 = vunpack.c.0.s8 %v2063
      %v2065 = vlaneseq
      %v2066 = vshrl.u32 %v2065, 7
      %v2067 = vsub.s32 %v2064, %v2066
      %v2068 = vrot.slane %v2052, %v2067
      %v2070 = vunpack.c.l.s4 1966171168
      %v2071 = vunpack.c.0.s8 %v2070
      %v2072 = vlaneseq
      %v2073 = vshrl.u32 %v2072, 7
      %v2074 = vsub.s32 %v2071, %v2073
      %v2075 = vrot.slane %v2053, %v2074
      %v2077 = vunpack.c.l.s4 1966171168
      %v2078 = vunpack.c.0.s8 %v2077
      %v2079 = vlaneseq
      %v2080 = vshrl.u32 %v2079, 7
      %v2081 = vsub.s32 %v2078, %v2080
      %v2082 = vrot.slane %v2054, %v2081
      %v2083 = vcombine.high %v2061, %v2061
      %v2084 = vcombine.high %v2068, %v2068
      %v2085 = vcombine.high %v2075, %v2075
      %v2086 = vcombine.high %v2082, %v2082
      %v2087 = vcombine.high %v260, %v260
      %v2089 = vunpack.c.l.s4 1966171168
      %v2090 = vunpack.c.0.s8 %v2089
      %v2091 = vlaneseq
      %v2092 = vshrl.u32 %v2091, 7
      %v2093 = vsub.s32 %v2090, %v2092
      %v2094 = vrot.slane %v260, %v2093
      %v2096 = vunpack.c.l.s4 1966171168
      %v2097 = vunpack.c.0.s8 %v2096
      %v2098 = vlaneseq
      %v2099 = vshrl.u32 %v2098, 7
      %v2100 = vsub.s32 %v2097, %v2099
      %v2101 = vrot.slane %v2087, %v2100
      %v2102 = vcombine.high %v2094, %v2094
      %v2103 = vcombine.high %v2101, %v2101
      %v2105 = vunpack.c.l.s4 1966171168
      %v2106 = vunpack.c.0.s8 %v2105
      %v2107 = vlaneseq
      %v2108 = vshrl.u32 %v2107, 7
      %v2109 = vsub.s32 %v2106, %v2108
      %v2110 = vrot.slane %v2094, %v2109
      %v2112 = vunpack.c.l.s4 1966171168
      %v2113 = vunpack.c.0.s8 %v2112
      %v2114 = vlaneseq
      %v2115 = vshrl.u32 %v2114, 7
      %v2116 = vsub.s32 %v2113, %v2115
      %v2117 = vrot.slane %v2101, %v2116
      %v2119 = vunpack.c.l.s4 1966171168
      %v2120 = vunpack.c.0.s8 %v2119
      %v2121 = vlaneseq
      %v2122 = vshrl.u32 %v2121, 7
      %v2123 = vsub.s32 %v2120, %v2122
      %v2124 = vrot.slane %v2102, %v2123
      %v2126 = vunpack.c.l.s4 1966171168
      %v2127 = vunpack.c.0.s8 %v2126
      %v2128 = vlaneseq
      %v2129 = vshrl.u32 %v2128, 7
      %v2130 = vsub.s32 %v2127, %v2129
      %v2131 = vrot.slane %v2103, %v2130
      %v2132 = vcombine.high %v2110, %v2110
      %v2133 = vcombine.high %v2117, %v2117
      %v2134 = vcombine.high %v2124, %v2124
      %v2135 = vcombine.high %v2131, %v2131
      %v2136 = vcombine.high %v261, %v261
      %v2138 = vunpack.c.l.s4 1966171168
      %v2139 = vunpack.c.0.s8 %v2138
      %v2140 = vlaneseq
      %v2141 = vshrl.u32 %v2140, 7
      %v2142 = vsub.s32 %v2139, %v2141
      %v2143 = vrot.slane %v261, %v2142
      %v2145 = vunpack.c.l.s4 1966171168
      %v2146 = vunpack.c.0.s8 %v2145
      %v2147 = vlaneseq
      %v2148 = vshrl.u32 %v2147, 7
      %v2149 = vsub.s32 %v2146, %v2148
      %v2150 = vrot.slane %v2136, %v2149
      %v2151 = vcombine.high %v2143, %v2143
      %v2152 = vcombine.high %v2150, %v2150
      %v2154 = vunpack.c.l.s4 1966171168
      %v2155 = vunpack.c.0.s8 %v2154
      %v2156 = vlaneseq
      %v2157 = vshrl.u32 %v2156, 7
      %v2158 = vsub.s32 %v2155, %v2157
      %v2159 = vrot.slane %v2143, %v2158
      %v2161 = vunpack.c.l.s4 1966171168
      %v2162 = vunpack.c.0.s8 %v2161
      %v2163 = vlaneseq
      %v2164 = vshrl.u32 %v2163, 7
      %v2165 = vsub.s32 %v2162, %v2164
      %v2166 = vrot.slane %v2150, %v2165
      %v2168 = vunpack.c.l.s4 1966171168
      %v2169 = vunpack.c.0.s8 %v2168
      %v2170 = vlaneseq
      %v2171 = vshrl.u32 %v2170, 7
      %v2172 = vsub.s32 %v2169, %v2171
      %v2173 = vrot.slane %v2151, %v2172
      %v2175 = vunpack.c.l.s4 1966171168
      %v2176 = vunpack.c.0.s8 %v2175
      %v2177 = vlaneseq
      %v2178 = vshrl.u32 %v2177, 7
      %v2179 = vsub.s32 %v2176, %v2178
      %v2180 = vrot.slane %v2152, %v2179
      %v2181 = vcombine.high %v2159, %v2159
      %v2182 = vcombine.high %v2166, %v2166
      %v2183 = vcombine.high %v2173, %v2173
      %v2184 = vcombine.high %v2180, %v2180
      %v2185 = vcombine.high %v262, %v262
      %v2187 = vunpack.c.l.s4 1966171168
      %v2188 = vunpack.c.0.s8 %v2187
      %v2189 = vlaneseq
      %v2190 = vshrl.u32 %v2189, 7
      %v2191 = vsub.s32 %v2188, %v2190
      %v2192 = vrot.slane %v262, %v2191
      %v2194 = vunpack.c.l.s4 1966171168
      %v2195 = vunpack.c.0.s8 %v2194
      %v2196 = vlaneseq
      %v2197 = vshrl.u32 %v2196, 7
      %v2198 = vsub.s32 %v2195, %v2197
      %v2199 = vrot.slane %v2185, %v2198
      %v2200 = vcombine.high %v2192, %v2192
      %v2201 = vcombine.high %v2199, %v2199
      %v2203 = vunpack.c.l.s4 1966171168
      %v2204 = vunpack.c.0.s8 %v2203
      %v2205 = vlaneseq
      %v2206 = vshrl.u32 %v2205, 7
      %v2207 = vsub.s32 %v2204, %v2206
      %v2208 = vrot.slane %v2192, %v2207
      %v2210 = vunpack.c.l.s4 1966171168
      %v2211 = vunpack.c.0.s8 %v2210
      %v2212 = vlaneseq
      %v2213 = vshrl.u32 %v2212, 7
      %v2214 = vsub.s32 %v2211, %v2213
      %v2215 = vrot.slane %v2199, %v2214
      %v2217 = vunpack.c.l.s4 1966171168
      %v2218 = vunpack.c.0.s8 %v2217
      %v2219 = vlaneseq
      %v2220 = vshrl.u32 %v2219, 7
      %v2221 = vsub.s32 %v2218, %v2220
      %v2222 = vrot.slane %v2200, %v2221
      %v2224 = vunpack.c.l.s4 1966171168
      %v2225 = vunpack.c.0.s8 %v2224
      %v2226 = vlaneseq
      %v2227 = vshrl.u32 %v2226, 7
      %v2228 = vsub.s32 %v2225, %v2227
      %v2229 = vrot.slane %v2201, %v2228
      %v2230 = vcombine.high %v2208, %v2208
      %v2231 = vcombine.high %v2215, %v2215
      %v2232 = vcombine.high %v2222, %v2222
      %v2233 = vcombine.high %v2229, %v2229
      %v2234 = vcombine.high %v263, %v263
      %v2236 = vunpack.c.l.s4 1966171168
      %v2237 = vunpack.c.0.s8 %v2236
      %v2238 = vlaneseq
      %v2239 = vshrl.u32 %v2238, 7
      %v2240 = vsub.s32 %v2237, %v2239
      %v2241 = vrot.slane %v263, %v2240
      %v2243 = vunpack.c.l.s4 1966171168
      %v2244 = vunpack.c.0.s8 %v2243
      %v2245 = vlaneseq
      %v2246 = vshrl.u32 %v2245, 7
      %v2247 = vsub.s32 %v2244, %v2246
      %v2248 = vrot.slane %v2234, %v2247
      %v2249 = vcombine.high %v2241, %v2241
      %v2250 = vcombine.high %v2248, %v2248
      %v2252 = vunpack.c.l.s4 1966171168
      %v2253 = vunpack.c.0.s8 %v2252
      %v2254 = vlaneseq
      %v2255 = vshrl.u32 %v2254, 7
      %v2256 = vsub.s32 %v2253, %v2255
      %v2257 = vrot.slane %v2241, %v2256
      %v2259 = vunpack.c.l.s4 1966171168
      %v2260 = vunpack.c.0.s8 %v2259
      %v2261 = vlaneseq
      %v2262 = vshrl.u32 %v2261, 7
      %v2263 = vsub.s32 %v2260, %v2262
      %v2264 = vrot.slane %v2248, %v2263
      %v2266 = vunpack.c.l.s4 1966171168
      %v2267 = vunpack.c.0.s8 %v2266
      %v2268 = vlaneseq
      %v2269 = vshrl.u32 %v2268, 7
      %v2270 = vsub.s32 %v2267, %v2269
      %v2271 = vrot.slane %v2249, %v2270
      %v2273 = vunpack.c.l.s4 1966171168
      %v2274 = vunpack.c.0.s8 %v2273
      %v2275 = vlaneseq
      %v2276 = vshrl.u32 %v2275, 7
      %v2277 = vsub.s32 %v2274, %v2276
      %v2278 = vrot.slane %v2250, %v2277
      %v2279 = vcombine.high %v2257, %v2257
      %v2280 = vcombine.high %v2264, %v2264
      %v2281 = vcombine.high %v2271, %v2271
      %v2282 = vcombine.high %v2278, %v2278
      %v2283 = vcombine.high %v264, %v264
      %v2285 = vunpack.c.l.s4 1966171168
      %v2286 = vunpack.c.0.s8 %v2285
      %v2287 = vlaneseq
      %v2288 = vshrl.u32 %v2287, 7
      %v2289 = vsub.s32 %v2286, %v2288
      %v2290 = vrot.slane %v264, %v2289
      %v2292 = vunpack.c.l.s4 1966171168
      %v2293 = vunpack.c.0.s8 %v2292
      %v2294 = vlaneseq
      %v2295 = vshrl.u32 %v2294, 7
      %v2296 = vsub.s32 %v2293, %v2295
      %v2297 = vrot.slane %v2283, %v2296
      %v2298 = vcombine.high %v2290, %v2290
      %v2299 = vcombine.high %v2297, %v2297
      %v2301 = vunpack.c.l.s4 1966171168
      %v2302 = vunpack.c.0.s8 %v2301
      %v2303 = vlaneseq
      %v2304 = vshrl.u32 %v2303, 7
      %v2305 = vsub.s32 %v2302, %v2304
      %v2306 = vrot.slane %v2290, %v2305
      %v2308 = vunpack.c.l.s4 1966171168
      %v2309 = vunpack.c.0.s8 %v2308
      %v2310 = vlaneseq
      %v2311 = vshrl.u32 %v2310, 7
      %v2312 = vsub.s32 %v2309, %v2311
      %v2313 = vrot.slane %v2297, %v2312
      %v2315 = vunpack.c.l.s4 1966171168
      %v2316 = vunpack.c.0.s8 %v2315
      %v2317 = vlaneseq
      %v2318 = vshrl.u32 %v2317, 7
      %v2319 = vsub.s32 %v2316, %v2318
      %v2320 = vrot.slane %v2298, %v2319
      %v2322 = vunpack.c.l.s4 1966171168
      %v2323 = vunpack.c.0.s8 %v2322
      %v2324 = vlaneseq
      %v2325 = vshrl.u32 %v2324, 7
      %v2326 = vsub.s32 %v2323, %v2325
      %v2327 = vrot.slane %v2299, %v2326
      %v2328 = vcombine.high %v2306, %v2306
      %v2329 = vcombine.high %v2313, %v2313
      %v2330 = vcombine.high %v2320, %v2320
      %v2331 = vcombine.high %v2327, %v2327
      %v2332 = vcombine.high %v265, %v265
      %v2334 = vunpack.c.l.s4 1966171168
      %v2335 = vunpack.c.0.s8 %v2334
      %v2336 = vlaneseq
      %v2337 = vshrl.u32 %v2336, 7
      %v2338 = vsub.s32 %v2335, %v2337
      %v2339 = vrot.slane %v265, %v2338
      %v2341 = vunpack.c.l.s4 1966171168
      %v2342 = vunpack.c.0.s8 %v2341
      %v2343 = vlaneseq
      %v2344 = vshrl.u32 %v2343, 7
      %v2345 = vsub.s32 %v2342, %v2344
      %v2346 = vrot.slane %v2332, %v2345
      %v2347 = vcombine.high %v2339, %v2339
      %v2348 = vcombine.high %v2346, %v2346
      %v2350 = vunpack.c.l.s4 1966171168
      %v2351 = vunpack.c.0.s8 %v2350
      %v2352 = vlaneseq
      %v2353 = vshrl.u32 %v2352, 7
      %v2354 = vsub.s32 %v2351, %v2353
      %v2355 = vrot.slane %v2339, %v2354
      %v2357 = vunpack.c.l.s4 1966171168
      %v2358 = vunpack.c.0.s8 %v2357
      %v2359 = vlaneseq
      %v2360 = vshrl.u32 %v2359, 7
      %v2361 = vsub.s32 %v2358, %v2360
      %v2362 = vrot.slane %v2346, %v2361
      %v2364 = vunpack.c.l.s4 1966171168
      %v2365 = vunpack.c.0.s8 %v2364
      %v2366 = vlaneseq
      %v2367 = vshrl.u32 %v2366, 7
      %v2368 = vsub.s32 %v2365, %v2367
      %v2369 = vrot.slane %v2347, %v2368
      %v2371 = vunpack.c.l.s4 1966171168
      %v2372 = vunpack.c.0.s8 %v2371
      %v2373 = vlaneseq
      %v2374 = vshrl.u32 %v2373, 7
      %v2375 = vsub.s32 %v2372, %v2374
      %v2376 = vrot.slane %v2348, %v2375
      %v2377 = vcombine.high %v2355, %v2355
      %v2378 = vcombine.high %v2362, %v2362
      %v2379 = vcombine.high %v2369, %v2369
      %v2380 = vcombine.high %v2376, %v2376
      %v2381 = vcombine.high %v266, %v266
      %v2383 = vunpack.c.l.s4 1966171168
      %v2384 = vunpack.c.0.s8 %v2383
      %v2385 = vlaneseq
      %v2386 = vshrl.u32 %v2385, 7
      %v2387 = vsub.s32 %v2384, %v2386
      %v2388 = vrot.slane %v266, %v2387
      %v2390 = vunpack.c.l.s4 1966171168
      %v2391 = vunpack.c.0.s8 %v2390
      %v2392 = vlaneseq
      %v2393 = vshrl.u32 %v2392, 7
      %v2394 = vsub.s32 %v2391, %v2393
      %v2395 = vrot.slane %v2381, %v2394
      %v2396 = vcombine.high %v2388, %v2388
      %v2397 = vcombine.high %v2395, %v2395
      %v2399 = vunpack.c.l.s4 1966171168
      %v2400 = vunpack.c.0.s8 %v2399
      %v2401 = vlaneseq
      %v2402 = vshrl.u32 %v2401, 7
      %v2403 = vsub.s32 %v2400, %v2402
      %v2404 = vrot.slane %v2388, %v2403
      %v2406 = vunpack.c.l.s4 1966171168
      %v2407 = vunpack.c.0.s8 %v2406
      %v2408 = vlaneseq
      %v2409 = vshrl.u32 %v2408, 7
      %v2410 = vsub.s32 %v2407, %v2409
      %v2411 = vrot.slane %v2395, %v2410
      %v2413 = vunpack.c.l.s4 1966171168
      %v2414 = vunpack.c.0.s8 %v2413
      %v2415 = vlaneseq
      %v2416 = vshrl.u32 %v2415, 7
      %v2417 = vsub.s32 %v2414, %v2416
      %v2418 = vrot.slane %v2396, %v2417
      %v2420 = vunpack.c.l.s4 1966171168
      %v2421 = vunpack.c.0.s8 %v2420
      %v2422 = vlaneseq
      %v2423 = vshrl.u32 %v2422, 7
      %v2424 = vsub.s32 %v2421, %v2423
      %v2425 = vrot.slane %v2397, %v2424
      %v2426 = vcombine.high %v2404, %v2404
      %v2427 = vcombine.high %v2411, %v2411
      %v2428 = vcombine.high %v2418, %v2418
      %v2429 = vcombine.high %v2425, %v2425
      %v2430 = vcombine.high %v267, %v267
      %v2432 = vunpack.c.l.s4 1966171168
      %v2433 = vunpack.c.0.s8 %v2432
      %v2434 = vlaneseq
      %v2435 = vshrl.u32 %v2434, 7
      %v2436 = vsub.s32 %v2433, %v2435
      %v2437 = vrot.slane %v267, %v2436
      %v2439 = vunpack.c.l.s4 1966171168
      %v2440 = vunpack.c.0.s8 %v2439
      %v2441 = vlaneseq
      %v2442 = vshrl.u32 %v2441, 7
      %v2443 = vsub.s32 %v2440, %v2442
      %v2444 = vrot.slane %v2430, %v2443
      %v2445 = vcombine.high %v2437, %v2437
      %v2446 = vcombine.high %v2444, %v2444
      %v2448 = vunpack.c.l.s4 1966171168
      %v2449 = vunpack.c.0.s8 %v2448
      %v2450 = vlaneseq
      %v2451 = vshrl.u32 %v2450, 7
      %v2452 = vsub.s32 %v2449, %v2451
      %v2453 = vrot.slane %v2437, %v2452
      %v2455 = vunpack.c.l.s4 1966171168
      %v2456 = vunpack.c.0.s8 %v2455
      %v2457 = vlaneseq
      %v2458 = vshrl.u32 %v2457, 7
      %v2459 = vsub.s32 %v2456, %v2458
      %v2460 = vrot.slane %v2444, %v2459
      %v2462 = vunpack.c.l.s4 1966171168
      %v2463 = vunpack.c.0.s8 %v2462
      %v2464 = vlaneseq
      %v2465 = vshrl.u32 %v2464, 7
      %v2466 = vsub.s32 %v2463, %v2465
      %v2467 = vrot.slane %v2445, %v2466
      %v2469 = vunpack.c.l.s4 1966171168
      %v2470 = vunpack.c.0.s8 %v2469
      %v2471 = vlaneseq
      %v2472 = vshrl.u32 %v2471, 7
      %v2473 = vsub.s32 %v2470, %v2472
      %v2474 = vrot.slane %v2446, %v2473
      %v2475 = vcombine.high %v2453, %v2453
      %v2476 = vcombine.high %v2460, %v2460
      %v2477 = vcombine.high %v2467, %v2467
      %v2478 = vcombine.high %v2474, %v2474
      %v2479 = vcombine.high %v268, %v268
      %v2481 = vunpack.c.l.s4 1966171168
      %v2482 = vunpack.c.0.s8 %v2481
      %v2483 = vlaneseq
      %v2484 = vshrl.u32 %v2483, 7
      %v2485 = vsub.s32 %v2482, %v2484
      %v2486 = vrot.slane %v268, %v2485
      %v2488 = vunpack.c.l.s4 1966171168
      %v2489 = vunpack.c.0.s8 %v2488
      %v2490 = vlaneseq
      %v2491 = vshrl.u32 %v2490, 7
      %v2492 = vsub.s32 %v2489, %v2491
      %v2493 = vrot.slane %v2479, %v2492
      %v2494 = vcombine.high %v2486, %v2486
      %v2495 = vcombine.high %v2493, %v2493
      %v2497 = vunpack.c.l.s4 1966171168
      %v2498 = vunpack.c.0.s8 %v2497
      %v2499 = vlaneseq
      %v2500 = vshrl.u32 %v2499, 7
      %v2501 = vsub.s32 %v2498, %v2500
      %v2502 = vrot.slane %v2486, %v2501
      %v2504 = vunpack.c.l.s4 1966171168
      %v2505 = vunpack.c.0.s8 %v2504
      %v2506 = vlaneseq
      %v2507 = vshrl.u32 %v2506, 7
      %v2508 = vsub.s32 %v2505, %v2507
      %v2509 = vrot.slane %v2493, %v2508
      %v2511 = vunpack.c.l.s4 1966171168
      %v2512 = vunpack.c.0.s8 %v2511
      %v2513 = vlaneseq
      %v2514 = vshrl.u32 %v2513, 7
      %v2515 = vsub.s32 %v2512, %v2514
      %v2516 = vrot.slane %v2494, %v2515
      %v2518 = vunpack.c.l.s4 1966171168
      %v2519 = vunpack.c.0.s8 %v2518
      %v2520 = vlaneseq
      %v2521 = vshrl.u32 %v2520, 7
      %v2522 = vsub.s32 %v2519, %v2521
      %v2523 = vrot.slane %v2495, %v2522
      %v2524 = vcombine.high %v2502, %v2502
      %v2525 = vcombine.high %v2509, %v2509
      %v2526 = vcombine.high %v2516, %v2516
      %v2527 = vcombine.high %v2523, %v2523
      %v2528 = vcombine.high %v269, %v269
      %v2530 = vunpack.c.l.s4 1966171168
      %v2531 = vunpack.c.0.s8 %v2530
      %v2532 = vlaneseq
      %v2533 = vshrl.u32 %v2532, 7
      %v2534 = vsub.s32 %v2531, %v2533
      %v2535 = vrot.slane %v269, %v2534
      %v2537 = vunpack.c.l.s4 1966171168
      %v2538 = vunpack.c.0.s8 %v2537
      %v2539 = vlaneseq
      %v2540 = vshrl.u32 %v2539, 7
      %v2541 = vsub.s32 %v2538, %v2540
      %v2542 = vrot.slane %v2528, %v2541
      %v2543 = vcombine.high %v2535, %v2535
      %v2544 = vcombine.high %v2542, %v2542
      %v2546 = vunpack.c.l.s4 1966171168
      %v2547 = vunpack.c.0.s8 %v2546
      %v2548 = vlaneseq
      %v2549 = vshrl.u32 %v2548, 7
      %v2550 = vsub.s32 %v2547, %v2549
      %v2551 = vrot.slane %v2535, %v2550
      %v2553 = vunpack.c.l.s4 1966171168
      %v2554 = vunpack.c.0.s8 %v2553
      %v2555 = vlaneseq
      %v2556 = vshrl.u32 %v2555, 7
      %v2557 = vsub.s32 %v2554, %v2556
      %v2558 = vrot.slane %v2542, %v2557
      %v2560 = vunpack.c.l.s4 1966171168
      %v2561 = vunpack.c.0.s8 %v2560
      %v2562 = vlaneseq
      %v2563 = vshrl.u32 %v2562, 7
      %v2564 = vsub.s32 %v2561, %v2563
      %v2565 = vrot.slane %v2543, %v2564
      %v2567 = vunpack.c.l.s4 1966171168
      %v2568 = vunpack.c.0.s8 %v2567
      %v2569 = vlaneseq
      %v2570 = vshrl.u32 %v2569, 7
      %v2571 = vsub.s32 %v2568, %v2570
      %v2572 = vrot.slane %v2544, %v2571
      %v2573 = vcombine.high %v2551, %v2551
      %v2574 = vcombine.high %v2558, %v2558
      %v2575 = vcombine.high %v2565, %v2565
      %v2576 = vcombine.high %v2572, %v2572
      %v2577 = vcombine.high %v270, %v270
      %v2579 = vunpack.c.l.s4 1966171168
      %v2580 = vunpack.c.0.s8 %v2579
      %v2581 = vlaneseq
      %v2582 = vshrl.u32 %v2581, 7
      %v2583 = vsub.s32 %v2580, %v2582
      %v2584 = vrot.slane %v270, %v2583
      %v2586 = vunpack.c.l.s4 1966171168
      %v2587 = vunpack.c.0.s8 %v2586
      %v2588 = vlaneseq
      %v2589 = vshrl.u32 %v2588, 7
      %v2590 = vsub.s32 %v2587, %v2589
      %v2591 = vrot.slane %v2577, %v2590
      %v2592 = vcombine.high %v2584, %v2584
      %v2593 = vcombine.high %v2591, %v2591
      %v2595 = vunpack.c.l.s4 1966171168
      %v2596 = vunpack.c.0.s8 %v2595
      %v2597 = vlaneseq
      %v2598 = vshrl.u32 %v2597, 7
      %v2599 = vsub.s32 %v2596, %v2598
      %v2600 = vrot.slane %v2584, %v2599
      %v2602 = vunpack.c.l.s4 1966171168
      %v2603 = vunpack.c.0.s8 %v2602
      %v2604 = vlaneseq
      %v2605 = vshrl.u32 %v2604, 7
      %v2606 = vsub.s32 %v2603, %v2605
      %v2607 = vrot.slane %v2591, %v2606
      %v2609 = vunpack.c.l.s4 1966171168
      %v2610 = vunpack.c.0.s8 %v2609
      %v2611 = vlaneseq
      %v2612 = vshrl.u32 %v2611, 7
      %v2613 = vsub.s32 %v2610, %v2612
      %v2614 = vrot.slane %v2592, %v2613
      %v2616 = vunpack.c.l.s4 1966171168
      %v2617 = vunpack.c.0.s8 %v2616
      %v2618 = vlaneseq
      %v2619 = vshrl.u32 %v2618, 7
      %v2620 = vsub.s32 %v2617, %v2619
      %v2621 = vrot.slane %v2593, %v2620
      %v2622 = vcombine.high %v2600, %v2600
      %v2623 = vcombine.high %v2607, %v2607
      %v2624 = vcombine.high %v2614, %v2614
      %v2625 = vcombine.high %v2621, %v2621
      %v2627 = vunpack.c.l.s4 1966171168
      %v2628 = vunpack.c.0.s8 %v2627
      %v2629 = vlaneseq
      %v2630 = vshrl.u32 %v2629, 7
      %v2631 = vsub.s32 %v2628, %v2630
      %v2632 = vrot.slane %v271, %v2631
      %v2633 = vcombine.high %v2632, %v2632
      %v2635 = vunpack.c.l.s4 1966171168
      %v2636 = vunpack.c.0.s8 %v2635
      %v2637 = vlaneseq
      %v2638 = vshrl.u32 %v2637, 7
      %v2639 = vsub.s32 %v2636, %v2638
      %v2640 = vrot.slane %v2632, %v2639
      %v2642 = vunpack.c.l.s4 1966171168
      %v2643 = vunpack.c.0.s8 %v2642
      %v2644 = vlaneseq
      %v2645 = vshrl.u32 %v2644, 7
      %v2646 = vsub.s32 %v2643, %v2645
      %v2647 = vrot.slane %v2633, %v2646
      %v4450 = vunpack.c.l.b16 %v272
      %v4451 = vunpack.c.l.b16 %v273
      %v4452 = vunpack.c.l.b16 %v274
      %v4453 = vunpack.c.l.b16 %v275
      %v4454 = vunpack.c.l.b16 %v276
      %v4455 = vunpack.c.l.b16 %v277
      %v4456 = vunpack.c.l.b16 %v278
      %v4457 = vunpack.c.l.b16 %v279
      %v4458 = vunpack.c.l.b16 %v280
      %v4459 = vunpack.c.l.b16 %v281
      %v4460 = vunpack.c.l.b16 %v282
      %v4461 = vunpack.c.l.b16 %v283
      %v4462 = vunpack.c.l.b16 %v284
      %v4463 = vunpack.c.l.b16 %v285
      %v4464 = vunpack.c.l.b16 %v286
      %v4465 = vunpack.c.l.b16 %v287
      %v4466 = vunpack.c.l.b16 %v288
      %v4467 = vunpack.c.l.b16 %v289
      %v4468 = vunpack.c.l.b16 %v290
      %v4469 = vunpack.c.l.b16 %v291
      %v4470 = vunpack.c.l.b16 %v292
      %v4471 = vunpack.c.l.b16 %v293
      %v4472 = vunpack.c.l.b16 %v294
      %v4473 = vunpack.c.l.b16 %v295
      %v4474 = vunpack.c.l.b16 %v296
      %v4475 = vunpack.c.l.b16 %v297
      %v4476 = vunpack.c.l.b16 %v298
      %v4477 = vunpack.c.l.b16 %v299
      %v4478 = vunpack.c.l.b16 %v300
      %v4479 = vunpack.c.l.b16 %v301
      %v4480 = vunpack.c.l.b16 %v302
      %v4481 = vunpack.c.l.b16 %v303
      %v4482 = vunpack.c.l.b16 %v304
      %v4483 = vunpack.c.l.b16 %v305
      %v4484 = vunpack.c.l.b16 %v306
      %v4485 = vunpack.c.l.b16 %v307
      %v4486 = vunpack.c.l.b16 %v308
      %v4487 = vunpack.c.l.b16 %v309
      %v4488 = vunpack.c.l.b16 %v310
      %v4489 = vunpack.c.l.b16 %v311
      %v4490 = vunpack.c.l.b16 %v312
      %v4491 = vunpack.c.l.b16 %v313
      %v4492 = vunpack.c.l.b16 %v314
      %v4493 = vunpack.c.l.b16 %v315
      %v4494 = vunpack.c.l.b16 %v316
      %v4495 = vunpack.c.l.b16 %v317
      %v4496 = vunpack.c.l.b16 %v318
      %v4497 = vunpack.c.l.b16 %v319
      %v4498 = vunpack.c.l.b16 %v320
      %v4499 = vunpack.c.l.b16 %v321
      %v4500 = vunpack.c.l.b16 %v322
      %v4501 = vunpack.c.l.b16 %v323
      %v4502 = vunpack.c.l.b16 %v324
      %v4503 = vunpack.c.l.b16 %v325
      %v4504 = vunpack.c.l.b16 %v326
      %v4505 = vunpack.c.l.b16 %v327
      %v4506 = vunpack.c.l.b16 %v328
      %v4507 = vunpack.c.l.b16 %v329
      %v4508 = vunpack.c.l.b16 %v330
      %v4509 = vunpack.c.l.b16 %v331
      %v4510 = vunpack.c.l.b16 %v332
      %v4511 = vunpack.c.l.b16 %v333
      %v4512 = vunpack.c.l.b16 %v334
      %v4513 = vunpack.c.l.b16 %v335
      %v4514 = vunpack.c.l.b16 %v336
      %v4515 = vunpack.c.l.b16 %v337
      %v4516 = vunpack.c.l.b16 %v338
      %v4517 = vunpack.c.l.b16 %v339
      %v4518 = vunpack.c.l.b16 %v340
      %v4519 = vunpack.c.l.b16 %v341
      %v4520 = vunpack.c.l.b16 %v342
      %v4521 = vunpack.c.l.b16 %v343
      %v4522 = vunpack.c.l.b16 %v344
      %v4523 = vunpack.c.l.b16 %v345
      %v4524 = vunpack.c.l.b16 %v346
      %v4525 = vunpack.c.l.b16 %v347
      %v4526 = vunpack.c.l.b16 %v348
      %v4527 = vunpack.c.l.b16 %v349
      %v4528 = vunpack.c.l.b16 %v350
      %v4529 = vunpack.c.l.b16 %v351
      %v4530 = vunpack.c.l.b16 %v352
      %v4531 = vunpack.c.l.b16 %v353
      %v4532 = vunpack.c.l.b16 %v354
      %v4533 = vunpack.c.l.b16 %v355
      %v4534 = vunpack.c.l.b16 %v356
      %v4535 = vunpack.c.l.b16 %v357
      %v4536 = vunpack.c.l.b16 %v358
      %v4537 = vunpack.c.l.b16 %v359
      %v4538 = vunpack.c.l.b16 %v360
      %v4539 = vunpack.c.l.b16 %v361
      %v4540 = vunpack.c.l.b16 %v362
      %v4541 = vunpack.c.l.b16 %v363
      %v4542 = vunpack.c.l.b16 %v364
      %v4543 = vunpack.c.l.b16 %v365
      %v4544 = vunpack.c.l.b16 %v366
      %v4545 = vunpack.c.l.b16 %v367
      %v4546 = vunpack.c.l.b16 %v368
      %v4547 = vunpack.c.l.b16 %v369
      %v4548 = vunpack.c.l.b16 %v370
      %v4549 = vunpack.c.l.b16 %v371
      %v4550 = vunpack.c.l.b16 %v372
      %v4551 = vunpack.c.l.b16 %v373
      %v4552 = vunpack.c.l.b16 %v374
      %v4553 = vunpack.c.l.b16 %v375
      %v4554 = vunpack.c.l.b16 %v376
      %v4555 = vunpack.c.l.b16 %v377
      %v4556 = vunpack.c.l.b16 %v378
      %v4557 = vunpack.c.l.b16 %v379
      %v4558 = vunpack.c.l.b16 %v380
      %v4559 = vunpack.c.l.b16 %v381
      %v4560 = vunpack.c.l.b16 %v382
      %v4561 = vunpack.c.l.b16 %v383
      %v4562 = vunpack.c.l.b16 %v384
      %v4563 = vunpack.c.l.b16 %v385
      %v4564 = vunpack.c.l.b16 %v386
      %v4565 = vunpack.c.l.b16 %v387
      %v4566 = vunpack.c.l.b16 %v388
      %v4567 = vunpack.c.l.b16 %v389
      %v4568 = vunpack.c.l.b16 %v390
      %v4569 = vunpack.c.l.b16 %v391
      %v4570 = vunpack.c.l.b16 %v392
      %v4571 = vunpack.c.l.b16 %v393
      %v4572 = vunpack.c.l.b16 %v394
      %v4573 = vunpack.c.l.b16 %v395
      %v4574 = vunpack.c.l.b16 %v396
      %v4575 = vunpack.c.l.b16 %v397
      %v4576 = vunpack.c.l.b16 %v398
      %v4577 = vunpack.c.l.b16 %v399
      %v4578 = vunpack.c.l.b16 %v400
      %v4579 = vunpack.c.l.b16 %v401
      %v4580 = vunpack.c.l.b16 %v402
      %v4581 = vunpack.c.l.b16 %v403
      %v4582 = vunpack.c.l.b16 %v404
      %v4583 = vunpack.c.l.b16 %v405
      %v4584 = vunpack.c.l.b16 %v406
      %v4585 = vunpack.c.l.b16 %v407
      %v4586 = vunpack.c.l.b16 %v408
      %v4587 = vunpack.c.l.b16 %v409
      %v4588 = vunpack.c.l.b16 %v410
      %v4589 = vunpack.c.l.b16 %v411
      %v4590 = vunpack.c.l.b16 %v412
      %v4591 = vunpack.c.l.b16 %v413
      %v4592 = vunpack.c.l.b16 %v414
      %v4593 = vunpack.c.l.b16 %v415
      %v4594 = vunpack.c.l.b16 %v416
      %v4595 = vunpack.c.l.b16 %v417
      %v4596 = vunpack.c.l.b16 %v418
      %v4597 = vunpack.c.l.b16 %v419
      %v4598 = vunpack.c.l.b16 %v420
      %v4599 = vunpack.c.l.b16 %v421
      %v4600 = vunpack.c.l.b16 %v422
      %v4601 = vunpack.c.l.b16 %v423
      %v4602 = vunpack.c.l.b16 %v424
      %v4603 = vunpack.c.l.b16 %v425
      %v4604 = vunpack.c.l.b16 %v426
      %v4605 = vunpack.c.l.b16 %v427
      %v4606 = vunpack.c.l.b16 %v428
      %v4607 = vunpack.c.l.b16 %v429
      %v4608 = vunpack.c.l.b16 %v430
      %v4609 = vunpack.c.l.b16 %v431
      %v4610 = vunpack.c.l.b16 %v432
      %v4611 = vunpack.c.l.b16 %v433
      %v4612 = vunpack.c.l.b16 %v434
      %v4613 = vunpack.c.l.b16 %v435
      %v4614 = vunpack.c.l.b16 %v436
      %v4615 = vunpack.c.l.b16 %v437
      %v4616 = vunpack.c.l.b16 %v438
      %v4617 = vunpack.c.l.b16 %v439
      %v4618 = vunpack.c.l.b16 %v440
      %v4619 = vunpack.c.l.b16 %v441
      %v4620 = vunpack.c.l.b16 %v442
      %v4621 = vunpack.c.l.b16 %v443
      %v4622 = vunpack.c.l.b16 %v444
      %v4623 = vunpack.c.l.b16 %v445
      %v4624 = vunpack.c.l.b16 %v446
      %v4625 = vunpack.c.l.b16 %v447
      %v4626 = vunpack.c.l.b16 %v448
      %v4627 = vunpack.c.l.b16 %v449
      %v4628 = vunpack.c.l.b16 %v450
      %v4629 = vunpack.c.l.b16 %v451
      %v4630 = vunpack.c.l.b16 %v452
      %v4631 = vunpack.c.l.b16 %v453
      %v4632 = vunpack.c.l.b16 %v454
      %v4633 = vunpack.c.l.b16 %v455
      %v4634 = vunpack.c.l.b16 %v456
      %v4635 = vunpack.c.l.b16 %v457
      %v4636 = vunpack.c.l.b16 %v458
      %v4637 = vunpack.c.l.b16 %v459
      %v4638 = vunpack.c.l.b16 %v460
      %v4639 = vunpack.c.l.b16 %v461
      %v4640 = vunpack.c.l.b16 %v462
      %v4641 = vunpack.c.l.b16 %v463
      %v4642 = vunpack.c.l.b16 %v464
      %v4643 = vunpack.c.l.b16 %v465
      %v4644 = vunpack.c.l.b16 %v466
      %v4645 = vunpack.c.l.b16 %v467
      %v4646 = vunpack.c.l.b16 %v468
      %v4647 = vunpack.c.l.b16 %v469
      %v4648 = vunpack.c.l.b16 %v470
      %v4649 = vunpack.c.l.b16 %v471
      %v4650 = vunpack.c.l.b16 %v472
      %v4651 = vunpack.c.l.b16 %v473
      %v4652 = vunpack.c.l.b16 %v474
      %v4653 = vunpack.c.l.b16 %v475
      %v4654 = vunpack.c.l.b16 %v476
      %v4655 = vunpack.c.l.b16 %v477
      %v4656 = vunpack.c.l.b16 %v478
      %v4657 = vunpack.c.l.b16 %v479
      %v4658 = vunpack.c.l.b16 %v480
      %v4659 = vunpack.c.l.b16 %v481
      %v4660 = vunpack.c.l.b16 %v482
      %v4661 = vunpack.c.l.b16 %v483
      %v4662 = vunpack.c.l.b16 %v484
      %v4663 = vunpack.c.l.b16 %v485
      %v4664 = vunpack.c.l.b16 %v486
      %v4665 = vunpack.c.l.b16 %v487
      %v4666 = vunpack.c.l.b16 %v488
      %v4667 = vunpack.c.l.b16 %v489
      %v4668 = vunpack.c.l.b16 %v490
      %v4669 = vunpack.c.l.b16 %v491
      %v4670 = vunpack.c.l.b16 %v492
      %v4671 = vunpack.c.l.b16 %v493
      %v4672 = vunpack.c.l.b16 %v494
      %v4673 = vunpack.c.l.b16 %v495
      %v4674 = vunpack.c.l.b16 %v496
      %v4675 = vunpack.c.l.b16 %v497
      %v4676 = vunpack.c.l.b16 %v498
      %v4677 = vunpack.c.l.b16 %v499
      %v4678 = vunpack.c.l.b16 %v500
      %v4679 = vunpack.c.l.b16 %v501
      %v4680 = vunpack.c.l.b16 %v502
      %v4681 = vunpack.c.l.b16 %v503
      %v4682 = vunpack.c.l.b16 %v504
      %v4683 = vunpack.c.l.b16 %v505
      %v4684 = vunpack.c.l.b16 %v506
      %v4685 = vunpack.c.l.b16 %v507
      %v4686 = vunpack.c.l.b16 %v508
      %v4687 = vunpack.c.l.b16 %v509
      %v4688 = vunpack.c.l.b16 %v510
      %v4689 = vunpack.c.l.b16 %v511
      %v4690 = vunpack.c.l.b16 %v512
      %v4691 = vunpack.c.l.b16 %v513
      %v4692 = vunpack.c.l.b16 %v514
      %v4693 = vunpack.c.l.b16 %v515
      %v4694 = vunpack.c.l.b16 %v516
      %v4695 = vunpack.c.l.b16 %v517
      %v4696 = vunpack.c.l.b16 %v518
      %v4697 = vunpack.c.l.b16 %v519
      %v4698 = vunpack.c.l.b16 %v520
      %v4699 = vunpack.c.l.b16 %v521
      %v4700 = vunpack.c.l.b16 %v522
      %v4701 = vunpack.c.l.b16 %v523
      %v4702 = vunpack.c.l.b16 %v524
      %v4703 = vunpack.c.l.b16 %v525
      %v4704 = vunpack.c.l.b16 %v526
      %v4705 = vunpack.c.l.b16 %v527
      %v4706 = vunpack.c.l.b16 %v528
      %v4707 = vunpack.c.l.b16 %v529
      %v4708 = vunpack.c.l.b16 %v530
      %v4709 = vunpack.c.l.b16 %v531
      %v4710 = vunpack.c.l.b16 %v532
      %v4711 = vunpack.c.l.b16 %v533
      %v4712 = vunpack.c.l.b16 %v534
      %v4713 = vunpack.c.l.b16 %v535
      %v4714 = vunpack.c.l.b16 %v536
      %v4715 = vunpack.c.l.b16 %v537
      %v4716 = vunpack.c.l.b16 %v538
      %v4717 = vunpack.c.l.b16 %v539
      %v4718 = vunpack.c.l.b16 %v540
      %v4719 = vunpack.c.l.b16 %v541
      %v4720 = vunpack.c.l.b16 %v542
      %v4721 = vunpack.c.l.b16 %v543
      %v4722 = vunpack.c.l.b16 %v544
      %v4723 = vunpack.c.l.b16 %v545
      %v4724 = vunpack.c.l.b16 %v546
      %v4725 = vunpack.c.l.b16 %v547
      %v4726 = vunpack.c.l.b16 %v548
      %v4727 = vunpack.c.l.b16 %v549
      %v4728 = vunpack.c.l.b16 %v550
      %v4729 = vunpack.c.l.b16 %v551
      %v4730 = vunpack.c.l.b16 %v552
      %v4731 = vunpack.c.l.b16 %v553
      %v4732 = vunpack.c.l.b16 %v554
      %v4733 = vunpack.c.l.b16 %v555
      %v4734 = vunpack.c.l.b16 %v556
      %v4735 = vunpack.c.l.b16 %v557
      %v4736 = vunpack.c.l.b16 %v558
      %v4737 = vunpack.c.l.b16 %v559
      %v4738 = vunpack.c.l.b16 %v560
      %v4739 = vunpack.c.l.b16 %v561
      %v4740 = vunpack.c.l.b16 %v562
      %v4741 = vunpack.c.l.b16 %v563
      %v4742 = vunpack.c.l.b16 %v564
      %v4743 = vunpack.c.l.b16 %v565
      %v4744 = vunpack.c.l.b16 %v566
      %v4745 = vunpack.c.l.b16 %v567
      %v4746 = vunpack.c.l.b16 %v568
      %v4747 = vunpack.c.l.b16 %v569
      %v4748 = vunpack.c.l.b16 %v570
      %v4749 = vunpack.c.l.b16 %v571
      %v4750 = vunpack.c.l.b16 %v572
      %v4751 = vunpack.c.l.b16 %v573
      %v4752 = vunpack.c.l.b16 %v574
      %v4753 = vunpack.c.l.b16 %v575
      %v4754 = vunpack.c.l.b16 %v576
      %v4755 = vunpack.c.l.b16 %v577
      %v4756 = vunpack.c.l.b16 %v578
      %v4757 = vunpack.c.l.b16 %v579
      %v4758 = vunpack.c.l.b16 %v580
      %v4759 = vunpack.c.l.b16 %v581
      %v4760 = vunpack.c.l.b16 %v582
      %v4761 = vunpack.c.l.b16 %v583
      %v4762 = vunpack.c.l.b16 %v584
      %v4763 = vunpack.c.l.b16 %v585
      %v4764 = vunpack.c.l.b16 %v586
      %v4765 = vunpack.c.l.b16 %v587
      %v4766 = vunpack.c.l.b16 %v588
      %v4767 = vunpack.c.l.b16 %v589
      %v4768 = vunpack.c.l.b16 %v590
      %v4769 = vunpack.c.l.b16 %v591
      %v4770 = vunpack.c.l.b16 %v592
      %v4771 = vunpack.c.l.b16 %v593
      %v4772 = vunpack.c.l.b16 %v594
      %v4773 = vunpack.c.l.b16 %v595
      %v4774 = vunpack.c.l.b16 %v596
      %v4775 = vunpack.c.l.b16 %v597
      %v4776 = vunpack.c.l.b16 %v598
      %v4777 = vunpack.c.l.b16 %v599
      %v4778 = vunpack.c.l.b16 %v600
      %v4779 = vunpack.c.l.b16 %v601
      %v4780 = vunpack.c.l.b16 %v602
      %v4781 = vunpack.c.l.b16 %v603
      %v4782 = vunpack.c.l.b16 %v604
      %v4783 = vunpack.c.l.b16 %v605
      %v4784 = vunpack.c.l.b16 %v606
      %v4785 = vunpack.c.l.b16 %v607
      %v4786 = vunpack.c.l.b16 %v608
      %v4787 = vunpack.c.l.b16 %v609
      %v4788 = vunpack.c.l.b16 %v610
      %v4789 = vunpack.c.l.b16 %v611
      %v4790 = vunpack.c.l.b16 %v612
      %v4791 = vunpack.c.l.b16 %v613
      %v4792 = vunpack.c.l.b16 %v614
      %v4793 = vunpack.c.l.b16 %v615
      %v4794 = vunpack.c.l.b16 %v616
      %v4795 = vunpack.c.l.b16 %v617
      %v4796 = vunpack.c.l.b16 %v618
      %v4797 = vunpack.c.l.b16 %v619
      %v4798 = vunpack.c.l.b16 %v620
      %v4799 = vunpack.c.l.b16 %v621
      %v4800 = vunpack.c.l.b16 %v622
      %v4801 = vunpack.c.l.b16 %v623
      %v4802 = vunpack.c.l.b16 %v624
      %v4803 = vunpack.c.l.b16 %v625
      %v4804 = vunpack.c.l.b16 %v626
      %v4805 = vunpack.c.l.b16 %v627
      %v4806 = vunpack.c.l.b16 %v628
      %v4807 = vunpack.c.l.b16 %v629
      %v4808 = vunpack.c.l.b16 %v630
      %v4809 = vunpack.c.l.b16 %v631
      %v4810 = vunpack.c.l.b16 %v632
      %v4811 = vunpack.c.l.b16 %v633
      %v4812 = vunpack.c.l.b16 %v634
      %v4813 = vunpack.c.l.b16 %v635
      %v4814 = vunpack.c.l.b16 %v636
      %v4815 = vunpack.c.l.b16 %v637
      %v4816 = vunpack.c.l.b16 %v638
      %v4817 = vunpack.c.l.b16 %v639
      %v4818 = vunpack.c.l.b16 %v640
      %v4819 = vunpack.c.l.b16 %v641
      %v4820 = vunpack.c.l.b16 %v642
      %v4821 = vunpack.c.l.b16 %v643
      %v4822 = vunpack.c.l.b16 %v644
      %v4823 = vunpack.c.l.b16 %v645
      %v4824 = vunpack.c.l.b16 %v646
      %v4825 = vunpack.c.l.b16 %v647
      %v4826 = vunpack.c.l.b16 %v648
      %v4827 = vunpack.c.l.b16 %v649
      %v4828 = vunpack.c.l.b16 %v650
      %v4829 = vunpack.c.l.b16 %v651
      %v4830 = vunpack.c.l.b16 %v652
      %v4831 = vunpack.c.l.b16 %v653
      %v4832 = vunpack.c.l.b16 %v654
      %v4833 = vunpack.c.l.b16 %v655
      %v4834 = vunpack.c.l.b16 %v656
      %v4835 = vunpack.c.l.b16 %v657
      %v4836 = vunpack.c.l.b16 %v658
      %v4837 = vunpack.c.l.b16 %v659
      %v4838 = vunpack.c.l.b16 %v660
      %v4839 = vunpack.c.l.b16 %v661
      %v4840 = vunpack.c.l.b16 %v662
      %v4841 = vunpack.c.l.b16 %v663
      %v4842 = vunpack.c.l.b16 %v664
      %v4843 = vunpack.c.l.b16 %v665
      %v4844 = vunpack.c.l.b16 %v666
      %v4845 = vunpack.c.l.b16 %v667
      %v4846 = vunpack.c.l.b16 %v668
      %v4847 = vunpack.c.l.b16 %v669
      %v4848 = vunpack.c.l.b16 %v670
      %v4849 = vunpack.c.l.b16 %v671
      %v4850 = vunpack.c.l.b16 %v672
      %v4851 = vunpack.c.l.b16 %v673
      %v4852 = vunpack.c.l.b16 %v674
      %v4853 = vunpack.c.l.b16 %v675
      %v4854 = vunpack.c.l.b16 %v676
      %v4855 = vunpack.c.l.b16 %v677
      %v4856 = vunpack.c.l.b16 %v678
      %v4857 = vunpack.c.l.b16 %v679
      %v4858 = vunpack.c.l.b16 %v680
      %v4859 = vunpack.c.l.b16 %v681
      %v4860 = vunpack.c.l.b16 %v682
      %v4861 = vunpack.c.l.b16 %v683
      %v4862 = vunpack.c.l.b16 %v684
      %v4863 = vunpack.c.l.b16 %v685
      %v4864 = vunpack.c.l.b16 %v686
      %v4865 = vunpack.c.l.b16 %v687
      %v4866 = vunpack.c.l.b16 %v688
      %v4867 = vunpack.c.l.b16 %v689
      %v4868 = vunpack.c.l.b16 %v690
      %v4869 = vunpack.c.l.b16 %v691
      %v4870 = vunpack.c.l.b16 %v692
      %v4871 = vunpack.c.l.b16 %v693
      %v4872 = vunpack.c.l.b16 %v694
      %v4873 = vunpack.c.l.b16 %v695
      %v4874 = vunpack.c.l.b16 %v696
      %v4875 = vunpack.c.l.b16 %v697
      %v4876 = vunpack.c.l.b16 %v698
      %v4877 = vunpack.c.l.b16 %v699
      %v4878 = vunpack.c.l.b16 %v700
      %v4879 = vunpack.c.l.b16 %v701
      %v4880 = vunpack.c.l.b16 %v702
      %v4881 = vunpack.c.l.b16 %v703
      %v4882 = vunpack.c.l.b16 %v704
      %v4883 = vunpack.c.l.b16 %v705
      %v4884 = vunpack.c.l.b16 %v706
      %v4885 = vunpack.c.l.b16 %v707
      %v4886 = vunpack.c.l.b16 %v708
      %v4887 = vunpack.c.l.b16 %v709
      %v4888 = vunpack.c.l.b16 %v710
      %v4889 = vunpack.c.l.b16 %v711
      %v4890 = vunpack.c.l.b16 %v712
      %v4891 = vunpack.c.l.b16 %v713
      %v4892 = vunpack.c.l.b16 %v714
      %v4893 = vunpack.c.l.b16 %v715
      %v4894 = vunpack.c.l.b16 %v716
      %v4895 = vunpack.c.l.b16 %v717
      %v4896 = vunpack.c.l.b16 %v718
      %v4897 = vunpack.c.l.b16 %v719
      %v4898 = vunpack.c.l.b16 %v720
      %v4899 = vunpack.c.l.b16 %v721
      %v4900 = vunpack.c.l.b16 %v722
      %v4901 = vunpack.c.l.b16 %v723
      %v4902 = vunpack.c.l.b16 %v724
      %v4903 = vunpack.c.l.b16 %v725
      %v4904 = vunpack.c.l.b16 %v726
      %v4905 = vunpack.c.l.b16 %v727
      %v4906 = vunpack.c.l.b16 %v728
      %v4907 = vunpack.c.l.b16 %v729
      %v4908 = vunpack.c.l.b16 %v730
      %v4909 = vunpack.c.l.b16 %v731
      %v4910 = vunpack.c.l.b16 %v732
      %v4911 = vunpack.c.l.b16 %v733
      %v4912 = vunpack.c.l.b16 %v734
      %v4913 = vunpack.c.l.b16 %v735
      %v4914 = vunpack.c.l.b16 %v736
      %v4915 = vunpack.c.l.b16 %v737
      %v4916 = vunpack.c.l.b16 %v738
      %v4917 = vunpack.c.l.b16 %v739
      %v4918 = vunpack.c.l.b16 %v740
      %v4919 = vunpack.c.l.b16 %v741
      %v4920 = vunpack.c.l.b16 %v742
      %v4921 = vunpack.c.l.b16 %v743
      %v4922 = vunpack.c.l.b16 %v744
      %v4923 = vunpack.c.l.b16 %v745
      %v4924 = vunpack.c.l.b16 %v746
      %v4925 = vunpack.c.l.b16 %v747
      %v4926 = vunpack.c.l.b16 %v748
      %v4927 = vunpack.c.l.b16 %v749
      %v4928 = vunpack.c.l.b16 %v750
      %v4929 = vunpack.c.l.b16 %v751
      %v4930 = vunpack.c.l.b16 %v752
      %v4931 = vunpack.c.l.b16 %v753
      %v4932 = vunpack.c.l.b16 %v754
      %v4933 = vunpack.c.l.b16 %v755
      %v4934 = vunpack.c.l.b16 %v756
      %v4935 = vunpack.c.l.b16 %v757
      %v4936 = vunpack.c.l.b16 %v758
      %v4937 = vunpack.c.l.b16 %v759
      %v4938 = vunpack.c.l.b16 %v760
      %v4939 = vunpack.c.l.b16 %v761
      %v4940 = vunpack.c.l.b16 %v762
      %v4941 = vunpack.c.l.b16 %v763
      %v4942 = vunpack.c.l.b16 %v764
      %v4943 = vunpack.c.l.b16 %v765
      %v4944 = vunpack.c.l.b16 %v766
      %v4945 = vunpack.c.l.b16 %v767
      %v4946 = vunpack.c.l.b16 %v768
      %v4947 = vunpack.c.l.b16 %v769
      %v4948 = vunpack.c.l.b16 %v770
      %v4949 = vunpack.c.l.b16 %v771
      %v4950 = vunpack.c.l.b16 %v772
      %v4951 = vunpack.c.l.b16 %v773
      %v4952 = vunpack.c.l.b16 %v774
      %v4953 = vunpack.c.l.b16 %v775
      %v4954 = vunpack.c.l.b16 %v776
      %v4955 = vunpack.c.l.b16 %v777
      %v4956 = vunpack.c.l.b16 %v778
      %v4957 = vunpack.c.l.b16 %v779
      %v4958 = vunpack.c.l.b16 %v780
      %v4959 = vunpack.c.l.b16 %v781
      %v4960 = vunpack.c.l.b16 %v782
      %v4961 = vunpack.c.l.b16 %v783
      %v4962 = vunpack.c.l.b16 %v784
      %v4963 = vunpack.c.l.b16 %v785
      %v4964 = vunpack.c.l.b16 %v786
      %v4965 = vunpack.c.l.b16 %v787
      %v4966 = vunpack.c.l.b16 %v788
      %v4967 = vunpack.c.l.b16 %v789
      %v4968 = vunpack.c.l.b16 %v790
      %v4969 = vunpack.c.l.b16 %v791
      %v4970 = vunpack.c.l.b16 %v792
      %v4971 = vunpack.c.l.b16 %v793
      %v4972 = vunpack.c.l.b16 %v794
      %v4973 = vunpack.c.l.b16 %v795
      %v4974 = vunpack.c.l.b16 %v796
      %v4975 = vunpack.c.l.b16 %v797
      %v4976 = vunpack.c.l.b16 %v798
      %v4977 = vunpack.c.l.b16 %v799
      %v4978 = vunpack.c.l.b16 %v800
      %v4979 = vunpack.c.l.b16 %v801
      %v4980 = vunpack.c.l.b16 %v802
      %v4981 = vunpack.c.l.b16 %v803
      %v4982 = vunpack.c.l.b16 %v804
      %v4983 = vunpack.c.l.b16 %v805
      %v4984 = vunpack.c.l.b16 %v806
      %v4985 = vunpack.c.l.b16 %v807
      %v4986 = vunpack.c.l.b16 %v808
      %v4987 = vunpack.c.l.b16 %v809
      %v4988 = vunpack.c.l.b16 %v810
      %v4989 = vunpack.c.l.b16 %v811
      %v4990 = vunpack.c.l.b16 %v812
      %v4991 = vunpack.c.l.b16 %v813
      %v4992 = vunpack.c.l.b16 %v814
      %v4993 = vunpack.c.l.b16 %v815
      %v4994 = vunpack.c.l.b16 %v816
      %v4995 = vunpack.c.l.b16 %v817
      %v4996 = vunpack.c.l.b16 %v818
      %v4997 = vunpack.c.l.b16 %v819
      %v4998 = vunpack.c.l.b16 %v820
      %v4999 = vunpack.c.l.b16 %v821
      %v5000 = vunpack.c.l.b16 %v822
      %v5001 = vunpack.c.l.b16 %v823
      %v5002 = vunpack.c.l.b16 %v824
      %v5003 = vunpack.c.l.b16 %v825
      %v5004 = vunpack.c.l.b16 %v826
      %v5005 = vunpack.c.l.b16 %v827
      %v5006 = vunpack.c.l.b16 %v828
      %v5007 = vunpack.c.l.b16 %v829
      %v5008 = vunpack.c.l.b16 %v830
      %v5009 = vunpack.c.l.b16 %v831
      %v5010 = vunpack.c.l.b16 %v832
      %v5011 = vunpack.c.l.b16 %v833
      %v5012 = vunpack.c.l.b16 %v834
      %v5013 = vunpack.c.l.b16 %v835
      %v5014 = vunpack.c.l.b16 %v836
      %v5015 = vunpack.c.l.b16 %v837
      %v5016 = vunpack.c.l.b16 %v838
      %v5017 = vunpack.c.l.b16 %v839
      %v5018 = vunpack.c.l.b16 %v840
      %v5019 = vunpack.c.l.b16 %v841
      %v5020 = vunpack.c.l.b16 %v842
      %v5021 = vunpack.c.l.b16 %v843
      %v5022 = vunpack.c.l.b16 %v844
      %v5023 = vunpack.c.l.b16 %v845
      %v5024 = vunpack.c.l.b16 %v846
      %v5025 = vunpack.c.l.b16 %v847
      %v5026 = vunpack.c.l.b16 %v848
      %v5027 = vunpack.c.l.b16 %v849
      %v5028 = vunpack.c.l.b16 %v850
      %v5029 = vunpack.c.l.b16 %v851
      %v5030 = vunpack.c.l.b16 %v852
      %v5031 = vunpack.c.l.b16 %v853
      %v5032 = vunpack.c.l.b16 %v854
      %v5033 = vunpack.c.l.b16 %v855
      %v5034 = vunpack.c.l.b16 %v856
      %v5035 = vunpack.c.l.b16 %v857
      %v5036 = vunpack.c.l.b16 %v858
      %v5037 = vunpack.c.l.b16 %v859
      %v5038 = vunpack.c.l.b16 %v860
      %v5039 = vunpack.c.l.b16 %v861
      %v5040 = vunpack.c.l.b16 %v862
      %v5041 = vunpack.c.l.b16 %v863
      %v5042 = vunpack.c.l.b16 %v864
      %v5043 = vunpack.c.l.b16 %v865
      %v5044 = vunpack.c.l.b16 %v866
      %v5045 = vunpack.c.l.b16 %v867
      %v5046 = vunpack.c.l.b16 %v868
      %v5047 = vunpack.c.l.b16 %v869
      %v5048 = vunpack.c.l.b16 %v870
      %v5049 = vunpack.c.l.b16 %v871
      %v5050 = vunpack.c.l.b16 %v872
      %v5051 = vunpack.c.l.b16 %v873
      %v5052 = vunpack.c.l.b16 %v874
      %v5053 = vunpack.c.l.b16 %v875
      %v5054 = vunpack.c.l.b16 %v876
      %v5055 = vunpack.c.l.b16 %v877
      %v5056 = vunpack.c.l.b16 %v878
      %v5057 = vunpack.c.l.b16 %v879
      %v5058 = vunpack.c.l.b16 %v880
      %v5059 = vunpack.c.l.b16 %v881
      %v5060 = vunpack.c.l.b16 %v882
      %v5061 = vunpack.c.l.b16 %v883
      %v5062 = vunpack.c.l.b16 %v884
      %v5063 = vunpack.c.l.b16 %v885
      %v5064 = vunpack.c.l.b16 %v886
      %v5065 = vunpack.c.l.b16 %v887
      %v5066 = vunpack.c.l.b16 %v888
      %v5067 = vunpack.c.l.b16 %v889
      %v5068 = vunpack.c.l.b16 %v890
      %v5069 = vunpack.c.l.b16 %v891
      %v5070 = vunpack.c.l.b16 %v892
      %v5071 = vunpack.c.l.b16 %v893
      %v5072 = vunpack.c.l.b16 %v894
      %v5073 = vunpack.c.l.b16 %v895
      %v5074 = vunpack.c.l.b16 %v896
      %v5075 = vunpack.c.l.b16 %v897
      %v5076 = vunpack.c.l.b16 %v898
      %v5077 = vunpack.c.l.b16 %v899
      %v5078 = vunpack.c.l.b16 %v900
      %v5079 = vunpack.c.l.b16 %v901
      %v5080 = vunpack.c.l.b16 %v902
      %v5081 = vunpack.c.l.b16 %v903
      %v5082 = vunpack.c.l.b16 %v904
      %v5083 = vunpack.c.l.b16 %v905
      %v5084 = vunpack.c.l.b16 %v906
      %v5085 = vunpack.c.l.b16 %v907
      %v5086 = vunpack.c.l.b16 %v908
      %v5087 = vunpack.c.l.b16 %v909
      %v5088 = vunpack.c.l.b16 %v910
      %v5089 = vunpack.c.l.b16 %v911
      %v5090 = vunpack.c.l.b16 %v912
      %v5091 = vunpack.c.l.b16 %v913
      %v5092 = vunpack.c.l.b16 %v914
      %v5093 = vunpack.c.l.b16 %v915
      %v5094 = vunpack.c.l.b16 %v916
      %v5095 = vunpack.c.l.b16 %v917
      %v5096 = vunpack.c.l.b16 %v918
      %v5097 = vunpack.c.l.b16 %v919
      %v5098 = vunpack.c.l.b16 %v920
      %v5099 = vunpack.c.l.b16 %v921
      %v5100 = vunpack.c.l.b16 %v922
      %v5101 = vunpack.c.l.b16 %v923
      %v5102 = vunpack.c.l.b16 %v924
      %v5103 = vunpack.c.l.b16 %v925
      %v5104 = vunpack.c.l.b16 %v926
      %v5105 = vunpack.c.l.b16 %v927
      %v5106 = vunpack.c.l.b16 %v928
      %v5107 = vunpack.c.l.b16 %v929
      %v5108 = vunpack.c.l.b16 %v930
      %v5109 = vunpack.c.l.b16 %v931
      %v5110 = vunpack.c.l.b16 %v932
      %v5111 = vunpack.c.l.b16 %v933
      %v5112 = vunpack.c.l.b16 %v934
      %v5113 = vunpack.c.l.b16 %v935
      %v5114 = vunpack.c.l.b16 %v936
      %v5115 = vunpack.c.l.b16 %v937
      %v5116 = vunpack.c.l.b16 %v938
      %v5117 = vunpack.c.l.b16 %v939
      %v5118 = vunpack.c.l.b16 %v940
      %v5119 = vunpack.c.l.b16 %v941
      %v5120 = vunpack.c.l.b16 %v942
      %v5121 = vunpack.c.l.b16 %v943
      %v5122 = vunpack.c.l.b16 %v944
      %v5123 = vunpack.c.l.b16 %v945
      %v5124 = vunpack.c.l.b16 %v946
      %v5125 = vunpack.c.l.b16 %v947
      %v5126 = vunpack.c.l.b16 %v948
      %v5127 = vunpack.c.l.b16 %v949
      %v5128 = vunpack.c.l.b16 %v950
      %v5129 = vunpack.c.l.b16 %v951
      %v5130 = vunpack.c.l.b16 %v952
      %v5131 = vunpack.c.l.b16 %v953
      %v5132 = vunpack.c.l.b16 %v954
      %v5133 = vunpack.c.l.b16 %v955
      %v5134 = vunpack.c.l.b16 %v956
      %v5135 = vunpack.c.l.b16 %v957
      %v5136 = vunpack.c.l.b16 %v958
      %v5137 = vunpack.c.l.b16 %v959
      %v5138 = vunpack.c.l.b16 %v960
      %v5139 = vunpack.c.l.b16 %v961
      %v5140 = vunpack.c.l.b16 %v962
      %v5141 = vunpack.c.l.b16 %v963
      %v5142 = vunpack.c.l.b16 %v964
      %v5143 = vunpack.c.l.b16 %v965
      %v5144 = vunpack.c.l.b16 %v966
      %v5145 = vunpack.c.l.b16 %v967
      %v5146 = vunpack.c.l.b16 %v968
      %v5147 = vunpack.c.l.b16 %v969
      %v5148 = vunpack.c.l.b16 %v970
      %v5149 = vunpack.c.l.b16 %v971
      %v5150 = vunpack.c.l.b16 %v972
      %v5151 = vunpack.c.l.b16 %v973
      %v5152 = vunpack.c.l.b16 %v974
      %v5153 = vunpack.c.l.b16 %v975
      %v5154 = vunpack.c.l.b16 %v976
      %v5155 = vunpack.c.l.b16 %v977
      %v5156 = vunpack.c.l.b16 %v978
      %v5157 = vunpack.c.l.b16 %v979
      %v5158 = vunpack.c.l.b16 %v980
      %v5159 = vunpack.c.l.b16 %v981
      %v5160 = vunpack.c.l.b16 %v982
      %v5161 = vunpack.c.l.b16 %v983
      %v5162 = vunpack.c.l.b16 %v984
      %v5163 = vunpack.c.l.b16 %v985
      %v5164 = vunpack.c.l.b16 %v986
      %v5165 = vunpack.c.l.b16 %v987
      %v5166 = vunpack.c.l.b16 %v988
      %v5167 = vunpack.c.l.b16 %v989
      %v5168 = vunpack.c.l.b16 %v990
      %v5169 = vunpack.c.l.b16 %v991
      %v5170 = vunpack.c.l.b16 %v992
      %v5171 = vunpack.c.l.b16 %v993
      %v5172 = vunpack.c.l.b16 %v994
      %v5173 = vunpack.c.l.b16 %v995
      %v5174 = vunpack.c.l.b16 %v996
      %v5175 = vunpack.c.l.b16 %v997
      %v5176 = vunpack.c.l.b16 %v998
      %v5177 = vunpack.c.l.b16 %v999
      %v5178 = vunpack.c.l.b16 %v1000
      %v5179 = vunpack.c.l.b16 %v1001
      %v5180 = vunpack.c.l.b16 %v1002
      %v5181 = vunpack.c.l.b16 %v1003
      %v5182 = vunpack.c.l.b16 %v1004
      %v5183 = vunpack.c.l.b16 %v1005
      %v5184 = vunpack.c.l.b16 %v1006
      %v5185 = vunpack.c.l.b16 %v1007
      %v5186 = vunpack.c.l.b16 %v1008
      %v5187 = vunpack.c.l.b16 %v1009
      %v5188 = vunpack.c.l.b16 %v1010
      %v5189 = vunpack.c.l.b16 %v1011
      %v5190 = vunpack.c.l.b16 %v1012
      %v5191 = vunpack.c.l.b16 %v1013
      %v5192 = vunpack.c.l.b16 %v1014
      %v5193 = vunpack.c.l.b16 %v1015
      %v5194 = vunpack.c.l.b16 %v1016
      %v5195 = vunpack.c.l.b16 %v1017
      %v5196 = vunpack.c.l.b16 %v1018
      %v5197 = vunpack.c.l.b16 %v1019
      %v5198 = vunpack.c.l.b16 %v1020
      %v5199 = vunpack.c.l.b16 %v1021
      %v5200 = vunpack.c.l.b16 %v1022
      %v5201 = vunpack.c.l.b16 %v1023
      %v5202 = vunpack.c.l.b16 %v1024
      %v5203 = vunpack.c.l.b16 %v1025
      %v5204 = vunpack.c.l.b16 %v1026
      %v5205 = vunpack.c.l.b16 %v1027
      %v5206 = vunpack.c.l.b16 %v1028
      %v5207 = vunpack.c.l.b16 %v1029
      %v5208 = vunpack.c.l.b16 %v1030
      %v5209 = vunpack.c.l.b16 %v1031
      %v5210 = vunpack.c.l.b16 %v1032
      %v5211 = vunpack.c.l.b16 %v1033
      %v5212 = vunpack.c.l.b16 %v1034
      %v5213 = vunpack.c.l.b16 %v1035
      %v5214 = vunpack.c.l.b16 %v1036
      %v5215 = vunpack.c.l.b16 %v1037
      %v5216 = vunpack.c.l.b16 %v1038
      %v5217 = vunpack.c.l.b16 %v1039
      %v5218 = vunpack.c.l.b16 %v1040
      %v5219 = vunpack.c.l.b16 %v1041
      %v5220 = vunpack.c.l.b16 %v1042
      %v5221 = vunpack.c.l.b16 %v1043
      %v5222 = vunpack.c.l.b16 %v1044
      %v5223 = vunpack.c.l.b16 %v1045
      %v5224 = vunpack.c.l.b16 %v1046
      %v5225 = vunpack.c.l.b16 %v1047
      %v5226 = vunpack.c.l.b16 %v1048
      %v5227 = vunpack.c.l.b16 %v1049
      %v5228 = vunpack.c.l.b16 %v1050
      %v5229 = vunpack.c.l.b16 %v1051
      %v5230 = vunpack.c.l.b16 %v1052
      %v5231 = vunpack.c.l.b16 %v1053
      %v5232 = vunpack.c.l.b16 %v1054
      %v5233 = vunpack.c.l.b16 %v1055
      %v5234 = vunpack.c.l.b16 %v1056
      %v5235 = vunpack.c.l.b16 %v1057
      %v5236 = vunpack.c.l.b16 %v1058
      %v5237 = vunpack.c.l.b16 %v1059
      %v5238 = vunpack.c.l.b16 %v1060
      %v5239 = vunpack.c.l.b16 %v1061
      %v5240 = vunpack.c.l.b16 %v1062
      %v5241 = vunpack.c.l.b16 %v1063
      %v5242 = vunpack.c.l.b16 %v1064
      %v5243 = vunpack.c.l.b16 %v1065
      %v5244 = vunpack.c.l.b16 %v1066
      %v5245 = vunpack.c.l.b16 %v1067
      %v5246 = vunpack.c.l.b16 %v1068
      %v5247 = vunpack.c.l.b16 %v1069
      %v5248 = vunpack.c.l.b16 %v1070
      %v5249 = vunpack.c.l.b16 %v1071
      %v5250 = vunpack.c.l.b16 %v1072
      %v5251 = vunpack.c.l.b16 %v1073
      %v5252 = vunpack.c.l.b16 %v1074
      %v5253 = vunpack.c.l.b16 %v1075
      %v5254 = vunpack.c.l.b16 %v1076
      %v5255 = vunpack.c.l.b16 %v1077
      %v5256 = vunpack.c.l.b16 %v1078
      %v5257 = vunpack.c.l.b16 %v1079
      %v5258 = vunpack.c.l.b16 %v1080
      %v5259 = vunpack.c.l.b16 %v1081
      %v5260 = vunpack.c.l.b16 %v1082
      %v5261 = vunpack.c.l.b16 %v1083
      %v5262 = vunpack.c.l.b16 %v1084
      %v5263 = vunpack.c.l.b16 %v1085
      %v5264 = vunpack.c.l.b16 %v1086
      %v5265 = vunpack.c.l.b16 %v1087
      %v5266 = vunpack.c.l.b16 %v1088
      %v5267 = vunpack.c.l.b16 %v1089
      %v5268 = vunpack.c.l.b16 %v1090
      %v5269 = vunpack.c.l.b16 %v1091
      %v5270 = vunpack.c.l.b16 %v1092
      %v5271 = vunpack.c.l.b16 %v1093
      %v5272 = vunpack.c.l.b16 %v1094
      %v5273 = vunpack.c.l.b16 %v1095
      %v5274 = vunpack.c.l.b16 %v1096
      %v5275 = vunpack.c.l.b16 %v1097
      %v5276 = vunpack.c.l.b16 %v1098
      %v5277 = vunpack.c.l.b16 %v1099
      %v5278 = vunpack.c.l.b16 %v1100
      %v5279 = vunpack.c.l.b16 %v1101
      %v5280 = vunpack.c.l.b16 %v1102
      %v5281 = vunpack.c.l.b16 %v1103
      %v5282 = vunpack.c.l.b16 %v1104
      %v5283 = vunpack.c.l.b16 %v1105
      %v5284 = vunpack.c.l.b16 %v1106
      %v5285 = vunpack.c.l.b16 %v1107
      %v5286 = vunpack.c.l.b16 %v1108
      %v5287 = vunpack.c.l.b16 %v1109
      %v5288 = vunpack.c.l.b16 %v1110
      %v5289 = vunpack.c.l.b16 %v1111
      %v5290 = vunpack.c.l.b16 %v1112
      %v5291 = vunpack.c.l.b16 %v1113
      %v5292 = vunpack.c.l.b16 %v1114
      %v5293 = vunpack.c.l.b16 %v1115
      %v5294 = vunpack.c.l.b16 %v1116
      %v5295 = vunpack.c.l.b16 %v1117
      %v5296 = vunpack.c.l.b16 %v1118
      %v5297 = vunpack.c.l.b16 %v1119
      %v5298 = vunpack.c.l.b16 %v1120
      %v5299 = vunpack.c.l.b16 %v1121
      %v5300 = vunpack.c.l.b16 %v1122
      %v5301 = vunpack.c.l.b16 %v1123
      %v5302 = vunpack.c.l.b16 %v1124
      %v5303 = vunpack.c.l.b16 %v1125
      %v5304 = vunpack.c.l.b16 %v1126
      %v5305 = vunpack.c.l.b16 %v1127
      %v5306 = vunpack.c.l.b16 %v1128
      %v5307 = vunpack.c.l.b16 %v1129
      %v5308 = vunpack.c.l.b16 %v1130
      %v5309 = vunpack.c.l.b16 %v1131
      %v5310 = vunpack.c.l.b16 %v1132
      %v5311 = vunpack.c.l.b16 %v1133
      %v5312 = vunpack.c.l.b16 %v1134
      %v5313 = vunpack.c.l.b16 %v1135
      %v5314 = vunpack.c.l.b16 %v1136
      %v5315 = vunpack.c.l.b16 %v1137
      %v5316 = vunpack.c.l.b16 %v1138
      %v5317 = vunpack.c.l.b16 %v1139
      %v5318 = vunpack.c.l.b16 %v1140
      %v5319 = vunpack.c.l.b16 %v1141
      %v5320 = vunpack.c.l.b16 %v1142
      %v5321 = vunpack.c.l.b16 %v1143
      %v5322 = vunpack.c.l.b16 %v1144
      %v5323 = vunpack.c.l.b16 %v1145
      %v5324 = vunpack.c.l.b16 %v1146
      %v5325 = vunpack.c.l.b16 %v1147
      %v5326 = vunpack.c.l.b16 %v1148
      %v5327 = vunpack.c.l.b16 %v1149
      %v5328 = vunpack.c.l.b16 %v1150
      %v5329 = vunpack.c.l.b16 %v1151
      %v5330 = vunpack.c.l.b16 %v1152
      %v5331 = vunpack.c.l.b16 %v1153
      %v5332 = vunpack.c.l.b16 %v1154
      %v5333 = vunpack.c.l.b16 %v1155
      %v5334 = vunpack.c.l.b16 %v1156
      %v5335 = vunpack.c.l.b16 %v1157
      %v5336 = vunpack.c.l.b16 %v1158
      %v5337 = vunpack.c.l.b16 %v1159
      %v5338 = vunpack.c.l.b16 %v1160
      %v5339 = vunpack.c.l.b16 %v1161
      %v5340 = vunpack.c.l.b16 %v1162
      %v5341 = vunpack.c.l.b16 %v1163
      %v5342 = vunpack.c.l.b16 %v1164
      %v5343 = vunpack.c.l.b16 %v1165
      %v5344 = vunpack.c.l.b16 %v1166
      %v5345 = vunpack.c.l.b16 %v1167
      %v5346 = vunpack.c.l.b16 %v1168
      %v5347 = vunpack.c.l.b16 %v1169
      %v5348 = vunpack.c.l.b16 %v1170
      %v5349 = vunpack.c.l.b16 %v1171
      %v5350 = vunpack.c.l.b16 %v1172
      %v5351 = vunpack.c.l.b16 %v1173
      %v5352 = vunpack.c.l.b16 %v1174
      %v5353 = vunpack.c.l.b16 %v1175
      %v5354 = vunpack.c.l.b16 %v1176
      %v5355 = vunpack.c.l.b16 %v1177
      %v5356 = vunpack.c.l.b16 %v1178
      %v5357 = vunpack.c.l.b16 %v1179
      %v5358 = vunpack.c.l.b16 %v1180
      %v5359 = vunpack.c.l.b16 %v1181
      %v5360 = vunpack.c.l.b16 %v1182
      %v5361 = vunpack.c.l.b16 %v1183
      %v5362 = vunpack.c.l.b16 %v1184
      %v5363 = vunpack.c.l.b16 %v1185
      %v5364 = vunpack.c.l.b16 %v1186
      %v5365 = vunpack.c.l.b16 %v1187
      %v5366 = vunpack.c.l.b16 %v1188
      %v5367 = vunpack.c.l.b16 %v1189
      %v5368 = vunpack.c.l.b16 %v1190
      %v5369 = vunpack.c.l.b16 %v1191
      %v5370 = vunpack.c.l.b16 %v1192
      %v5371 = vunpack.c.l.b16 %v1193
      %v5372 = vunpack.c.l.b16 %v1194
      %v5373 = vunpack.c.l.b16 %v1195
      %v5374 = vunpack.c.l.b16 %v1196
      %v5375 = vunpack.c.l.b16 %v1197
      %v5376 = vunpack.c.l.b16 %v1198
      %v5377 = vunpack.c.l.b16 %v1199
      %v5378 = vunpack.c.l.b16 %v1200
      %v5379 = vunpack.c.l.b16 %v1201
      %v5380 = vunpack.c.l.b16 %v1202
      %v5381 = vunpack.c.l.b16 %v1203
      %v5382 = vunpack.c.l.b16 %v1204
      %v5383 = vunpack.c.l.b16 %v1205
      %v5384 = vunpack.c.l.b16 %v1206
      %v5385 = vunpack.c.l.b16 %v1207
      %v5386 = vunpack.c.l.b16 %v1208
      %v5387 = vunpack.c.l.b16 %v1209
      %v5388 = vunpack.c.l.b16 %v1210
      %v5389 = vunpack.c.l.b16 %v1211
      %v5390 = vunpack.c.l.b16 %v1212
      %v5391 = vunpack.c.l.b16 %v1213
      %v5392 = vunpack.c.l.b16 %v1214
      %v5393 = vunpack.c.l.b16 %v1215
      %v5394 = vunpack.c.l.b16 %v1216
      %v5395 = vunpack.c.l.b16 %v1217
      %v5396 = vunpack.c.l.b16 %v1218
      %v5397 = vunpack.c.l.b16 %v1219
      %v5398 = vunpack.c.l.b16 %v1220
      %v5399 = vunpack.c.l.b16 %v1221
      %v5400 = vunpack.c.l.b16 %v1222
      %v5401 = vunpack.c.l.b16 %v1223
      %v5402 = vunpack.c.l.b16 %v1224
      %v5403 = vunpack.c.l.b16 %v1225
      %v5404 = vunpack.c.l.b16 %v1226
      %v5405 = vunpack.c.l.b16 %v1227
      %v5406 = vunpack.c.l.b16 %v1228
      %v5407 = vunpack.c.l.b16 %v1229
      %v5408 = vunpack.c.l.b16 %v1230
      %v5409 = vunpack.c.l.b16 %v1231
      %v5410 = vunpack.c.l.b16 %v1232
      %v5411 = vunpack.c.l.b16 %v1233
      %v5412 = vunpack.c.l.b16 %v1234
      %v5413 = vunpack.c.l.b16 %v1235
      %v5414 = vunpack.c.l.b16 %v1236
      %v5415 = vunpack.c.l.b16 %v1237
      %v5416 = vunpack.c.l.b16 %v1238
      %v5417 = vunpack.c.l.b16 %v1239
      %v5418 = vunpack.c.l.b16 %v1240
      %v5419 = vunpack.c.l.b16 %v1241
      %v5420 = vunpack.c.l.b16 %v1242
      %v5421 = vunpack.c.l.b16 %v1243
      %v5422 = vunpack.c.l.b16 %v1244
      %v5423 = vunpack.c.l.b16 %v1245
      %v5424 = vunpack.c.l.b16 %v1246
      %v5425 = vunpack.c.l.b16 %v1247
      %v5426 = vunpack.c.l.b16 %v1248
      %v5427 = vunpack.c.l.b16 %v1249
      %v5428 = vunpack.c.l.b16 %v1250
      %v5429 = vunpack.c.l.b16 %v1251
      %v5430 = vunpack.c.l.b16 %v1252
      %v5431 = vunpack.c.l.b16 %v1253
      %v5432 = vunpack.c.l.b16 %v1254
      %v5433 = vunpack.c.l.b16 %v1255
      %v5434 = vunpack.c.l.b16 %v1256
      %v5435 = vunpack.c.l.b16 %v1257
      %v5436 = vunpack.c.l.b16 %v1258
      %v5437 = vunpack.c.l.b16 %v1259
      %v5438 = vunpack.c.l.b16 %v1260
      %v5439 = vunpack.c.l.b16 %v1261
      %v5440 = vunpack.c.l.b16 %v1262
      %v5441 = vunpack.c.l.b16 %v1263
      %v5442 = vunpack.c.l.b16 %v1264
      %v5443 = vunpack.c.l.b16 %v1265
      %v5444 = vunpack.c.l.b16 %v1266
      %v5445 = vunpack.c.l.b16 %v1267
      %v5446 = vunpack.c.l.b16 %v1268
      %v5447 = vunpack.c.l.b16 %v1269
      %v5448 = vunpack.c.l.b16 %v1270
      %v5449 = vunpack.c.l.b16 %v1271
      %v5450 = vunpack.c.l.b16 %v1272
      %v5451 = vunpack.c.l.b16 %v1273
      %v5452 = vunpack.c.l.b16 %v1274
      %v5453 = vunpack.c.l.b16 %v1275
      %v5454 = vunpack.c.l.b16 %v1276
      %v5455 = vunpack.c.l.b16 %v1277
      %v5456 = vunpack.c.l.b16 %v1278
      %v5457 = vunpack.c.l.b16 %v1279
      %v5458 = vunpack.c.l.b16 %v1280
      %v5459 = vunpack.c.l.b16 %v1281
      %v5460 = vunpack.c.l.b16 %v1282
      %v5461 = vunpack.c.l.b16 %v1283
      %v5462 = vunpack.c.l.b16 %v1284
      %v5463 = vunpack.c.l.b16 %v1285
      %v5464 = vunpack.c.l.b16 %v1286
      %v5465 = vunpack.c.l.b16 %v1287
      %v5466 = vunpack.c.l.b16 %v1288
      %v5467 = vunpack.c.l.b16 %v1289
      %v5468 = vunpack.c.l.b16 %v1290
      %v5469 = vunpack.c.l.b16 %v1291
      %v5470 = vunpack.c.l.b16 %v1292
      %v5471 = vunpack.c.l.b16 %v1293
      %v5472 = vunpack.c.l.b16 %v1294
      %v5473 = vunpack.c.l.b16 %v1295
      %v5474 = vunpack.c.l.b16 %v1296
      %v5475 = vunpack.c.l.b16 %v1297
      %v5476 = vunpack.c.l.b16 %v1298
      %v5477 = vunpack.c.l.b16 %v1299
      %v5478 = vunpack.c.l.b16 %v1300
      %v5479 = vunpack.c.l.b16 %v1301
      %v5480 = vunpack.c.l.b16 %v1302
      %v5481 = vunpack.c.l.b16 %v1303
      %v5482 = vunpack.c.l.b16 %v1304
      %v5483 = vunpack.c.l.b16 %v1305
      %v5484 = vunpack.c.l.b16 %v1306
      %v5485 = vunpack.c.l.b16 %v1307
      %v5486 = vunpack.c.l.b16 %v1308
      %v5487 = vunpack.c.l.b16 %v1309
      %v5488 = vunpack.c.l.b16 %v1310
      %v5489 = vunpack.c.l.b16 %v1311
      %v5490 = vunpack.c.l.b16 %v1312
      %v5491 = vunpack.c.l.b16 %v1313
      %v5492 = vunpack.c.l.b16 %v1314
      %v5493 = vunpack.c.l.b16 %v1315
      %v5494 = vunpack.c.l.b16 %v1316
      %v5495 = vunpack.c.l.b16 %v1317
      %v5496 = vunpack.c.l.b16 %v1318
      %v5497 = vunpack.c.l.b16 %v1319
      %v5498 = vunpack.c.l.b16 %v1320
      %v5499 = vunpack.c.l.b16 %v1321
      %v5500 = vunpack.c.l.b16 %v1322
      %v5501 = vunpack.c.l.b16 %v1323
      %v5502 = vunpack.c.l.b16 %v1324
      %v5503 = vunpack.c.l.b16 %v1325
      %v5504 = vunpack.c.l.b16 %v1326
      %v5505 = vunpack.c.l.b16 %v1327
      %v5506 = vunpack.c.l.b16 %v1328
      %v5507 = vunpack.c.l.b16 %v1329
      %v5508 = vunpack.c.l.b16 %v1330
      %v5509 = vunpack.c.l.b16 %v1331
      %v5510 = vunpack.c.l.b16 %v1332
      %v5511 = vunpack.c.l.b16 %v1333
      %v5512 = vunpack.c.l.b16 %v1334
      %v5513 = vunpack.c.l.b16 %v1335
      %v5514 = vunpack.c.l.b16 %v1336
      %v5515 = vunpack.c.l.b16 %v1337
      %v5516 = vunpack.c.l.b16 %v1338
      %v5517 = vunpack.c.l.b16 %v1339
      %v5518 = vunpack.c.l.b16 %v1340
      %v5519 = vunpack.c.l.b16 %v1341
      %v5520 = vunpack.c.l.b16 %v1342
      %v5521 = vunpack.c.l.b16 %v1343
      %v5522 = vunpack.c.l.b16 %v1344
      %v5523 = vunpack.c.l.b16 %v1345
      %v5524 = vunpack.c.l.b16 %v1346
      %v5525 = vunpack.c.l.b16 %v1347
      %v5526 = vunpack.c.l.b16 %v1348
      %v5527 = vunpack.c.l.b16 %v1349
      %v5528 = vunpack.c.l.b16 %v1350
      %v5529 = vunpack.c.l.b16 %v1351
      %v5530 = vunpack.c.l.b16 %v1352
      %v5531 = vunpack.c.l.b16 %v1353
      %v5532 = vunpack.c.l.b16 %v1354
      %v5533 = vunpack.c.l.b16 %v1355
      %v5534 = vunpack.c.l.b16 %v1356
      %v5535 = vunpack.c.l.b16 %v1357
      %v5536 = vunpack.c.l.b16 %v1358
      %v5537 = vunpack.c.l.b16 %v1359
      %v5538 = vunpack.c.l.b16 %v1360
      %v5539 = vunpack.c.l.b16 %v1361
      %v5540 = vunpack.c.l.b16 %v1362
      %v5541 = vunpack.c.l.b16 %v1363
      %v5542 = vunpack.c.l.b16 %v1364
      %v5543 = vunpack.c.l.b16 %v1365
      %v5544 = vunpack.c.l.b16 %v1366
      %v5545 = vunpack.c.l.b16 %v1367
      %v5546 = vunpack.c.l.b16 %v1368
      %v5547 = vunpack.c.l.b16 %v1369
      %v5548 = vunpack.c.l.b16 %v1370
      %v5549 = vunpack.c.l.b16 %v1371
      %v5550 = vunpack.c.l.b16 %v1372
      %v5551 = vunpack.c.l.b16 %v1373
      %v5552 = vunpack.c.l.b16 %v1374
      %v5553 = vunpack.c.l.b16 %v1375
      %v5554 = vunpack.c.l.b16 %v1376
      %v5555 = vunpack.c.l.b16 %v1377
      %v5556 = vunpack.c.l.b16 %v1378
      %v5557 = vunpack.c.l.b16 %v1379
      %v5558 = vunpack.c.l.b16 %v1380
      %v5559 = vunpack.c.l.b16 %v1381
      %v5560 = vunpack.c.l.b16 %v1382
      %v5561 = vunpack.c.l.b16 %v1383
      %v5562 = vunpack.c.l.b16 %v1384
      %v5563 = vunpack.c.l.b16 %v1385
      %v5564 = vunpack.c.l.b16 %v1386
      %v5565 = vunpack.c.l.b16 %v1387
      %v5566 = vunpack.c.l.b16 %v1388
      %v5567 = vunpack.c.l.b16 %v1389
      %v5568 = vunpack.c.l.b16 %v1390
      %v5569 = vunpack.c.l.b16 %v1391
      %v5570 = vunpack.c.l.b16 %v1392
      %v5571 = vunpack.c.l.b16 %v1393
      %v5572 = vunpack.c.l.b16 %v1394
      %v5573 = vunpack.c.l.b16 %v1395
      %v5574 = vunpack.c.l.b16 %v1396
      %v5575 = vunpack.c.l.b16 %v1397
      %v5576 = vunpack.c.l.b16 %v1398
      %v5577 = vunpack.c.l.b16 %v1399
      %v5578 = vunpack.c.l.b16 %v1400
      %v5579 = vunpack.c.l.b16 %v1401
      %v5580 = vunpack.c.l.b16 %v1402
      %v5581 = vunpack.c.l.b16 %v1403
      %v5582 = vunpack.c.l.b16 %v1404
      %v5583 = vunpack.c.l.b16 %v1405
      %v5584 = vunpack.c.l.b16 %v1406
      %v5585 = vunpack.c.l.b16 %v1407
      %v5586 = vunpack.c.l.b16 %v1408
      %v5587 = vunpack.c.l.b16 %v1409
      %v5588 = vunpack.c.l.b16 %v1410
      %v5589 = vunpack.c.l.b16 %v1411
      %v5590 = vunpack.c.l.b16 %v1412
      %v5591 = vunpack.c.l.b16 %v1413
      %v5592 = vunpack.c.l.b16 %v1414
      %v5593 = vunpack.c.l.b16 %v1415
      %v5594 = vunpack.c.l.b16 %v1416
      %v5595 = vunpack.c.l.b16 %v1417
      %v5596 = vunpack.c.l.b16 %v1418
      %v5597 = vunpack.c.l.b16 %v1419
      %v5598 = vunpack.c.l.b16 %v1420
      %v5599 = vunpack.c.l.b16 %v1421
      %v5600 = vunpack.c.l.b16 %v1422
      %v5601 = vunpack.c.l.b16 %v1423
      %v5602 = vunpack.c.l.b16 %v1424
      %v5603 = vunpack.c.l.b16 %v1425
      %v5604 = vunpack.c.l.b16 %v1426
      %v5605 = vunpack.c.l.b16 %v1427
      %v5606 = vunpack.c.l.b16 %v1428
      %v5607 = vunpack.c.l.b16 %v1429
      %v5608 = vunpack.c.l.b16 %v1430
      %v5609 = vunpack.c.l.b16 %v1431
      %v5610 = vunpack.c.l.b16 %v1432
      %v5611 = vunpack.c.l.b16 %v1433
      %v5612 = vunpack.c.l.b16 %v1434
      %v5613 = vunpack.c.l.b16 %v1435
      %v5614 = vunpack.c.l.b16 %v1436
      %v5615 = vunpack.c.l.b16 %v1437
      %v5616 = vunpack.c.l.b16 %v1438
      %v5617 = vunpack.c.l.b16 %v1439
      %v5618 = vunpack.c.l.b16 %v1440
      %v5619 = vunpack.c.l.b16 %v1441
      %v5620 = vunpack.c.l.b16 %v1442
      %v5621 = vunpack.c.l.b16 %v1443
      %v5622 = vunpack.c.l.b16 %v1444
      %v5623 = vunpack.c.l.b16 %v1445
      %v5624 = vunpack.c.l.b16 %v1446
      %v5625 = vunpack.c.l.b16 %v1447
      %v5626 = vunpack.c.l.b16 %v1448
      %v5627 = vunpack.c.l.b16 %v1449
      %v5628 = vunpack.c.l.b16 %v1450
      %v5629 = vunpack.c.l.b16 %v1451
      %v5630 = vunpack.c.l.b16 %v1452
      %v5631 = vunpack.c.l.b16 %v1453
      %v5632 = vunpack.c.l.b16 %v1454
      %v5633 = vunpack.c.l.b16 %v1455
      %v5634 = vunpack.c.l.b16 %v1456
      %v5635 = vunpack.c.l.b16 %v1457
      %v5636 = vunpack.c.l.b16 %v1458
      %v5637 = vunpack.c.l.b16 %v1459
      %v5638 = vunpack.c.l.b16 %v1460
      %v5639 = vunpack.c.l.b16 %v1461
      %v5640 = vunpack.c.l.b16 %v1462
      %v5641 = vunpack.c.l.b16 %v1463
      %v5642 = vunpack.c.l.b16 %v1464
      %v5643 = vunpack.c.l.b16 %v1465
      %v5644 = vunpack.c.l.b16 %v1466
      %v5645 = vunpack.c.l.b16 %v1467
      %v5646 = vunpack.c.l.b16 %v1468
      %v5647 = vunpack.c.l.b16 %v1469
      %v5648 = vunpack.c.l.b16 %v1470
      %v5649 = vunpack.c.l.b16 %v1471
      %v5650 = vunpack.c.l.b16 %v1472
      %v5651 = vunpack.c.l.b16 %v1473
      %v5652 = vunpack.c.l.b16 %v1474
      %v5653 = vunpack.c.l.b16 %v1475
      %v5654 = vunpack.c.l.b16 %v1476
      %v5655 = vunpack.c.l.b16 %v1477
      %v5656 = vunpack.c.l.b16 %v1478
      %v5657 = vunpack.c.l.b16 %v1479
      %v5658 = vunpack.c.l.b16 %v1480
      %v5659 = vunpack.c.l.b16 %v1481
      %v5660 = vunpack.c.l.b16 %v1482
      %v5661 = vunpack.c.l.b16 %v1483
      %v5662 = vunpack.c.l.b16 %v1484
      %v5663 = vunpack.c.l.b16 %v1485
      %v5664 = vunpack.c.l.b16 %v1486
      %v5665 = vunpack.c.l.b16 %v1487
      %v5666 = vunpack.c.l.b16 %v1488
      %v5667 = vunpack.c.l.b16 %v1489
      %v5668 = vunpack.c.l.b16 %v1490
      %v5669 = vunpack.c.l.b16 %v1491
      %v5670 = vunpack.c.l.b16 %v1492
      %v5671 = vunpack.c.l.b16 %v1493
      %v5672 = vunpack.c.l.b16 %v1494
      %v5673 = vunpack.c.l.b16 %v1495
      %v5674 = vunpack.c.l.b16 %v1496
      %v5675 = vunpack.c.l.b16 %v1497
      %v5676 = vunpack.c.l.b16 %v1498
      %v5677 = vunpack.c.l.b16 %v1499
      %v5678 = vunpack.c.l.b16 %v1500
      %v5679 = vunpack.c.l.b16 %v1501
      %v5680 = vunpack.c.l.b16 %v1502
      %v5681 = vunpack.c.l.b16 %v1503
      %v5682 = vunpack.c.l.b16 %v1504
      %v5683 = vunpack.c.l.b16 %v1505
      %v5684 = vunpack.c.l.b16 %v1506
      %v5685 = vunpack.c.l.b16 %v1507
      %v5686 = vunpack.c.l.b16 %v1508
      %v5687 = vunpack.c.l.b16 %v1509
      %v5688 = vunpack.c.l.b16 %v1510
      %v5689 = vunpack.c.l.b16 %v1511
      %v5690 = vunpack.c.l.b16 %v1512
      %v5691 = vunpack.c.l.b16 %v1513
      %v5692 = vunpack.c.l.b16 %v1514
      %v5693 = vunpack.c.l.b16 %v1515
      %v5694 = vunpack.c.l.b16 %v1516
      %v5695 = vunpack.c.l.b16 %v1517
      %v5696 = vunpack.c.l.b16 %v1518
      %v5697 = vunpack.c.l.b16 %v1519
      %v5698 = vunpack.c.l.b16 %v1520
      %v5699 = vunpack.c.l.b16 %v1521
      %v5700 = vunpack.c.l.b16 %v1522
      %v5701 = vunpack.c.l.b16 %v1523
      %v5702 = vunpack.c.l.b16 %v1524
      %v5703 = vunpack.c.l.b16 %v1525
      %v5704 = vunpack.c.l.b16 %v1526
      %v5705 = vunpack.c.l.b16 %v1527
      %v5706 = vunpack.c.l.b16 %v1528
      %v5707 = vunpack.c.l.b16 %v1529
      %v5708 = vunpack.c.l.b16 %v1530
      %v5709 = vunpack.c.l.b16 %v1531
      %v5710 = vunpack.c.l.b16 %v1532
      %v5711 = vunpack.c.l.b16 %v1533
      %v5712 = vunpack.c.l.b16 %v1534
      %v5713 = vunpack.c.l.b16 %v1535
      %v5714 = vunpack.c.l.b16 %v1536
      %v5715 = vunpack.c.l.b16 %v1537
      %v5716 = vunpack.c.l.b16 %v1538
      %v5717 = vunpack.c.l.b16 %v1539
      %v5718 = vunpack.c.l.b16 %v1540
      %v5719 = vunpack.c.l.b16 %v1541
      %v5720 = vunpack.c.l.b16 %v1542
      %v5721 = vunpack.c.l.b16 %v1543
      %v5722 = vunpack.c.l.b16 %v1544
      %v5723 = vunpack.c.l.b16 %v1545
      %v5724 = vunpack.c.l.b16 %v1546
      %v5725 = vunpack.c.l.b16 %v1547
      %v5726 = vunpack.c.l.b16 %v1548
      %v5727 = vunpack.c.l.b16 %v1549
      %v5728 = vunpack.c.l.b16 %v1550
      %v5729 = vunpack.c.l.b16 %v1551
      %v5730 = vunpack.c.l.b16 %v1552
      %v5731 = vunpack.c.l.b16 %v1553
      %v5732 = vunpack.c.l.b16 %v1554
      %v5733 = vunpack.c.l.b16 %v1555
      %v5734 = vunpack.c.l.b16 %v1556
      %v5735 = vunpack.c.l.b16 %v1557
      %v5736 = vunpack.c.l.b16 %v1558
      %v5737 = vunpack.c.l.b16 %v1559
      %v5738 = vunpack.c.l.b16 %v1560
      %v5739 = vunpack.c.l.b16 %v1561
      %v5740 = vunpack.c.l.b16 %v1562
      %v5741 = vunpack.c.l.b16 %v1563
      %v5742 = vunpack.c.l.b16 %v1564
      %v5743 = vunpack.c.l.b16 %v1565
      %v5744 = vunpack.c.l.b16 %v1566
      %v5745 = vunpack.c.l.b16 %v1567
      %v5746 = vunpack.c.l.b16 %v1568
      %v5747 = vunpack.c.l.b16 %v1569
      %v5748 = vunpack.c.l.b16 %v1570
      %v5749 = vunpack.c.l.b16 %v1571
      %v5750 = vunpack.c.l.b16 %v1572
      %v5751 = vunpack.c.l.b16 %v1573
      %v5752 = vunpack.c.l.b16 %v1574
      %v5753 = vunpack.c.l.b16 %v1575
      %v5754 = vunpack.c.l.b16 %v1576
      %v5755 = vunpack.c.l.b16 %v1577
      %v5756 = vunpack.c.l.b16 %v1578
      %v5757 = vunpack.c.l.b16 %v1579
      %v5758 = vunpack.c.l.b16 %v1580
      %v5759 = vunpack.c.l.b16 %v1581
      %v5760 = vunpack.c.l.b16 %v1582
      %v5761 = vunpack.c.l.b16 %v1583
      %v5762 = vunpack.c.l.b16 %v1584
      %v5763 = vunpack.c.l.b16 %v1585
      %v5764 = vunpack.c.l.b16 %v1586
      %v5765 = vunpack.c.l.b16 %v1587
      %v5766 = vunpack.c.l.b16 %v1588
      %v5767 = vunpack.c.l.b16 %v1589
      %v5768 = vunpack.c.l.b16 %v1590
      %v5769 = vunpack.c.l.b16 %v1591
      %v5770 = vunpack.c.l.b16 %v1592
      %v5771 = vunpack.c.l.b16 %v1593
      %v5772 = vunpack.c.l.b16 %v1594
      %v5773 = vunpack.c.l.b16 %v1595
      %v5774 = vunpack.c.l.b16 %v1596
      %v5775 = vunpack.c.l.b16 %v1597
      %v5776 = vunpack.c.l.b16 %v1598
      %v5777 = vunpack.c.l.b16 %v1599
      %v5778 = vunpack.c.l.b16 %v1600
      %v5779 = vunpack.c.l.b16 %v1601
      %v5780 = vunpack.c.l.b16 %v1602
      %v5781 = vunpack.c.l.b16 %v1603
      %v5782 = vunpack.c.l.b16 %v1604
      %v5783 = vunpack.c.l.b16 %v1605
      %v5784 = vunpack.c.l.b16 %v1606
      %v5785 = vunpack.c.l.b16 %v1607
      %v5786 = vunpack.c.l.b16 %v1608
      %v5787 = vunpack.c.l.b16 %v1609
      %v5788 = vunpack.c.l.b16 %v1610
      %v5789 = vunpack.c.l.b16 %v1611
      %v5790 = vunpack.c.l.b16 %v1612
      %v5791 = vunpack.c.l.b16 %v1613
      %v5792 = vunpack.c.l.b16 %v1614
      %v5793 = vunpack.c.l.b16 %v1615
      %v5794 = vunpack.c.l.b16 %v1616
      %v5795 = vunpack.c.l.b16 %v1617
      %v5796 = vunpack.c.l.b16 %v1618
      %v5797 = vunpack.c.l.b16 %v1619
      %v5798 = vunpack.c.l.b16 %v1620
      %v5799 = vunpack.c.l.b16 %v1621
      %v5800 = vunpack.c.l.b16 %v1622
      %v5801 = vunpack.c.l.b16 %v1623
      %v5802 = vunpack.c.l.b16 %v1624
      %v5803 = vunpack.c.l.b16 %v1625
      %v5804 = vunpack.c.l.b16 %v1626
      %v5805 = vunpack.c.l.b16 %v1627
      %v5806 = vunpack.c.l.b16 %v1628
      %v5807 = vunpack.c.l.b16 %v1629
      %v5808 = vunpack.c.l.b16 %v1630
      %v5809 = vunpack.c.l.b16 %v1631
      %v5810 = vunpack.c.l.b16 %v1632
      %v5811 = vunpack.c.l.b16 %v1633
      %v5812 = vunpack.c.l.b16 %v1634
      %v5813 = vunpack.c.l.b16 %v1635
      %v5814 = vunpack.c.l.b16 %v1636
      %v5815 = vunpack.c.l.b16 %v1637
      %v5816 = vunpack.c.l.b16 %v1638
      %v5817 = vunpack.c.l.b16 %v1639
      %v5818 = vunpack.c.l.b16 %v1640
      %v5819 = vunpack.c.l.b16 %v1641
      %v5820 = vunpack.c.l.b16 %v1642
      %v5821 = vunpack.c.l.b16 %v1643
      %v5822 = vunpack.c.l.b16 %v1644
      %v5823 = vunpack.c.l.b16 %v1645
      %v5824 = vunpack.c.l.b16 %v1646
      %v5825 = vunpack.c.l.b16 %v1647
      %v5826 = vunpack.c.l.b16 %v1648
      %v5827 = vunpack.c.l.b16 %v1649
      %v5828 = vunpack.c.l.b16 %v1650
      %v5829 = vunpack.c.l.b16 %v1651
      %v5830 = vunpack.c.l.b16 %v1652
      %v5831 = vunpack.c.l.b16 %v1653
      %v5832 = vunpack.c.l.b16 %v1654
      %v5833 = vunpack.c.l.b16 %v1655
      %v5834 = vunpack.c.l.b16 %v1656
      %v5835 = vunpack.c.l.b16 %v1657
      %v5836 = vunpack.c.l.b16 %v1658
      %v5837 = vunpack.c.l.b16 %v1659
      %v5838 = vunpack.c.l.b16 %v1660
      %v5839 = vunpack.c.l.b16 %v1661
      %v5840 = vunpack.c.l.b16 %v1662
      %v5841 = vunpack.c.l.b16 %v1663
      %v5842 = vunpack.c.l.b16 %v1664
      %v5843 = vunpack.c.l.b16 %v1665
      %v5844 = vunpack.c.l.b16 %v1666
      %v5845 = vunpack.c.l.b16 %v1667
      %v5846 = vunpack.c.l.b16 %v1668
      %v5847 = vunpack.c.l.b16 %v1669
      %v5848 = vunpack.c.l.b16 %v1670
      %v5849 = vunpack.c.l.b16 %v1671
      %v5850 = vunpack.c.l.b16 %v1672
      %v5851 = vunpack.c.l.b16 %v1673
      %v5852 = vunpack.c.l.b16 %v1674
      %v5853 = vunpack.c.l.b16 %v1675
      %v5854 = vunpack.c.l.b16 %v1676
      %v5855 = vunpack.c.l.b16 %v1677
      %v5856 = vunpack.c.l.b16 %v1678
      %v5857 = vunpack.c.l.b16 %v1679
      %v5858 = vunpack.c.l.b16 %v1680
      %v5859 = vunpack.c.l.b16 %v1681
      %v5860 = vunpack.c.l.b16 %v1682
      %v5861 = vunpack.c.l.b16 %v1683
      %v5862 = vunpack.c.l.b16 %v1684
      %v5863 = vunpack.c.l.b16 %v1685
      %v5864 = vunpack.c.l.b16 %v1686
      %v5865 = vunpack.c.l.b16 %v1687
      %v5866 = vunpack.c.l.b16 %v1688
      %v5867 = vunpack.c.l.b16 %v1689
      %v5868 = vunpack.c.l.b16 %v1690
      %v5869 = vunpack.c.l.b16 %v1691
      %v5870 = vunpack.c.l.b16 %v1692
      %v5871 = vunpack.c.l.b16 %v1693
      %v5872 = vunpack.c.l.b16 %v1694
      %v5873 = vunpack.c.l.b16 %v1695
      %v5874 = vunpack.c.l.b16 %v1696
      %v5875 = vunpack.c.l.b16 %v1697
      %v5876 = vunpack.c.l.b16 %v1698
      %v5877 = vunpack.c.l.b16 %v1699
      %v5878 = vunpack.c.l.b16 %v1700
      %v5879 = vunpack.c.l.b16 %v1701
      %v5880 = vunpack.c.l.b16 %v1702
      %v5881 = vunpack.c.l.b16 %v1703
      %v5882 = vunpack.c.l.b16 %v1704
      %v5883 = vunpack.c.l.b16 %v1705
      %v5884 = vunpack.c.l.b16 %v1706
      %v5885 = vunpack.c.l.b16 %v1707
      %v5886 = vunpack.c.l.b16 %v1708
      %v5887 = vunpack.c.l.b16 %v1709
      %v5888 = vunpack.c.l.b16 %v1710
      %v5889 = vunpack.c.l.b16 %v1711
      %v5890 = vunpack.c.l.b16 %v1712
      %v5891 = vunpack.c.l.b16 %v1713
      %v5892 = vunpack.c.l.b16 %v1714
      %v5893 = vunpack.c.l.b16 %v1715
      %v5894 = vunpack.c.l.b16 %v1716
      %v5895 = vunpack.c.l.b16 %v1717
      %v5896 = vunpack.c.l.b16 %v1718
      %v5897 = vunpack.c.l.b16 %v1719
      %v5898 = vunpack.c.l.b16 %v1720
      %v5899 = vunpack.c.l.b16 %v1721
      %v5900 = vunpack.c.l.b16 %v1722
      %v5901 = vunpack.c.l.b16 %v1723
      %v5902 = vunpack.c.l.b16 %v1724
      %v5903 = vunpack.c.l.b16 %v1725
      %v5904 = vunpack.c.l.b16 %v1726
      %v5905 = vunpack.c.l.b16 %v1727
      %v5906 = vunpack.c.l.b16 %v1728
      %v5907 = vunpack.c.l.b16 %v1729
      %v5908 = vunpack.c.l.b16 %v1730
      %v5909 = vunpack.c.l.b16 %v1731
      %v5910 = vunpack.c.l.b16 %v1732
      %v5911 = vunpack.c.l.b16 %v1733
      %v5912 = vunpack.c.l.b16 %v1734
      %v5913 = vunpack.c.l.b16 %v1735
      %v5914 = vunpack.c.l.b16 %v1736
      %v5915 = vunpack.c.l.b16 %v1737
      %v5916 = vunpack.c.l.b16 %v1738
      %v5917 = vunpack.c.l.b16 %v1739
      %v5918 = vunpack.c.l.b16 %v1740
      %v5919 = vunpack.c.l.b16 %v1741
      %v5920 = vunpack.c.l.b16 %v1742
      %v5921 = vunpack.c.l.b16 %v1743
      %v5922 = vunpack.c.l.b16 %v1744
      %v5923 = vunpack.c.l.b16 %v1745
      %v5924 = vunpack.c.l.b16 %v1746
      %v5925 = vunpack.c.l.b16 %v1747
      %v5926 = vunpack.c.l.b16 %v1748
      %v5927 = vunpack.c.l.b16 %v1749
      %v5928 = vunpack.c.l.b16 %v1750
      %v5929 = vunpack.c.l.b16 %v1751
      %v5930 = vunpack.c.l.b16 %v1752
      %v5931 = vunpack.c.l.b16 %v1753
      %v5932 = vunpack.c.l.b16 %v1754
      %v5933 = vunpack.c.l.b16 %v1755
      %v5934 = vunpack.c.l.b16 %v1756
      %v5935 = vunpack.c.l.b16 %v1757
      %v5936 = vunpack.c.l.b16 %v1758
      %v5937 = vunpack.c.l.b16 %v1759
      %v5938 = vunpack.c.l.b16 %v1760
      %v5939 = vunpack.c.l.b16 %v1761
      %v5940 = vunpack.c.l.b16 %v1762
      %v5941 = vunpack.c.l.b16 %v1763
      %v5942 = vunpack.c.l.b16 %v1764
      %v5943 = vunpack.c.l.b16 %v1765
      %v5944 = vunpack.c.l.b16 %v1766
      %v5945 = vunpack.c.l.b16 %v1767
      %v5946 = vunpack.c.l.b16 %v1768
      %v5947 = vunpack.c.l.b16 %v1769
      %v5948 = vunpack.c.l.b16 %v1770
      %v5949 = vunpack.c.l.b16 %v1771
      %v5950 = vunpack.c.l.b16 %v1772
      %v5951 = vunpack.c.l.b16 %v1773
      %v5952 = vunpack.c.l.b16 %v1774
      %v5953 = vunpack.c.l.b16 %v1775
      %v5954 = vunpack.c.l.b16 %v1776
      %v5955 = vunpack.c.l.b16 %v1777
      %v5956 = vunpack.c.l.b16 %v1778
      %v5957 = vunpack.c.l.b16 %v1779
      %v5958 = vunpack.c.l.b16 %v1780
      %v5959 = vunpack.c.l.b16 %v1781
      %v5960 = vunpack.c.l.b16 %v1782
      %v5961 = vunpack.c.l.b16 %v1783
      %v5962 = vunpack.c.l.b16 %v1784
      %v5963 = vunpack.c.l.b16 %v1785
      %v5964 = vunpack.c.l.b16 %v1786
      %v5965 = vunpack.c.l.b16 %v1787
      %v5966 = vunpack.c.l.b16 %v1788
      %v5967 = vunpack.c.l.b16 %v1789
      %v5968 = vunpack.c.l.b16 %v1790
      %v5969 = vunpack.c.l.b16 %v1791
      %v5970 = vunpack.c.l.b16 %v1792
      %v5971 = vunpack.c.l.b16 %v1793
      %v5972 = vunpack.c.l.b16 %v1794
      %v5973 = vunpack.c.l.b16 %v1795
      %v5974 = vunpack.c.l.b16 %v1796
      %v5975 = vunpack.c.l.b16 %v1797
      %v5976 = vunpack.c.l.b16 %v1798
      %v5977 = vunpack.c.l.b16 %v1799
      %v5978 = vunpack.c.l.b16 %v1800
      %v5979 = vunpack.c.l.b16 %v1801
      %v5980 = vunpack.c.l.b16 %v1802
      %v5981 = vunpack.c.l.b16 %v1803
      %v5982 = vunpack.c.l.b16 %v1804
      %v5983 = vunpack.c.l.b16 %v1805
      %v5984 = vunpack.c.l.b16 %v1806
      %v5985 = vunpack.c.l.b16 %v1807
      %v5986 = vunpack.c.l.b16 %v1808
      %v5987 = vunpack.c.l.b16 %v1809
      %v5988 = vunpack.c.l.b16 %v1810
      %v5989 = vunpack.c.l.b16 %v1811
      %v5990 = vunpack.c.l.b16 %v1812
      %v5991 = vunpack.c.l.b16 %v1813
      %v5992 = vunpack.c.l.b16 %v1814
      %v5993 = vunpack.c.l.b16 %v1815
      %v5994 = vunpack.c.l.b16 %v1816
      %v5995 = vunpack.c.l.b16 %v1817
      %v5996 = vunpack.c.l.b16 %v1818
      %v5997 = vunpack.c.l.b16 %v1819
      %v5998 = vunpack.c.l.b16 %v1820
      %v5999 = vunpack.c.l.b16 %v1821
      %v6000 = vunpack.c.l.b16 %v1822
      %v6001 = vunpack.c.l.b16 %v1823
      %v6002 = vunpack.c.l.b16 %v1824
      %v6003 = vunpack.c.l.b16 %v1825
      %v6004 = vunpack.c.l.b16 %v1826
      %v6005 = vunpack.c.l.b16 %v1827
      %v6006 = vunpack.c.l.b16 %v1828
      %v6007 = vunpack.c.l.b16 %v1829
      %v6008 = vunpack.c.l.b16 %v1830
      %v6009 = vunpack.c.l.b16 %v1831
      %v6010 = vunpack.c.l.b16 %v1832
      %v6011 = vunpack.c.l.b16 %v1833
      %v6012 = vunpack.c.l.b16 %v1834
      %v6013 = vunpack.c.l.b16 %v1835
      %v6014 = vunpack.c.l.b16 %v1836
      %v6015 = vunpack.c.l.b16 %v1837
      %v6016 = vunpack.c.l.b16 %v1838
      %v6017 = vunpack.c.l.b16 %v1839
      %v6018 = vunpack.c.l.b16 %v1840
      %v6019 = vunpack.c.l.b16 %v1841
      %v6020 = vunpack.c.l.b16 %v1842
      %v6021 = vunpack.c.l.b16 %v1843
      %v6022 = vunpack.c.l.b16 %v1844
      %v6023 = vunpack.c.l.b16 %v1845
      %v6024 = vunpack.c.l.b16 %v1846
      %v6025 = vunpack.c.l.b16 %v1847
      %v6026 = vunpack.c.l.b16 %v1848
      %v6027 = vunpack.c.l.b16 %v1849
      %v6028 = vunpack.c.l.b16 %v1850
      %v6029 = vunpack.c.l.b16 %v1851
      %v6030 = vunpack.c.l.b16 %v1852
      %v6031 = vunpack.c.l.b16 %v1853
      %v6032 = vunpack.c.l.b16 %v1854
      %v6033 = vunpack.c.l.b16 %v1855
      %v6034 = vunpack.c.l.b16 %v1856
      %v6035 = vunpack.c.l.b16 %v1857
      %v6036 = vunpack.c.l.b16 %v1858
      %v6037 = vunpack.c.l.b16 %v1859
      %v6038 = vunpack.c.l.b16 %v1860
      %v6039 = vunpack.c.l.b16 %v1861
      %v6040 = vunpack.c.l.b16 %v1862
      %v6041 = vunpack.c.l.b16 %v1863
      %v6042 = vunpack.c.l.b16 %v1864
      %v6043 = vunpack.c.l.b16 %v1865
      %v6044 = vunpack.c.l.b16 %v1866
      %v6045 = vunpack.c.l.b16 %v1867
      %v6046 = vunpack.c.l.b16 %v1868
      %v6047 = vunpack.c.l.b16 %v1869
      %v6048 = vunpack.c.l.b16 %v1870
      %v6049 = vunpack.c.l.b16 %v1871
      %v6050 = vunpack.c.l.b16 %v1872
      %v6051 = vunpack.c.l.b16 %v1873
      %v6052 = vunpack.c.l.b16 %v1874
      %v6053 = vunpack.c.l.b16 %v1875
      %v6054 = vunpack.c.l.b16 %v1876
      %v6055 = vunpack.c.l.b16 %v1877
      %v6056 = vunpack.c.l.b16 %v1878
      %v6057 = vunpack.c.l.b16 %v1879
      %v6058 = vunpack.c.l.b16 %v1880
      %v6059 = vunpack.c.l.b16 %v1881
      %v6060 = vunpack.c.l.b16 %v1882
      %v6061 = vunpack.c.l.b16 %v1883
      %v6062 = vunpack.c.l.b16 %v1884
      %v6063 = vunpack.c.l.b16 %v1885
      %v6064 = vunpack.c.l.b16 %v1886
      %v6065 = vunpack.c.l.b16 %v1887
      %v6066 = vunpack.c.l.b16 %v1888
      %v6067 = vunpack.c.l.b16 %v1889
      %v6068 = vunpack.c.l.b16 %v1890
      %v6069 = vunpack.c.l.b16 %v1891
      %v6070 = vunpack.c.l.b16 %v1892
      %v6071 = vunpack.c.l.b16 %v1893
      %v6072 = vunpack.c.l.b16 %v1894
      %v6073 = vunpack.c.l.b16 %v1895
      %v6074 = vunpack.c.l.b16 %v1896
      %v6075 = vunpack.c.l.b16 %v1897
      %v6076 = vunpack.c.l.b16 %v1898
      %v6077 = vunpack.c.l.b16 %v1899
      %v6078 = vunpack.c.l.b16 %v1900
      %v6079 = vunpack.c.l.b16 %v1901
      %v6080 = vunpack.c.l.b16 %v1902
      %v6081 = vunpack.c.l.b16 %v1903
      %v6082 = vunpack.c.l.b16 %v1904
      %v6083 = vunpack.c.l.b16 %v1905
      %v6084 = vunpack.c.l.b16 %v1906
      %v6085 = vunpack.c.l.b16 %v1907
      %v6086 = vunpack.c.l.b16 %v1908
      %v6087 = vunpack.c.l.b16 %v1909
      %v6088 = vunpack.c.l.b16 %v1910
      %v6089 = vunpack.c.l.b16 %v1911
      %v6090 = vunpack.c.l.b16 %v1912
      %v6091 = vunpack.c.l.b16 %v1913
      %v6092 = vunpack.c.l.b16 %v1914
      %v6093 = vunpack.c.l.b16 %v1915
      %v6094 = vunpack.c.l.b16 %v1916
      %v6095 = vunpack.c.l.b16 %v1917
      %v6096 = vunpack.c.l.b16 %v1918
      %v6097 = vunpack.c.l.b16 %v1919
      %v6098 = vunpack.c.l.b16 %v1920
      %v6099 = vunpack.c.l.b16 %v1921
      %v6100 = vunpack.c.l.b16 %v1922
      %v6101 = vunpack.c.l.b16 %v1923
      %v6102 = vunpack.c.l.b16 %v1924
      %v6103 = vunpack.c.l.b16 %v1925
      %v6104 = vunpack.c.l.b16 %v1926
      %v6105 = vunpack.c.l.b16 %v1927
      %v6106 = vunpack.c.l.b16 %v1928
      %v6107 = vunpack.c.l.b16 %v1929
      %v6108 = vunpack.c.l.b16 %v1930
      %v6109 = vunpack.c.l.b16 %v1931
      %v6110 = vunpack.c.l.b16 %v1932
      %v6111 = vunpack.c.l.b16 %v1933
      %v6112 = vunpack.c.l.b16 %v1934
      %v6113 = vunpack.c.l.b16 %v1935
      %v6114 = vunpack.c.l.b16 %v1936
      %v6115 = vunpack.c.l.b16 %v1937
      %v6116 = vunpack.c.l.b16 %v1938
      %v6117 = vunpack.c.l.b16 %v1939
      %v6118 = vunpack.c.l.b16 %v1940
      %v6119 = vunpack.c.l.b16 %v1941
      %v6120 = vunpack.c.l.b16 %v1942
      %v6121 = vunpack.c.l.b16 %v1943
      %v6122 = vunpack.c.l.b16 %v1944
      %v6123 = vunpack.c.l.b16 %v1945
      %v6124 = vunpack.c.l.b16 %v1946
      %v6125 = vunpack.c.l.b16 %v1947
      %v6126 = vunpack.c.l.b16 %v1948
      %v6127 = vunpack.c.l.b16 %v1949
      %v6128 = vunpack.c.l.b16 %v1950
      %v6129 = vunpack.c.l.b16 %v1951
      %v6130 = vunpack.c.l.b16 %v1952
      %v6131 = vunpack.c.l.b16 %v1953
      %v6132 = vunpack.c.l.b16 %v1954
      %v6133 = vunpack.c.l.b16 %v1955
      %v6134 = vunpack.c.l.b16 %v1956
      %v6135 = vunpack.c.l.b16 %v1957
      %v6136 = vunpack.c.l.b16 %v1958
      %v6137 = vunpack.c.l.b16 %v1959
      %v6138 = vunpack.c.l.b16 %v1960
      %v6139 = vunpack.c.l.b16 %v1961
      %v6140 = vunpack.c.l.b16 %v1962
      %v6141 = vunpack.c.l.b16 %v1963
      %v6142 = vunpack.c.l.b16 %v1964
      %v6143 = vunpack.c.l.b16 %v1965
      %v6144 = vunpack.c.l.b16 %v1966
      %v6145 = vunpack.c.l.b16 %v1967
      %v6146 = vpack.c.b16 %v4451, %v4450
      %v6147 = vpack.c.b16 %v4453, %v4452
      %v6148 = vpack.c.b16 %v4455, %v4454
      %v6149 = vpack.c.b16 %v4457, %v4456
      %v6150 = vpack.c.b16 %v4459, %v4458
      %v6151 = vpack.c.b16 %v4461, %v4460
      %v6152 = vpack.c.b16 %v4463, %v4462
      %v6153 = vpack.c.b16 %v4465, %v4464
      %v6154 = vpack.c.b16 %v4467, %v4466
      %v6155 = vpack.c.b16 %v4469, %v4468
      %v6156 = vpack.c.b16 %v4471, %v4470
      %v6157 = vpack.c.b16 %v4473, %v4472
      %v6158 = vpack.c.b16 %v4475, %v4474
      %v6159 = vpack.c.b16 %v4477, %v4476
      %v6160 = vpack.c.b16 %v4479, %v4478
      %v6161 = vpack.c.b16 %v4481, %v4480
      %v6162 = vpack.c.b16 %v4483, %v4482
      %v6163 = vpack.c.b16 %v4485, %v4484
      %v6164 = vpack.c.b16 %v4487, %v4486
      %v6165 = vpack.c.b16 %v4489, %v4488
      %v6166 = vpack.c.b16 %v4491, %v4490
      %v6167 = vpack.c.b16 %v4493, %v4492
      %v6168 = vpack.c.b16 %v4495, %v4494
      %v6169 = vpack.c.b16 %v4497, %v4496
      %v6170 = vpack.c.b16 %v4499, %v4498
      %v6171 = vpack.c.b16 %v4501, %v4500
      %v6172 = vpack.c.b16 %v4503, %v4502
      %v6173 = vpack.c.b16 %v4505, %v4504
      %v6174 = vpack.c.b16 %v4507, %v4506
      %v6175 = vpack.c.b16 %v4509, %v4508
      %v6176 = vpack.c.b16 %v4511, %v4510
      %v6177 = vpack.c.b16 %v4513, %v4512
      %v6178 = vpack.c.b16 %v4515, %v4514
      %v6179 = vpack.c.b16 %v4517, %v4516
      %v6180 = vpack.c.b16 %v4519, %v4518
      %v6181 = vpack.c.b16 %v4521, %v4520
      %v6182 = vpack.c.b16 %v4523, %v4522
      %v6183 = vpack.c.b16 %v4525, %v4524
      %v6184 = vpack.c.b16 %v4527, %v4526
      %v6185 = vpack.c.b16 %v4529, %v4528
      %v6186 = vpack.c.b16 %v4531, %v4530
      %v6187 = vpack.c.b16 %v4533, %v4532
      %v6188 = vpack.c.b16 %v4535, %v4534
      %v6189 = vpack.c.b16 %v4537, %v4536
      %v6190 = vpack.c.b16 %v4539, %v4538
      %v6191 = vpack.c.b16 %v4541, %v4540
      %v6192 = vpack.c.b16 %v4543, %v4542
      %v6193 = vpack.c.b16 %v4545, %v4544
      %v6194 = vpack.c.b16 %v4547, %v4546
      %v6195 = vpack.c.b16 %v4549, %v4548
      %v6196 = vpack.c.b16 %v4551, %v4550
      %v6197 = vpack.c.b16 %v4553, %v4552
      %v6198 = vpack.c.b16 %v4555, %v4554
      %v6199 = vpack.c.b16 %v4557, %v4556
      %v6200 = vpack.c.b16 %v4559, %v4558
      %v6201 = vpack.c.b16 %v4561, %v4560
      %v6202 = vpack.c.b16 %v4563, %v4562
      %v6203 = vpack.c.b16 %v4565, %v4564
      %v6204 = vpack.c.b16 %v4567, %v4566
      %v6205 = vpack.c.b16 %v4569, %v4568
      %v6206 = vpack.c.b16 %v4571, %v4570
      %v6207 = vpack.c.b16 %v4573, %v4572
      %v6208 = vpack.c.b16 %v4575, %v4574
      %v6209 = vpack.c.b16 %v4577, %v4576
      %v6210 = vpack.c.b16 %v4579, %v4578
      %v6211 = vpack.c.b16 %v4581, %v4580
      %v6212 = vpack.c.b16 %v4583, %v4582
      %v6213 = vpack.c.b16 %v4585, %v4584
      %v6214 = vpack.c.b16 %v4587, %v4586
      %v6215 = vpack.c.b16 %v4589, %v4588
      %v6216 = vpack.c.b16 %v4591, %v4590
      %v6217 = vpack.c.b16 %v4593, %v4592
      %v6218 = vpack.c.b16 %v4595, %v4594
      %v6219 = vpack.c.b16 %v4597, %v4596
      %v6220 = vpack.c.b16 %v4599, %v4598
      %v6221 = vpack.c.b16 %v4601, %v4600
      %v6222 = vpack.c.b16 %v4603, %v4602
      %v6223 = vpack.c.b16 %v4605, %v4604
      %v6224 = vpack.c.b16 %v4607, %v4606
      %v6225 = vpack.c.b16 %v4609, %v4608
      %v6226 = vpack.c.b16 %v4611, %v4610
      %v6227 = vpack.c.b16 %v4613, %v4612
      %v6228 = vpack.c.b16 %v4615, %v4614
      %v6229 = vpack.c.b16 %v4617, %v4616
      %v6230 = vpack.c.b16 %v4619, %v4618
      %v6231 = vpack.c.b16 %v4621, %v4620
      %v6232 = vpack.c.b16 %v4623, %v4622
      %v6233 = vpack.c.b16 %v4625, %v4624
      %v6234 = vpack.c.b16 %v4627, %v4626
      %v6235 = vpack.c.b16 %v4629, %v4628
      %v6236 = vpack.c.b16 %v4631, %v4630
      %v6237 = vpack.c.b16 %v4633, %v4632
      %v6238 = vpack.c.b16 %v4635, %v4634
      %v6239 = vpack.c.b16 %v4637, %v4636
      %v6240 = vpack.c.b16 %v4639, %v4638
      %v6241 = vpack.c.b16 %v4641, %v4640
      %v6242 = vpack.c.b16 %v4643, %v4642
      %v6243 = vpack.c.b16 %v4645, %v4644
      %v6244 = vpack.c.b16 %v4647, %v4646
      %v6245 = vpack.c.b16 %v4649, %v4648
      %v6246 = vpack.c.b16 %v4651, %v4650
      %v6247 = vpack.c.b16 %v4653, %v4652
      %v6248 = vpack.c.b16 %v4655, %v4654
      %v6249 = vpack.c.b16 %v4657, %v4656
      %v6250 = vpack.c.b16 %v4659, %v4658
      %v6251 = vpack.c.b16 %v4661, %v4660
      %v6252 = vpack.c.b16 %v4663, %v4662
      %v6253 = vpack.c.b16 %v4665, %v4664
      %v6254 = vpack.c.b16 %v4667, %v4666
      %v6255 = vpack.c.b16 %v4669, %v4668
      %v6256 = vpack.c.b16 %v4671, %v4670
      %v6257 = vpack.c.b16 %v4673, %v4672
      %v6258 = vpack.c.b16 %v4675, %v4674
      %v6259 = vpack.c.b16 %v4677, %v4676
      %v6260 = vpack.c.b16 %v4679, %v4678
      %v6261 = vpack.c.b16 %v4681, %v4680
      %v6262 = vpack.c.b16 %v4683, %v4682
      %v6263 = vpack.c.b16 %v4685, %v4684
      %v6264 = vpack.c.b16 %v4687, %v4686
      %v6265 = vpack.c.b16 %v4689, %v4688
      %v6266 = vpack.c.b16 %v4691, %v4690
      %v6267 = vpack.c.b16 %v4693, %v4692
      %v6268 = vpack.c.b16 %v4695, %v4694
      %v6269 = vpack.c.b16 %v4697, %v4696
      %v6270 = vpack.c.b16 %v4699, %v4698
      %v6271 = vpack.c.b16 %v4701, %v4700
      %v6272 = vpack.c.b16 %v4703, %v4702
      %v6273 = vpack.c.b16 %v4705, %v4704
      %v6274 = vpack.c.b16 %v4707, %v4706
      %v6275 = vpack.c.b16 %v4709, %v4708
      %v6276 = vpack.c.b16 %v4711, %v4710
      %v6277 = vpack.c.b16 %v4713, %v4712
      %v6278 = vpack.c.b16 %v4715, %v4714
      %v6279 = vpack.c.b16 %v4717, %v4716
      %v6280 = vpack.c.b16 %v4719, %v4718
      %v6281 = vpack.c.b16 %v4721, %v4720
      %v6282 = vpack.c.b16 %v4723, %v4722
      %v6283 = vpack.c.b16 %v4725, %v4724
      %v6284 = vpack.c.b16 %v4727, %v4726
      %v6285 = vpack.c.b16 %v4729, %v4728
      %v6286 = vpack.c.b16 %v4731, %v4730
      %v6287 = vpack.c.b16 %v4733, %v4732
      %v6288 = vpack.c.b16 %v4735, %v4734
      %v6289 = vpack.c.b16 %v4737, %v4736
      %v6290 = vpack.c.b16 %v4739, %v4738
      %v6291 = vpack.c.b16 %v4741, %v4740
      %v6292 = vpack.c.b16 %v4743, %v4742
      %v6293 = vpack.c.b16 %v4745, %v4744
      %v6294 = vpack.c.b16 %v4747, %v4746
      %v6295 = vpack.c.b16 %v4749, %v4748
      %v6296 = vpack.c.b16 %v4751, %v4750
      %v6297 = vpack.c.b16 %v4753, %v4752
      %v6298 = vpack.c.b16 %v4755, %v4754
      %v6299 = vpack.c.b16 %v4757, %v4756
      %v6300 = vpack.c.b16 %v4759, %v4758
      %v6301 = vpack.c.b16 %v4761, %v4760
      %v6302 = vpack.c.b16 %v4763, %v4762
      %v6303 = vpack.c.b16 %v4765, %v4764
      %v6304 = vpack.c.b16 %v4767, %v4766
      %v6305 = vpack.c.b16 %v4769, %v4768
      %v6306 = vpack.c.b16 %v4771, %v4770
      %v6307 = vpack.c.b16 %v4773, %v4772
      %v6308 = vpack.c.b16 %v4775, %v4774
      %v6309 = vpack.c.b16 %v4777, %v4776
      %v6310 = vpack.c.b16 %v4779, %v4778
      %v6311 = vpack.c.b16 %v4781, %v4780
      %v6312 = vpack.c.b16 %v4783, %v4782
      %v6313 = vpack.c.b16 %v4785, %v4784
      %v6314 = vpack.c.b16 %v4787, %v4786
      %v6315 = vpack.c.b16 %v4789, %v4788
      %v6316 = vpack.c.b16 %v4791, %v4790
      %v6317 = vpack.c.b16 %v4793, %v4792
      %v6318 = vpack.c.b16 %v4795, %v4794
      %v6319 = vpack.c.b16 %v4797, %v4796
      %v6320 = vpack.c.b16 %v4799, %v4798
      %v6321 = vpack.c.b16 %v4801, %v4800
      %v6322 = vpack.c.b16 %v4803, %v4802
      %v6323 = vpack.c.b16 %v4805, %v4804
      %v6324 = vpack.c.b16 %v4807, %v4806
      %v6325 = vpack.c.b16 %v4809, %v4808
      %v6326 = vpack.c.b16 %v4811, %v4810
      %v6327 = vpack.c.b16 %v4813, %v4812
      %v6328 = vpack.c.b16 %v4815, %v4814
      %v6329 = vpack.c.b16 %v4817, %v4816
      %v6330 = vpack.c.b16 %v4819, %v4818
      %v6331 = vpack.c.b16 %v4821, %v4820
      %v6332 = vpack.c.b16 %v4823, %v4822
      %v6333 = vpack.c.b16 %v4825, %v4824
      %v6334 = vpack.c.b16 %v4827, %v4826
      %v6335 = vpack.c.b16 %v4829, %v4828
      %v6336 = vpack.c.b16 %v4831, %v4830
      %v6337 = vpack.c.b16 %v4833, %v4832
      %v6338 = vpack.c.b16 %v4835, %v4834
      %v6339 = vpack.c.b16 %v4837, %v4836
      %v6340 = vpack.c.b16 %v4839, %v4838
      %v6341 = vpack.c.b16 %v4841, %v4840
      %v6342 = vpack.c.b16 %v4843, %v4842
      %v6343 = vpack.c.b16 %v4845, %v4844
      %v6344 = vpack.c.b16 %v4847, %v4846
      %v6345 = vpack.c.b16 %v4849, %v4848
      %v6346 = vpack.c.b16 %v4851, %v4850
      %v6347 = vpack.c.b16 %v4853, %v4852
      %v6348 = vpack.c.b16 %v4855, %v4854
      %v6349 = vpack.c.b16 %v4857, %v4856
      %v6350 = vpack.c.b16 %v4859, %v4858
      %v6351 = vpack.c.b16 %v4861, %v4860
      %v6352 = vpack.c.b16 %v4863, %v4862
      %v6353 = vpack.c.b16 %v4865, %v4864
      %v6354 = vpack.c.b16 %v4867, %v4866
      %v6355 = vpack.c.b16 %v4869, %v4868
      %v6356 = vpack.c.b16 %v4871, %v4870
      %v6357 = vpack.c.b16 %v4873, %v4872
      %v6358 = vpack.c.b16 %v4875, %v4874
      %v6359 = vpack.c.b16 %v4877, %v4876
      %v6360 = vpack.c.b16 %v4879, %v4878
      %v6361 = vpack.c.b16 %v4881, %v4880
      %v6362 = vpack.c.b16 %v4883, %v4882
      %v6363 = vpack.c.b16 %v4885, %v4884
      %v6364 = vpack.c.b16 %v4887, %v4886
      %v6365 = vpack.c.b16 %v4889, %v4888
      %v6366 = vpack.c.b16 %v4891, %v4890
      %v6367 = vpack.c.b16 %v4893, %v4892
      %v6368 = vpack.c.b16 %v4895, %v4894
      %v6369 = vpack.c.b16 %v4897, %v4896
      %v6370 = vpack.c.b16 %v4899, %v4898
      %v6371 = vpack.c.b16 %v4901, %v4900
      %v6372 = vpack.c.b16 %v4903, %v4902
      %v6373 = vpack.c.b16 %v4905, %v4904
      %v6374 = vpack.c.b16 %v4907, %v4906
      %v6375 = vpack.c.b16 %v4909, %v4908
      %v6376 = vpack.c.b16 %v4911, %v4910
      %v6377 = vpack.c.b16 %v4913, %v4912
      %v6378 = vpack.c.b16 %v4915, %v4914
      %v6379 = vpack.c.b16 %v4917, %v4916
      %v6380 = vpack.c.b16 %v4919, %v4918
      %v6381 = vpack.c.b16 %v4921, %v4920
      %v6382 = vpack.c.b16 %v4923, %v4922
      %v6383 = vpack.c.b16 %v4925, %v4924
      %v6384 = vpack.c.b16 %v4927, %v4926
      %v6385 = vpack.c.b16 %v4929, %v4928
      %v6386 = vpack.c.b16 %v4931, %v4930
      %v6387 = vpack.c.b16 %v4933, %v4932
      %v6388 = vpack.c.b16 %v4935, %v4934
      %v6389 = vpack.c.b16 %v4937, %v4936
      %v6390 = vpack.c.b16 %v4939, %v4938
      %v6391 = vpack.c.b16 %v4941, %v4940
      %v6392 = vpack.c.b16 %v4943, %v4942
      %v6393 = vpack.c.b16 %v4945, %v4944
      %v6394 = vpack.c.b16 %v4947, %v4946
      %v6395 = vpack.c.b16 %v4949, %v4948
      %v6396 = vpack.c.b16 %v4951, %v4950
      %v6397 = vpack.c.b16 %v4953, %v4952
      %v6398 = vpack.c.b16 %v4955, %v4954
      %v6399 = vpack.c.b16 %v4957, %v4956
      %v6400 = vpack.c.b16 %v4959, %v4958
      %v6401 = vpack.c.b16 %v4961, %v4960
      %v6402 = vpack.c.b16 %v4963, %v4962
      %v6403 = vpack.c.b16 %v4965, %v4964
      %v6404 = vpack.c.b16 %v4967, %v4966
      %v6405 = vpack.c.b16 %v4969, %v4968
      %v6406 = vpack.c.b16 %v4971, %v4970
      %v6407 = vpack.c.b16 %v4973, %v4972
      %v6408 = vpack.c.b16 %v4975, %v4974
      %v6409 = vpack.c.b16 %v4977, %v4976
      %v6410 = vpack.c.b16 %v4979, %v4978
      %v6411 = vpack.c.b16 %v4981, %v4980
      %v6412 = vpack.c.b16 %v4983, %v4982
      %v6413 = vpack.c.b16 %v4985, %v4984
      %v6414 = vpack.c.b16 %v4987, %v4986
      %v6415 = vpack.c.b16 %v4989, %v4988
      %v6416 = vpack.c.b16 %v4991, %v4990
      %v6417 = vpack.c.b16 %v4993, %v4992
      %v6418 = vpack.c.b16 %v4995, %v4994
      %v6419 = vpack.c.b16 %v4997, %v4996
      %v6420 = vpack.c.b16 %v4999, %v4998
      %v6421 = vpack.c.b16 %v5001, %v5000
      %v6422 = vpack.c.b16 %v5003, %v5002
      %v6423 = vpack.c.b16 %v5005, %v5004
      %v6424 = vpack.c.b16 %v5007, %v5006
      %v6425 = vpack.c.b16 %v5009, %v5008
      %v6426 = vpack.c.b16 %v5011, %v5010
      %v6427 = vpack.c.b16 %v5013, %v5012
      %v6428 = vpack.c.b16 %v5015, %v5014
      %v6429 = vpack.c.b16 %v5017, %v5016
      %v6430 = vpack.c.b16 %v5019, %v5018
      %v6431 = vpack.c.b16 %v5021, %v5020
      %v6432 = vpack.c.b16 %v5023, %v5022
      %v6433 = vpack.c.b16 %v5025, %v5024
      %v6434 = vpack.c.b16 %v5027, %v5026
      %v6435 = vpack.c.b16 %v5029, %v5028
      %v6436 = vpack.c.b16 %v5031, %v5030
      %v6437 = vpack.c.b16 %v5033, %v5032
      %v6438 = vpack.c.b16 %v5035, %v5034
      %v6439 = vpack.c.b16 %v5037, %v5036
      %v6440 = vpack.c.b16 %v5039, %v5038
      %v6441 = vpack.c.b16 %v5041, %v5040
      %v6442 = vpack.c.b16 %v5043, %v5042
      %v6443 = vpack.c.b16 %v5045, %v5044
      %v6444 = vpack.c.b16 %v5047, %v5046
      %v6445 = vpack.c.b16 %v5049, %v5048
      %v6446 = vpack.c.b16 %v5051, %v5050
      %v6447 = vpack.c.b16 %v5053, %v5052
      %v6448 = vpack.c.b16 %v5055, %v5054
      %v6449 = vpack.c.b16 %v5057, %v5056
      %v6450 = vpack.c.b16 %v5059, %v5058
      %v6451 = vpack.c.b16 %v5061, %v5060
      %v6452 = vpack.c.b16 %v5063, %v5062
      %v6453 = vpack.c.b16 %v5065, %v5064
      %v6454 = vpack.c.b16 %v5067, %v5066
      %v6455 = vpack.c.b16 %v5069, %v5068
      %v6456 = vpack.c.b16 %v5071, %v5070
      %v6457 = vpack.c.b16 %v5073, %v5072
      %v6458 = vpack.c.b16 %v5075, %v5074
      %v6459 = vpack.c.b16 %v5077, %v5076
      %v6460 = vpack.c.b16 %v5079, %v5078
      %v6461 = vpack.c.b16 %v5081, %v5080
      %v6462 = vpack.c.b16 %v5083, %v5082
      %v6463 = vpack.c.b16 %v5085, %v5084
      %v6464 = vpack.c.b16 %v5087, %v5086
      %v6465 = vpack.c.b16 %v5089, %v5088
      %v6466 = vpack.c.b16 %v5091, %v5090
      %v6467 = vpack.c.b16 %v5093, %v5092
      %v6468 = vpack.c.b16 %v5095, %v5094
      %v6469 = vpack.c.b16 %v5097, %v5096
      %v6470 = vpack.c.b16 %v5099, %v5098
      %v6471 = vpack.c.b16 %v5101, %v5100
      %v6472 = vpack.c.b16 %v5103, %v5102
      %v6473 = vpack.c.b16 %v5105, %v5104
      %v6474 = vpack.c.b16 %v5107, %v5106
      %v6475 = vpack.c.b16 %v5109, %v5108
      %v6476 = vpack.c.b16 %v5111, %v5110
      %v6477 = vpack.c.b16 %v5113, %v5112
      %v6478 = vpack.c.b16 %v5115, %v5114
      %v6479 = vpack.c.b16 %v5117, %v5116
      %v6480 = vpack.c.b16 %v5119, %v5118
      %v6481 = vpack.c.b16 %v5121, %v5120
      %v6482 = vpack.c.b16 %v5123, %v5122
      %v6483 = vpack.c.b16 %v5125, %v5124
      %v6484 = vpack.c.b16 %v5127, %v5126
      %v6485 = vpack.c.b16 %v5129, %v5128
      %v6486 = vpack.c.b16 %v5131, %v5130
      %v6487 = vpack.c.b16 %v5133, %v5132
      %v6488 = vpack.c.b16 %v5135, %v5134
      %v6489 = vpack.c.b16 %v5137, %v5136
      %v6490 = vpack.c.b16 %v5139, %v5138
      %v6491 = vpack.c.b16 %v5141, %v5140
      %v6492 = vpack.c.b16 %v5143, %v5142
      %v6493 = vpack.c.b16 %v5145, %v5144
      %v6494 = vpack.c.b16 %v5147, %v5146
      %v6495 = vpack.c.b16 %v5149, %v5148
      %v6496 = vpack.c.b16 %v5151, %v5150
      %v6497 = vpack.c.b16 %v5153, %v5152
      %v6498 = vpack.c.b16 %v5155, %v5154
      %v6499 = vpack.c.b16 %v5157, %v5156
      %v6500 = vpack.c.b16 %v5159, %v5158
      %v6501 = vpack.c.b16 %v5161, %v5160
      %v6502 = vpack.c.b16 %v5163, %v5162
      %v6503 = vpack.c.b16 %v5165, %v5164
      %v6504 = vpack.c.b16 %v5167, %v5166
      %v6505 = vpack.c.b16 %v5169, %v5168
      %v6506 = vpack.c.b16 %v5171, %v5170
      %v6507 = vpack.c.b16 %v5173, %v5172
      %v6508 = vpack.c.b16 %v5175, %v5174
      %v6509 = vpack.c.b16 %v5177, %v5176
      %v6510 = vpack.c.b16 %v5179, %v5178
      %v6511 = vpack.c.b16 %v5181, %v5180
      %v6512 = vpack.c.b16 %v5183, %v5182
      %v6513 = vpack.c.b16 %v5185, %v5184
      %v6514 = vpack.c.b16 %v5187, %v5186
      %v6515 = vpack.c.b16 %v5189, %v5188
      %v6516 = vpack.c.b16 %v5191, %v5190
      %v6517 = vpack.c.b16 %v5193, %v5192
      %v6518 = vpack.c.b16 %v5195, %v5194
      %v6519 = vpack.c.b16 %v5197, %v5196
      %v6520 = vpack.c.b16 %v5199, %v5198
      %v6521 = vpack.c.b16 %v5201, %v5200
      %v6522 = vpack.c.b16 %v5203, %v5202
      %v6523 = vpack.c.b16 %v5205, %v5204
      %v6524 = vpack.c.b16 %v5207, %v5206
      %v6525 = vpack.c.b16 %v5209, %v5208
      %v6526 = vpack.c.b16 %v5211, %v5210
      %v6527 = vpack.c.b16 %v5213, %v5212
      %v6528 = vpack.c.b16 %v5215, %v5214
      %v6529 = vpack.c.b16 %v5217, %v5216
      %v6530 = vpack.c.b16 %v5219, %v5218
      %v6531 = vpack.c.b16 %v5221, %v5220
      %v6532 = vpack.c.b16 %v5223, %v5222
      %v6533 = vpack.c.b16 %v5225, %v5224
      %v6534 = vpack.c.b16 %v5227, %v5226
      %v6535 = vpack.c.b16 %v5229, %v5228
      %v6536 = vpack.c.b16 %v5231, %v5230
      %v6537 = vpack.c.b16 %v5233, %v5232
      %v6538 = vpack.c.b16 %v5235, %v5234
      %v6539 = vpack.c.b16 %v5237, %v5236
      %v6540 = vpack.c.b16 %v5239, %v5238
      %v6541 = vpack.c.b16 %v5241, %v5240
      %v6542 = vpack.c.b16 %v5243, %v5242
      %v6543 = vpack.c.b16 %v5245, %v5244
      %v6544 = vpack.c.b16 %v5247, %v5246
      %v6545 = vpack.c.b16 %v5249, %v5248
      %v6546 = vpack.c.b16 %v5251, %v5250
      %v6547 = vpack.c.b16 %v5253, %v5252
      %v6548 = vpack.c.b16 %v5255, %v5254
      %v6549 = vpack.c.b16 %v5257, %v5256
      %v6550 = vpack.c.b16 %v5259, %v5258
      %v6551 = vpack.c.b16 %v5261, %v5260
      %v6552 = vpack.c.b16 %v5263, %v5262
      %v6553 = vpack.c.b16 %v5265, %v5264
      %v6554 = vpack.c.b16 %v5267, %v5266
      %v6555 = vpack.c.b16 %v5269, %v5268
      %v6556 = vpack.c.b16 %v5271, %v5270
      %v6557 = vpack.c.b16 %v5273, %v5272
      %v6558 = vpack.c.b16 %v5275, %v5274
      %v6559 = vpack.c.b16 %v5277, %v5276
      %v6560 = vpack.c.b16 %v5279, %v5278
      %v6561 = vpack.c.b16 %v5281, %v5280
      %v6562 = vpack.c.b16 %v5283, %v5282
      %v6563 = vpack.c.b16 %v5285, %v5284
      %v6564 = vpack.c.b16 %v5287, %v5286
      %v6565 = vpack.c.b16 %v5289, %v5288
      %v6566 = vpack.c.b16 %v5291, %v5290
      %v6567 = vpack.c.b16 %v5293, %v5292
      %v6568 = vpack.c.b16 %v5295, %v5294
      %v6569 = vpack.c.b16 %v5297, %v5296
      %v6570 = vpack.c.b16 %v5299, %v5298
      %v6571 = vpack.c.b16 %v5301, %v5300
      %v6572 = vpack.c.b16 %v5303, %v5302
      %v6573 = vpack.c.b16 %v5305, %v5304
      %v6574 = vpack.c.b16 %v5307, %v5306
      %v6575 = vpack.c.b16 %v5309, %v5308
      %v6576 = vpack.c.b16 %v5311, %v5310
      %v6577 = vpack.c.b16 %v5313, %v5312
      %v6578 = vpack.c.b16 %v5315, %v5314
      %v6579 = vpack.c.b16 %v5317, %v5316
      %v6580 = vpack.c.b16 %v5319, %v5318
      %v6581 = vpack.c.b16 %v5321, %v5320
      %v6582 = vpack.c.b16 %v5323, %v5322
      %v6583 = vpack.c.b16 %v5325, %v5324
      %v6584 = vpack.c.b16 %v5327, %v5326
      %v6585 = vpack.c.b16 %v5329, %v5328
      %v6586 = vpack.c.b16 %v5331, %v5330
      %v6587 = vpack.c.b16 %v5333, %v5332
      %v6588 = vpack.c.b16 %v5335, %v5334
      %v6589 = vpack.c.b16 %v5337, %v5336
      %v6590 = vpack.c.b16 %v5339, %v5338
      %v6591 = vpack.c.b16 %v5341, %v5340
      %v6592 = vpack.c.b16 %v5343, %v5342
      %v6593 = vpack.c.b16 %v5345, %v5344
      %v6594 = vpack.c.b16 %v5347, %v5346
      %v6595 = vpack.c.b16 %v5349, %v5348
      %v6596 = vpack.c.b16 %v5351, %v5350
      %v6597 = vpack.c.b16 %v5353, %v5352
      %v6598 = vpack.c.b16 %v5355, %v5354
      %v6599 = vpack.c.b16 %v5357, %v5356
      %v6600 = vpack.c.b16 %v5359, %v5358
      %v6601 = vpack.c.b16 %v5361, %v5360
      %v6602 = vpack.c.b16 %v5363, %v5362
      %v6603 = vpack.c.b16 %v5365, %v5364
      %v6604 = vpack.c.b16 %v5367, %v5366
      %v6605 = vpack.c.b16 %v5369, %v5368
      %v6606 = vpack.c.b16 %v5371, %v5370
      %v6607 = vpack.c.b16 %v5373, %v5372
      %v6608 = vpack.c.b16 %v5375, %v5374
      %v6609 = vpack.c.b16 %v5377, %v5376
      %v6610 = vpack.c.b16 %v5379, %v5378
      %v6611 = vpack.c.b16 %v5381, %v5380
      %v6612 = vpack.c.b16 %v5383, %v5382
      %v6613 = vpack.c.b16 %v5385, %v5384
      %v6614 = vpack.c.b16 %v5387, %v5386
      %v6615 = vpack.c.b16 %v5389, %v5388
      %v6616 = vpack.c.b16 %v5391, %v5390
      %v6617 = vpack.c.b16 %v5393, %v5392
      %v6618 = vpack.c.b16 %v5395, %v5394
      %v6619 = vpack.c.b16 %v5397, %v5396
      %v6620 = vpack.c.b16 %v5399, %v5398
      %v6621 = vpack.c.b16 %v5401, %v5400
      %v6622 = vpack.c.b16 %v5403, %v5402
      %v6623 = vpack.c.b16 %v5405, %v5404
      %v6624 = vpack.c.b16 %v5407, %v5406
      %v6625 = vpack.c.b16 %v5409, %v5408
      %v6626 = vpack.c.b16 %v5411, %v5410
      %v6627 = vpack.c.b16 %v5413, %v5412
      %v6628 = vpack.c.b16 %v5415, %v5414
      %v6629 = vpack.c.b16 %v5417, %v5416
      %v6630 = vpack.c.b16 %v5419, %v5418
      %v6631 = vpack.c.b16 %v5421, %v5420
      %v6632 = vpack.c.b16 %v5423, %v5422
      %v6633 = vpack.c.b16 %v5425, %v5424
      %v6634 = vpack.c.b16 %v5427, %v5426
      %v6635 = vpack.c.b16 %v5429, %v5428
      %v6636 = vpack.c.b16 %v5431, %v5430
      %v6637 = vpack.c.b16 %v5433, %v5432
      %v6638 = vpack.c.b16 %v5435, %v5434
      %v6639 = vpack.c.b16 %v5437, %v5436
      %v6640 = vpack.c.b16 %v5439, %v5438
      %v6641 = vpack.c.b16 %v5441, %v5440
      %v6642 = vpack.c.b16 %v5443, %v5442
      %v6643 = vpack.c.b16 %v5445, %v5444
      %v6644 = vpack.c.b16 %v5447, %v5446
      %v6645 = vpack.c.b16 %v5449, %v5448
      %v6646 = vpack.c.b16 %v5451, %v5450
      %v6647 = vpack.c.b16 %v5453, %v5452
      %v6648 = vpack.c.b16 %v5455, %v5454
      %v6649 = vpack.c.b16 %v5457, %v5456
      %v6650 = vpack.c.b16 %v5459, %v5458
      %v6651 = vpack.c.b16 %v5461, %v5460
      %v6652 = vpack.c.b16 %v5463, %v5462
      %v6653 = vpack.c.b16 %v5465, %v5464
      %v6654 = vpack.c.b16 %v5467, %v5466
      %v6655 = vpack.c.b16 %v5469, %v5468
      %v6656 = vpack.c.b16 %v5471, %v5470
      %v6657 = vpack.c.b16 %v5473, %v5472
      %v6658 = vpack.c.b16 %v5475, %v5474
      %v6659 = vpack.c.b16 %v5477, %v5476
      %v6660 = vpack.c.b16 %v5479, %v5478
      %v6661 = vpack.c.b16 %v5481, %v5480
      %v6662 = vpack.c.b16 %v5483, %v5482
      %v6663 = vpack.c.b16 %v5485, %v5484
      %v6664 = vpack.c.b16 %v5487, %v5486
      %v6665 = vpack.c.b16 %v5489, %v5488
      %v6666 = vpack.c.b16 %v5491, %v5490
      %v6667 = vpack.c.b16 %v5493, %v5492
      %v6668 = vpack.c.b16 %v5495, %v5494
      %v6669 = vpack.c.b16 %v5497, %v5496
      %v6670 = vpack.c.b16 %v5499, %v5498
      %v6671 = vpack.c.b16 %v5501, %v5500
      %v6672 = vpack.c.b16 %v5503, %v5502
      %v6673 = vpack.c.b16 %v5505, %v5504
      %v6674 = vpack.c.b16 %v5507, %v5506
      %v6675 = vpack.c.b16 %v5509, %v5508
      %v6676 = vpack.c.b16 %v5511, %v5510
      %v6677 = vpack.c.b16 %v5513, %v5512
      %v6678 = vpack.c.b16 %v5515, %v5514
      %v6679 = vpack.c.b16 %v5517, %v5516
      %v6680 = vpack.c.b16 %v5519, %v5518
      %v6681 = vpack.c.b16 %v5521, %v5520
      %v6682 = vpack.c.b16 %v5523, %v5522
      %v6683 = vpack.c.b16 %v5525, %v5524
      %v6684 = vpack.c.b16 %v5527, %v5526
      %v6685 = vpack.c.b16 %v5529, %v5528
      %v6686 = vpack.c.b16 %v5531, %v5530
      %v6687 = vpack.c.b16 %v5533, %v5532
      %v6688 = vpack.c.b16 %v5535, %v5534
      %v6689 = vpack.c.b16 %v5537, %v5536
      %v6690 = vpack.c.b16 %v5539, %v5538
      %v6691 = vpack.c.b16 %v5541, %v5540
      %v6692 = vpack.c.b16 %v5543, %v5542
      %v6693 = vpack.c.b16 %v5545, %v5544
      %v6694 = vpack.c.b16 %v5547, %v5546
      %v6695 = vpack.c.b16 %v5549, %v5548
      %v6696 = vpack.c.b16 %v5551, %v5550
      %v6697 = vpack.c.b16 %v5553, %v5552
      %v6698 = vpack.c.b16 %v5555, %v5554
      %v6699 = vpack.c.b16 %v5557, %v5556
      %v6700 = vpack.c.b16 %v5559, %v5558
      %v6701 = vpack.c.b16 %v5561, %v5560
      %v6702 = vpack.c.b16 %v5563, %v5562
      %v6703 = vpack.c.b16 %v5565, %v5564
      %v6704 = vpack.c.b16 %v5567, %v5566
      %v6705 = vpack.c.b16 %v5569, %v5568
      %v6706 = vpack.c.b16 %v5571, %v5570
      %v6707 = vpack.c.b16 %v5573, %v5572
      %v6708 = vpack.c.b16 %v5575, %v5574
      %v6709 = vpack.c.b16 %v5577, %v5576
      %v6710 = vpack.c.b16 %v5579, %v5578
      %v6711 = vpack.c.b16 %v5581, %v5580
      %v6712 = vpack.c.b16 %v5583, %v5582
      %v6713 = vpack.c.b16 %v5585, %v5584
      %v6714 = vpack.c.b16 %v5587, %v5586
      %v6715 = vpack.c.b16 %v5589, %v5588
      %v6716 = vpack.c.b16 %v5591, %v5590
      %v6717 = vpack.c.b16 %v5593, %v5592
      %v6718 = vpack.c.b16 %v5595, %v5594
      %v6719 = vpack.c.b16 %v5597, %v5596
      %v6720 = vpack.c.b16 %v5599, %v5598
      %v6721 = vpack.c.b16 %v5601, %v5600
      %v6722 = vpack.c.b16 %v5603, %v5602
      %v6723 = vpack.c.b16 %v5605, %v5604
      %v6724 = vpack.c.b16 %v5607, %v5606
      %v6725 = vpack.c.b16 %v5609, %v5608
      %v6726 = vpack.c.b16 %v5611, %v5610
      %v6727 = vpack.c.b16 %v5613, %v5612
      %v6728 = vpack.c.b16 %v5615, %v5614
      %v6729 = vpack.c.b16 %v5617, %v5616
      %v6730 = vpack.c.b16 %v5619, %v5618
      %v6731 = vpack.c.b16 %v5621, %v5620
      %v6732 = vpack.c.b16 %v5623, %v5622
      %v6733 = vpack.c.b16 %v5625, %v5624
      %v6734 = vpack.c.b16 %v5627, %v5626
      %v6735 = vpack.c.b16 %v5629, %v5628
      %v6736 = vpack.c.b16 %v5631, %v5630
      %v6737 = vpack.c.b16 %v5633, %v5632
      %v6738 = vpack.c.b16 %v5635, %v5634
      %v6739 = vpack.c.b16 %v5637, %v5636
      %v6740 = vpack.c.b16 %v5639, %v5638
      %v6741 = vpack.c.b16 %v5641, %v5640
      %v6742 = vpack.c.b16 %v5643, %v5642
      %v6743 = vpack.c.b16 %v5645, %v5644
      %v6744 = vpack.c.b16 %v5647, %v5646
      %v6745 = vpack.c.b16 %v5649, %v5648
      %v6746 = vpack.c.b16 %v5651, %v5650
      %v6747 = vpack.c.b16 %v5653, %v5652
      %v6748 = vpack.c.b16 %v5655, %v5654
      %v6749 = vpack.c.b16 %v5657, %v5656
      %v6750 = vpack.c.b16 %v5659, %v5658
      %v6751 = vpack.c.b16 %v5661, %v5660
      %v6752 = vpack.c.b16 %v5663, %v5662
      %v6753 = vpack.c.b16 %v5665, %v5664
      %v6754 = vpack.c.b16 %v5667, %v5666
      %v6755 = vpack.c.b16 %v5669, %v5668
      %v6756 = vpack.c.b16 %v5671, %v5670
      %v6757 = vpack.c.b16 %v5673, %v5672
      %v6758 = vpack.c.b16 %v5675, %v5674
      %v6759 = vpack.c.b16 %v5677, %v5676
      %v6760 = vpack.c.b16 %v5679, %v5678
      %v6761 = vpack.c.b16 %v5681, %v5680
      %v6762 = vpack.c.b16 %v5683, %v5682
      %v6763 = vpack.c.b16 %v5685, %v5684
      %v6764 = vpack.c.b16 %v5687, %v5686
      %v6765 = vpack.c.b16 %v5689, %v5688
      %v6766 = vpack.c.b16 %v5691, %v5690
      %v6767 = vpack.c.b16 %v5693, %v5692
      %v6768 = vpack.c.b16 %v5695, %v5694
      %v6769 = vpack.c.b16 %v5697, %v5696
      %v6770 = vpack.c.b16 %v5699, %v5698
      %v6771 = vpack.c.b16 %v5701, %v5700
      %v6772 = vpack.c.b16 %v5703, %v5702
      %v6773 = vpack.c.b16 %v5705, %v5704
      %v6774 = vpack.c.b16 %v5707, %v5706
      %v6775 = vpack.c.b16 %v5709, %v5708
      %v6776 = vpack.c.b16 %v5711, %v5710
      %v6777 = vpack.c.b16 %v5713, %v5712
      %v6778 = vpack.c.b16 %v5715, %v5714
      %v6779 = vpack.c.b16 %v5717, %v5716
      %v6780 = vpack.c.b16 %v5719, %v5718
      %v6781 = vpack.c.b16 %v5721, %v5720
      %v6782 = vpack.c.b16 %v5723, %v5722
      %v6783 = vpack.c.b16 %v5725, %v5724
      %v6784 = vpack.c.b16 %v5727, %v5726
      %v6785 = vpack.c.b16 %v5729, %v5728
      %v6786 = vpack.c.b16 %v5731, %v5730
      %v6787 = vpack.c.b16 %v5733, %v5732
      %v6788 = vpack.c.b16 %v5735, %v5734
      %v6789 = vpack.c.b16 %v5737, %v5736
      %v6790 = vpack.c.b16 %v5739, %v5738
      %v6791 = vpack.c.b16 %v5741, %v5740
      %v6792 = vpack.c.b16 %v5743, %v5742
      %v6793 = vpack.c.b16 %v5745, %v5744
      %v6794 = vpack.c.b16 %v5747, %v5746
      %v6795 = vpack.c.b16 %v5749, %v5748
      %v6796 = vpack.c.b16 %v5751, %v5750
      %v6797 = vpack.c.b16 %v5753, %v5752
      %v6798 = vpack.c.b16 %v5755, %v5754
      %v6799 = vpack.c.b16 %v5757, %v5756
      %v6800 = vpack.c.b16 %v5759, %v5758
      %v6801 = vpack.c.b16 %v5761, %v5760
      %v6802 = vpack.c.b16 %v5763, %v5762
      %v6803 = vpack.c.b16 %v5765, %v5764
      %v6804 = vpack.c.b16 %v5767, %v5766
      %v6805 = vpack.c.b16 %v5769, %v5768
      %v6806 = vpack.c.b16 %v5771, %v5770
      %v6807 = vpack.c.b16 %v5773, %v5772
      %v6808 = vpack.c.b16 %v5775, %v5774
      %v6809 = vpack.c.b16 %v5777, %v5776
      %v6810 = vpack.c.b16 %v5779, %v5778
      %v6811 = vpack.c.b16 %v5781, %v5780
      %v6812 = vpack.c.b16 %v5783, %v5782
      %v6813 = vpack.c.b16 %v5785, %v5784
      %v6814 = vpack.c.b16 %v5787, %v5786
      %v6815 = vpack.c.b16 %v5789, %v5788
      %v6816 = vpack.c.b16 %v5791, %v5790
      %v6817 = vpack.c.b16 %v5793, %v5792
      %v6818 = vpack.c.b16 %v5795, %v5794
      %v6819 = vpack.c.b16 %v5797, %v5796
      %v6820 = vpack.c.b16 %v5799, %v5798
      %v6821 = vpack.c.b16 %v5801, %v5800
      %v6822 = vpack.c.b16 %v5803, %v5802
      %v6823 = vpack.c.b16 %v5805, %v5804
      %v6824 = vpack.c.b16 %v5807, %v5806
      %v6825 = vpack.c.b16 %v5809, %v5808
      %v6826 = vpack.c.b16 %v5811, %v5810
      %v6827 = vpack.c.b16 %v5813, %v5812
      %v6828 = vpack.c.b16 %v5815, %v5814
      %v6829 = vpack.c.b16 %v5817, %v5816
      %v6830 = vpack.c.b16 %v5819, %v5818
      %v6831 = vpack.c.b16 %v5821, %v5820
      %v6832 = vpack.c.b16 %v5823, %v5822
      %v6833 = vpack.c.b16 %v5825, %v5824
      %v6834 = vpack.c.b16 %v5827, %v5826
      %v6835 = vpack.c.b16 %v5829, %v5828
      %v6836 = vpack.c.b16 %v5831, %v5830
      %v6837 = vpack.c.b16 %v5833, %v5832
      %v6838 = vpack.c.b16 %v5835, %v5834
      %v6839 = vpack.c.b16 %v5837, %v5836
      %v6840 = vpack.c.b16 %v5839, %v5838
      %v6841 = vpack.c.b16 %v5841, %v5840
      %v6842 = vpack.c.b16 %v5843, %v5842
      %v6843 = vpack.c.b16 %v5845, %v5844
      %v6844 = vpack.c.b16 %v5847, %v5846
      %v6845 = vpack.c.b16 %v5849, %v5848
      %v6846 = vpack.c.b16 %v5851, %v5850
      %v6847 = vpack.c.b16 %v5853, %v5852
      %v6848 = vpack.c.b16 %v5855, %v5854
      %v6849 = vpack.c.b16 %v5857, %v5856
      %v6850 = vpack.c.b16 %v5859, %v5858
      %v6851 = vpack.c.b16 %v5861, %v5860
      %v6852 = vpack.c.b16 %v5863, %v5862
      %v6853 = vpack.c.b16 %v5865, %v5864
      %v6854 = vpack.c.b16 %v5867, %v5866
      %v6855 = vpack.c.b16 %v5869, %v5868
      %v6856 = vpack.c.b16 %v5871, %v5870
      %v6857 = vpack.c.b16 %v5873, %v5872
      %v6858 = vpack.c.b16 %v5875, %v5874
      %v6859 = vpack.c.b16 %v5877, %v5876
      %v6860 = vpack.c.b16 %v5879, %v5878
      %v6861 = vpack.c.b16 %v5881, %v5880
      %v6862 = vpack.c.b16 %v5883, %v5882
      %v6863 = vpack.c.b16 %v5885, %v5884
      %v6864 = vpack.c.b16 %v5887, %v5886
      %v6865 = vpack.c.b16 %v5889, %v5888
      %v6866 = vpack.c.b16 %v5891, %v5890
      %v6867 = vpack.c.b16 %v5893, %v5892
      %v6868 = vpack.c.b16 %v5895, %v5894
      %v6869 = vpack.c.b16 %v5897, %v5896
      %v6870 = vpack.c.b16 %v5899, %v5898
      %v6871 = vpack.c.b16 %v5901, %v5900
      %v6872 = vpack.c.b16 %v5903, %v5902
      %v6873 = vpack.c.b16 %v5905, %v5904
      %v6874 = vpack.c.b16 %v5907, %v5906
      %v6875 = vpack.c.b16 %v5909, %v5908
      %v6876 = vpack.c.b16 %v5911, %v5910
      %v6877 = vpack.c.b16 %v5913, %v5912
      %v6878 = vpack.c.b16 %v5915, %v5914
      %v6879 = vpack.c.b16 %v5917, %v5916
      %v6880 = vpack.c.b16 %v5919, %v5918
      %v6881 = vpack.c.b16 %v5921, %v5920
      %v6882 = vpack.c.b16 %v5923, %v5922
      %v6883 = vpack.c.b16 %v5925, %v5924
      %v6884 = vpack.c.b16 %v5927, %v5926
      %v6885 = vpack.c.b16 %v5929, %v5928
      %v6886 = vpack.c.b16 %v5931, %v5930
      %v6887 = vpack.c.b16 %v5933, %v5932
      %v6888 = vpack.c.b16 %v5935, %v5934
      %v6889 = vpack.c.b16 %v5937, %v5936
      %v6890 = vpack.c.b16 %v5939, %v5938
      %v6891 = vpack.c.b16 %v5941, %v5940
      %v6892 = vpack.c.b16 %v5943, %v5942
      %v6893 = vpack.c.b16 %v5945, %v5944
      %v6894 = vpack.c.b16 %v5947, %v5946
      %v6895 = vpack.c.b16 %v5949, %v5948
      %v6896 = vpack.c.b16 %v5951, %v5950
      %v6897 = vpack.c.b16 %v5953, %v5952
      %v6898 = vpack.c.b16 %v5955, %v5954
      %v6899 = vpack.c.b16 %v5957, %v5956
      %v6900 = vpack.c.b16 %v5959, %v5958
      %v6901 = vpack.c.b16 %v5961, %v5960
      %v6902 = vpack.c.b16 %v5963, %v5962
      %v6903 = vpack.c.b16 %v5965, %v5964
      %v6904 = vpack.c.b16 %v5967, %v5966
      %v6905 = vpack.c.b16 %v5969, %v5968
      %v6906 = vpack.c.b16 %v5971, %v5970
      %v6907 = vpack.c.b16 %v5973, %v5972
      %v6908 = vpack.c.b16 %v5975, %v5974
      %v6909 = vpack.c.b16 %v5977, %v5976
      %v6910 = vpack.c.b16 %v5979, %v5978
      %v6911 = vpack.c.b16 %v5981, %v5980
      %v6912 = vpack.c.b16 %v5983, %v5982
      %v6913 = vpack.c.b16 %v5985, %v5984
      %v6914 = vpack.c.b16 %v5987, %v5986
      %v6915 = vpack.c.b16 %v5989, %v5988
      %v6916 = vpack.c.b16 %v5991, %v5990
      %v6917 = vpack.c.b16 %v5993, %v5992
      %v6918 = vpack.c.b16 %v5995, %v5994
      %v6919 = vpack.c.b16 %v5997, %v5996
      %v6920 = vpack.c.b16 %v5999, %v5998
      %v6921 = vpack.c.b16 %v6001, %v6000
      %v6922 = vpack.c.b16 %v6003, %v6002
      %v6923 = vpack.c.b16 %v6005, %v6004
      %v6924 = vpack.c.b16 %v6007, %v6006
      %v6925 = vpack.c.b16 %v6009, %v6008
      %v6926 = vpack.c.b16 %v6011, %v6010
      %v6927 = vpack.c.b16 %v6013, %v6012
      %v6928 = vpack.c.b16 %v6015, %v6014
      %v6929 = vpack.c.b16 %v6017, %v6016
      %v6930 = vpack.c.b16 %v6019, %v6018
      %v6931 = vpack.c.b16 %v6021, %v6020
      %v6932 = vpack.c.b16 %v6023, %v6022
      %v6933 = vpack.c.b16 %v6025, %v6024
      %v6934 = vpack.c.b16 %v6027, %v6026
      %v6935 = vpack.c.b16 %v6029, %v6028
      %v6936 = vpack.c.b16 %v6031, %v6030
      %v6937 = vpack.c.b16 %v6033, %v6032
      %v6938 = vpack.c.b16 %v6035, %v6034
      %v6939 = vpack.c.b16 %v6037, %v6036
      %v6940 = vpack.c.b16 %v6039, %v6038
      %v6941 = vpack.c.b16 %v6041, %v6040
      %v6942 = vpack.c.b16 %v6043, %v6042
      %v6943 = vpack.c.b16 %v6045, %v6044
      %v6944 = vpack.c.b16 %v6047, %v6046
      %v6945 = vpack.c.b16 %v6049, %v6048
      %v6946 = vpack.c.b16 %v6051, %v6050
      %v6947 = vpack.c.b16 %v6053, %v6052
      %v6948 = vpack.c.b16 %v6055, %v6054
      %v6949 = vpack.c.b16 %v6057, %v6056
      %v6950 = vpack.c.b16 %v6059, %v6058
      %v6951 = vpack.c.b16 %v6061, %v6060
      %v6952 = vpack.c.b16 %v6063, %v6062
      %v6953 = vpack.c.b16 %v6065, %v6064
      %v6954 = vpack.c.b16 %v6067, %v6066
      %v6955 = vpack.c.b16 %v6069, %v6068
      %v6956 = vpack.c.b16 %v6071, %v6070
      %v6957 = vpack.c.b16 %v6073, %v6072
      %v6958 = vpack.c.b16 %v6075, %v6074
      %v6959 = vpack.c.b16 %v6077, %v6076
      %v6960 = vpack.c.b16 %v6079, %v6078
      %v6961 = vpack.c.b16 %v6081, %v6080
      %v6962 = vpack.c.b16 %v6083, %v6082
      %v6963 = vpack.c.b16 %v6085, %v6084
      %v6964 = vpack.c.b16 %v6087, %v6086
      %v6965 = vpack.c.b16 %v6089, %v6088
      %v6966 = vpack.c.b16 %v6091, %v6090
      %v6967 = vpack.c.b16 %v6093, %v6092
      %v6968 = vpack.c.b16 %v6095, %v6094
      %v6969 = vpack.c.b16 %v6097, %v6096
      %v6970 = vpack.c.b16 %v6099, %v6098
      %v6971 = vpack.c.b16 %v6101, %v6100
      %v6972 = vpack.c.b16 %v6103, %v6102
      %v6973 = vpack.c.b16 %v6105, %v6104
      %v6974 = vpack.c.b16 %v6107, %v6106
      %v6975 = vpack.c.b16 %v6109, %v6108
      %v6976 = vpack.c.b16 %v6111, %v6110
      %v6977 = vpack.c.b16 %v6113, %v6112
      %v6978 = vpack.c.b16 %v6115, %v6114
      %v6979 = vpack.c.b16 %v6117, %v6116
      %v6980 = vpack.c.b16 %v6119, %v6118
      %v6981 = vpack.c.b16 %v6121, %v6120
      %v6982 = vpack.c.b16 %v6123, %v6122
      %v6983 = vpack.c.b16 %v6125, %v6124
      %v6984 = vpack.c.b16 %v6127, %v6126
      %v6985 = vpack.c.b16 %v6129, %v6128
      %v6986 = vpack.c.b16 %v6131, %v6130
      %v6987 = vpack.c.b16 %v6133, %v6132
      %v6988 = vpack.c.b16 %v6135, %v6134
      %v6989 = vpack.c.b16 %v6137, %v6136
      %v6990 = vpack.c.b16 %v6139, %v6138
      %v6991 = vpack.c.b16 %v6141, %v6140
      %v6992 = vpack.c.b16 %v6143, %v6142
      %v6993 = vpack.c.b16 %v6145, %v6144
      %7842 = vmatprep.subr.bf16.mxu0 0
      %7843 = vmatpush1.bf16.msra.mxu0 %v6146
      %7844 = vmatprep.subr.bf16.mxu0 0
      %7845 = vmatpush1.bf16.msra.mxu0 %v6147
      %7846 = vmatprep.subr.bf16.mxu0 0
      %7847 = vmatpush1.bf16.msra.mxu0 %v6148
      %7848 = vmatprep.subr.bf16.mxu0 0
      %7849 = vmatpush1.bf16.msra.mxu0 %v6149
      %7850 = vmatprep.subr.bf16.mxu0 0
      %7851 = vmatpush1.bf16.msra.mxu0 %v6150
      %7852 = vmatprep.subr.bf16.mxu0 0
      %7853 = vmatpush1.bf16.msra.mxu0 %v6151
      %7854 = vmatprep.subr.bf16.mxu0 0
      %7855 = vmatpush1.bf16.msra.mxu0 %v6152
      %7856 = vmatprep.subr.bf16.mxu0 0
      %7857 = vmatpush1.bf16.msra.mxu0 %v6153
      %7858 = vmatprep.subr.bf16.mxu0 0
      %7859 = vmatpush1.bf16.msra.mxu0 %v6154
      %7860 = vmatprep.subr.bf16.mxu0 0
      %7861 = vmatpush1.bf16.msra.mxu0 %v6155
      %7862 = vmatprep.subr.bf16.mxu0 0
      %7863 = vmatpush1.bf16.msra.mxu0 %v6156
      %7864 = vmatprep.subr.bf16.mxu0 0
      %7865 = vmatpush1.bf16.msra.mxu0 %v6157
      %7866 = vmatprep.subr.bf16.mxu0 0
      %7867 = vmatpush1.bf16.msra.mxu0 %v6158
      %7868 = vmatprep.subr.bf16.mxu0 0
      %7869 = vmatpush1.bf16.msra.mxu0 %v6159
      %7870 = vmatprep.subr.bf16.mxu0 0
      %7871 = vmatpush1.bf16.msra.mxu0 %v6160
      %7872 = vmatprep.subr.bf16.mxu0 0
      %7873 = vmatpush1.bf16.msra.mxu0 %v6161
      %7874 = vmatprep.mubr.bf16.mxu0 %v2026
      %7875 = vmatmul.mubr.bf16.gmra.mrb[0].mxu0 %v2012
      %v7876 = vpop.f32.mrb[0].mxu0
      %v7877 = vadd.f32 %v1973, %v7876
      %v7878 = vpop.f32.mrb[0].mxu0
      %v7879 = vpop.f32.mrb[0].mxu0
      %v7880 = vpop.f32.mrb[0].mxu0
      %7881 = vdwg.mxu0
      %7882 = vmatprep.subr.bf16.mxu0 0
      %7883 = vmatpush1.bf16.msra.mxu0 %v6162
      %7884 = vmatprep.subr.bf16.mxu0 0
      %7885 = vmatpush1.bf16.msra.mxu0 %v6163
      %7886 = vmatprep.subr.bf16.mxu0 0
      %7887 = vmatpush1.bf16.msra.mxu0 %v6164
      %7888 = vmatprep.subr.bf16.mxu0 0
      %7889 = vmatpush1.bf16.msra.mxu0 %v6165
      %7890 = vmatprep.subr.bf16.mxu0 0
      %7891 = vmatpush1.bf16.msra.mxu0 %v6166
      %7892 = vmatprep.subr.bf16.mxu0 0
      %7893 = vmatpush1.bf16.msra.mxu0 %v6167
      %7894 = vmatprep.subr.bf16.mxu0 0
      %7895 = vmatpush1.bf16.msra.mxu0 %v6168
      %7896 = vmatprep.subr.bf16.mxu0 0
      %7897 = vmatpush1.bf16.msra.mxu0 %v6169
      %7898 = vmatprep.subr.bf16.mxu0 0
      %7899 = vmatpush1.bf16.msra.mxu0 %v6170
      %7900 = vmatprep.subr.bf16.mxu0 0
      %7901 = vmatpush1.bf16.msra.mxu0 %v6171
      %7902 = vmatprep.subr.bf16.mxu0 0
      %7903 = vmatpush1.bf16.msra.mxu0 %v6172
      %7904 = vmatprep.subr.bf16.mxu0 0
      %7905 = vmatpush1.bf16.msra.mxu0 %v6173
      %7906 = vmatprep.subr.bf16.mxu0 0
      %7907 = vmatpush1.bf16.msra.mxu0 %v6174
      %7908 = vmatprep.subr.bf16.mxu0 0
      %7909 = vmatpush1.bf16.msra.mxu0 %v6175
      %7910 = vmatprep.subr.bf16.mxu0 0
      %7911 = vmatpush1.bf16.msra.mxu0 %v6176
      %7912 = vmatprep.subr.bf16.mxu0 0
      %7913 = vmatpush1.bf16.msra.mxu0 %v6177
      %7914 = vmatprep.mubr.bf16.mxu0 %v2036
      %7915 = vmatmul.mubr.bf16.gmra.mrb[0].mxu0 %v2034
      %v7916 = vpop.f32.mrb[0].mxu0
      %v7917 = vadd.f32 %v7877, %v7916
      %v7918 = vpop.f32.mrb[0].mxu0
      %v7919 = vpop.f32.mrb[0].mxu0
      %v7920 = vpop.f32.mrb[0].mxu0
      %7921 = vdwg.mxu0
      %7922 = vmatprep.subr.bf16.mxu0 0
      %7923 = vmatpush1.bf16.msra.mxu0 %v6178
      %7924 = vmatprep.subr.bf16.mxu0 0
      %7925 = vmatpush1.bf16.msra.mxu0 %v6179
      %7926 = vmatprep.subr.bf16.mxu0 0
      %7927 = vmatpush1.bf16.msra.mxu0 %v6180
      %7928 = vmatprep.subr.bf16.mxu0 0
      %7929 = vmatpush1.bf16.msra.mxu0 %v6181
      %7930 = vmatprep.subr.bf16.mxu0 0
      %7931 = vmatpush1.bf16.msra.mxu0 %v6182
      %7932 = vmatprep.subr.bf16.mxu0 0
      %7933 = vmatpush1.bf16.msra.mxu0 %v6183
      %7934 = vmatprep.subr.bf16.mxu0 0
      %7935 = vmatpush1.bf16.msra.mxu0 %v6184
      %7936 = vmatprep.subr.bf16.mxu0 0
      %7937 = vmatpush1.bf16.msra.mxu0 %v6185
      %7938 = vmatprep.subr.bf16.mxu0 0
      %7939 = vmatpush1.bf16.msra.mxu0 %v6186
      %7940 = vmatprep.subr.bf16.mxu0 0
      %7941 = vmatpush1.bf16.msra.mxu0 %v6187
      %7942 = vmatprep.subr.bf16.mxu0 0
      %7943 = vmatpush1.bf16.msra.mxu0 %v6188
      %7944 = vmatprep.subr.bf16.mxu0 0
      %7945 = vmatpush1.bf16.msra.mxu0 %v6189
      %7946 = vmatprep.subr.bf16.mxu0 0
      %7947 = vmatpush1.bf16.msra.mxu0 %v6190
      %7948 = vmatprep.subr.bf16.mxu0 0
      %7949 = vmatpush1.bf16.msra.mxu0 %v6191
      %7950 = vmatprep.subr.bf16.mxu0 0
      %7951 = vmatpush1.bf16.msra.mxu0 %v6192
      %7952 = vmatprep.subr.bf16.mxu0 0
      %7953 = vmatpush1.bf16.msra.mxu0 %v6193
      %7954 = vmatprep.mubr.bf16.mxu0 %v2033
      %7955 = vmatmul.mubr.bf16.gmra.mrb[0].mxu0 %v2019
      %v7956 = vpop.f32.mrb[0].mxu0
      %v7957 = vadd.f32 %v7917, %v7956
      %v7958 = vpop.f32.mrb[0].mxu0
      %v7959 = vpop.f32.mrb[0].mxu0
      %v7960 = vpop.f32.mrb[0].mxu0
      %7961 = vdwg.mxu0
      %7962 = vmatprep.subr.bf16.mxu0 0
      %7963 = vmatpush1.bf16.msra.mxu0 %v6194
      %7964 = vmatprep.subr.bf16.mxu0 0
      %7965 = vmatpush1.bf16.msra.mxu0 %v6195
      %7966 = vmatprep.subr.bf16.mxu0 0
      %7967 = vmatpush1.bf16.msra.mxu0 %v6196
      %7968 = vmatprep.subr.bf16.mxu0 0
      %7969 = vmatpush1.bf16.msra.mxu0 %v6197
      %7970 = vmatprep.subr.bf16.mxu0 0
      %7971 = vmatpush1.bf16.msra.mxu0 %v6198
      %7972 = vmatprep.subr.bf16.mxu0 0
      %7973 = vmatpush1.bf16.msra.mxu0 %v6199
      %7974 = vmatprep.subr.bf16.mxu0 0
      %7975 = vmatpush1.bf16.msra.mxu0 %v6200
      %7976 = vmatprep.subr.bf16.mxu0 0
      %7977 = vmatpush1.bf16.msra.mxu0 %v6201
      %7978 = vmatprep.subr.bf16.mxu0 0
      %7979 = vmatpush1.bf16.msra.mxu0 %v6202
      %7980 = vmatprep.subr.bf16.mxu0 0
      %7981 = vmatpush1.bf16.msra.mxu0 %v6203
      %7982 = vmatprep.subr.bf16.mxu0 0
      %7983 = vmatpush1.bf16.msra.mxu0 %v6204
      %7984 = vmatprep.subr.bf16.mxu0 0
      %7985 = vmatpush1.bf16.msra.mxu0 %v6205
      %7986 = vmatprep.subr.bf16.mxu0 0
      %7987 = vmatpush1.bf16.msra.mxu0 %v6206
      %7988 = vmatprep.subr.bf16.mxu0 0
      %7989 = vmatpush1.bf16.msra.mxu0 %v6207
      %7990 = vmatprep.subr.bf16.mxu0 0
      %7991 = vmatpush1.bf16.msra.mxu0 %v6208
      %7992 = vmatprep.subr.bf16.mxu0 0
      %7993 = vmatpush1.bf16.msra.mxu0 %v6209
      %7994 = vmatprep.mubr.bf16.mxu0 %v2037
      %7995 = vmatmul.mubr.bf16.gmra.mrb[0].mxu0 %v2035
      %v7996 = vpop.f32.mrb[0].mxu0
      %v7997 = vadd.f32 %v7957, %v7996
      %v7998 = vpop.f32.mrb[0].mxu0
      %v7999 = vpop.f32.mrb[0].mxu0
      %v8000 = vpop.f32.mrb[0].mxu0
      %8001 = vdwg.mxu0
      %8002 = vmatprep.subr.bf16.mxu0 0
      %8003 = vmatpush1.bf16.msra.mxu0 %v6210
      %8004 = vmatprep.subr.bf16.mxu0 0
      %8005 = vmatpush1.bf16.msra.mxu0 %v6211
      %8006 = vmatprep.subr.bf16.mxu0 0
      %8007 = vmatpush1.bf16.msra.mxu0 %v6212
      %8008 = vmatprep.subr.bf16.mxu0 0
      %8009 = vmatpush1.bf16.msra.mxu0 %v6213
      %8010 = vmatprep.subr.bf16.mxu0 0
      %8011 = vmatpush1.bf16.msra.mxu0 %v6214
      %8012 = vmatprep.subr.bf16.mxu0 0
      %8013 = vmatpush1.bf16.msra.mxu0 %v6215
      %8014 = vmatprep.subr.bf16.mxu0 0
      %8015 = vmatpush1.bf16.msra.mxu0 %v6216
      %8016 = vmatprep.subr.bf16.mxu0 0
      %8017 = vmatpush1.bf16.msra.mxu0 %v6217
      %8018 = vmatprep.subr.bf16.mxu0 0
      %8019 = vmatpush1.bf16.msra.mxu0 %v6218
      %8020 = vmatprep.subr.bf16.mxu0 0
      %8021 = vmatpush1.bf16.msra.mxu0 %v6219
      %8022 = vmatprep.subr.bf16.mxu0 0
      %8023 = vmatpush1.bf16.msra.mxu0 %v6220
      %8024 = vmatprep.subr.bf16.mxu0 0
      %8025 = vmatpush1.bf16.msra.mxu0 %v6221
      %8026 = vmatprep.subr.bf16.mxu0 0
      %8027 = vmatpush1.bf16.msra.mxu0 %v6222
      %8028 = vmatprep.subr.bf16.mxu0 0
      %8029 = vmatpush1.bf16.msra.mxu0 %v6223
      %8030 = vmatprep.subr.bf16.mxu0 0
      %8031 = vmatpush1.bf16.msra.mxu0 %v6224
      %8032 = vmatprep.subr.bf16.mxu0 0
      %8033 = vmatpush1.bf16.msra.mxu0 %v6225
      %8034 = vmatprep.mubr.bf16.mxu0 %v2075
      %8035 = vmatmul.mubr.bf16.gmra.mrb[0].mxu0 %v2061
      %v8036 = vpop.f32.mrb[0].mxu0
      %v8037 = vadd.f32 %v7997, %v8036
      %v8038 = vpop.f32.mrb[0].mxu0
      %v8039 = vpop.f32.mrb[0].mxu0
      %v8040 = vpop.f32.mrb[0].mxu0
      %8041 = vdwg.mxu0
      %8042 = vmatprep.subr.bf16.mxu0 0
      %8043 = vmatpush1.bf16.msra.mxu0 %v6226
      %8044 = vmatprep.subr.bf16.mxu0 0
      %8045 = vmatpush1.bf16.msra.mxu0 %v6227
      %8046 = vmatprep.subr.bf16.mxu0 0
      %8047 = vmatpush1.bf16.msra.mxu0 %v6228
      %8048 = vmatprep.subr.bf16.mxu0 0
      %8049 = vmatpush1.bf16.msra.mxu0 %v6229
      %8050 = vmatprep.subr.bf16.mxu0 0
      %8051 = vmatpush1.bf16.msra.mxu0 %v6230
      %8052 = vmatprep.subr.bf16.mxu0 0
      %8053 = vmatpush1.bf16.msra.mxu0 %v6231
      %8054 = vmatprep.subr.bf16.mxu0 0
      %8055 = vmatpush1.bf16.msra.mxu0 %v6232
      %8056 = vmatprep.subr.bf16.mxu0 0
      %8057 = vmatpush1.bf16.msra.mxu0 %v6233
      %8058 = vmatprep.subr.bf16.mxu0 0
      %8059 = vmatpush1.bf16.msra.mxu0 %v6234
      %8060 = vmatprep.subr.bf16.mxu0 0
      %8061 = vmatpush1.bf16.msra.mxu0 %v6235
      %8062 = vmatprep.subr.bf16.mxu0 0
      %8063 = vmatpush1.bf16.msra.mxu0 %v6236
      %8064 = vmatprep.subr.bf16.mxu0 0
      %8065 = vmatpush1.bf16.msra.mxu0 %v6237
      %8066 = vmatprep.subr.bf16.mxu0 0
      %8067 = vmatpush1.bf16.msra.mxu0 %v6238
      %8068 = vmatprep.subr.bf16.mxu0 0
      %8069 = vmatpush1.bf16.msra.mxu0 %v6239
      %8070 = vmatprep.subr.bf16.mxu0 0
      %8071 = vmatpush1.bf16.msra.mxu0 %v6240
      %8072 = vmatprep.subr.bf16.mxu0 0
      %8073 = vmatpush1.bf16.msra.mxu0 %v6241
      %8074 = vmatprep.mubr.bf16.mxu0 %v2085
      %8075 = vmatmul.mubr.bf16.gmra.mrb[0].mxu0 %v2083
      %v8076 = vpop.f32.mrb[0].mxu0
      %v8077 = vadd.f32 %v8037, %v8076
      %v8078 = vpop.f32.mrb[0].mxu0
      %v8079 = vpop.f32.mrb[0].mxu0
      %v8080 = vpop.f32.mrb[0].mxu0
      %8081 = vdwg.mxu0
      %8082 = vmatprep.subr.bf16.mxu0 0
      %8083 = vmatpush1.bf16.msra.mxu0 %v6242
      %8084 = vmatprep.subr.bf16.mxu0 0
      %8085 = vmatpush1.bf16.msra.mxu0 %v6243
      %8086 = vmatprep.subr.bf16.mxu0 0
      %8087 = vmatpush1.bf16.msra.mxu0 %v6244
      %8088 = vmatprep.subr.bf16.mxu0 0
      %8089 = vmatpush1.bf16.msra.mxu0 %v6245
      %8090 = vmatprep.subr.bf16.mxu0 0
      %8091 = vmatpush1.bf16.msra.mxu0 %v6246
      %8092 = vmatprep.subr.bf16.mxu0 0
      %8093 = vmatpush1.bf16.msra.mxu0 %v6247
      %8094 = vmatprep.subr.bf16.mxu0 0
      %8095 = vmatpush1.bf16.msra.mxu0 %v6248
      %8096 = vmatprep.subr.bf16.mxu0 0
      %8097 = vmatpush1.bf16.msra.mxu0 %v6249
      %8098 = vmatprep.subr.bf16.mxu0 0
      %8099 = vmatpush1.bf16.msra.mxu0 %v6250
      %8100 = vmatprep.subr.bf16.mxu0 0
      %8101 = vmatpush1.bf16.msra.mxu0 %v6251
      %8102 = vmatprep.subr.bf16.mxu0 0
      %8103 = vmatpush1.bf16.msra.mxu0 %v6252
      %8104 = vmatprep.subr.bf16.mxu0 0
      %8105 = vmatpush1.bf16.msra.mxu0 %v6253
      %8106 = vmatprep.subr.bf16.mxu0 0
      %8107 = vmatpush1.bf16.msra.mxu0 %v6254
      %8108 = vmatprep.subr.bf16.mxu0 0
      %8109 = vmatpush1.bf16.msra.mxu0 %v6255
      %8110 = vmatprep.subr.bf16.mxu0 0
      %8111 = vmatpush1.bf16.msra.mxu0 %v6256
      %8112 = vmatprep.subr.bf16.mxu0 0
      %8113 = vmatpush1.bf16.msra.mxu0 %v6257
      %8114 = vmatprep.mubr.bf16.mxu0 %v2082
      %8115 = vmatmul.mubr.bf16.gmra.mrb[0].mxu0 %v2068
      %v8116 = vpop.f32.mrb[0].mxu0
      %v8117 = vadd.f32 %v8077, %v8116
      %v8118 = vpop.f32.mrb[0].mxu0
      %v8119 = vpop.f32.mrb[0].mxu0
      %v8120 = vpop.f32.mrb[0].mxu0
      %8121 = vdwg.mxu0
      %8122 = vmatprep.subr.bf16.mxu0 0
      %8123 = vmatpush1.bf16.msra.mxu0 %v6258
      %8124 = vmatprep.subr.bf16.mxu0 0
      %8125 = vmatpush1.bf16.msra.mxu0 %v6259
      %8126 = vmatprep.subr.bf16.mxu0 0
      %8127 = vmatpush1.bf16.msra.mxu0 %v6260
      %8128 = vmatprep.subr.bf16.mxu0 0
      %8129 = vmatpush1.bf16.msra.mxu0 %v6261
      %8130 = vmatprep.subr.bf16.mxu0 0
      %8131 = vmatpush1.bf16.msra.mxu0 %v6262
      %8132 = vmatprep.subr.bf16.mxu0 0
      %8133 = vmatpush1.bf16.msra.mxu0 %v6263
      %8134 = vmatprep.subr.bf16.mxu0 0
      %8135 = vmatpush1.bf16.msra.mxu0 %v6264
      %8136 = vmatprep.subr.bf16.mxu0 0
      %8137 = vmatpush1.bf16.msra.mxu0 %v6265
      %8138 = vmatprep.subr.bf16.mxu0 0
      %8139 = vmatpush1.bf16.msra.mxu0 %v6266
      %8140 = vmatprep.subr.bf16.mxu0 0
      %8141 = vmatpush1.bf16.msra.mxu0 %v6267
      %8142 = vmatprep.subr.bf16.mxu0 0
      %8143 = vmatpush1.bf16.msra.mxu0 %v6268
      %8144 = vmatprep.subr.bf16.mxu0 0
      %8145 = vmatpush1.bf16.msra.mxu0 %v6269
      %8146 = vmatprep.subr.bf16.mxu0 0
      %8147 = vmatpush1.bf16.msra.mxu0 %v6270
      %8148 = vmatprep.subr.bf16.mxu0 0
      %8149 = vmatpush1.bf16.msra.mxu0 %v6271
      %8150 = vmatprep.subr.bf16.mxu0 0
      %8151 = vmatpush1.bf16.msra.mxu0 %v6272
      %8152 = vmatprep.subr.bf16.mxu0 0
      %8153 = vmatpush1.bf16.msra.mxu0 %v6273
      %8154 = vmatprep.mubr.bf16.mxu0 %v2086
      %8155 = vmatmul.mubr.bf16.gmra.mrb[0].mxu0 %v2084
      %v8156 = vpop.f32.mrb[0].mxu0
      %v8157 = vadd.f32 %v8117, %v8156
      %v8158 = vpop.f32.mrb[0].mxu0
      %v8159 = vpop.f32.mrb[0].mxu0
      %v8160 = vpop.f32.mrb[0].mxu0
      %8161 = vdwg.mxu0
      %8162 = vmatprep.subr.bf16.mxu0 0
      %8163 = vmatpush1.bf16.msra.mxu0 %v6274
      %8164 = vmatprep.subr.bf16.mxu0 0
      %8165 = vmatpush1.bf16.msra.mxu0 %v6275
      %8166 = vmatprep.subr.bf16.mxu0 0
      %8167 = vmatpush1.bf16.msra.mxu0 %v6276
      %8168 = vmatprep.subr.bf16.mxu0 0
      %8169 = vmatpush1.bf16.msra.mxu0 %v6277
      %8170 = vmatprep.subr.bf16.mxu0 0
      %8171 = vmatpush1.bf16.msra.mxu0 %v6278
      %8172 = vmatprep.subr.bf16.mxu0 0
      %8173 = vmatpush1.bf16.msra.mxu0 %v6279
      %8174 = vmatprep.subr.bf16.mxu0 0
      %8175 = vmatpush1.bf16.msra.mxu0 %v6280
      %8176 = vmatprep.subr.bf16.mxu0 0
      %8177 = vmatpush1.bf16.msra.mxu0 %v6281
      %8178 = vmatprep.subr.bf16.mxu0 0
      %8179 = vmatpush1.bf16.msra.mxu0 %v6282
      %8180 = vmatprep.subr.bf16.mxu0 0
      %8181 = vmatpush1.bf16.msra.mxu0 %v6283
      %8182 = vmatprep.subr.bf16.mxu0 0
      %8183 = vmatpush1.bf16.msra.mxu0 %v6284
      %8184 = vmatprep.subr.bf16.mxu0 0
      %8185 = vmatpush1.bf16.msra.mxu0 %v6285
      %8186 = vmatprep.subr.bf16.mxu0 0
      %8187 = vmatpush1.bf16.msra.mxu0 %v6286
      %8188 = vmatprep.subr.bf16.mxu0 0
      %8189 = vmatpush1.bf16.msra.mxu0 %v6287
      %8190 = vmatprep.subr.bf16.mxu0 0
      %8191 = vmatpush1.bf16.msra.mxu0 %v6288
      %8192 = vmatprep.subr.bf16.mxu0 0
      %8193 = vmatpush1.bf16.msra.mxu0 %v6289
      %8194 = vmatprep.mubr.bf16.mxu0 %v2124
      %8195 = vmatmul.mubr.bf16.gmra.mrb[0].mxu0 %v2110
      %v8196 = vpop.f32.mrb[0].mxu0
      %v8197 = vadd.f32 %v8157, %v8196
      %v8198 = vpop.f32.mrb[0].mxu0
      %v8199 = vpop.f32.mrb[0].mxu0
      %v8200 = vpop.f32.mrb[0].mxu0
      %8201 = vdwg.mxu0
      %8202 = vmatprep.subr.bf16.mxu0 0
      %8203 = vmatpush1.bf16.msra.mxu0 %v6290
      %8204 = vmatprep.subr.bf16.mxu0 0
      %8205 = vmatpush1.bf16.msra.mxu0 %v6291
      %8206 = vmatprep.subr.bf16.mxu0 0
      %8207 = vmatpush1.bf16.msra.mxu0 %v6292
      %8208 = vmatprep.subr.bf16.mxu0 0
      %8209 = vmatpush1.bf16.msra.mxu0 %v6293
      %8210 = vmatprep.subr.bf16.mxu0 0
      %8211 = vmatpush1.bf16.msra.mxu0 %v6294
      %8212 = vmatprep.subr.bf16.mxu0 0
      %8213 = vmatpush1.bf16.msra.mxu0 %v6295
      %8214 = vmatprep.subr.bf16.mxu0 0
      %8215 = vmatpush1.bf16.msra.mxu0 %v6296
      %8216 = vmatprep.subr.bf16.mxu0 0
      %8217 = vmatpush1.bf16.msra.mxu0 %v6297
      %8218 = vmatprep.subr.bf16.mxu0 0
      %8219 = vmatpush1.bf16.msra.mxu0 %v6298
      %8220 = vmatprep.subr.bf16.mxu0 0
      %8221 = vmatpush1.bf16.msra.mxu0 %v6299
      %8222 = vmatprep.subr.bf16.mxu0 0
      %8223 = vmatpush1.bf16.msra.mxu0 %v6300
      %8224 = vmatprep.subr.bf16.mxu0 0
      %8225 = vmatpush1.bf16.msra.mxu0 %v6301
      %8226 = vmatprep.subr.bf16.mxu0 0
      %8227 = vmatpush1.bf16.msra.mxu0 %v6302
      %8228 = vmatprep.subr.bf16.mxu0 0
      %8229 = vmatpush1.bf16.msra.mxu0 %v6303
      %8230 = vmatprep.subr.bf16.mxu0 0
      %8231 = vmatpush1.bf16.msra.mxu0 %v6304
      %8232 = vmatprep.subr.bf16.mxu0 0
      %8233 = vmatpush1.bf16.msra.mxu0 %v6305
      %8234 = vmatprep.mubr.bf16.mxu0 %v2134
      %8235 = vmatmul.mubr.bf16.gmra.mrb[0].mxu0 %v2132
      %v8236 = vpop.f32.mrb[0].mxu0
      %v8237 = vadd.f32 %v8197, %v8236
      %v8238 = vpop.f32.mrb[0].mxu0
      %v8239 = vpop.f32.mrb[0].mxu0
      %v8240 = vpop.f32.mrb[0].mxu0
      %8241 = vdwg.mxu0
      %8242 = vmatprep.subr.bf16.mxu0 0
      %8243 = vmatpush1.bf16.msra.mxu0 %v6306
      %8244 = vmatprep.subr.bf16.mxu0 0
      %8245 = vmatpush1.bf16.msra.mxu0 %v6307
      %8246 = vmatprep.subr.bf16.mxu0 0
      %8247 = vmatpush1.bf16.msra.mxu0 %v6308
      %8248 = vmatprep.subr.bf16.mxu0 0
      %8249 = vmatpush1.bf16.msra.mxu0 %v6309
      %8250 = vmatprep.subr.bf16.mxu0 0
      %8251 = vmatpush1.bf16.msra.mxu0 %v6310
      %8252 = vmatprep.subr.bf16.mxu0 0
      %8253 = vmatpush1.bf16.msra.mxu0 %v6311
      %8254 = vmatprep.subr.bf16.mxu0 0
      %8255 = vmatpush1.bf16.msra.mxu0 %v6312
      %8256 = vmatprep.subr.bf16.mxu0 0
      %8257 = vmatpush1.bf16.msra.mxu0 %v6313
      %8258 = vmatprep.subr.bf16.mxu0 0
      %8259 = vmatpush1.bf16.msra.mxu0 %v6314
      %8260 = vmatprep.subr.bf16.mxu0 0
      %8261 = vmatpush1.bf16.msra.mxu0 %v6315
      %8262 = vmatprep.subr.bf16.mxu0 0
      %8263 = vmatpush1.bf16.msra.mxu0 %v6316
      %8264 = vmatprep.subr.bf16.mxu0 0
      %8265 = vmatpush1.bf16.msra.mxu0 %v6317
      %8266 = vmatprep.subr.bf16.mxu0 0
      %8267 = vmatpush1.bf16.msra.mxu0 %v6318
      %8268 = vmatprep.subr.bf16.mxu0 0
      %8269 = vmatpush1.bf16.msra.mxu0 %v6319
      %8270 = vmatprep.subr.bf16.mxu0 0
      %8271 = vmatpush1.bf16.msra.mxu0 %v6320
      %8272 = vmatprep.subr.bf16.mxu0 0
      %8273 = vmatpush1.bf16.msra.mxu0 %v6321
      %8274 = vmatprep.mubr.bf16.mxu0 %v2131
      %8275 = vmatmul.mubr.bf16.gmra.mrb[0].mxu0 %v2117
      %v8276 = vpop.f32.mrb[0].mxu0
      %v8277 = vadd.f32 %v8237, %v8276
      %v8278 = vpop.f32.mrb[0].mxu0
      %v8279 = vpop.f32.mrb[0].mxu0
      %v8280 = vpop.f32.mrb[0].mxu0
      %8281 = vdwg.mxu0
      %8282 = vmatprep.subr.bf16.mxu0 0
      %8283 = vmatpush1.bf16.msra.mxu0 %v6322
      %8284 = vmatprep.subr.bf16.mxu0 0
      %8285 = vmatpush1.bf16.msra.mxu0 %v6323
      %8286 = vmatprep.subr.bf16.mxu0 0
      %8287 = vmatpush1.bf16.msra.mxu0 %v6324
      %8288 = vmatprep.subr.bf16.mxu0 0
      %8289 = vmatpush1.bf16.msra.mxu0 %v6325
      %8290 = vmatprep.subr.bf16.mxu0 0
      %8291 = vmatpush1.bf16.msra.mxu0 %v6326
      %8292 = vmatprep.subr.bf16.mxu0 0
      %8293 = vmatpush1.bf16.msra.mxu0 %v6327
      %8294 = vmatprep.subr.bf16.mxu0 0
      %8295 = vmatpush1.bf16.msra.mxu0 %v6328
      %8296 = vmatprep.subr.bf16.mxu0 0
      %8297 = vmatpush1.bf16.msra.mxu0 %v6329
      %8298 = vmatprep.subr.bf16.mxu0 0
      %8299 = vmatpush1.bf16.msra.mxu0 %v6330
      %8300 = vmatprep.subr.bf16.mxu0 0
      %8301 = vmatpush1.bf16.msra.mxu0 %v6331
      %8302 = vmatprep.subr.bf16.mxu0 0
      %8303 = vmatpush1.bf16.msra.mxu0 %v6332
      %8304 = vmatprep.subr.bf16.mxu0 0
      %8305 = vmatpush1.bf16.msra.mxu0 %v6333
      %8306 = vmatprep.subr.bf16.mxu0 0
      %8307 = vmatpush1.bf16.msra.mxu0 %v6334
      %8308 = vmatprep.subr.bf16.mxu0 0
      %8309 = vmatpush1.bf16.msra.mxu0 %v6335
      %8310 = vmatprep.subr.bf16.mxu0 0
      %8311 = vmatpush1.bf16.msra.mxu0 %v6336
      %8312 = vmatprep.subr.bf16.mxu0 0
      %8313 = vmatpush1.bf16.msra.mxu0 %v6337
      %8314 = vmatprep.mubr.bf16.mxu0 %v2135
      %8315 = vmatmul.mubr.bf16.gmra.mrb[0].mxu0 %v2133
      %v8316 = vpop.f32.mrb[0].mxu0
      %v8317 = vadd.f32 %v8277, %v8316
      %v8318 = vpop.f32.mrb[0].mxu0
      %v8319 = vpop.f32.mrb[0].mxu0
      %v8320 = vpop.f32.mrb[0].mxu0
      %8321 = vdwg.mxu0
      %8322 = vmatprep.subr.bf16.mxu0 0
      %8323 = vmatpush1.bf16.msra.mxu0 %v6338
      %8324 = vmatprep.subr.bf16.mxu0 0
      %8325 = vmatpush1.bf16.msra.mxu0 %v6339
      %8326 = vmatprep.subr.bf16.mxu0 0
      %8327 = vmatpush1.bf16.msra.mxu0 %v6340
      %8328 = vmatprep.subr.bf16.mxu0 0
      %8329 = vmatpush1.bf16.msra.mxu0 %v6341
      %8330 = vmatprep.subr.bf16.mxu0 0
      %8331 = vmatpush1.bf16.msra.mxu0 %v6342
      %8332 = vmatprep.subr.bf16.mxu0 0
      %8333 = vmatpush1.bf16.msra.mxu0 %v6343
      %8334 = vmatprep.subr.bf16.mxu0 0
      %8335 = vmatpush1.bf16.msra.mxu0 %v6344
      %8336 = vmatprep.subr.bf16.mxu0 0
      %8337 = vmatpush1.bf16.msra.mxu0 %v6345
      %8338 = vmatprep.subr.bf16.mxu0 0
      %8339 = vmatpush1.bf16.msra.mxu0 %v6346
      %8340 = vmatprep.subr.bf16.mxu0 0
      %8341 = vmatpush1.bf16.msra.mxu0 %v6347
      %8342 = vmatprep.subr.bf16.mxu0 0
      %8343 = vmatpush1.bf16.msra.mxu0 %v6348
      %8344 = vmatprep.subr.bf16.mxu0 0
      %8345 = vmatpush1.bf16.msra.mxu0 %v6349
      %8346 = vmatprep.subr.bf16.mxu0 0
      %8347 = vmatpush1.bf16.msra.mxu0 %v6350
      %8348 = vmatprep.subr.bf16.mxu0 0
      %8349 = vmatpush1.bf16.msra.mxu0 %v6351
      %8350 = vmatprep.subr.bf16.mxu0 0
      %8351 = vmatpush1.bf16.msra.mxu0 %v6352
      %8352 = vmatprep.subr.bf16.mxu0 0
      %8353 = vmatpush1.bf16.msra.mxu0 %v6353
      %8354 = vmatprep.mubr.bf16.mxu0 %v2173
      %8355 = vmatmul.mubr.bf16.gmra.mrb[0].mxu0 %v2159
      %v8356 = vpop.f32.mrb[0].mxu0
      %v8357 = vadd.f32 %v8317, %v8356
      %v8358 = vpop.f32.mrb[0].mxu0
      %v8359 = vpop.f32.mrb[0].mxu0
      %v8360 = vpop.f32.mrb[0].mxu0
      %8361 = vdwg.mxu0
      %8362 = vmatprep.subr.bf16.mxu0 0
      %8363 = vmatpush1.bf16.msra.mxu0 %v6354
      %8364 = vmatprep.subr.bf16.mxu0 0
      %8365 = vmatpush1.bf16.msra.mxu0 %v6355
      %8366 = vmatprep.subr.bf16.mxu0 0
      %8367 = vmatpush1.bf16.msra.mxu0 %v6356
      %8368 = vmatprep.subr.bf16.mxu0 0
      %8369 = vmatpush1.bf16.msra.mxu0 %v6357
      %8370 = vmatprep.subr.bf16.mxu0 0
      %8371 = vmatpush1.bf16.msra.mxu0 %v6358
      %8372 = vmatprep.subr.bf16.mxu0 0
      %8373 = vmatpush1.bf16.msra.mxu0 %v6359
      %8374 = vmatprep.subr.bf16.mxu0 0
      %8375 = vmatpush1.bf16.msra.mxu0 %v6360
      %8376 = vmatprep.subr.bf16.mxu0 0
      %8377 = vmatpush1.bf16.msra.mxu0 %v6361
      %8378 = vmatprep.subr.bf16.mxu0 0
      %8379 = vmatpush1.bf16.msra.mxu0 %v6362
      %8380 = vmatprep.subr.bf16.mxu0 0
      %8381 = vmatpush1.bf16.msra.mxu0 %v6363
      %8382 = vmatprep.subr.bf16.mxu0 0
      %8383 = vmatpush1.bf16.msra.mxu0 %v6364
      %8384 = vmatprep.subr.bf16.mxu0 0
      %8385 = vmatpush1.bf16.msra.mxu0 %v6365
      %8386 = vmatprep.subr.bf16.mxu0 0
      %8387 = vmatpush1.bf16.msra.mxu0 %v6366
      %8388 = vmatprep.subr.bf16.mxu0 0
      %8389 = vmatpush1.bf16.msra.mxu0 %v6367
      %8390 = vmatprep.subr.bf16.mxu0 0
      %8391 = vmatpush1.bf16.msra.mxu0 %v6368
      %8392 = vmatprep.subr.bf16.mxu0 0
      %8393 = vmatpush1.bf16.msra.mxu0 %v6369
      %8394 = vmatprep.mubr.bf16.mxu0 %v2183
      %8395 = vmatmul.mubr.bf16.gmra.mrb[0].mxu0 %v2181
      %v8396 = vpop.f32.mrb[0].mxu0
      %v8397 = vadd.f32 %v8357, %v8396
      %v8398 = vpop.f32.mrb[0].mxu0
      %v8399 = vpop.f32.mrb[0].mxu0
      %v8400 = vpop.f32.mrb[0].mxu0
      %8401 = vdwg.mxu0
      %8402 = vmatprep.subr.bf16.mxu0 0
      %8403 = vmatpush1.bf16.msra.mxu0 %v6370
      %8404 = vmatprep.subr.bf16.mxu0 0
      %8405 = vmatpush1.bf16.msra.mxu0 %v6371
      %8406 = vmatprep.subr.bf16.mxu0 0
      %8407 = vmatpush1.bf16.msra.mxu0 %v6372
      %8408 = vmatprep.subr.bf16.mxu0 0
      %8409 = vmatpush1.bf16.msra.mxu0 %v6373
      %8410 = vmatprep.subr.bf16.mxu0 0
      %8411 = vmatpush1.bf16.msra.mxu0 %v6374
      %8412 = vmatprep.subr.bf16.mxu0 0
      %8413 = vmatpush1.bf16.msra.mxu0 %v6375
      %8414 = vmatprep.subr.bf16.mxu0 0
      %8415 = vmatpush1.bf16.msra.mxu0 %v6376
      %8416 = vmatprep.subr.bf16.mxu0 0
      %8417 = vmatpush1.bf16.msra.mxu0 %v6377
      %8418 = vmatprep.subr.bf16.mxu0 0
      %8419 = vmatpush1.bf16.msra.mxu0 %v6378
      %8420 = vmatprep.subr.bf16.mxu0 0
      %8421 = vmatpush1.bf16.msra.mxu0 %v6379
      %8422 = vmatprep.subr.bf16.mxu0 0
      %8423 = vmatpush1.bf16.msra.mxu0 %v6380
      %8424 = vmatprep.subr.bf16.mxu0 0
      %8425 = vmatpush1.bf16.msra.mxu0 %v6381
      %8426 = vmatprep.subr.bf16.mxu0 0
      %8427 = vmatpush1.bf16.msra.mxu0 %v6382
      %8428 = vmatprep.subr.bf16.mxu0 0
      %8429 = vmatpush1.bf16.msra.mxu0 %v6383
      %8430 = vmatprep.subr.bf16.mxu0 0
      %8431 = vmatpush1.bf16.msra.mxu0 %v6384
      %8432 = vmatprep.subr.bf16.mxu0 0
      %8433 = vmatpush1.bf16.msra.mxu0 %v6385
      %8434 = vmatprep.mubr.bf16.mxu0 %v2180
      %8435 = vmatmul.mubr.bf16.gmra.mrb[0].mxu0 %v2166
      %v8436 = vpop.f32.mrb[0].mxu0
      %v8437 = vadd.f32 %v8397, %v8436
      %v8438 = vpop.f32.mrb[0].mxu0
      %v8439 = vpop.f32.mrb[0].mxu0
      %v8440 = vpop.f32.mrb[0].mxu0
      %8441 = vdwg.mxu0
      %8442 = vmatprep.subr.bf16.mxu0 0
      %8443 = vmatpush1.bf16.msra.mxu0 %v6386
      %8444 = vmatprep.subr.bf16.mxu0 0
      %8445 = vmatpush1.bf16.msra.mxu0 %v6387
      %8446 = vmatprep.subr.bf16.mxu0 0
      %8447 = vmatpush1.bf16.msra.mxu0 %v6388
      %8448 = vmatprep.subr.bf16.mxu0 0
      %8449 = vmatpush1.bf16.msra.mxu0 %v6389
      %8450 = vmatprep.subr.bf16.mxu0 0
      %8451 = vmatpush1.bf16.msra.mxu0 %v6390
      %8452 = vmatprep.subr.bf16.mxu0 0
      %8453 = vmatpush1.bf16.msra.mxu0 %v6391
      %8454 = vmatprep.subr.bf16.mxu0 0
      %8455 = vmatpush1.bf16.msra.mxu0 %v6392
      %8456 = vmatprep.subr.bf16.mxu0 0
      %8457 = vmatpush1.bf16.msra.mxu0 %v6393
      %8458 = vmatprep.subr.bf16.mxu0 0
      %8459 = vmatpush1.bf16.msra.mxu0 %v6394
      %8460 = vmatprep.subr.bf16.mxu0 0
      %8461 = vmatpush1.bf16.msra.mxu0 %v6395
      %8462 = vmatprep.subr.bf16.mxu0 0
      %8463 = vmatpush1.bf16.msra.mxu0 %v6396
      %8464 = vmatprep.subr.bf16.mxu0 0
      %8465 = vmatpush1.bf16.msra.mxu0 %v6397
      %8466 = vmatprep.subr.bf16.mxu0 0
      %8467 = vmatpush1.bf16.msra.mxu0 %v6398
      %8468 = vmatprep.subr.bf16.mxu0 0
      %8469 = vmatpush1.bf16.msra.mxu0 %v6399
      %8470 = vmatprep.subr.bf16.mxu0 0
      %8471 = vmatpush1.bf16.msra.mxu0 %v6400
      %8472 = vmatprep.subr.bf16.mxu0 0
      %8473 = vmatpush1.bf16.msra.mxu0 %v6401
      %8474 = vmatprep.mubr.bf16.mxu0 %v2184
      %8475 = vmatmul.mubr.bf16.gmra.mrb[0].mxu0 %v2182
      %v8476 = vpop.f32.mrb[0].mxu0
      %v8477 = vadd.f32 %v8437, %v8476
      %v8478 = vpop.f32.mrb[0].mxu0
      %v8479 = vpop.f32.mrb[0].mxu0
      %v8480 = vpop.f32.mrb[0].mxu0
      %8481 = vdwg.mxu0
      %8482 = vmatprep.subr.bf16.mxu0 0
      %8483 = vmatpush1.bf16.msra.mxu0 %v6402
      %8484 = vmatprep.subr.bf16.mxu0 0
      %8485 = vmatpush1.bf16.msra.mxu0 %v6403
      %8486 = vmatprep.subr.bf16.mxu0 0
      %8487 = vmatpush1.bf16.msra.mxu0 %v6404
      %8488 = vmatprep.subr.bf16.mxu0 0
      %8489 = vmatpush1.bf16.msra.mxu0 %v6405
      %8490 = vmatprep.subr.bf16.mxu0 0
      %8491 = vmatpush1.bf16.msra.mxu0 %v6406
      %8492 = vmatprep.subr.bf16.mxu0 0
      %8493 = vmatpush1.bf16.msra.mxu0 %v6407
      %8494 = vmatprep.subr.bf16.mxu0 0
      %8495 = vmatpush1.bf16.msra.mxu0 %v6408
      %8496 = vmatprep.subr.bf16.mxu0 0
      %8497 = vmatpush1.bf16.msra.mxu0 %v6409
      %8498 = vmatprep.subr.bf16.mxu0 0
      %8499 = vmatpush1.bf16.msra.mxu0 %v6410
      %8500 = vmatprep.subr.bf16.mxu0 0
      %8501 = vmatpush1.bf16.msra.mxu0 %v6411
      %8502 = vmatprep.subr.bf16.mxu0 0
      %8503 = vmatpush1.bf16.msra.mxu0 %v6412
      %8504 = vmatprep.subr.bf16.mxu0 0
      %8505 = vmatpush1.bf16.msra.mxu0 %v6413
      %8506 = vmatprep.subr.bf16.mxu0 0
      %8507 = vmatpush1.bf16.msra.mxu0 %v6414
      %8508 = vmatprep.subr.bf16.mxu0 0
      %8509 = vmatpush1.bf16.msra.mxu0 %v6415
      %8510 = vmatprep.subr.bf16.mxu0 0
      %8511 = vmatpush1.bf16.msra.mxu0 %v6416
      %8512 = vmatprep.subr.bf16.mxu0 0
      %8513 = vmatpush1.bf16.msra.mxu0 %v6417
      %8514 = vmatprep.mubr.bf16.mxu0 %v2222
      %8515 = vmatmul.mubr.bf16.gmra.mrb[0].mxu0 %v2208
      %v8516 = vpop.f32.mrb[0].mxu0
      %v8517 = vadd.f32 %v8477, %v8516
      %v8518 = vpop.f32.mrb[0].mxu0
      %v8519 = vpop.f32.mrb[0].mxu0
      %v8520 = vpop.f32.mrb[0].mxu0
      %8521 = vdwg.mxu0
      %8522 = vmatprep.subr.bf16.mxu0 0
      %8523 = vmatpush1.bf16.msra.mxu0 %v6418
      %8524 = vmatprep.subr.bf16.mxu0 0
      %8525 = vmatpush1.bf16.msra.mxu0 %v6419
      %8526 = vmatprep.subr.bf16.mxu0 0
      %8527 = vmatpush1.bf16.msra.mxu0 %v6420
      %8528 = vmatprep.subr.bf16.mxu0 0
      %8529 = vmatpush1.bf16.msra.mxu0 %v6421
      %8530 = vmatprep.subr.bf16.mxu0 0
      %8531 = vmatpush1.bf16.msra.mxu0 %v6422
      %8532 = vmatprep.subr.bf16.mxu0 0
      %8533 = vmatpush1.bf16.msra.mxu0 %v6423
      %8534 = vmatprep.subr.bf16.mxu0 0
      %8535 = vmatpush1.bf16.msra.mxu0 %v6424
      %8536 = vmatprep.subr.bf16.mxu0 0
      %8537 = vmatpush1.bf16.msra.mxu0 %v6425
      %8538 = vmatprep.subr.bf16.mxu0 0
      %8539 = vmatpush1.bf16.msra.mxu0 %v6426
      %8540 = vmatprep.subr.bf16.mxu0 0
      %8541 = vmatpush1.bf16.msra.mxu0 %v6427
      %8542 = vmatprep.subr.bf16.mxu0 0
      %8543 = vmatpush1.bf16.msra.mxu0 %v6428
      %8544 = vmatprep.subr.bf16.mxu0 0
      %8545 = vmatpush1.bf16.msra.mxu0 %v6429
      %8546 = vmatprep.subr.bf16.mxu0 0
      %8547 = vmatpush1.bf16.msra.mxu0 %v6430
      %8548 = vmatprep.subr.bf16.mxu0 0
      %8549 = vmatpush1.bf16.msra.mxu0 %v6431
      %8550 = vmatprep.subr.bf16.mxu0 0
      %8551 = vmatpush1.bf16.msra.mxu0 %v6432
      %8552 = vmatprep.subr.bf16.mxu0 0
      %8553 = vmatpush1.bf16.msra.mxu0 %v6433
      %8554 = vmatprep.mubr.bf16.mxu0 %v2232
      %8555 = vmatmul.mubr.bf16.gmra.mrb[0].mxu0 %v2230
      %v8556 = vpop.f32.mrb[0].mxu0
      %v8557 = vadd.f32 %v8517, %v8556
      %v8558 = vpop.f32.mrb[0].mxu0
      %v8559 = vpop.f32.mrb[0].mxu0
      %v8560 = vpop.f32.mrb[0].mxu0
      %8561 = vdwg.mxu0
      %8562 = vmatprep.subr.bf16.mxu0 0
      %8563 = vmatpush1.bf16.msra.mxu0 %v6434
      %8564 = vmatprep.subr.bf16.mxu0 0
      %8565 = vmatpush1.bf16.msra.mxu0 %v6435
      %8566 = vmatprep.subr.bf16.mxu0 0
      %8567 = vmatpush1.bf16.msra.mxu0 %v6436
      %8568 = vmatprep.subr.bf16.mxu0 0
      %8569 = vmatpush1.bf16.msra.mxu0 %v6437
      %8570 = vmatprep.subr.bf16.mxu0 0
      %8571 = vmatpush1.bf16.msra.mxu0 %v6438
      %8572 = vmatprep.subr.bf16.mxu0 0
      %8573 = vmatpush1.bf16.msra.mxu0 %v6439
      %8574 = vmatprep.subr.bf16.mxu0 0
      %8575 = vmatpush1.bf16.msra.mxu0 %v6440
      %8576 = vmatprep.subr.bf16.mxu0 0
      %8577 = vmatpush1.bf16.msra.mxu0 %v6441
      %8578 = vmatprep.subr.bf16.mxu0 0
      %8579 = vmatpush1.bf16.msra.mxu0 %v6442
      %8580 = vmatprep.subr.bf16.mxu0 0
      %8581 = vmatpush1.bf16.msra.mxu0 %v6443
      %8582 = vmatprep.subr.bf16.mxu0 0
      %8583 = vmatpush1.bf16.msra.mxu0 %v6444
      %8584 = vmatprep.subr.bf16.mxu0 0
      %8585 = vmatpush1.bf16.msra.mxu0 %v6445
      %8586 = vmatprep.subr.bf16.mxu0 0
      %8587 = vmatpush1.bf16.msra.mxu0 %v6446
      %8588 = vmatprep.subr.bf16.mxu0 0
      %8589 = vmatpush1.bf16.msra.mxu0 %v6447
      %8590 = vmatprep.subr.bf16.mxu0 0
      %8591 = vmatpush1.bf16.msra.mxu0 %v6448
      %8592 = vmatprep.subr.bf16.mxu0 0
      %8593 = vmatpush1.bf16.msra.mxu0 %v6449
      %8594 = vmatprep.mubr.bf16.mxu0 %v2229
      %8595 = vmatmul.mubr.bf16.gmra.mrb[0].mxu0 %v2215
      %v8596 = vpop.f32.mrb[0].mxu0
      %v8597 = vadd.f32 %v8557, %v8596
      %v8598 = vpop.f32.mrb[0].mxu0
      %v8599 = vpop.f32.mrb[0].mxu0
      %v8600 = vpop.f32.mrb[0].mxu0
      %8601 = vdwg.mxu0
      %8602 = vmatprep.subr.bf16.mxu0 0
      %8603 = vmatpush1.bf16.msra.mxu0 %v6450
      %8604 = vmatprep.subr.bf16.mxu0 0
      %8605 = vmatpush1.bf16.msra.mxu0 %v6451
      %8606 = vmatprep.subr.bf16.mxu0 0
      %8607 = vmatpush1.bf16.msra.mxu0 %v6452
      %8608 = vmatprep.subr.bf16.mxu0 0
      %8609 = vmatpush1.bf16.msra.mxu0 %v6453
      %8610 = vmatprep.subr.bf16.mxu0 0
      %8611 = vmatpush1.bf16.msra.mxu0 %v6454
      %8612 = vmatprep.subr.bf16.mxu0 0
      %8613 = vmatpush1.bf16.msra.mxu0 %v6455
      %8614 = vmatprep.subr.bf16.mxu0 0
      %8615 = vmatpush1.bf16.msra.mxu0 %v6456
      %8616 = vmatprep.subr.bf16.mxu0 0
      %8617 = vmatpush1.bf16.msra.mxu0 %v6457
      %8618 = vmatprep.subr.bf16.mxu0 0
      %8619 = vmatpush1.bf16.msra.mxu0 %v6458
      %8620 = vmatprep.subr.bf16.mxu0 0
      %8621 = vmatpush1.bf16.msra.mxu0 %v6459
      %8622 = vmatprep.subr.bf16.mxu0 0
      %8623 = vmatpush1.bf16.msra.mxu0 %v6460
      %8624 = vmatprep.subr.bf16.mxu0 0
      %8625 = vmatpush1.bf16.msra.mxu0 %v6461
      %8626 = vmatprep.subr.bf16.mxu0 0
      %8627 = vmatpush1.bf16.msra.mxu0 %v6462
      %8628 = vmatprep.subr.bf16.mxu0 0
      %8629 = vmatpush1.bf16.msra.mxu0 %v6463
      %8630 = vmatprep.subr.bf16.mxu0 0
      %8631 = vmatpush1.bf16.msra.mxu0 %v6464
      %8632 = vmatprep.subr.bf16.mxu0 0
      %8633 = vmatpush1.bf16.msra.mxu0 %v6465
      %8634 = vmatprep.mubr.bf16.mxu0 %v2233
      %8635 = vmatmul.mubr.bf16.gmra.mrb[0].mxu0 %v2231
      %v8636 = vpop.f32.mrb[0].mxu0
      %v8637 = vadd.f32 %v8597, %v8636
      %v8638 = vpop.f32.mrb[0].mxu0
      %v8639 = vpop.f32.mrb[0].mxu0
      %v8640 = vpop.f32.mrb[0].mxu0
      %8641 = vdwg.mxu0
      %8642 = vmatprep.subr.bf16.mxu0 0
      %8643 = vmatpush1.bf16.msra.mxu0 %v6466
      %8644 = vmatprep.subr.bf16.mxu0 0
      %8645 = vmatpush1.bf16.msra.mxu0 %v6467
      %8646 = vmatprep.subr.bf16.mxu0 0
      %8647 = vmatpush1.bf16.msra.mxu0 %v6468
      %8648 = vmatprep.subr.bf16.mxu0 0
      %8649 = vmatpush1.bf16.msra.mxu0 %v6469
      %8650 = vmatprep.subr.bf16.mxu0 0
      %8651 = vmatpush1.bf16.msra.mxu0 %v6470
      %8652 = vmatprep.subr.bf16.mxu0 0
      %8653 = vmatpush1.bf16.msra.mxu0 %v6471
      %8654 = vmatprep.subr.bf16.mxu0 0
      %8655 = vmatpush1.bf16.msra.mxu0 %v6472
      %8656 = vmatprep.subr.bf16.mxu0 0
      %8657 = vmatpush1.bf16.msra.mxu0 %v6473
      %8658 = vmatprep.subr.bf16.mxu0 0
      %8659 = vmatpush1.bf16.msra.mxu0 %v6474
      %8660 = vmatprep.subr.bf16.mxu0 0
      %8661 = vmatpush1.bf16.msra.mxu0 %v6475
      %8662 = vmatprep.subr.bf16.mxu0 0
      %8663 = vmatpush1.bf16.msra.mxu0 %v6476
      %8664 = vmatprep.subr.bf16.mxu0 0
      %8665 = vmatpush1.bf16.msra.mxu0 %v6477
      %8666 = vmatprep.subr.bf16.mxu0 0
      %8667 = vmatpush1.bf16.msra.mxu0 %v6478
      %8668 = vmatprep.subr.bf16.mxu0 0
      %8669 = vmatpush1.bf16.msra.mxu0 %v6479
      %8670 = vmatprep.subr.bf16.mxu0 0
      %8671 = vmatpush1.bf16.msra.mxu0 %v6480
      %8672 = vmatprep.subr.bf16.mxu0 0
      %8673 = vmatpush1.bf16.msra.mxu0 %v6481
      %8674 = vmatprep.mubr.bf16.mxu0 %v2271
      %8675 = vmatmul.mubr.bf16.gmra.mrb[0].mxu0 %v2257
      %v8676 = vpop.f32.mrb[0].mxu0
      %v8677 = vadd.f32 %v8637, %v8676
      %v8678 = vpop.f32.mrb[0].mxu0
      %v8679 = vpop.f32.mrb[0].mxu0
      %v8680 = vpop.f32.mrb[0].mxu0
      %8681 = vdwg.mxu0
      %8682 = vmatprep.subr.bf16.mxu0 0
      %8683 = vmatpush1.bf16.msra.mxu0 %v6482
      %8684 = vmatprep.subr.bf16.mxu0 0
      %8685 = vmatpush1.bf16.msra.mxu0 %v6483
      %8686 = vmatprep.subr.bf16.mxu0 0
      %8687 = vmatpush1.bf16.msra.mxu0 %v6484
      %8688 = vmatprep.subr.bf16.mxu0 0
      %8689 = vmatpush1.bf16.msra.mxu0 %v6485
      %8690 = vmatprep.subr.bf16.mxu0 0
      %8691 = vmatpush1.bf16.msra.mxu0 %v6486
      %8692 = vmatprep.subr.bf16.mxu0 0
      %8693 = vmatpush1.bf16.msra.mxu0 %v6487
      %8694 = vmatprep.subr.bf16.mxu0 0
      %8695 = vmatpush1.bf16.msra.mxu0 %v6488
      %8696 = vmatprep.subr.bf16.mxu0 0
      %8697 = vmatpush1.bf16.msra.mxu0 %v6489
      %8698 = vmatprep.subr.bf16.mxu0 0
      %8699 = vmatpush1.bf16.msra.mxu0 %v6490
      %8700 = vmatprep.subr.bf16.mxu0 0
      %8701 = vmatpush1.bf16.msra.mxu0 %v6491
      %8702 = vmatprep.subr.bf16.mxu0 0
      %8703 = vmatpush1.bf16.msra.mxu0 %v6492
      %8704 = vmatprep.subr.bf16.mxu0 0
      %8705 = vmatpush1.bf16.msra.mxu0 %v6493
      %8706 = vmatprep.subr.bf16.mxu0 0
      %8707 = vmatpush1.bf16.msra.mxu0 %v6494
      %8708 = vmatprep.subr.bf16.mxu0 0
      %8709 = vmatpush1.bf16.msra.mxu0 %v6495
      %8710 = vmatprep.subr.bf16.mxu0 0
      %8711 = vmatpush1.bf16.msra.mxu0 %v6496
      %8712 = vmatprep.subr.bf16.mxu0 0
      %8713 = vmatpush1.bf16.msra.mxu0 %v6497
      %8714 = vmatprep.mubr.bf16.mxu0 %v2281
      %8715 = vmatmul.mubr.bf16.gmra.mrb[0].mxu0 %v2279
      %v8716 = vpop.f32.mrb[0].mxu0
      %v8717 = vadd.f32 %v8677, %v8716
      %v8718 = vpop.f32.mrb[0].mxu0
      %v8719 = vpop.f32.mrb[0].mxu0
      %v8720 = vpop.f32.mrb[0].mxu0
      %8721 = vdwg.mxu0
      %8722 = vmatprep.subr.bf16.mxu0 0
      %8723 = vmatpush1.bf16.msra.mxu0 %v6498
      %8724 = vmatprep.subr.bf16.mxu0 0
      %8725 = vmatpush1.bf16.msra.mxu0 %v6499
      %8726 = vmatprep.subr.bf16.mxu0 0
      %8727 = vmatpush1.bf16.msra.mxu0 %v6500
      %8728 = vmatprep.subr.bf16.mxu0 0
      %8729 = vmatpush1.bf16.msra.mxu0 %v6501
      %8730 = vmatprep.subr.bf16.mxu0 0
      %8731 = vmatpush1.bf16.msra.mxu0 %v6502
      %8732 = vmatprep.subr.bf16.mxu0 0
      %8733 = vmatpush1.bf16.msra.mxu0 %v6503
      %8734 = vmatprep.subr.bf16.mxu0 0
      %8735 = vmatpush1.bf16.msra.mxu0 %v6504
      %8736 = vmatprep.subr.bf16.mxu0 0
      %8737 = vmatpush1.bf16.msra.mxu0 %v6505
      %8738 = vmatprep.subr.bf16.mxu0 0
      %8739 = vmatpush1.bf16.msra.mxu0 %v6506
      %8740 = vmatprep.subr.bf16.mxu0 0
      %8741 = vmatpush1.bf16.msra.mxu0 %v6507
      %8742 = vmatprep.subr.bf16.mxu0 0
      %8743 = vmatpush1.bf16.msra.mxu0 %v6508
      %8744 = vmatprep.subr.bf16.mxu0 0
      %8745 = vmatpush1.bf16.msra.mxu0 %v6509
      %8746 = vmatprep.subr.bf16.mxu0 0
      %8747 = vmatpush1.bf16.msra.mxu0 %v6510
      %8748 = vmatprep.subr.bf16.mxu0 0
      %8749 = vmatpush1.bf16.msra.mxu0 %v6511
      %8750 = vmatprep.subr.bf16.mxu0 0
      %8751 = vmatpush1.bf16.msra.mxu0 %v6512
      %8752 = vmatprep.subr.bf16.mxu0 0
      %8753 = vmatpush1.bf16.msra.mxu0 %v6513
      %8754 = vmatprep.mubr.bf16.mxu0 %v2278
      %8755 = vmatmul.mubr.bf16.gmra.mrb[0].mxu0 %v2264
      %v8756 = vpop.f32.mrb[0].mxu0
      %v8757 = vadd.f32 %v8717, %v8756
      %v8758 = vpop.f32.mrb[0].mxu0
      %v8759 = vpop.f32.mrb[0].mxu0
      %v8760 = vpop.f32.mrb[0].mxu0
      %8761 = vdwg.mxu0
      %8762 = vmatprep.subr.bf16.mxu0 0
      %8763 = vmatpush1.bf16.msra.mxu0 %v6514
      %8764 = vmatprep.subr.bf16.mxu0 0
      %8765 = vmatpush1.bf16.msra.mxu0 %v6515
      %8766 = vmatprep.subr.bf16.mxu0 0
      %8767 = vmatpush1.bf16.msra.mxu0 %v6516
      %8768 = vmatprep.subr.bf16.mxu0 0
      %8769 = vmatpush1.bf16.msra.mxu0 %v6517
      %8770 = vmatprep.subr.bf16.mxu0 0
      %8771 = vmatpush1.bf16.msra.mxu0 %v6518
      %8772 = vmatprep.subr.bf16.mxu0 0
      %8773 = vmatpush1.bf16.msra.mxu0 %v6519
      %8774 = vmatprep.subr.bf16.mxu0 0
      %8775 = vmatpush1.bf16.msra.mxu0 %v6520
      %8776 = vmatprep.subr.bf16.mxu0 0
      %8777 = vmatpush1.bf16.msra.mxu0 %v6521
      %8778 = vmatprep.subr.bf16.mxu0 0
      %8779 = vmatpush1.bf16.msra.mxu0 %v6522
      %8780 = vmatprep.subr.bf16.mxu0 0
      %8781 = vmatpush1.bf16.msra.mxu0 %v6523
      %8782 = vmatprep.subr.bf16.mxu0 0
      %8783 = vmatpush1.bf16.msra.mxu0 %v6524
      %8784 = vmatprep.subr.bf16.mxu0 0
      %8785 = vmatpush1.bf16.msra.mxu0 %v6525
      %8786 = vmatprep.subr.bf16.mxu0 0
      %8787 = vmatpush1.bf16.msra.mxu0 %v6526
      %8788 = vmatprep.subr.bf16.mxu0 0
      %8789 = vmatpush1.bf16.msra.mxu0 %v6527
      %8790 = vmatprep.subr.bf16.mxu0 0
      %8791 = vmatpush1.bf16.msra.mxu0 %v6528
      %8792 = vmatprep.subr.bf16.mxu0 0
      %8793 = vmatpush1.bf16.msra.mxu0 %v6529
      %8794 = vmatprep.mubr.bf16.mxu0 %v2282
      %8795 = vmatmul.mubr.bf16.gmra.mrb[0].mxu0 %v2280
      %v8796 = vpop.f32.mrb[0].mxu0
      %v8797 = vadd.f32 %v8757, %v8796
      %v8798 = vpop.f32.mrb[0].mxu0
      %v8799 = vpop.f32.mrb[0].mxu0
      %v8800 = vpop.f32.mrb[0].mxu0
      %8801 = vdwg.mxu0
      %8802 = vmatprep.subr.bf16.mxu0 0
      %8803 = vmatpush1.bf16.msra.mxu0 %v6530
      %8804 = vmatprep.subr.bf16.mxu0 0
      %8805 = vmatpush1.bf16.msra.mxu0 %v6531
      %8806 = vmatprep.subr.bf16.mxu0 0
      %8807 = vmatpush1.bf16.msra.mxu0 %v6532
      %8808 = vmatprep.subr.bf16.mxu0 0
      %8809 = vmatpush1.bf16.msra.mxu0 %v6533
      %8810 = vmatprep.subr.bf16.mxu0 0
      %8811 = vmatpush1.bf16.msra.mxu0 %v6534
      %8812 = vmatprep.subr.bf16.mxu0 0
      %8813 = vmatpush1.bf16.msra.mxu0 %v6535
      %8814 = vmatprep.subr.bf16.mxu0 0
      %8815 = vmatpush1.bf16.msra.mxu0 %v6536
      %8816 = vmatprep.subr.bf16.mxu0 0
      %8817 = vmatpush1.bf16.msra.mxu0 %v6537
      %8818 = vmatprep.subr.bf16.mxu0 0
      %8819 = vmatpush1.bf16.msra.mxu0 %v6538
      %8820 = vmatprep.subr.bf16.mxu0 0
      %8821 = vmatpush1.bf16.msra.mxu0 %v6539
      %8822 = vmatprep.subr.bf16.mxu0 0
      %8823 = vmatpush1.bf16.msra.mxu0 %v6540
      %8824 = vmatprep.subr.bf16.mxu0 0
      %8825 = vmatpush1.bf16.msra.mxu0 %v6541
      %8826 = vmatprep.subr.bf16.mxu0 0
      %8827 = vmatpush1.bf16.msra.mxu0 %v6542
      %8828 = vmatprep.subr.bf16.mxu0 0
      %8829 = vmatpush1.bf16.msra.mxu0 %v6543
      %8830 = vmatprep.subr.bf16.mxu0 0
      %8831 = vmatpush1.bf16.msra.mxu0 %v6544
      %8832 = vmatprep.subr.bf16.mxu0 0
      %8833 = vmatpush1.bf16.msra.mxu0 %v6545
      %8834 = vmatprep.mubr.bf16.mxu0 %v2320
      %8835 = vmatmul.mubr.bf16.gmra.mrb[0].mxu0 %v2306
      %v8836 = vpop.f32.mrb[0].mxu0
      %v8837 = vadd.f32 %v8797, %v8836
      %v8838 = vpop.f32.mrb[0].mxu0
      %v8839 = vpop.f32.mrb[0].mxu0
      %v8840 = vpop.f32.mrb[0].mxu0
      %8841 = vdwg.mxu0
      %8842 = vmatprep.subr.bf16.mxu0 0
      %8843 = vmatpush1.bf16.msra.mxu0 %v6546
      %8844 = vmatprep.subr.bf16.mxu0 0
      %8845 = vmatpush1.bf16.msra.mxu0 %v6547
      %8846 = vmatprep.subr.bf16.mxu0 0
      %8847 = vmatpush1.bf16.msra.mxu0 %v6548
      %8848 = vmatprep.subr.bf16.mxu0 0
      %8849 = vmatpush1.bf16.msra.mxu0 %v6549
      %8850 = vmatprep.subr.bf16.mxu0 0
      %8851 = vmatpush1.bf16.msra.mxu0 %v6550
      %8852 = vmatprep.subr.bf16.mxu0 0
      %8853 = vmatpush1.bf16.msra.mxu0 %v6551
      %8854 = vmatprep.subr.bf16.mxu0 0
      %8855 = vmatpush1.bf16.msra.mxu0 %v6552
      %8856 = vmatprep.subr.bf16.mxu0 0
      %8857 = vmatpush1.bf16.msra.mxu0 %v6553
      %8858 = vmatprep.subr.bf16.mxu0 0
      %8859 = vmatpush1.bf16.msra.mxu0 %v6554
      %8860 = vmatprep.subr.bf16.mxu0 0
      %8861 = vmatpush1.bf16.msra.mxu0 %v6555
      %8862 = vmatprep.subr.bf16.mxu0 0
      %8863 = vmatpush1.bf16.msra.mxu0 %v6556
      %8864 = vmatprep.subr.bf16.mxu0 0
      %8865 = vmatpush1.bf16.msra.mxu0 %v6557
      %8866 = vmatprep.subr.bf16.mxu0 0
      %8867 = vmatpush1.bf16.msra.mxu0 %v6558
      %8868 = vmatprep.subr.bf16.mxu0 0
      %8869 = vmatpush1.bf16.msra.mxu0 %v6559
      %8870 = vmatprep.subr.bf16.mxu0 0
      %8871 = vmatpush1.bf16.msra.mxu0 %v6560
      %8872 = vmatprep.subr.bf16.mxu0 0
      %8873 = vmatpush1.bf16.msra.mxu0 %v6561
      %8874 = vmatprep.mubr.bf16.mxu0 %v2330
      %8875 = vmatmul.mubr.bf16.gmra.mrb[0].mxu0 %v2328
      %v8876 = vpop.f32.mrb[0].mxu0
      %v8877 = vadd.f32 %v8837, %v8876
      %v8878 = vpop.f32.mrb[0].mxu0
      %v8879 = vpop.f32.mrb[0].mxu0
      %v8880 = vpop.f32.mrb[0].mxu0
      %8881 = vdwg.mxu0
      %8882 = vmatprep.subr.bf16.mxu0 0
      %8883 = vmatpush1.bf16.msra.mxu0 %v6562
      %8884 = vmatprep.subr.bf16.mxu0 0
      %8885 = vmatpush1.bf16.msra.mxu0 %v6563
      %8886 = vmatprep.subr.bf16.mxu0 0
      %8887 = vmatpush1.bf16.msra.mxu0 %v6564
      %8888 = vmatprep.subr.bf16.mxu0 0
      %8889 = vmatpush1.bf16.msra.mxu0 %v6565
      %8890 = vmatprep.subr.bf16.mxu0 0
      %8891 = vmatpush1.bf16.msra.mxu0 %v6566
      %8892 = vmatprep.subr.bf16.mxu0 0
      %8893 = vmatpush1.bf16.msra.mxu0 %v6567
      %8894 = vmatprep.subr.bf16.mxu0 0
      %8895 = vmatpush1.bf16.msra.mxu0 %v6568
      %8896 = vmatprep.subr.bf16.mxu0 0
      %8897 = vmatpush1.bf16.msra.mxu0 %v6569
      %8898 = vmatprep.subr.bf16.mxu0 0
      %8899 = vmatpush1.bf16.msra.mxu0 %v6570
      %8900 = vmatprep.subr.bf16.mxu0 0
      %8901 = vmatpush1.bf16.msra.mxu0 %v6571
      %8902 = vmatprep.subr.bf16.mxu0 0
      %8903 = vmatpush1.bf16.msra.mxu0 %v6572
      %8904 = vmatprep.subr.bf16.mxu0 0
      %8905 = vmatpush1.bf16.msra.mxu0 %v6573
      %8906 = vmatprep.subr.bf16.mxu0 0
      %8907 = vmatpush1.bf16.msra.mxu0 %v6574
      %8908 = vmatprep.subr.bf16.mxu0 0
      %8909 = vmatpush1.bf16.msra.mxu0 %v6575
      %8910 = vmatprep.subr.bf16.mxu0 0
      %8911 = vmatpush1.bf16.msra.mxu0 %v6576
      %8912 = vmatprep.subr.bf16.mxu0 0
      %8913 = vmatpush1.bf16.msra.mxu0 %v6577
      %8914 = vmatprep.mubr.bf16.mxu0 %v2327
      %8915 = vmatmul.mubr.bf16.gmra.mrb[0].mxu0 %v2313
      %v8916 = vpop.f32.mrb[0].mxu0
      %v8917 = vadd.f32 %v8877, %v8916
      %v8918 = vpop.f32.mrb[0].mxu0
      %v8919 = vpop.f32.mrb[0].mxu0
      %v8920 = vpop.f32.mrb[0].mxu0
      %8921 = vdwg.mxu0
      %8922 = vmatprep.subr.bf16.mxu0 0
      %8923 = vmatpush1.bf16.msra.mxu0 %v6578
      %8924 = vmatprep.subr.bf16.mxu0 0
      %8925 = vmatpush1.bf16.msra.mxu0 %v6579
      %8926 = vmatprep.subr.bf16.mxu0 0
      %8927 = vmatpush1.bf16.msra.mxu0 %v6580
      %8928 = vmatprep.subr.bf16.mxu0 0
      %8929 = vmatpush1.bf16.msra.mxu0 %v6581
      %8930 = vmatprep.subr.bf16.mxu0 0
      %8931 = vmatpush1.bf16.msra.mxu0 %v6582
      %8932 = vmatprep.subr.bf16.mxu0 0
      %8933 = vmatpush1.bf16.msra.mxu0 %v6583
      %8934 = vmatprep.subr.bf16.mxu0 0
      %8935 = vmatpush1.bf16.msra.mxu0 %v6584
      %8936 = vmatprep.subr.bf16.mxu0 0
      %8937 = vmatpush1.bf16.msra.mxu0 %v6585
      %8938 = vmatprep.subr.bf16.mxu0 0
      %8939 = vmatpush1.bf16.msra.mxu0 %v6586
      %8940 = vmatprep.subr.bf16.mxu0 0
      %8941 = vmatpush1.bf16.msra.mxu0 %v6587
      %8942 = vmatprep.subr.bf16.mxu0 0
      %8943 = vmatpush1.bf16.msra.mxu0 %v6588
      %8944 = vmatprep.subr.bf16.mxu0 0
      %8945 = vmatpush1.bf16.msra.mxu0 %v6589
      %8946 = vmatprep.subr.bf16.mxu0 0
      %8947 = vmatpush1.bf16.msra.mxu0 %v6590
      %8948 = vmatprep.subr.bf16.mxu0 0
      %8949 = vmatpush1.bf16.msra.mxu0 %v6591
      %8950 = vmatprep.subr.bf16.mxu0 0
      %8951 = vmatpush1.bf16.msra.mxu0 %v6592
      %8952 = vmatprep.subr.bf16.mxu0 0
      %8953 = vmatpush1.bf16.msra.mxu0 %v6593
      %8954 = vmatprep.mubr.bf16.mxu0 %v2331
      %8955 = vmatmul.mubr.bf16.gmra.mrb[0].mxu0 %v2329
      %v8956 = vpop.f32.mrb[0].mxu0
      %v8957 = vadd.f32 %v8917, %v8956
      %v8958 = vpop.f32.mrb[0].mxu0
      %v8959 = vpop.f32.mrb[0].mxu0
      %v8960 = vpop.f32.mrb[0].mxu0
      %8961 = vdwg.mxu0
      %8962 = vmatprep.subr.bf16.mxu0 0
      %8963 = vmatpush1.bf16.msra.mxu0 %v6594
      %8964 = vmatprep.subr.bf16.mxu0 0
      %8965 = vmatpush1.bf16.msra.mxu0 %v6595
      %8966 = vmatprep.subr.bf16.mxu0 0
      %8967 = vmatpush1.bf16.msra.mxu0 %v6596
      %8968 = vmatprep.subr.bf16.mxu0 0
      %8969 = vmatpush1.bf16.msra.mxu0 %v6597
      %8970 = vmatprep.subr.bf16.mxu0 0
      %8971 = vmatpush1.bf16.msra.mxu0 %v6598
      %8972 = vmatprep.subr.bf16.mxu0 0
      %8973 = vmatpush1.bf16.msra.mxu0 %v6599
      %8974 = vmatprep.subr.bf16.mxu0 0
      %8975 = vmatpush1.bf16.msra.mxu0 %v6600
      %8976 = vmatprep.subr.bf16.mxu0 0
      %8977 = vmatpush1.bf16.msra.mxu0 %v6601
      %8978 = vmatprep.subr.bf16.mxu0 0
      %8979 = vmatpush1.bf16.msra.mxu0 %v6602
      %8980 = vmatprep.subr.bf16.mxu0 0
      %8981 = vmatpush1.bf16.msra.mxu0 %v6603
      %8982 = vmatprep.subr.bf16.mxu0 0
      %8983 = vmatpush1.bf16.msra.mxu0 %v6604
      %8984 = vmatprep.subr.bf16.mxu0 0
      %8985 = vmatpush1.bf16.msra.mxu0 %v6605
      %8986 = vmatprep.subr.bf16.mxu0 0
      %8987 = vmatpush1.bf16.msra.mxu0 %v6606
      %8988 = vmatprep.subr.bf16.mxu0 0
      %8989 = vmatpush1.bf16.msra.mxu0 %v6607
      %8990 = vmatprep.subr.bf16.mxu0 0
      %8991 = vmatpush1.bf16.msra.mxu0 %v6608
      %8992 = vmatprep.subr.bf16.mxu0 0
      %8993 = vmatpush1.bf16.msra.mxu0 %v6609
      %8994 = vmatprep.mubr.bf16.mxu0 %v2369
      %8995 = vmatmul.mubr.bf16.gmra.mrb[0].mxu0 %v2355
      %v8996 = vpop.f32.mrb[0].mxu0
      %v8997 = vadd.f32 %v8957, %v8996
      %v8998 = vpop.f32.mrb[0].mxu0
      %v8999 = vpop.f32.mrb[0].mxu0
      %v9000 = vpop.f32.mrb[0].mxu0
      %9001 = vdwg.mxu0
      %9002 = vmatprep.subr.bf16.mxu0 0
      %9003 = vmatpush1.bf16.msra.mxu0 %v6610
      %9004 = vmatprep.subr.bf16.mxu0 0
      %9005 = vmatpush1.bf16.msra.mxu0 %v6611
      %9006 = vmatprep.subr.bf16.mxu0 0
      %9007 = vmatpush1.bf16.msra.mxu0 %v6612
      %9008 = vmatprep.subr.bf16.mxu0 0
      %9009 = vmatpush1.bf16.msra.mxu0 %v6613
      %9010 = vmatprep.subr.bf16.mxu0 0
      %9011 = vmatpush1.bf16.msra.mxu0 %v6614
      %9012 = vmatprep.subr.bf16.mxu0 0
      %9013 = vmatpush1.bf16.msra.mxu0 %v6615
      %9014 = vmatprep.subr.bf16.mxu0 0
      %9015 = vmatpush1.bf16.msra.mxu0 %v6616
      %9016 = vmatprep.subr.bf16.mxu0 0
      %9017 = vmatpush1.bf16.msra.mxu0 %v6617
      %9018 = vmatprep.subr.bf16.mxu0 0
      %9019 = vmatpush1.bf16.msra.mxu0 %v6618
      %9020 = vmatprep.subr.bf16.mxu0 0
      %9021 = vmatpush1.bf16.msra.mxu0 %v6619
      %9022 = vmatprep.subr.bf16.mxu0 0
      %9023 = vmatpush1.bf16.msra.mxu0 %v6620
      %9024 = vmatprep.subr.bf16.mxu0 0
      %9025 = vmatpush1.bf16.msra.mxu0 %v6621
      %9026 = vmatprep.subr.bf16.mxu0 0
      %9027 = vmatpush1.bf16.msra.mxu0 %v6622
      %9028 = vmatprep.subr.bf16.mxu0 0
      %9029 = vmatpush1.bf16.msra.mxu0 %v6623
      %9030 = vmatprep.subr.bf16.mxu0 0
      %9031 = vmatpush1.bf16.msra.mxu0 %v6624
      %9032 = vmatprep.subr.bf16.mxu0 0
      %9033 = vmatpush1.bf16.msra.mxu0 %v6625
      %9034 = vmatprep.mubr.bf16.mxu0 %v2379
      %9035 = vmatmul.mubr.bf16.gmra.mrb[0].mxu0 %v2377
      %v9036 = vpop.f32.mrb[0].mxu0
      %v9037 = vadd.f32 %v8997, %v9036
      %v9038 = vpop.f32.mrb[0].mxu0
      %v9039 = vpop.f32.mrb[0].mxu0
      %v9040 = vpop.f32.mrb[0].mxu0
      %9041 = vdwg.mxu0
      %9042 = vmatprep.subr.bf16.mxu0 0
      %9043 = vmatpush1.bf16.msra.mxu0 %v6626
      %9044 = vmatprep.subr.bf16.mxu0 0
      %9045 = vmatpush1.bf16.msra.mxu0 %v6627
      %9046 = vmatprep.subr.bf16.mxu0 0
      %9047 = vmatpush1.bf16.msra.mxu0 %v6628
      %9048 = vmatprep.subr.bf16.mxu0 0
      %9049 = vmatpush1.bf16.msra.mxu0 %v6629
      %9050 = vmatprep.subr.bf16.mxu0 0
      %9051 = vmatpush1.bf16.msra.mxu0 %v6630
      %9052 = vmatprep.subr.bf16.mxu0 0
      %9053 = vmatpush1.bf16.msra.mxu0 %v6631
      %9054 = vmatprep.subr.bf16.mxu0 0
      %9055 = vmatpush1.bf16.msra.mxu0 %v6632
      %9056 = vmatprep.subr.bf16.mxu0 0
      %9057 = vmatpush1.bf16.msra.mxu0 %v6633
      %9058 = vmatprep.subr.bf16.mxu0 0
      %9059 = vmatpush1.bf16.msra.mxu0 %v6634
      %9060 = vmatprep.subr.bf16.mxu0 0
      %9061 = vmatpush1.bf16.msra.mxu0 %v6635
      %9062 = vmatprep.subr.bf16.mxu0 0
      %9063 = vmatpush1.bf16.msra.mxu0 %v6636
      %9064 = vmatprep.subr.bf16.mxu0 0
      %9065 = vmatpush1.bf16.msra.mxu0 %v6637
      %9066 = vmatprep.subr.bf16.mxu0 0
      %9067 = vmatpush1.bf16.msra.mxu0 %v6638
      %9068 = vmatprep.subr.bf16.mxu0 0
      %9069 = vmatpush1.bf16.msra.mxu0 %v6639
      %9070 = vmatprep.subr.bf16.mxu0 0
      %9071 = vmatpush1.bf16.msra.mxu0 %v6640
      %9072 = vmatprep.subr.bf16.mxu0 0
      %9073 = vmatpush1.bf16.msra.mxu0 %v6641
      %9074 = vmatprep.mubr.bf16.mxu0 %v2376
      %9075 = vmatmul.mubr.bf16.gmra.mrb[0].mxu0 %v2362
      %v9076 = vpop.f32.mrb[0].mxu0
      %v9077 = vadd.f32 %v9037, %v9076
      %v9078 = vpop.f32.mrb[0].mxu0
      %v9079 = vpop.f32.mrb[0].mxu0
      %v9080 = vpop.f32.mrb[0].mxu0
      %9081 = vdwg.mxu0
      %9082 = vmatprep.subr.bf16.mxu0 0
      %9083 = vmatpush1.bf16.msra.mxu0 %v6642
      %9084 = vmatprep.subr.bf16.mxu0 0
      %9085 = vmatpush1.bf16.msra.mxu0 %v6643
      %9086 = vmatprep.subr.bf16.mxu0 0
      %9087 = vmatpush1.bf16.msra.mxu0 %v6644
      %9088 = vmatprep.subr.bf16.mxu0 0
      %9089 = vmatpush1.bf16.msra.mxu0 %v6645
      %9090 = vmatprep.subr.bf16.mxu0 0
      %9091 = vmatpush1.bf16.msra.mxu0 %v6646
      %9092 = vmatprep.subr.bf16.mxu0 0
      %9093 = vmatpush1.bf16.msra.mxu0 %v6647
      %9094 = vmatprep.subr.bf16.mxu0 0
      %9095 = vmatpush1.bf16.msra.mxu0 %v6648
      %9096 = vmatprep.subr.bf16.mxu0 0
      %9097 = vmatpush1.bf16.msra.mxu0 %v6649
      %9098 = vmatprep.subr.bf16.mxu0 0
      %9099 = vmatpush1.bf16.msra.mxu0 %v6650
      %9100 = vmatprep.subr.bf16.mxu0 0
      %9101 = vmatpush1.bf16.msra.mxu0 %v6651
      %9102 = vmatprep.subr.bf16.mxu0 0
      %9103 = vmatpush1.bf16.msra.mxu0 %v6652
      %9104 = vmatprep.subr.bf16.mxu0 0
      %9105 = vmatpush1.bf16.msra.mxu0 %v6653
      %9106 = vmatprep.subr.bf16.mxu0 0
      %9107 = vmatpush1.bf16.msra.mxu0 %v6654
      %9108 = vmatprep.subr.bf16.mxu0 0
      %9109 = vmatpush1.bf16.msra.mxu0 %v6655
      %9110 = vmatprep.subr.bf16.mxu0 0
      %9111 = vmatpush1.bf16.msra.mxu0 %v6656
      %9112 = vmatprep.subr.bf16.mxu0 0
      %9113 = vmatpush1.bf16.msra.mxu0 %v6657
      %9114 = vmatprep.mubr.bf16.mxu0 %v2380
      %9115 = vmatmul.mubr.bf16.gmra.mrb[0].mxu0 %v2378
      %v9116 = vpop.f32.mrb[0].mxu0
      %v9117 = vadd.f32 %v9077, %v9116
      %v9118 = vpop.f32.mrb[0].mxu0
      %v9119 = vpop.f32.mrb[0].mxu0
      %v9120 = vpop.f32.mrb[0].mxu0
      %9121 = vdwg.mxu0
      %9122 = vmatprep.subr.bf16.mxu0 0
      %9123 = vmatpush1.bf16.msra.mxu0 %v6658
      %9124 = vmatprep.subr.bf16.mxu0 0
      %9125 = vmatpush1.bf16.msra.mxu0 %v6659
      %9126 = vmatprep.subr.bf16.mxu0 0
      %9127 = vmatpush1.bf16.msra.mxu0 %v6660
      %9128 = vmatprep.subr.bf16.mxu0 0
      %9129 = vmatpush1.bf16.msra.mxu0 %v6661
      %9130 = vmatprep.subr.bf16.mxu0 0
      %9131 = vmatpush1.bf16.msra.mxu0 %v6662
      %9132 = vmatprep.subr.bf16.mxu0 0
      %9133 = vmatpush1.bf16.msra.mxu0 %v6663
      %9134 = vmatprep.subr.bf16.mxu0 0
      %9135 = vmatpush1.bf16.msra.mxu0 %v6664
      %9136 = vmatprep.subr.bf16.mxu0 0
      %9137 = vmatpush1.bf16.msra.mxu0 %v6665
      %9138 = vmatprep.subr.bf16.mxu0 0
      %9139 = vmatpush1.bf16.msra.mxu0 %v6666
      %9140 = vmatprep.subr.bf16.mxu0 0
      %9141 = vmatpush1.bf16.msra.mxu0 %v6667
      %9142 = vmatprep.subr.bf16.mxu0 0
      %9143 = vmatpush1.bf16.msra.mxu0 %v6668
      %9144 = vmatprep.subr.bf16.mxu0 0
      %9145 = vmatpush1.bf16.msra.mxu0 %v6669
      %9146 = vmatprep.subr.bf16.mxu0 0
      %9147 = vmatpush1.bf16.msra.mxu0 %v6670
      %9148 = vmatprep.subr.bf16.mxu0 0
      %9149 = vmatpush1.bf16.msra.mxu0 %v6671
      %9150 = vmatprep.subr.bf16.mxu0 0
      %9151 = vmatpush1.bf16.msra.mxu0 %v6672
      %9152 = vmatprep.subr.bf16.mxu0 0
      %9153 = vmatpush1.bf16.msra.mxu0 %v6673
      %9154 = vmatprep.mubr.bf16.mxu0 %v2418
      %9155 = vmatmul.mubr.bf16.gmra.mrb[0].mxu0 %v2404
      %v9156 = vpop.f32.mrb[0].mxu0
      %v9157 = vadd.f32 %v9117, %v9156
      %v9158 = vpop.f32.mrb[0].mxu0
      %v9159 = vpop.f32.mrb[0].mxu0
      %v9160 = vpop.f32.mrb[0].mxu0
      %9161 = vdwg.mxu0
      %9162 = vmatprep.subr.bf16.mxu0 0
      %9163 = vmatpush1.bf16.msra.mxu0 %v6674
      %9164 = vmatprep.subr.bf16.mxu0 0
      %9165 = vmatpush1.bf16.msra.mxu0 %v6675
      %9166 = vmatprep.subr.bf16.mxu0 0
      %9167 = vmatpush1.bf16.msra.mxu0 %v6676
      %9168 = vmatprep.subr.bf16.mxu0 0
      %9169 = vmatpush1.bf16.msra.mxu0 %v6677
      %9170 = vmatprep.subr.bf16.mxu0 0
      %9171 = vmatpush1.bf16.msra.mxu0 %v6678
      %9172 = vmatprep.subr.bf16.mxu0 0
      %9173 = vmatpush1.bf16.msra.mxu0 %v6679
      %9174 = vmatprep.subr.bf16.mxu0 0
      %9175 = vmatpush1.bf16.msra.mxu0 %v6680
      %9176 = vmatprep.subr.bf16.mxu0 0
      %9177 = vmatpush1.bf16.msra.mxu0 %v6681
      %9178 = vmatprep.subr.bf16.mxu0 0
      %9179 = vmatpush1.bf16.msra.mxu0 %v6682
      %9180 = vmatprep.subr.bf16.mxu0 0
      %9181 = vmatpush1.bf16.msra.mxu0 %v6683
      %9182 = vmatprep.subr.bf16.mxu0 0
      %9183 = vmatpush1.bf16.msra.mxu0 %v6684
      %9184 = vmatprep.subr.bf16.mxu0 0
      %9185 = vmatpush1.bf16.msra.mxu0 %v6685
      %9186 = vmatprep.subr.bf16.mxu0 0
      %9187 = vmatpush1.bf16.msra.mxu0 %v6686
      %9188 = vmatprep.subr.bf16.mxu0 0
      %9189 = vmatpush1.bf16.msra.mxu0 %v6687
      %9190 = vmatprep.subr.bf16.mxu0 0
      %9191 = vmatpush1.bf16.msra.mxu0 %v6688
      %9192 = vmatprep.subr.bf16.mxu0 0
      %9193 = vmatpush1.bf16.msra.mxu0 %v6689
      %9194 = vmatprep.mubr.bf16.mxu0 %v2428
      %9195 = vmatmul.mubr.bf16.gmra.mrb[0].mxu0 %v2426
      %v9196 = vpop.f32.mrb[0].mxu0
      %v9197 = vadd.f32 %v9157, %v9196
      %v9198 = vpop.f32.mrb[0].mxu0
      %v9199 = vpop.f32.mrb[0].mxu0
      %v9200 = vpop.f32.mrb[0].mxu0
      %9201 = vdwg.mxu0
      %9202 = vmatprep.subr.bf16.mxu0 0
      %9203 = vmatpush1.bf16.msra.mxu0 %v6690
      %9204 = vmatprep.subr.bf16.mxu0 0
      %9205 = vmatpush1.bf16.msra.mxu0 %v6691
      %9206 = vmatprep.subr.bf16.mxu0 0
      %9207 = vmatpush1.bf16.msra.mxu0 %v6692
      %9208 = vmatprep.subr.bf16.mxu0 0
      %9209 = vmatpush1.bf16.msra.mxu0 %v6693
      %9210 = vmatprep.subr.bf16.mxu0 0
      %9211 = vmatpush1.bf16.msra.mxu0 %v6694
      %9212 = vmatprep.subr.bf16.mxu0 0
      %9213 = vmatpush1.bf16.msra.mxu0 %v6695
      %9214 = vmatprep.subr.bf16.mxu0 0
      %9215 = vmatpush1.bf16.msra.mxu0 %v6696
      %9216 = vmatprep.subr.bf16.mxu0 0
      %9217 = vmatpush1.bf16.msra.mxu0 %v6697
      %9218 = vmatprep.subr.bf16.mxu0 0
      %9219 = vmatpush1.bf16.msra.mxu0 %v6698
      %9220 = vmatprep.subr.bf16.mxu0 0
      %9221 = vmatpush1.bf16.msra.mxu0 %v6699
      %9222 = vmatprep.subr.bf16.mxu0 0
      %9223 = vmatpush1.bf16.msra.mxu0 %v6700
      %9224 = vmatprep.subr.bf16.mxu0 0
      %9225 = vmatpush1.bf16.msra.mxu0 %v6701
      %9226 = vmatprep.subr.bf16.mxu0 0
      %9227 = vmatpush1.bf16.msra.mxu0 %v6702
      %9228 = vmatprep.subr.bf16.mxu0 0
      %9229 = vmatpush1.bf16.msra.mxu0 %v6703
      %9230 = vmatprep.subr.bf16.mxu0 0
      %9231 = vmatpush1.bf16.msra.mxu0 %v6704
      %9232 = vmatprep.subr.bf16.mxu0 0
      %9233 = vmatpush1.bf16.msra.mxu0 %v6705
      %9234 = vmatprep.mubr.bf16.mxu0 %v2425
      %9235 = vmatmul.mubr.bf16.gmra.mrb[0].mxu0 %v2411
      %v9236 = vpop.f32.mrb[0].mxu0
      %v9237 = vadd.f32 %v9197, %v9236
      %v9238 = vpop.f32.mrb[0].mxu0
      %v9239 = vpop.f32.mrb[0].mxu0
      %v9240 = vpop.f32.mrb[0].mxu0
      %9241 = vdwg.mxu0
      %9242 = vmatprep.subr.bf16.mxu0 0
      %9243 = vmatpush1.bf16.msra.mxu0 %v6706
      %9244 = vmatprep.subr.bf16.mxu0 0
      %9245 = vmatpush1.bf16.msra.mxu0 %v6707
      %9246 = vmatprep.subr.bf16.mxu0 0
      %9247 = vmatpush1.bf16.msra.mxu0 %v6708
      %9248 = vmatprep.subr.bf16.mxu0 0
      %9249 = vmatpush1.bf16.msra.mxu0 %v6709
      %9250 = vmatprep.subr.bf16.mxu0 0
      %9251 = vmatpush1.bf16.msra.mxu0 %v6710
      %9252 = vmatprep.subr.bf16.mxu0 0
      %9253 = vmatpush1.bf16.msra.mxu0 %v6711
      %9254 = vmatprep.subr.bf16.mxu0 0
      %9255 = vmatpush1.bf16.msra.mxu0 %v6712
      %9256 = vmatprep.subr.bf16.mxu0 0
      %9257 = vmatpush1.bf16.msra.mxu0 %v6713
      %9258 = vmatprep.subr.bf16.mxu0 0
      %9259 = vmatpush1.bf16.msra.mxu0 %v6714
      %9260 = vmatprep.subr.bf16.mxu0 0
      %9261 = vmatpush1.bf16.msra.mxu0 %v6715
      %9262 = vmatprep.subr.bf16.mxu0 0
      %9263 = vmatpush1.bf16.msra.mxu0 %v6716
      %9264 = vmatprep.subr.bf16.mxu0 0
      %9265 = vmatpush1.bf16.msra.mxu0 %v6717
      %9266 = vmatprep.subr.bf16.mxu0 0
      %9267 = vmatpush1.bf16.msra.mxu0 %v6718
      %9268 = vmatprep.subr.bf16.mxu0 0
      %9269 = vmatpush1.bf16.msra.mxu0 %v6719
      %9270 = vmatprep.subr.bf16.mxu0 0
      %9271 = vmatpush1.bf16.msra.mxu0 %v6720
      %9272 = vmatprep.subr.bf16.mxu0 0
      %9273 = vmatpush1.bf16.msra.mxu0 %v6721
      %9274 = vmatprep.mubr.bf16.mxu0 %v2429
      %9275 = vmatmul.mubr.bf16.gmra.mrb[0].mxu0 %v2427
      %v9276 = vpop.f32.mrb[0].mxu0
      %v9277 = vadd.f32 %v9237, %v9276
      %v9278 = vpop.f32.mrb[0].mxu0
      %v9279 = vpop.f32.mrb[0].mxu0
      %v9280 = vpop.f32.mrb[0].mxu0
      %9281 = vdwg.mxu0
      %9282 = vmatprep.subr.bf16.mxu0 0
      %9283 = vmatpush1.bf16.msra.mxu0 %v6722
      %9284 = vmatprep.subr.bf16.mxu0 0
      %9285 = vmatpush1.bf16.msra.mxu0 %v6723
      %9286 = vmatprep.subr.bf16.mxu0 0
      %9287 = vmatpush1.bf16.msra.mxu0 %v6724
      %9288 = vmatprep.subr.bf16.mxu0 0
      %9289 = vmatpush1.bf16.msra.mxu0 %v6725
      %9290 = vmatprep.subr.bf16.mxu0 0
      %9291 = vmatpush1.bf16.msra.mxu0 %v6726
      %9292 = vmatprep.subr.bf16.mxu0 0
      %9293 = vmatpush1.bf16.msra.mxu0 %v6727
      %9294 = vmatprep.subr.bf16.mxu0 0
      %9295 = vmatpush1.bf16.msra.mxu0 %v6728
      %9296 = vmatprep.subr.bf16.mxu0 0
      %9297 = vmatpush1.bf16.msra.mxu0 %v6729
      %9298 = vmatprep.subr.bf16.mxu0 0
      %9299 = vmatpush1.bf16.msra.mxu0 %v6730
      %9300 = vmatprep.subr.bf16.mxu0 0
      %9301 = vmatpush1.bf16.msra.mxu0 %v6731
      %9302 = vmatprep.subr.bf16.mxu0 0
      %9303 = vmatpush1.bf16.msra.mxu0 %v6732
      %9304 = vmatprep.subr.bf16.mxu0 0
      %9305 = vmatpush1.bf16.msra.mxu0 %v6733
      %9306 = vmatprep.subr.bf16.mxu0 0
      %9307 = vmatpush1.bf16.msra.mxu0 %v6734
      %9308 = vmatprep.subr.bf16.mxu0 0
      %9309 = vmatpush1.bf16.msra.mxu0 %v6735
      %9310 = vmatprep.subr.bf16.mxu0 0
      %9311 = vmatpush1.bf16.msra.mxu0 %v6736
      %9312 = vmatprep.subr.bf16.mxu0 0
      %9313 = vmatpush1.bf16.msra.mxu0 %v6737
      %9314 = vmatprep.mubr.bf16.mxu0 %v2467
      %9315 = vmatmul.mubr.bf16.gmra.mrb[0].mxu0 %v2453
      %v9316 = vpop.f32.mrb[0].mxu0
      %v9317 = vadd.f32 %v9277, %v9316
      %v9318 = vpop.f32.mrb[0].mxu0
      %v9319 = vpop.f32.mrb[0].mxu0
      %v9320 = vpop.f32.mrb[0].mxu0
      %9321 = vdwg.mxu0
      %9322 = vmatprep.subr.bf16.mxu0 0
      %9323 = vmatpush1.bf16.msra.mxu0 %v6738
      %9324 = vmatprep.subr.bf16.mxu0 0
      %9325 = vmatpush1.bf16.msra.mxu0 %v6739
      %9326 = vmatprep.subr.bf16.mxu0 0
      %9327 = vmatpush1.bf16.msra.mxu0 %v6740
      %9328 = vmatprep.subr.bf16.mxu0 0
      %9329 = vmatpush1.bf16.msra.mxu0 %v6741
      %9330 = vmatprep.subr.bf16.mxu0 0
      %9331 = vmatpush1.bf16.msra.mxu0 %v6742
      %9332 = vmatprep.subr.bf16.mxu0 0
      %9333 = vmatpush1.bf16.msra.mxu0 %v6743
      %9334 = vmatprep.subr.bf16.mxu0 0
      %9335 = vmatpush1.bf16.msra.mxu0 %v6744
      %9336 = vmatprep.subr.bf16.mxu0 0
      %9337 = vmatpush1.bf16.msra.mxu0 %v6745
      %9338 = vmatprep.subr.bf16.mxu0 0
      %9339 = vmatpush1.bf16.msra.mxu0 %v6746
      %9340 = vmatprep.subr.bf16.mxu0 0
      %9341 = vmatpush1.bf16.msra.mxu0 %v6747
      %9342 = vmatprep.subr.bf16.mxu0 0
      %9343 = vmatpush1.bf16.msra.mxu0 %v6748
      %9344 = vmatprep.subr.bf16.mxu0 0
      %9345 = vmatpush1.bf16.msra.mxu0 %v6749
      %9346 = vmatprep.subr.bf16.mxu0 0
      %9347 = vmatpush1.bf16.msra.mxu0 %v6750
      %9348 = vmatprep.subr.bf16.mxu0 0
      %9349 = vmatpush1.bf16.msra.mxu0 %v6751
      %9350 = vmatprep.subr.bf16.mxu0 0
      %9351 = vmatpush1.bf16.msra.mxu0 %v6752
      %9352 = vmatprep.subr.bf16.mxu0 0
      %9353 = vmatpush1.bf16.msra.mxu0 %v6753
      %9354 = vmatprep.mubr.bf16.mxu0 %v2477
      %9355 = vmatmul.mubr.bf16.gmra.mrb[0].mxu0 %v2475
      %v9356 = vpop.f32.mrb[0].mxu0
      %v9357 = vadd.f32 %v9317, %v9356
      %v9358 = vpop.f32.mrb[0].mxu0
      %v9359 = vpop.f32.mrb[0].mxu0
      %v9360 = vpop.f32.mrb[0].mxu0
      %9361 = vdwg.mxu0
      %9362 = vmatprep.subr.bf16.mxu0 0
      %9363 = vmatpush1.bf16.msra.mxu0 %v6754
      %9364 = vmatprep.subr.bf16.mxu0 0
      %9365 = vmatpush1.bf16.msra.mxu0 %v6755
      %9366 = vmatprep.subr.bf16.mxu0 0
      %9367 = vmatpush1.bf16.msra.mxu0 %v6756
      %9368 = vmatprep.subr.bf16.mxu0 0
      %9369 = vmatpush1.bf16.msra.mxu0 %v6757
      %9370 = vmatprep.subr.bf16.mxu0 0
      %9371 = vmatpush1.bf16.msra.mxu0 %v6758
      %9372 = vmatprep.subr.bf16.mxu0 0
      %9373 = vmatpush1.bf16.msra.mxu0 %v6759
      %9374 = vmatprep.subr.bf16.mxu0 0
      %9375 = vmatpush1.bf16.msra.mxu0 %v6760
      %9376 = vmatprep.subr.bf16.mxu0 0
      %9377 = vmatpush1.bf16.msra.mxu0 %v6761
      %9378 = vmatprep.subr.bf16.mxu0 0
      %9379 = vmatpush1.bf16.msra.mxu0 %v6762
      %9380 = vmatprep.subr.bf16.mxu0 0
      %9381 = vmatpush1.bf16.msra.mxu0 %v6763
      %9382 = vmatprep.subr.bf16.mxu0 0
      %9383 = vmatpush1.bf16.msra.mxu0 %v6764
      %9384 = vmatprep.subr.bf16.mxu0 0
      %9385 = vmatpush1.bf16.msra.mxu0 %v6765
      %9386 = vmatprep.subr.bf16.mxu0 0
      %9387 = vmatpush1.bf16.msra.mxu0 %v6766
      %9388 = vmatprep.subr.bf16.mxu0 0
      %9389 = vmatpush1.bf16.msra.mxu0 %v6767
      %9390 = vmatprep.subr.bf16.mxu0 0
      %9391 = vmatpush1.bf16.msra.mxu0 %v6768
      %9392 = vmatprep.subr.bf16.mxu0 0
      %9393 = vmatpush1.bf16.msra.mxu0 %v6769
      %9394 = vmatprep.mubr.bf16.mxu0 %v2474
      %9395 = vmatmul.mubr.bf16.gmra.mrb[0].mxu0 %v2460
      %v9396 = vpop.f32.mrb[0].mxu0
      %v9397 = vadd.f32 %v9357, %v9396
      %v9398 = vpop.f32.mrb[0].mxu0
      %v9399 = vpop.f32.mrb[0].mxu0
      %v9400 = vpop.f32.mrb[0].mxu0
      %9401 = vdwg.mxu0
      %9402 = vmatprep.subr.bf16.mxu0 0
      %9403 = vmatpush1.bf16.msra.mxu0 %v6770
      %9404 = vmatprep.subr.bf16.mxu0 0
      %9405 = vmatpush1.bf16.msra.mxu0 %v6771
      %9406 = vmatprep.subr.bf16.mxu0 0
      %9407 = vmatpush1.bf16.msra.mxu0 %v6772
      %9408 = vmatprep.subr.bf16.mxu0 0
      %9409 = vmatpush1.bf16.msra.mxu0 %v6773
      %9410 = vmatprep.subr.bf16.mxu0 0
      %9411 = vmatpush1.bf16.msra.mxu0 %v6774
      %9412 = vmatprep.subr.bf16.mxu0 0
      %9413 = vmatpush1.bf16.msra.mxu0 %v6775
      %9414 = vmatprep.subr.bf16.mxu0 0
      %9415 = vmatpush1.bf16.msra.mxu0 %v6776
      %9416 = vmatprep.subr.bf16.mxu0 0
      %9417 = vmatpush1.bf16.msra.mxu0 %v6777
      %9418 = vmatprep.subr.bf16.mxu0 0
      %9419 = vmatpush1.bf16.msra.mxu0 %v6778
      %9420 = vmatprep.subr.bf16.mxu0 0
      %9421 = vmatpush1.bf16.msra.mxu0 %v6779
      %9422 = vmatprep.subr.bf16.mxu0 0
      %9423 = vmatpush1.bf16.msra.mxu0 %v6780
      %9424 = vmatprep.subr.bf16.mxu0 0
      %9425 = vmatpush1.bf16.msra.mxu0 %v6781
      %9426 = vmatprep.subr.bf16.mxu0 0
      %9427 = vmatpush1.bf16.msra.mxu0 %v6782
      %9428 = vmatprep.subr.bf16.mxu0 0
      %9429 = vmatpush1.bf16.msra.mxu0 %v6783
      %9430 = vmatprep.subr.bf16.mxu0 0
      %9431 = vmatpush1.bf16.msra.mxu0 %v6784
      %9432 = vmatprep.subr.bf16.mxu0 0
      %9433 = vmatpush1.bf16.msra.mxu0 %v6785
      %9434 = vmatprep.mubr.bf16.mxu0 %v2478
      %9435 = vmatmul.mubr.bf16.gmra.mrb[0].mxu0 %v2476
      %v9436 = vpop.f32.mrb[0].mxu0
      %v9437 = vadd.f32 %v9397, %v9436
      %v9438 = vpop.f32.mrb[0].mxu0
      %v9439 = vpop.f32.mrb[0].mxu0
      %v9440 = vpop.f32.mrb[0].mxu0
      %9441 = vdwg.mxu0
      %9442 = vmatprep.subr.bf16.mxu0 0
      %9443 = vmatpush1.bf16.msra.mxu0 %v6786
      %9444 = vmatprep.subr.bf16.mxu0 0
      %9445 = vmatpush1.bf16.msra.mxu0 %v6787
      %9446 = vmatprep.subr.bf16.mxu0 0
      %9447 = vmatpush1.bf16.msra.mxu0 %v6788
      %9448 = vmatprep.subr.bf16.mxu0 0
      %9449 = vmatpush1.bf16.msra.mxu0 %v6789
      %9450 = vmatprep.subr.bf16.mxu0 0
      %9451 = vmatpush1.bf16.msra.mxu0 %v6790
      %9452 = vmatprep.subr.bf16.mxu0 0
      %9453 = vmatpush1.bf16.msra.mxu0 %v6791
      %9454 = vmatprep.subr.bf16.mxu0 0
      %9455 = vmatpush1.bf16.msra.mxu0 %v6792
      %9456 = vmatprep.subr.bf16.mxu0 0
      %9457 = vmatpush1.bf16.msra.mxu0 %v6793
      %9458 = vmatprep.subr.bf16.mxu0 0
      %9459 = vmatpush1.bf16.msra.mxu0 %v6794
      %9460 = vmatprep.subr.bf16.mxu0 0
      %9461 = vmatpush1.bf16.msra.mxu0 %v6795
      %9462 = vmatprep.subr.bf16.mxu0 0
      %9463 = vmatpush1.bf16.msra.mxu0 %v6796
      %9464 = vmatprep.subr.bf16.mxu0 0
      %9465 = vmatpush1.bf16.msra.mxu0 %v6797
      %9466 = vmatprep.subr.bf16.mxu0 0
      %9467 = vmatpush1.bf16.msra.mxu0 %v6798
      %9468 = vmatprep.subr.bf16.mxu0 0
      %9469 = vmatpush1.bf16.msra.mxu0 %v6799
      %9470 = vmatprep.subr.bf16.mxu0 0
      %9471 = vmatpush1.bf16.msra.mxu0 %v6800
      %9472 = vmatprep.subr.bf16.mxu0 0
      %9473 = vmatpush1.bf16.msra.mxu0 %v6801
      %9474 = vmatprep.mubr.bf16.mxu0 %v2516
      %9475 = vmatmul.mubr.bf16.gmra.mrb[0].mxu0 %v2502
      %v9476 = vpop.f32.mrb[0].mxu0
      %v9477 = vadd.f32 %v9437, %v9476
      %v9478 = vpop.f32.mrb[0].mxu0
      %v9479 = vpop.f32.mrb[0].mxu0
      %v9480 = vpop.f32.mrb[0].mxu0
      %9481 = vdwg.mxu0
      %9482 = vmatprep.subr.bf16.mxu0 0
      %9483 = vmatpush1.bf16.msra.mxu0 %v6802
      %9484 = vmatprep.subr.bf16.mxu0 0
      %9485 = vmatpush1.bf16.msra.mxu0 %v6803
      %9486 = vmatprep.subr.bf16.mxu0 0
      %9487 = vmatpush1.bf16.msra.mxu0 %v6804
      %9488 = vmatprep.subr.bf16.mxu0 0
      %9489 = vmatpush1.bf16.msra.mxu0 %v6805
      %9490 = vmatprep.subr.bf16.mxu0 0
      %9491 = vmatpush1.bf16.msra.mxu0 %v6806
      %9492 = vmatprep.subr.bf16.mxu0 0
      %9493 = vmatpush1.bf16.msra.mxu0 %v6807
      %9494 = vmatprep.subr.bf16.mxu0 0
      %9495 = vmatpush1.bf16.msra.mxu0 %v6808
      %9496 = vmatprep.subr.bf16.mxu0 0
      %9497 = vmatpush1.bf16.msra.mxu0 %v6809
      %9498 = vmatprep.subr.bf16.mxu0 0
      %9499 = vmatpush1.bf16.msra.mxu0 %v6810
      %9500 = vmatprep.subr.bf16.mxu0 0
      %9501 = vmatpush1.bf16.msra.mxu0 %v6811
      %9502 = vmatprep.subr.bf16.mxu0 0
      %9503 = vmatpush1.bf16.msra.mxu0 %v6812
      %9504 = vmatprep.subr.bf16.mxu0 0
      %9505 = vmatpush1.bf16.msra.mxu0 %v6813
      %9506 = vmatprep.subr.bf16.mxu0 0
      %9507 = vmatpush1.bf16.msra.mxu0 %v6814
      %9508 = vmatprep.subr.bf16.mxu0 0
      %9509 = vmatpush1.bf16.msra.mxu0 %v6815
      %9510 = vmatprep.subr.bf16.mxu0 0
      %9511 = vmatpush1.bf16.msra.mxu0 %v6816
      %9512 = vmatprep.subr.bf16.mxu0 0
      %9513 = vmatpush1.bf16.msra.mxu0 %v6817
      %9514 = vmatprep.mubr.bf16.mxu0 %v2526
      %9515 = vmatmul.mubr.bf16.gmra.mrb[0].mxu0 %v2524
      %v9516 = vpop.f32.mrb[0].mxu0
      %v9517 = vadd.f32 %v9477, %v9516
      %v9518 = vpop.f32.mrb[0].mxu0
      %v9519 = vpop.f32.mrb[0].mxu0
      %v9520 = vpop.f32.mrb[0].mxu0
      %9521 = vdwg.mxu0
      %9522 = vmatprep.subr.bf16.mxu0 0
      %9523 = vmatpush1.bf16.msra.mxu0 %v6818
      %9524 = vmatprep.subr.bf16.mxu0 0
      %9525 = vmatpush1.bf16.msra.mxu0 %v6819
      %9526 = vmatprep.subr.bf16.mxu0 0
      %9527 = vmatpush1.bf16.msra.mxu0 %v6820
      %9528 = vmatprep.subr.bf16.mxu0 0
      %9529 = vmatpush1.bf16.msra.mxu0 %v6821
      %9530 = vmatprep.subr.bf16.mxu0 0
      %9531 = vmatpush1.bf16.msra.mxu0 %v6822
      %9532 = vmatprep.subr.bf16.mxu0 0
      %9533 = vmatpush1.bf16.msra.mxu0 %v6823
      %9534 = vmatprep.subr.bf16.mxu0 0
      %9535 = vmatpush1.bf16.msra.mxu0 %v6824
      %9536 = vmatprep.subr.bf16.mxu0 0
      %9537 = vmatpush1.bf16.msra.mxu0 %v6825
      %9538 = vmatprep.subr.bf16.mxu0 0
      %9539 = vmatpush1.bf16.msra.mxu0 %v6826
      %9540 = vmatprep.subr.bf16.mxu0 0
      %9541 = vmatpush1.bf16.msra.mxu0 %v6827
      %9542 = vmatprep.subr.bf16.mxu0 0
      %9543 = vmatpush1.bf16.msra.mxu0 %v6828
      %9544 = vmatprep.subr.bf16.mxu0 0
      %9545 = vmatpush1.bf16.msra.mxu0 %v6829
      %9546 = vmatprep.subr.bf16.mxu0 0
      %9547 = vmatpush1.bf16.msra.mxu0 %v6830
      %9548 = vmatprep.subr.bf16.mxu0 0
      %9549 = vmatpush1.bf16.msra.mxu0 %v6831
      %9550 = vmatprep.subr.bf16.mxu0 0
      %9551 = vmatpush1.bf16.msra.mxu0 %v6832
      %9552 = vmatprep.subr.bf16.mxu0 0
      %9553 = vmatpush1.bf16.msra.mxu0 %v6833
      %9554 = vmatprep.mubr.bf16.mxu0 %v2523
      %9555 = vmatmul.mubr.bf16.gmra.mrb[0].mxu0 %v2509
      %v9556 = vpop.f32.mrb[0].mxu0
      %v9557 = vadd.f32 %v9517, %v9556
      %v9558 = vpop.f32.mrb[0].mxu0
      %v9559 = vpop.f32.mrb[0].mxu0
      %v9560 = vpop.f32.mrb[0].mxu0
      %9561 = vdwg.mxu0
      %9562 = vmatprep.subr.bf16.mxu0 0
      %9563 = vmatpush1.bf16.msra.mxu0 %v6834
      %9564 = vmatprep.subr.bf16.mxu0 0
      %9565 = vmatpush1.bf16.msra.mxu0 %v6835
      %9566 = vmatprep.subr.bf16.mxu0 0
      %9567 = vmatpush1.bf16.msra.mxu0 %v6836
      %9568 = vmatprep.subr.bf16.mxu0 0
      %9569 = vmatpush1.bf16.msra.mxu0 %v6837
      %9570 = vmatprep.subr.bf16.mxu0 0
      %9571 = vmatpush1.bf16.msra.mxu0 %v6838
      %9572 = vmatprep.subr.bf16.mxu0 0
      %9573 = vmatpush1.bf16.msra.mxu0 %v6839
      %9574 = vmatprep.subr.bf16.mxu0 0
      %9575 = vmatpush1.bf16.msra.mxu0 %v6840
      %9576 = vmatprep.subr.bf16.mxu0 0
      %9577 = vmatpush1.bf16.msra.mxu0 %v6841
      %9578 = vmatprep.subr.bf16.mxu0 0
      %9579 = vmatpush1.bf16.msra.mxu0 %v6842
      %9580 = vmatprep.subr.bf16.mxu0 0
      %9581 = vmatpush1.bf16.msra.mxu0 %v6843
      %9582 = vmatprep.subr.bf16.mxu0 0
      %9583 = vmatpush1.bf16.msra.mxu0 %v6844
      %9584 = vmatprep.subr.bf16.mxu0 0
      %9585 = vmatpush1.bf16.msra.mxu0 %v6845
      %9586 = vmatprep.subr.bf16.mxu0 0
      %9587 = vmatpush1.bf16.msra.mxu0 %v6846
      %9588 = vmatprep.subr.bf16.mxu0 0
      %9589 = vmatpush1.bf16.msra.mxu0 %v6847
      %9590 = vmatprep.subr.bf16.mxu0 0
      %9591 = vmatpush1.bf16.msra.mxu0 %v6848
      %9592 = vmatprep.subr.bf16.mxu0 0
      %9593 = vmatpush1.bf16.msra.mxu0 %v6849
      %9594 = vmatprep.mubr.bf16.mxu0 %v2527
      %9595 = vmatmul.mubr.bf16.gmra.mrb[0].mxu0 %v2525
      %v9596 = vpop.f32.mrb[0].mxu0
      %v9597 = vadd.f32 %v9557, %v9596
      %v9598 = vpop.f32.mrb[0].mxu0
      %v9599 = vpop.f32.mrb[0].mxu0
      %v9600 = vpop.f32.mrb[0].mxu0
      %9601 = vdwg.mxu0
      %9602 = vmatprep.subr.bf16.mxu0 0
      %9603 = vmatpush1.bf16.msra.mxu0 %v6850
      %9604 = vmatprep.subr.bf16.mxu0 0
      %9605 = vmatpush1.bf16.msra.mxu0 %v6851
      %9606 = vmatprep.subr.bf16.mxu0 0
      %9607 = vmatpush1.bf16.msra.mxu0 %v6852
      %9608 = vmatprep.subr.bf16.mxu0 0
      %9609 = vmatpush1.bf16.msra.mxu0 %v6853
      %9610 = vmatprep.subr.bf16.mxu0 0
      %9611 = vmatpush1.bf16.msra.mxu0 %v6854
      %9612 = vmatprep.subr.bf16.mxu0 0
      %9613 = vmatpush1.bf16.msra.mxu0 %v6855
      %9614 = vmatprep.subr.bf16.mxu0 0
      %9615 = vmatpush1.bf16.msra.mxu0 %v6856
      %9616 = vmatprep.subr.bf16.mxu0 0
      %9617 = vmatpush1.bf16.msra.mxu0 %v6857
      %9618 = vmatprep.subr.bf16.mxu0 0
      %9619 = vmatpush1.bf16.msra.mxu0 %v6858
      %9620 = vmatprep.subr.bf16.mxu0 0
      %9621 = vmatpush1.bf16.msra.mxu0 %v6859
      %9622 = vmatprep.subr.bf16.mxu0 0
      %9623 = vmatpush1.bf16.msra.mxu0 %v6860
      %9624 = vmatprep.subr.bf16.mxu0 0
      %9625 = vmatpush1.bf16.msra.mxu0 %v6861
      %9626 = vmatprep.subr.bf16.mxu0 0
      %9627 = vmatpush1.bf16.msra.mxu0 %v6862
      %9628 = vmatprep.subr.bf16.mxu0 0
      %9629 = vmatpush1.bf16.msra.mxu0 %v6863
      %9630 = vmatprep.subr.bf16.mxu0 0
      %9631 = vmatpush1.bf16.msra.mxu0 %v6864
      %9632 = vmatprep.subr.bf16.mxu0 0
      %9633 = vmatpush1.bf16.msra.mxu0 %v6865
      %9634 = vmatprep.mubr.bf16.mxu0 %v2565
      %9635 = vmatmul.mubr.bf16.gmra.mrb[0].mxu0 %v2551
      %v9636 = vpop.f32.mrb[0].mxu0
      %v9637 = vadd.f32 %v9597, %v9636
      %v9638 = vpop.f32.mrb[0].mxu0
      %v9639 = vpop.f32.mrb[0].mxu0
      %v9640 = vpop.f32.mrb[0].mxu0
      %9641 = vdwg.mxu0
      %9642 = vmatprep.subr.bf16.mxu0 0
      %9643 = vmatpush1.bf16.msra.mxu0 %v6866
      %9644 = vmatprep.subr.bf16.mxu0 0
      %9645 = vmatpush1.bf16.msra.mxu0 %v6867
      %9646 = vmatprep.subr.bf16.mxu0 0
      %9647 = vmatpush1.bf16.msra.mxu0 %v6868
      %9648 = vmatprep.subr.bf16.mxu0 0
      %9649 = vmatpush1.bf16.msra.mxu0 %v6869
      %9650 = vmatprep.subr.bf16.mxu0 0
      %9651 = vmatpush1.bf16.msra.mxu0 %v6870
      %9652 = vmatprep.subr.bf16.mxu0 0
      %9653 = vmatpush1.bf16.msra.mxu0 %v6871
      %9654 = vmatprep.subr.bf16.mxu0 0
      %9655 = vmatpush1.bf16.msra.mxu0 %v6872
      %9656 = vmatprep.subr.bf16.mxu0 0
      %9657 = vmatpush1.bf16.msra.mxu0 %v6873
      %9658 = vmatprep.subr.bf16.mxu0 0
      %9659 = vmatpush1.bf16.msra.mxu0 %v6874
      %9660 = vmatprep.subr.bf16.mxu0 0
      %9661 = vmatpush1.bf16.msra.mxu0 %v6875
      %9662 = vmatprep.subr.bf16.mxu0 0
      %9663 = vmatpush1.bf16.msra.mxu0 %v6876
      %9664 = vmatprep.subr.bf16.mxu0 0
      %9665 = vmatpush1.bf16.msra.mxu0 %v6877
      %9666 = vmatprep.subr.bf16.mxu0 0
      %9667 = vmatpush1.bf16.msra.mxu0 %v6878
      %9668 = vmatprep.subr.bf16.mxu0 0
      %9669 = vmatpush1.bf16.msra.mxu0 %v6879
      %9670 = vmatprep.subr.bf16.mxu0 0
      %9671 = vmatpush1.bf16.msra.mxu0 %v6880
      %9672 = vmatprep.subr.bf16.mxu0 0
      %9673 = vmatpush1.bf16.msra.mxu0 %v6881
      %9674 = vmatprep.mubr.bf16.mxu0 %v2575
      %9675 = vmatmul.mubr.bf16.gmra.mrb[0].mxu0 %v2573
      %v9676 = vpop.f32.mrb[0].mxu0
      %v9677 = vadd.f32 %v9637, %v9676
      %v9678 = vpop.f32.mrb[0].mxu0
      %v9679 = vpop.f32.mrb[0].mxu0
      %v9680 = vpop.f32.mrb[0].mxu0
      %9681 = vdwg.mxu0
      %9682 = vmatprep.subr.bf16.mxu0 0
      %9683 = vmatpush1.bf16.msra.mxu0 %v6882
      %9684 = vmatprep.subr.bf16.mxu0 0
      %9685 = vmatpush1.bf16.msra.mxu0 %v6883
      %9686 = vmatprep.subr.bf16.mxu0 0
      %9687 = vmatpush1.bf16.msra.mxu0 %v6884
      %9688 = vmatprep.subr.bf16.mxu0 0
      %9689 = vmatpush1.bf16.msra.mxu0 %v6885
      %9690 = vmatprep.subr.bf16.mxu0 0
      %9691 = vmatpush1.bf16.msra.mxu0 %v6886
      %9692 = vmatprep.subr.bf16.mxu0 0
      %9693 = vmatpush1.bf16.msra.mxu0 %v6887
      %9694 = vmatprep.subr.bf16.mxu0 0
      %9695 = vmatpush1.bf16.msra.mxu0 %v6888
      %9696 = vmatprep.subr.bf16.mxu0 0
      %9697 = vmatpush1.bf16.msra.mxu0 %v6889
      %9698 = vmatprep.subr.bf16.mxu0 0
      %9699 = vmatpush1.bf16.msra.mxu0 %v6890
      %9700 = vmatprep.subr.bf16.mxu0 0
      %9701 = vmatpush1.bf16.msra.mxu0 %v6891
      %9702 = vmatprep.subr.bf16.mxu0 0
      %9703 = vmatpush1.bf16.msra.mxu0 %v6892
      %9704 = vmatprep.subr.bf16.mxu0 0
      %9705 = vmatpush1.bf16.msra.mxu0 %v6893
      %9706 = vmatprep.subr.bf16.mxu0 0
      %9707 = vmatpush1.bf16.msra.mxu0 %v6894
      %9708 = vmatprep.subr.bf16.mxu0 0
      %9709 = vmatpush1.bf16.msra.mxu0 %v6895
      %9710 = vmatprep.subr.bf16.mxu0 0
      %9711 = vmatpush1.bf16.msra.mxu0 %v6896
      %9712 = vmatprep.subr.bf16.mxu0 0
      %9713 = vmatpush1.bf16.msra.mxu0 %v6897
      %9714 = vmatprep.mubr.bf16.mxu0 %v2572
      %9715 = vmatmul.mubr.bf16.gmra.mrb[0].mxu0 %v2558
      %v9716 = vpop.f32.mrb[0].mxu0
      %v9717 = vadd.f32 %v9677, %v9716
      %v9718 = vpop.f32.mrb[0].mxu0
      %v9719 = vpop.f32.mrb[0].mxu0
      %v9720 = vpop.f32.mrb[0].mxu0
      %9721 = vdwg.mxu0
      %9722 = vmatprep.subr.bf16.mxu0 0
      %9723 = vmatpush1.bf16.msra.mxu0 %v6898
      %9724 = vmatprep.subr.bf16.mxu0 0
      %9725 = vmatpush1.bf16.msra.mxu0 %v6899
      %9726 = vmatprep.subr.bf16.mxu0 0
      %9727 = vmatpush1.bf16.msra.mxu0 %v6900
      %9728 = vmatprep.subr.bf16.mxu0 0
      %9729 = vmatpush1.bf16.msra.mxu0 %v6901
      %9730 = vmatprep.subr.bf16.mxu0 0
      %9731 = vmatpush1.bf16.msra.mxu0 %v6902
      %9732 = vmatprep.subr.bf16.mxu0 0
      %9733 = vmatpush1.bf16.msra.mxu0 %v6903
      %9734 = vmatprep.subr.bf16.mxu0 0
      %9735 = vmatpush1.bf16.msra.mxu0 %v6904
      %9736 = vmatprep.subr.bf16.mxu0 0
      %9737 = vmatpush1.bf16.msra.mxu0 %v6905
      %9738 = vmatprep.subr.bf16.mxu0 0
      %9739 = vmatpush1.bf16.msra.mxu0 %v6906
      %9740 = vmatprep.subr.bf16.mxu0 0
      %9741 = vmatpush1.bf16.msra.mxu0 %v6907
      %9742 = vmatprep.subr.bf16.mxu0 0
      %9743 = vmatpush1.bf16.msra.mxu0 %v6908
      %9744 = vmatprep.subr.bf16.mxu0 0
      %9745 = vmatpush1.bf16.msra.mxu0 %v6909
      %9746 = vmatprep.subr.bf16.mxu0 0
      %9747 = vmatpush1.bf16.msra.mxu0 %v6910
      %9748 = vmatprep.subr.bf16.mxu0 0
      %9749 = vmatpush1.bf16.msra.mxu0 %v6911
      %9750 = vmatprep.subr.bf16.mxu0 0
      %9751 = vmatpush1.bf16.msra.mxu0 %v6912
      %9752 = vmatprep.subr.bf16.mxu0 0
      %9753 = vmatpush1.bf16.msra.mxu0 %v6913
      %9754 = vmatprep.mubr.bf16.mxu0 %v2576
      %9755 = vmatmul.mubr.bf16.gmra.mrb[0].mxu0 %v2574
      %v9756 = vpop.f32.mrb[0].mxu0
      %v9757 = vadd.f32 %v9717, %v9756
      %v9758 = vpop.f32.mrb[0].mxu0
      %v9759 = vpop.f32.mrb[0].mxu0
      %v9760 = vpop.f32.mrb[0].mxu0
      %9761 = vdwg.mxu0
      %9762 = vmatprep.subr.bf16.mxu0 0
      %9763 = vmatpush1.bf16.msra.mxu0 %v6914
      %9764 = vmatprep.subr.bf16.mxu0 0
      %9765 = vmatpush1.bf16.msra.mxu0 %v6915
      %9766 = vmatprep.subr.bf16.mxu0 0
      %9767 = vmatpush1.bf16.msra.mxu0 %v6916
      %9768 = vmatprep.subr.bf16.mxu0 0
      %9769 = vmatpush1.bf16.msra.mxu0 %v6917
      %9770 = vmatprep.subr.bf16.mxu0 0
      %9771 = vmatpush1.bf16.msra.mxu0 %v6918
      %9772 = vmatprep.subr.bf16.mxu0 0
      %9773 = vmatpush1.bf16.msra.mxu0 %v6919
      %9774 = vmatprep.subr.bf16.mxu0 0
      %9775 = vmatpush1.bf16.msra.mxu0 %v6920
      %9776 = vmatprep.subr.bf16.mxu0 0
      %9777 = vmatpush1.bf16.msra.mxu0 %v6921
      %9778 = vmatprep.subr.bf16.mxu0 0
      %9779 = vmatpush1.bf16.msra.mxu0 %v6922
      %9780 = vmatprep.subr.bf16.mxu0 0
      %9781 = vmatpush1.bf16.msra.mxu0 %v6923
      %9782 = vmatprep.subr.bf16.mxu0 0
      %9783 = vmatpush1.bf16.msra.mxu0 %v6924
      %9784 = vmatprep.subr.bf16.mxu0 0
      %9785 = vmatpush1.bf16.msra.mxu0 %v6925
      %9786 = vmatprep.subr.bf16.mxu0 0
      %9787 = vmatpush1.bf16.msra.mxu0 %v6926
      %9788 = vmatprep.subr.bf16.mxu0 0
      %9789 = vmatpush1.bf16.msra.mxu0 %v6927
      %9790 = vmatprep.subr.bf16.mxu0 0
      %9791 = vmatpush1.bf16.msra.mxu0 %v6928
      %9792 = vmatprep.subr.bf16.mxu0 0
      %9793 = vmatpush1.bf16.msra.mxu0 %v6929
      %9794 = vmatprep.mubr.bf16.mxu0 %v2614
      %9795 = vmatmul.mubr.bf16.gmra.mrb[0].mxu0 %v2600
      %v9796 = vpop.f32.mrb[0].mxu0
      %v9797 = vadd.f32 %v9757, %v9796
      %v9798 = vpop.f32.mrb[0].mxu0
      %v9799 = vpop.f32.mrb[0].mxu0
      %v9800 = vpop.f32.mrb[0].mxu0
      %9801 = vdwg.mxu0
      %9802 = vmatprep.subr.bf16.mxu0 0
      %9803 = vmatpush1.bf16.msra.mxu0 %v6930
      %9804 = vmatprep.subr.bf16.mxu0 0
      %9805 = vmatpush1.bf16.msra.mxu0 %v6931
      %9806 = vmatprep.subr.bf16.mxu0 0
      %9807 = vmatpush1.bf16.msra.mxu0 %v6932
      %9808 = vmatprep.subr.bf16.mxu0 0
      %9809 = vmatpush1.bf16.msra.mxu0 %v6933
      %9810 = vmatprep.subr.bf16.mxu0 0
      %9811 = vmatpush1.bf16.msra.mxu0 %v6934
      %9812 = vmatprep.subr.bf16.mxu0 0
      %9813 = vmatpush1.bf16.msra.mxu0 %v6935
      %9814 = vmatprep.subr.bf16.mxu0 0
      %9815 = vmatpush1.bf16.msra.mxu0 %v6936
      %9816 = vmatprep.subr.bf16.mxu0 0
      %9817 = vmatpush1.bf16.msra.mxu0 %v6937
      %9818 = vmatprep.subr.bf16.mxu0 0
      %9819 = vmatpush1.bf16.msra.mxu0 %v6938
      %9820 = vmatprep.subr.bf16.mxu0 0
      %9821 = vmatpush1.bf16.msra.mxu0 %v6939
      %9822 = vmatprep.subr.bf16.mxu0 0
      %9823 = vmatpush1.bf16.msra.mxu0 %v6940
      %9824 = vmatprep.subr.bf16.mxu0 0
      %9825 = vmatpush1.bf16.msra.mxu0 %v6941
      %9826 = vmatprep.subr.bf16.mxu0 0
      %9827 = vmatpush1.bf16.msra.mxu0 %v6942
      %9828 = vmatprep.subr.bf16.mxu0 0
      %9829 = vmatpush1.bf16.msra.mxu0 %v6943
      %9830 = vmatprep.subr.bf16.mxu0 0
      %9831 = vmatpush1.bf16.msra.mxu0 %v6944
      %9832 = vmatprep.subr.bf16.mxu0 0
      %9833 = vmatpush1.bf16.msra.mxu0 %v6945
      %9834 = vmatprep.mubr.bf16.mxu0 %v2624
      %9835 = vmatmul.mubr.bf16.gmra.mrb[0].mxu0 %v2622
      %v9836 = vpop.f32.mrb[0].mxu0
      %v9837 = vadd.f32 %v9797, %v9836
      %v9838 = vpop.f32.mrb[0].mxu0
      %v9839 = vpop.f32.mrb[0].mxu0
      %v9840 = vpop.f32.mrb[0].mxu0
      %9841 = vdwg.mxu0
      %9842 = vmatprep.subr.bf16.mxu0 0
      %9843 = vmatpush1.bf16.msra.mxu0 %v6946
      %9844 = vmatprep.subr.bf16.mxu0 0
      %9845 = vmatpush1.bf16.msra.mxu0 %v6947
      %9846 = vmatprep.subr.bf16.mxu0 0
      %9847 = vmatpush1.bf16.msra.mxu0 %v6948
      %9848 = vmatprep.subr.bf16.mxu0 0
      %9849 = vmatpush1.bf16.msra.mxu0 %v6949
      %9850 = vmatprep.subr.bf16.mxu0 0
      %9851 = vmatpush1.bf16.msra.mxu0 %v6950
      %9852 = vmatprep.subr.bf16.mxu0 0
      %9853 = vmatpush1.bf16.msra.mxu0 %v6951
      %9854 = vmatprep.subr.bf16.mxu0 0
      %9855 = vmatpush1.bf16.msra.mxu0 %v6952
      %9856 = vmatprep.subr.bf16.mxu0 0
      %9857 = vmatpush1.bf16.msra.mxu0 %v6953
      %9858 = vmatprep.subr.bf16.mxu0 0
      %9859 = vmatpush1.bf16.msra.mxu0 %v6954
      %9860 = vmatprep.subr.bf16.mxu0 0
      %9861 = vmatpush1.bf16.msra.mxu0 %v6955
      %9862 = vmatprep.subr.bf16.mxu0 0
      %9863 = vmatpush1.bf16.msra.mxu0 %v6956
      %9864 = vmatprep.subr.bf16.mxu0 0
      %9865 = vmatpush1.bf16.msra.mxu0 %v6957
      %9866 = vmatprep.subr.bf16.mxu0 0
      %9867 = vmatpush1.bf16.msra.mxu0 %v6958
      %9868 = vmatprep.subr.bf16.mxu0 0
      %9869 = vmatpush1.bf16.msra.mxu0 %v6959
      %9870 = vmatprep.subr.bf16.mxu0 0
      %9871 = vmatpush1.bf16.msra.mxu0 %v6960
      %9872 = vmatprep.subr.bf16.mxu0 0
      %9873 = vmatpush1.bf16.msra.mxu0 %v6961
      %9874 = vmatprep.mubr.bf16.mxu0 %v2621
      %9875 = vmatmul.mubr.bf16.gmra.mrb[0].mxu0 %v2607
      %v9876 = vpop.f32.mrb[0].mxu0
      %v9877 = vadd.f32 %v9837, %v9876
      %v9878 = vpop.f32.mrb[0].mxu0
      %v9879 = vpop.f32.mrb[0].mxu0
      %v9880 = vpop.f32.mrb[0].mxu0
      %9881 = vdwg.mxu0
      %9882 = vmatprep.subr.bf16.mxu0 0
      %9883 = vmatpush1.bf16.msra.mxu0 %v6962
      %9884 = vmatprep.subr.bf16.mxu0 0
      %9885 = vmatpush1.bf16.msra.mxu0 %v6963
      %9886 = vmatprep.subr.bf16.mxu0 0
      %9887 = vmatpush1.bf16.msra.mxu0 %v6964
      %9888 = vmatprep.subr.bf16.mxu0 0
      %9889 = vmatpush1.bf16.msra.mxu0 %v6965
      %9890 = vmatprep.subr.bf16.mxu0 0
      %9891 = vmatpush1.bf16.msra.mxu0 %v6966
      %9892 = vmatprep.subr.bf16.mxu0 0
      %9893 = vmatpush1.bf16.msra.mxu0 %v6967
      %9894 = vmatprep.subr.bf16.mxu0 0
      %9895 = vmatpush1.bf16.msra.mxu0 %v6968
      %9896 = vmatprep.subr.bf16.mxu0 0
      %9897 = vmatpush1.bf16.msra.mxu0 %v6969
      %9898 = vmatprep.subr.bf16.mxu0 0
      %9899 = vmatpush1.bf16.msra.mxu0 %v6970
      %9900 = vmatprep.subr.bf16.mxu0 0
      %9901 = vmatpush1.bf16.msra.mxu0 %v6971
      %9902 = vmatprep.subr.bf16.mxu0 0
      %9903 = vmatpush1.bf16.msra.mxu0 %v6972
      %9904 = vmatprep.subr.bf16.mxu0 0
      %9905 = vmatpush1.bf16.msra.mxu0 %v6973
      %9906 = vmatprep.subr.bf16.mxu0 0
      %9907 = vmatpush1.bf16.msra.mxu0 %v6974
      %9908 = vmatprep.subr.bf16.mxu0 0
      %9909 = vmatpush1.bf16.msra.mxu0 %v6975
      %9910 = vmatprep.subr.bf16.mxu0 0
      %9911 = vmatpush1.bf16.msra.mxu0 %v6976
      %9912 = vmatprep.subr.bf16.mxu0 0
      %9913 = vmatpush1.bf16.msra.mxu0 %v6977
      %9914 = vmatprep.mubr.bf16.mxu0 %v2625
      %9915 = vmatmul.mubr.bf16.gmra.mrb[0].mxu0 %v2623
      %v9916 = vpop.f32.mrb[0].mxu0
      %v9917 = vadd.f32 %v9877, %v9916
      %v9918 = vpop.f32.mrb[0].mxu0
      %v9919 = vpop.f32.mrb[0].mxu0
      %v9920 = vpop.f32.mrb[0].mxu0
      %9921 = vdwg.mxu0
      %9922 = vmatprep.subr.bf16.mxu0 0
      %9923 = vmatpush1.bf16.msra.mxu0 %v6978
      %9924 = vmatprep.subr.bf16.mxu0 0
      %9925 = vmatpush1.bf16.msra.mxu0 %v6979
      %9926 = vmatprep.subr.bf16.mxu0 0
      %9927 = vmatpush1.bf16.msra.mxu0 %v6980
      %9928 = vmatprep.subr.bf16.mxu0 0
      %9929 = vmatpush1.bf16.msra.mxu0 %v6981
      %9930 = vmatprep.subr.bf16.mxu0 0
      %9931 = vmatpush1.bf16.msra.mxu0 %v6982
      %9932 = vmatprep.subr.bf16.mxu0 0
      %9933 = vmatpush1.bf16.msra.mxu0 %v6983
      %9934 = vmatprep.subr.bf16.mxu0 0
      %9935 = vmatpush1.bf16.msra.mxu0 %v6984
      %9936 = vmatprep.subr.bf16.mxu0 0
      %9937 = vmatpush1.bf16.msra.mxu0 %v6985
      %9938 = vmatprep.subr.bf16.mxu0 0
      %9939 = vmatpush1.bf16.msra.mxu0 %v6986
      %9940 = vmatprep.subr.bf16.mxu0 0
      %9941 = vmatpush1.bf16.msra.mxu0 %v6987
      %9942 = vmatprep.subr.bf16.mxu0 0
      %9943 = vmatpush1.bf16.msra.mxu0 %v6988
      %9944 = vmatprep.subr.bf16.mxu0 0
      %9945 = vmatpush1.bf16.msra.mxu0 %v6989
      %9946 = vmatprep.subr.bf16.mxu0 0
      %9947 = vmatpush1.bf16.msra.mxu0 %v6990
      %9948 = vmatprep.subr.bf16.mxu0 0
      %9949 = vmatpush1.bf16.msra.mxu0 %v6991
      %9950 = vmatprep.subr.bf16.mxu0 0
      %9951 = vmatpush1.bf16.msra.mxu0 %v6992
      %9952 = vmatprep.subr.bf16.mxu0 0
      %9953 = vmatpush1.bf16.msra.mxu0 %v6993
      %9954 = vmatprep.mubr.bf16.mxu0 %v2647
      %9955 = vmatmul.mubr.bf16.gmra.mrb[0].mxu0 %v2640
      %v9956 = vpop.f32.mrb[0].mxu0
      %v9957 = vadd.f32 %v9917, %v9956
      %v9958 = vpop.f32.mrb[0].mxu0
      %v9959 = vpop.f32.mrb[0].mxu0
      %v9960 = vpop.f32.mrb[0].mxu0
      %9961 = vdwg.mxu0
      %v9962 = vmax.f32 %v9957, 0.0
      %v9963 = vld [vmem:[%s252] sm:$0xff]
      %v9964 = vld [vmem:[%s252 + $0x8] sm:$0xff]
      %v9965 = vld [vmem:[%s252 + $0x10] sm:$0xff]
      %v9966 = vld [vmem:[%s252 + $0x18] sm:$0xff]
      %v9967 = vld [vmem:[%s252 + $0x20] sm:$0xff]
      %v9968 = vld [vmem:[%s252 + $0x28] sm:$0xff]
      %v9969 = vld [vmem:[%s252 + $0x30] sm:$0xff]
      %v9970 = vld [vmem:[%s252 + $0x38] sm:$0xff]
      %p9971 = scmp.eq.s32.totalorder %s16, 0
      %v9972 = vld [vmem:[%s4] sm:$0x1]
      %s9973 = scalar_select %p9971, 1, 0
      %v9974 = vstv %s9973
      %vm9975 = vcmp.eq.s32.totalorder %v9974, 1
      %v9976 = vsel %vm9975, %v9972, 0.0
      %v9978 = vlaneseq
      %v9979 = vshrl.u32 %v9978, 7
      %v9980 = vsub.s32 0, %v9979
      %v9981 = vrot.slane %v9976, %v9980
      %vm9983 = vcmask 523264
      %v9985 = vsel %vm9983, %v9962, 0
      %9987 = vmatprep.subr.mxu0 0.0
      %9988 = vmatpush1.msra.mxu0 %v9963
      %9989 = vmatprep.subr.mxu0 0.0
      %9990 = vmatpush1.msra.mxu0 %v9964
      %9991 = vmatprep.subr.mxu0 0.0
      %9992 = vmatpush1.msra.mxu0 %v9965
      %9993 = vmatprep.subr.mxu0 0.0
      %9994 = vmatpush1.msra.mxu0 %v9966
      %9995 = vmatprep.subr.mxu0 0.0
      %9996 = vmatpush1.msra.mxu0 %v9967
      %9997 = vmatprep.subr.mxu0 0.0
      %9998 = vmatpush1.msra.mxu0 %v9968
      %9999 = vmatprep.subr.mxu0 0.0
      %10000 = vmatpush1.msra.mxu0 %v9969
      %10001 = vmatprep.subr.mxu0 0.0
      %10002 = vmatpush1.msra.mxu0 %v9970
      %10003 = vmatprep.subr.mxu0 0.0
      %10004 = vmatpush1.msra.mxu0 0.0
      %10005 = vmatprep.subr.mxu0 0.0
      %10006 = vmatpush1.msra.mxu0 0.0
      %10007 = vmatprep.subr.mxu0 0.0
      %10008 = vmatpush1.msra.mxu0 0.0
      %10009 = vmatprep.subr.mxu0 0.0
      %10010 = vmatpush1.msra.mxu0 0.0
      %10011 = vmatprep.subr.mxu0 0.0
      %10012 = vmatpush1.msra.mxu0 0.0
      %10013 = vmatprep.subr.mxu0 0.0
      %10014 = vmatpush1.msra.mxu0 0.0
      %10015 = vmatprep.subr.mxu0 0.0
      %10016 = vmatpush1.msra.mxu0 0.0
      %10017 = vmatprep.subr.mxu0 0.0
      %10018 = vmatpush1.msra.mxu0 0.0
      %10019 = vmatprep.subr.mxu0 0.0
      %10020 = vmatpush1.msra.mxu0 0.0
      %10021 = vmatprep.subr.mxu0 0.0
      %10022 = vmatpush1.msra.mxu0 0.0
      %10023 = vmatprep.subr.mxu0 0.0
      %10024 = vmatpush1.msra.mxu0 0.0
      %10025 = vmatprep.subr.mxu0 0.0
      %10026 = vmatpush1.msra.mxu0 0.0
      %10027 = vmatprep.subr.mxu0 0.0
      %10028 = vmatpush1.msra.mxu0 0.0
      %10029 = vmatprep.subr.mxu0 0.0
      %10030 = vmatpush1.msra.mxu0 0.0
      %10031 = vmatprep.subr.mxu0 0.0
      %10032 = vmatpush1.msra.mxu0 0.0
      %10033 = vmatprep.subr.mxu0 0.0
      %10034 = vmatpush1.msra.mxu0 0.0
      %10035 = vmatprep.subr.mxu0 0.0
      %10036 = vmatpush1.msra.mxu0 0.0
      %10037 = vmatprep.subr.mxu0 0.0
      %10038 = vmatpush1.msra.mxu0 0.0
      %10039 = vmatprep.subr.mxu0 0.0
      %10040 = vmatpush1.msra.mxu0 0.0
      %10041 = vmatprep.subr.mxu0 0.0
      %10042 = vmatpush1.msra.mxu0 0.0
      %10043 = vmatprep.subr.mxu0 0.0
      %10044 = vmatpush1.msra.mxu0 0.0
      %10045 = vmatprep.subr.mxu0 0.0
      %10046 = vmatpush1.msra.mxu0 0.0
      %10047 = vmatprep.subr.mxu0 0.0
      %10048 = vmatpush1.msra.mxu0 0.0
      %10049 = vmatprep.subr.mxu0 0.0
      %10050 = vmatpush1.msra.mxu0 0.0
      %10051 = vmatprep.mubr.f32.mxu0 0.0
      %10052 = vmatmul.mubr.f32.gmra.mrb[0].mxu0 %v9985
      %v10053 = vpop.f32.mrb[0].mxu0
      %v10054 = vadd.f32 %v9981, %v10053
      %v10055 = vpop.f32.mrb[0].mxu0
      %10056 = vdwg.mxu0
      %vm10057 = vcmask 9216
      %10058 = vst.msk [vmem:[%s256] sm:$0x3] %vm10057, %v10054
      %p10059 = scmp.lt.s32.totalorder %s16, 1
      %s10060 = scalar_select %p10059, %s16, 1
      %s10061 = smul.addr %s10060, 2
      %s10062 = scalar_lea.vmem %s5, %s10061
      // Predicated region
      $region41: #{deep_cnn1d_forward.3} parent=39 // pred_check
        %p10063 = pneg %p154
      $region42: #{deep_cnn1d_forward.3} parent=39 // pred_check_branch
        %10065 = sbr.rel (%p10063) target = $region44
      $region43: #{deep_cnn1d_forward.3} parent=39 // pred_region
        _
      $region44: #{deep_cnn1d_forward.3} parent=39 // pred_fallthru
        _
    $region40: #{deep_cnn1d_forward.3} parent=5 // pred_fallthru
      _
    %p10066 = scmp.le.s32.totalorder 2, %s11
    // Predicated region
    $region45: #{deep_cnn1d_forward.3} parent=5 // pred_check
      %p10067 = pneg %p10066
    $region46: #{deep_cnn1d_forward.3} parent=5 // pred_check_branch
      %10069 = sbr.rel (%p10067) target = $region48
    $region47: #{deep_cnn1d_forward.3} parent=5 // pred_region
      %s10070 = ssub.s32 %s11, 2
      // Predicated region
      $region49: #{deep_cnn1d_forward.3} parent=47 // pred_check
        %p10071 = pneg %p160
      $region50: #{deep_cnn1d_forward.3} parent=47 // pred_check_branch
        %10073 = sbr.rel (%p10071) target = $region52
      $region51: #{deep_cnn1d_forward.3} parent=47 // pred_region
        %p10074 = scmp.lt.s32.totalorder %s17, 1
        %s10075 = scalar_select %p10074, %s17, 1
        %s10076 = smul.addr %s10075, 2
        %s10077 = scalar_lea.vmem %s5, %s10076
      $region52: #{deep_cnn1d_forward.3} parent=47 // pred_fallthru
        _
    $region48: #{deep_cnn1d_forward.3} parent=5 // pred_fallthru
      _
  $region6: #{deep_cnn1d_forward.3} parent=0 // loop_footer
    %s15 = sadd.s32 1, %s11
  $region7: #{deep_cnn1d_forward.3} parent=0 // loop_footer_branch
    %10 = sbr.rel target = $region3
  $region8: #{deep_cnn1d_forward.3} parent=0 // loop_exit
    _

</llo_original>
